<compile_context>
chip_gen: v5e
topology: v5e:2x2
jax: 0.10.0
libtpu: 0.0.40
codegen_flags: <defaults>
</compile_context>

<pallas_src>
from functools import partial

import jax
import jax.numpy as jnp
from jax import lax
from jax.experimental import pallas as pl
from jax.experimental.pallas import tpu as pltpu


# ------------------------------ VMEM budgeting ---------------------------------
def _vmem_limit_bytes():
    """Generation-aware scoped-VMEM limit (7/8 of physical, capped at 112 MiB)."""
    cap = 64 * 1024 * 1024                       # conservative fallback (v7x per-TC)
    try:
        info = pltpu.get_tpu_info()
        c = getattr(info, "vmem_capacity_bytes", None)
        if c:
            cap = int(c)
    except Exception:
        pass
    return min(cap * 7 // 8, 112 * 1024 * 1024)


def _est_bytes(nb, P, Hp, Wp, Cin, Ho, Wo, C):
    """Rough per-grid-step VMEM estimate (max over the three stages)."""
    ph_in = 2 * nb * P * Hp * Wp * Cin * 2          # bf16 inputs, double-buffered
    y_bf = 2 * nb * Ho * Wo * C * 2                 # bf16 y1, double-buffered
    y_f32 = 2 * nb * Ho * Wo * C * 4                # f32 y2, double-buffered
    scr = nb * (Ho + 2) * (Wo + 2) * max(Cin, C) * 2
    acc = nb * Ho * Wo * C * 4                      # f32 accumulator
    tmp = 2 * nb * Ho * Wo * max(Cin, C) * 4        # tap / cast temporaries
    s1 = ph_in + y_bf + scr + acc + tmp
    s2 = y_bf + y_f32 + scr + acc + tmp
    s3 = y_f32 + y_bf + y_f32 + tmp
    return max(s1, s2, s3)


def _pick_batch_tile(N, P, Hp, Wp, Cin, Ho, Wo, C, budget, min_steps):
    """Largest divisor of N fitting `budget`, preferring >= min_steps grid steps."""
    divisors = [d for d in range(1, N + 1) if N % d == 0]
    best = 1
    for nb in divisors:
        if _est_bytes(nb, P, Hp, Wp, Cin, Ho, Wo, C) <= budget and N // nb >= min_steps:
            best = max(best, nb)
    if best == 1:
        for nb in divisors:
            if _est_bytes(nb, P, Hp, Wp, Cin, Ho, Wo, C) <= budget:
                best = max(best, nb)
    return best


# ------------------------ stage 1: conv1 + BN1 stats --------------------------
def _conv1_stats_kernel(*args, stride, Ho, Wo):
    """3x3 conv as a 9-tap K-accumulation on the MXU + per-tile BN partial stats.

    args = P phase refs (bf16, P = stride**2), weight ref (9, Cin, Cout) bf16,
           y out ref (nb, Ho, Wo, Cout) bf16, stats out ref (1, 2, Cout) f32,
           [pad scratch (nb, Ho+2, Wo+2, Cin) bf16 when stride == 1].
    For stride 2, phase p = (ky%2)*2 + (kx%2) holds x_pad[:, ky%2::2, kx%2::2, :],
    so every tap is a unit-stride static Ref slice.
    """
    P = stride * stride
    phase_refs = args[:P]
    w_ref = args[P]
    y_ref, stats_ref = args[P + 1], args[P + 2]

    nb, _, _, cout = y_ref.shape
    cin = phase_refs[0].shape[-1]
    M = nb * Ho * Wo

    if stride == 1:
        pad_scr = args[P + 3]
        # Zero the 1-px border (cheap thin stores, redone each step so it stays
        # correct under megacore grid sharding), then write the interior once.
        pad_scr[:, 0:1, :, :] = jnp.zeros((nb, 1, Wo + 2, cin), jnp.bfloat16)
        pad_scr[:, Ho + 1:Ho + 2, :, :] = jnp.zeros((nb, 1, Wo + 2, cin), jnp.bfloat16)
        pad_scr[:, :, 0:1, :] = jnp.zeros((nb, Ho + 2, 1, cin), jnp.bfloat16)
        pad_scr[:, :, Wo + 1:Wo + 2, :] = jnp.zeros((nb, Ho + 2, 1, cin), jnp.bfloat16)
        pad_scr[:, 1:Ho + 1, 1:Wo + 1, :] = phase_refs[0][...]

        def tap(ky, kx):
            return pad_scr[:, ky:ky + Ho, kx:kx + Wo, :]
    else:
        def tap(ky, kx):
            p = (ky % 2) * 2 + (kx % 2)
            oy, ox = ky // 2, kx // 2
            return phase_refs[p][:, oy:oy + Ho, ox:ox + Wo, :]

    acc = jnp.zeros((M, cout), jnp.float32)
    k = 0
    for ky in range(3):
        for kx in range(3):
            t = tap(ky, kx).reshape(M, cin)              # static Ref slice -> bf16 tile
            acc = acc + jnp.dot(t, w_ref[k],             # (M,Cin) x (Cin,Cout), f32 acc
                                preferred_element_type=jnp.float32)
            k += 1

    y_bf = acc.astype(jnp.bfloat16)                      # bf16 intermediate (HBM traffic /2)
    y_ref[...] = y_bf.reshape(nb, Ho, Wo, cout)

    # BN1 partial stats from the *stored* (rounded) values: per-tile sum + centered M2.
    yf = y_bf.astype(jnp.float32)
    s1 = jnp.sum(yf, axis=0, keepdims=True)
    mean = s1 / jnp.float32(M)
    d = yf - mean
    m2 = jnp.sum(d * d, axis=0, keepdims=True)
    stats_ref[...] = jnp.concatenate([s1, m2], axis=0)[None, :, :]


# -------------------- stage 2: BN1+ReLU -> conv2 + BN2 stats ------------------
def _bn_relu_conv_stats_kernel(y1_ref, sb1_ref, w2_ref, y2_ref, stats_ref, pad_scr):
    nb, Ho, Wo, C = y1_ref.shape
    M = nb * Ho * Wo

    scale = sb1_ref[0:1, :].reshape(1, 1, 1, C)
    bias = sb1_ref[1:2, :].reshape(1, 1, 1, C)
    # f32 FMA for accuracy (v5e has no bf16 VPU anyway), then cast for the MXU.
    a = jnp.maximum(y1_ref[...].astype(jnp.float32) * scale + bias, 0.0
                    ).astype(jnp.bfloat16)

    # Halo pad via persistent VMEM scratch: zero the 1-px border with thin
    # stores, write the interior once, then read taps as static Ref slices.
    pad_scr[:, 0:1, :, :] = jnp.zeros((nb, 1, Wo + 2, C), jnp.bfloat16)
    pad_scr[:, Ho + 1:Ho + 2, :, :] = jnp.zeros((nb, 1, Wo + 2, C), jnp.bfloat16)
    pad_scr[:, :, 0:1, :] = jnp.zeros((nb, Ho + 2, 1, C), jnp.bfloat16)
    pad_scr[:, :, Wo + 1:Wo + 2, :] = jnp.zeros((nb, Ho + 2, 1, C), jnp.bfloat16)
    pad_scr[:, 1:Ho + 1, 1:Wo + 1, :] = a

    acc = jnp.zeros((M, C), jnp.float32)
    k = 0
    for ky in range(3):
        for kx in range(3):
            t = pad_scr[:, ky:ky + Ho, kx:kx + Wo, :].reshape(M, C)
            acc = acc + jnp.dot(t, w2_ref[k], preferred_element_type=jnp.float32)
            k += 1

    y2_ref[...] = acc.reshape(nb, Ho, Wo, C)             # f32 (BN2 applied in stage 3)

    s1 = jnp.sum(acc, axis=0, keepdims=True)
    mean = s1 / jnp.float32(M)
    d = acc - mean
    m2 = jnp.sum(d * d, axis=0, keepdims=True)
    stats_ref[...] = jnp.concatenate([s1, m2], axis=0)[None, :, :]


# ---------------------- stage 3: BN2 + residual + ReLU ------------------------
def _bn_add_relu_kernel(y2_ref, sb2_ref, sc_ref, o_ref):
    C = o_ref.shape[-1]
    scale = sb2_ref[0:1, :].reshape(1, 1, 1, C)
    bias = sb2_ref[1:2, :].reshape(1, 1, 1, C)
    out = y2_ref[...] * scale + bias + sc_ref[...].astype(jnp.float32)
    o_ref[...] = jnp.maximum(out, 0.0).astype(o_ref.dtype)


# ------------------------------- BN finalize -----------------------------------
def _fold_bn(partial_stats, tile_count, gamma, beta, eps):
    """(T, 2, C) per-tile [sum, centered M2] -> (2, C) [scale; bias] via Chan combine."""
    s = partial_stats[:, 0, :]                    # (T, C) per-tile sums
    m2 = partial_stats[:, 1, :]                   # (T, C) per-tile centered SSQ
    T = s.shape[0]
    total = tile_count * T
    mean = jnp.sum(s, axis=0) / total
    tile_mean = s / tile_count
    var = (jnp.sum(m2, axis=0)
           + tile_count * jnp.sum((tile_mean - mean) ** 2, axis=0)) / total
    var = jnp.maximum(var, 0.0)                   # biased variance, f32
    scale = gamma.reshape(-1) * lax.rsqrt(var + eps)
    bias = beta.reshape(-1) - mean * scale
    return jnp.stack([scale, bias], axis=0).astype(jnp.float32)


# ------------------------------- wrapper ---------------------------------------
def basic_block_forward(x_nchw, params, *, stride=1, option='A', eps=1e-5,
                        batch_tile=None):
    """Pallas forward of _BasicBlock. Input/output are NCHW (PyTorch layout)."""
    w1, g1, b1 = params['w1'], params['g1'], params['b1']
    w2, g2, b2 = params['w2'], params['g2'], params['b2']
    in_planes, planes = w1.shape[2], w1.shape[3]
    assert stride in (1, 2), "option-A basic block only supports stride 1 or 2"

    x = jnp.transpose(x_nchw, (0, 2, 3, 1)).astype(jnp.bfloat16)   # NCHW -> NHWC, bf16
    N, H, W, Cin = x.shape
    assert Cin == in_planes
    Ho = (H - 1) // stride + 1
    Wo = (W - 1) // stride + 1

    # ---- shortcut branch (tiny glue, plain JAX) ----
    if stride != 1 or in_planes != planes:
        if option == 'A':
            # matches F.pad(x[:, :, ::2, ::2], (0,0,0,0, planes//4, planes//4))
            sc = jnp.pad(x[:, ::2, ::2, :],
                         ((0, 0), (0, 0), (0, 0), (planes // 4, planes // 4)))
        else:
            # TODO(synk): option 'B' shortcut (1x1 conv + BatchNorm) not implemented.
            raise NotImplementedError("option 'B' shortcut not implemented")
    else:
        sc = x
    assert sc.shape == (N, Ho, Wo, planes), (
        "shortcut/main shape mismatch (non-canonical stride/channel combination): "
        f"{sc.shape} vs {(N, Ho, Wo, planes)}")

    # ---- conv1 input layout ----
    if stride == 1:
        # No padded HBM copy: the 1-px halo is built in-kernel in VMEM scratch.
        Hp, Wp = H, W
        phases = [x]
    else:
        # stride-2: phase-decompose once in the wrapper so kernel slices are unit-stride.
        x_pad = jnp.pad(x, ((0, 0), (1, 1), (1, 1), (0, 0)))
        Hp, Wp = Ho + 1, Wo + 1
        phases = []
        for py in range(2):
            for px in range(2):
                ph = x_pad[:, py::2, px::2, :]
                ph = jnp.pad(ph, ((0, 0), (0, Hp - ph.shape[1]),
                                  (0, Wp - ph.shape[2]), (0, 0)))
                phases.append(ph)
    P = stride * stride

    # weights as (9, Cin, Cout) bf16: per-tap reads are full leading-axis slices.
    w1m = jnp.asarray(w1, jnp.float32).reshape(9, in_planes, planes).astype(jnp.bfloat16)
    w2m = jnp.asarray(w2, jnp.float32).reshape(9, planes, planes).astype(jnp.bfloat16)

    # ---- tiling / VMEM budget (generation-aware) ----
    vmem_limit = _vmem_limit_bytes()
    budget = int(vmem_limit * 0.55)
    min_steps = min(N, 4)        # keep >=4 grid steps for pipelining / v7x 2-TC sharding
    nb = batch_tile if batch_tile is not None else _pick_batch_tile(
        N, P, Hp, Wp, Cin, Ho, Wo, planes, budget, min_steps)
    assert N % nb == 0
    T = N // nb

    cparams = pltpu.CompilerParams(dimension_semantics=("parallel",),
                                   vmem_limit_bytes=vmem_limit)
    act_spec = pl.BlockSpec((nb, Ho, Wo, planes), lambda i: (i, 0, 0, 0))
    stats_spec = pl.BlockSpec((1, 2, planes), lambda i: (i, 0, 0))
    sb_spec = pl.BlockSpec((2, planes), lambda i: (0, 0))
    phase_spec = pl.BlockSpec((nb, Hp, Wp, Cin), lambda i: (i, 0, 0, 0))
    w1_spec = pl.BlockSpec((9, in_planes, planes), lambda i: (0, 0, 0))
    w2_spec = pl.BlockSpec((9, planes, planes), lambda i: (0, 0, 0))

    # ---- stage 1: conv1 + BN1 partial stats ----
    scratch1 = ([pltpu.VMEM((nb, Ho + 2, Wo + 2, Cin), jnp.bfloat16)]
                if stride == 1 else [])
    y1, st1 = pl.pallas_call(
        partial(_conv1_stats_kernel, stride=stride, Ho=Ho, Wo=Wo),
        grid=(T,),
        in_specs=[phase_spec] * P + [w1_spec],
        out_specs=(act_spec, stats_spec),
        out_shape=(jax.ShapeDtypeStruct((N, Ho, Wo, planes), jnp.bfloat16),
                   jax.ShapeDtypeStruct((T, 2, planes), jnp.float32)),
        scratch_shapes=scratch1,
        compiler_params=cparams,
    )(*phases, w1m)
    tile_count = jnp.float32(nb * Ho * Wo)
    sb1 = _fold_bn(st1, tile_count, g1, b1, eps)          # (2, planes) tiny glue

    # ---- stage 2: BN1 + ReLU -> conv2 + BN2 partial stats ----
    y2, st2 = pl.pallas_call(
        _bn_relu_conv_stats_kernel,
        grid=(T,),
        in_specs=[act_spec, sb_spec, w2_spec],
        out_specs=(act_spec, stats_spec),
        out_shape=(jax.ShapeDtypeStruct((N, Ho, Wo, planes), jnp.float32),
                   jax.ShapeDtypeStruct((T, 2, planes), jnp.float32)),
        scratch_shapes=[pltpu.VMEM((nb, Ho + 2, Wo + 2, planes), jnp.bfloat16)],
        compiler_params=cparams,
    )(y1, sb1, w2m)
    sb2 = _fold_bn(st2, tile_count, g2, b2, eps)

    # ---- stage 3: BN2 + residual add + ReLU ----
    out_nhwc = pl.pallas_call(
        _bn_add_relu_kernel,
        grid=(T,),
        in_specs=[act_spec, sb_spec, act_spec],
        out_specs=act_spec,
        out_shape=jax.ShapeDtypeStruct((N, Ho, Wo, planes), jnp.float32),
        compiler_params=cparams,
    )(y2, sb2, sc)

    return jnp.transpose(out_nhwc, (0, 3, 1, 2))                  # NHWC -> NCHW


# --------------------------- pure-JAX reference --------------------------------
def basic_block_reference(x_nchw, params, *, stride=1, option='A', eps=1e-5):
    """Reference with the same bf16-operand / f32-accumulate mixed precision
    (including the kernel's bf16 storage of the conv1 output)."""
    w1, g1, b1 = params['w1'], params['g1'], params['b1']
    w2, g2, b2 = params['w2'], params['g2'], params['b2']
    in_planes, planes = w1.shape[2], w1.shape[3]
    x = jnp.transpose(x_nchw, (0, 2, 3, 1)).astype(jnp.float32)

    def conv(a, w, s):
        return lax.conv_general_dilated(
            a.astype(jnp.bfloat16),
            jnp.asarray(w, jnp.float32).astype(jnp.bfloat16),
            (s, s), ((1, 1), (1, 1)),
            dimension_numbers=('NHWC', 'HWIO', 'NHWC'),
            preferred_element_type=jnp.float32)

    def bn(a, g, b):
        m = jnp.mean(a, axis=(0, 1, 2))
        v = jnp.mean((a - m) ** 2, axis=(0, 1, 2))
        return (a - m) * (g.reshape(-1) * lax.rsqrt(v + eps)) + b.reshape(-1)

    y1 = conv(x, w1, stride).astype(jnp.bfloat16).astype(jnp.float32)  # mirrors bf16 y1
    out = jax.nn.relu(bn(y1, g1, b1))
    out = bn(conv(out, w2, 1), g2, b2)
    if stride != 1 or in_planes != planes:
        sc = jnp.pad(x[:, ::2, ::2, :],
                     ((0, 0), (0, 0), (0, 0), (planes // 4, planes // 4)))
    else:
        sc = x
    sc = sc.astype(jnp.bfloat16).astype(jnp.float32)
    return jnp.transpose(jax.nn.relu(out + sc), (0, 3, 1, 2))


# ---------------------------------- main ----------------------------------------
if __name__ == "__main__":
    def make_case(key, N, in_planes, planes, H, W):
        ks = jax.random.split(key, 7)
        x = jax.random.normal(ks[0], (N, in_planes, H, W), jnp.float32)
        params = {
            'w1': jax.random.normal(ks[1], (3, 3, in_planes, planes), jnp.float32) * 0.1,
            'g1': 1.0 + 0.1 * jax.random.normal(ks[2], (1, planes), jnp.float32),
            'b1': 0.1 * jax.random.normal(ks[3], (1, planes), jnp.float32),
            'w2': jax.random.normal(ks[4], (3, 3, planes, planes), jnp.float32) * 0.1,
            'g2': 1.0 + 0.1 * jax.random.normal(ks[5], (1, planes), jnp.float32),
            'b2': 0.1 * jax.random.normal(ks[6], (1, planes), jnp.float32),
        }
        return x, params

    k1, k2 = jax.random.split(jax.random.PRNGKey(0))

    # case 1: identity shortcut (stride=1, in_planes == planes)
    x, p = make_case(k1, N=2, in_planes=4, planes=4, H=16, W=16)
    out = jax.block_until_ready(basic_block_forward(x, p, stride=1, option='A'))
    ref = basic_block_reference(x, p, stride=1, option='A')
    assert out.shape == (2, 4, 16, 16)
    assert jnp.allclose(out, ref, rtol=5e-3, atol=5e-3), \
        f"stride=1 max abs err {jnp.max(jnp.abs(out - ref))}"

    # case 2: downsampling block (stride=2, option-A shortcut, channel expansion)
    x, p = make_case(k2, N=2, in_planes=4, planes=8, H=16, W=16)
    out = jax.block_until_ready(basic_block_forward(x, p, stride=2, option='A'))
    ref = basic_block_reference(x, p, stride=2, option='A')
    assert out.shape == (2, 8, 8, 8)
    assert jnp.allclose(out, ref, rtol=5e-3, atol=5e-3), \
        f"stride=2 max abs err {jnp.max(jnp.abs(out - ref))}"

    print("KERNEL_OK")
</pallas_src>

<mosaic_0001>
module attributes {stable_mosaic.version = 11 : i64} {
  func.func @_conv1_stats_kernel(%arg0: i32, %arg1: memref<2x16x16x4xbf16, #tpu.memory_space<vmem>>, %arg2: memref<9x4x4xbf16, #tpu.memory_space<vmem>>, %arg3: memref<2x16x16x4xbf16, #tpu.memory_space<vmem>>, %arg4: memref<1x2x4xf32, #tpu.memory_space<vmem>>, %arg5: memref<2x18x18x4xbf16, #tpu.memory_space<vmem>>) attributes {dimension_semantics = [#tpu.dimension_semantics<parallel>], iteration_bounds = array<i64: 1>, scalar_prefetch = 0 : i64, scratch_operands = 1 : i64, tpu.core_type = #tpu.core_type<tc>, window_params = [{transform_indices = @transform_0, window_bounds = array<i64: 2, 16, 16, 4>}, {pipeline_mode = #tpu.pipeline_mode<synchronous>, transform_indices = @transform_1, window_bounds = array<i64: 9, 4, 4>}, {transform_indices = @transform_2, window_bounds = array<i64: 2, 16, 16, 4>}, {transform_indices = @transform_3, window_bounds = array<i64: 1, 2, 4>}]} {
    %cst = arith.constant 0.000000e+00 : bf16
    %0 = vector.broadcast %cst : bf16 to vector<2x1x18x4xbf16>
    %c0 = arith.constant 0 : index
    %c0_0 = arith.constant 0 : index
    %c0_1 = arith.constant 0 : index
    %c0_2 = arith.constant 0 : index
    %1 = vector.load %arg5[%c0, %c0_0, %c0_1, %c0_2] : memref<2x18x18x4xbf16, #tpu.memory_space<vmem>>, vector<2x1x18x4xbf16>
    tpu.vector_store %arg5[%c0, %c0_0, %c0_1, %c0_2], %0 {strides = array<i32>} : memref<2x18x18x4xbf16, #tpu.memory_space<vmem>>, vector<2x1x18x4xbf16>,
    %cst_3 = arith.constant 0.000000e+00 : bf16
    %2 = vector.broadcast %cst_3 : bf16 to vector<2x1x18x4xbf16>
    %c0_4 = arith.constant 0 : index
    %c17 = arith.constant 17 : index
    %c0_5 = arith.constant 0 : index
    %c0_6 = arith.constant 0 : index
    %3 = vector.load %arg5[%c0_4, %c17, %c0_5, %c0_6] : memref<2x18x18x4xbf16, #tpu.memory_space<vmem>>, vector<2x1x18x4xbf16>
    tpu.vector_store %arg5[%c0_4, %c17, %c0_5, %c0_6], %2 {strides = array<i32>} : memref<2x18x18x4xbf16, #tpu.memory_space<vmem>>, vector<2x1x18x4xbf16>,
    %cst_7 = arith.constant 0.000000e+00 : bf16
    %4 = vector.broadcast %cst_7 : bf16 to vector<2x18x1x4xbf16>
    %c0_8 = arith.constant 0 : index
    %c0_9 = arith.constant 0 : index
    %c0_10 = arith.constant 0 : index
    %c0_11 = arith.constant 0 : index
    %5 = vector.load %arg5[%c0_8, %c0_9, %c0_10, %c0_11] : memref<2x18x18x4xbf16, #tpu.memory_space<vmem>>, vector<2x18x1x4xbf16>
    tpu.vector_store %arg5[%c0_8, %c0_9, %c0_10, %c0_11], %4 {strides = array<i32>} : memref<2x18x18x4xbf16, #tpu.memory_space<vmem>>, vector<2x18x1x4xbf16>,
    %cst_12 = arith.constant 0.000000e+00 : bf16
    %6 = vector.broadcast %cst_12 : bf16 to vector<2x18x1x4xbf16>
    %c0_13 = arith.constant 0 : index
    %c0_14 = arith.constant 0 : index
    %c17_15 = arith.constant 17 : index
    %c0_16 = arith.constant 0 : index
    %7 = vector.load %arg5[%c0_13, %c0_14, %c17_15, %c0_16] : memref<2x18x18x4xbf16, #tpu.memory_space<vmem>>, vector<2x18x1x4xbf16>
    tpu.vector_store %arg5[%c0_13, %c0_14, %c17_15, %c0_16], %6 {strides = array<i32>} : memref<2x18x18x4xbf16, #tpu.memory_space<vmem>>, vector<2x18x1x4xbf16>,
    %c0_17 = arith.constant 0 : index
    %c0_18 = arith.constant 0 : index
    %c0_19 = arith.constant 0 : index
    %c0_20 = arith.constant 0 : index
    %8 = vector.load %arg1[%c0_17, %c0_18, %c0_19, %c0_20] : memref<2x16x16x4xbf16, #tpu.memory_space<vmem>>, vector<2x16x16x4xbf16>
    %c0_21 = arith.constant 0 : index
    %c1 = arith.constant 1 : index
    %c1_22 = arith.constant 1 : index
    %c0_23 = arith.constant 0 : index
    %9 = vector.load %arg5[%c0_21, %c1, %c1_22, %c0_23] : memref<2x18x18x4xbf16, #tpu.memory_space<vmem>>, vector<2x16x16x4xbf16>
    tpu.vector_store %arg5[%c0_21, %c1, %c1_22, %c0_23], %8 {strides = array<i32>} : memref<2x18x18x4xbf16, #tpu.memory_space<vmem>>, vector<2x16x16x4xbf16>,
    %cst_24 = arith.constant 0.000000e+00 : f32
    %10 = vector.broadcast %cst_24 : f32 to vector<512x4xf32>
    %c0_25 = arith.constant 0 : index
    %c0_26 = arith.constant 0 : index
    %c0_27 = arith.constant 0 : index
    %c0_28 = arith.constant 0 : index
    %11 = vector.load %arg5[%c0_25, %c0_26, %c0_27, %c0_28] : memref<2x18x18x4xbf16, #tpu.memory_space<vmem>>, vector<2x16x16x4xbf16>
    %12 = vector.shape_cast %11 : vector<2x16x16x4xbf16> to vector<512x4xbf16>
    %c0_29 = arith.constant 0 : index
    %c0_30 = arith.constant 0 : index
    %c0_31 = arith.constant 0 : index
    %13 = vector.load %arg2[%c0_29, %c0_30, %c0_31] : memref<9x4x4xbf16, #tpu.memory_space<vmem>>, vector<1x4x4xbf16>
    %14 = vector.shape_cast %13 : vector<1x4x4xbf16> to vector<4x4xbf16>
    %cst_32 = arith.constant dense<0.000000e+00> : vector<512x4xf32>
    %15 = tpu.matmul %12, %14, %cst_32 {dimension_numbers = #tpu.dot_dimension_numbers<[1], [0], [0], [1], [0, 0, 1, 1], [], []>} : vector<512x4xbf16>, vector<4x4xbf16>, vector<512x4xf32> -> vector<512x4xf32>
    %16 = arith.addf %10, %15 : vector<512x4xf32>
    %c0_33 = arith.constant 0 : index
    %c0_34 = arith.constant 0 : index
    %c1_35 = arith.constant 1 : index
    %c0_36 = arith.constant 0 : index
    %17 = vector.load %arg5[%c0_33, %c0_34, %c1_35, %c0_36] : memref<2x18x18x4xbf16, #tpu.memory_space<vmem>>, vector<2x16x16x4xbf16>
    %18 = vector.shape_cast %17 : vector<2x16x16x4xbf16> to vector<512x4xbf16>
    %c1_37 = arith.constant 1 : index
    %c0_38 = arith.constant 0 : index
    %c0_39 = arith.constant 0 : index
    %19 = vector.load %arg2[%c1_37, %c0_38, %c0_39] : memref<9x4x4xbf16, #tpu.memory_space<vmem>>, vector<1x4x4xbf16>
    %20 = vector.shape_cast %19 : vector<1x4x4xbf16> to vector<4x4xbf16>
    %cst_40 = arith.constant dense<0.000000e+00> : vector<512x4xf32>
    %21 = tpu.matmul %18, %20, %cst_40 {dimension_numbers = #tpu.dot_dimension_numbers<[1], [0], [0], [1], [0, 0, 1, 1], [], []>} : vector<512x4xbf16>, vector<4x4xbf16>, vector<512x4xf32> -> vector<512x4xf32>
    %22 = arith.addf %16, %21 : vector<512x4xf32>
    %c0_41 = arith.constant 0 : index
    %c0_42 = arith.constant 0 : index
    %c2 = arith.constant 2 : index
    %c0_43 = arith.constant 0 : index
    %23 = vector.load %arg5[%c0_41, %c0_42, %c2, %c0_43] : memref<2x18x18x4xbf16, #tpu.memory_space<vmem>>, vector<2x16x16x4xbf16>
    %24 = vector.shape_cast %23 : vector<2x16x16x4xbf16> to vector<512x4xbf16>
    %c2_44 = arith.constant 2 : index
    %c0_45 = arith.constant 0 : index
    %c0_46 = arith.constant 0 : index
    %25 = vector.load %arg2[%c2_44, %c0_45, %c0_46] : memref<9x4x4xbf16, #tpu.memory_space<vmem>>, vector<1x4x4xbf16>
    %26 = vector.shape_cast %25 : vector<1x4x4xbf16> to vector<4x4xbf16>
    %cst_47 = arith.constant dense<0.000000e+00> : vector<512x4xf32>
    %27 = tpu.matmul %24, %26, %cst_47 {dimension_numbers = #tpu.dot_dimension_numbers<[1], [0], [0], [1], [0, 0, 1, 1], [], []>} : vector<512x4xbf16>, vector<4x4xbf16>, vector<512x4xf32> -> vector<512x4xf32>
    %28 = arith.addf %22, %27 : vector<512x4xf32>
    %c0_48 = arith.constant 0 : index
    %c1_49 = arith.constant 1 : index
    %c0_50 = arith.constant 0 : index
    %c0_51 = arith.constant 0 : index
    %29 = vector.load %arg5[%c0_48, %c1_49, %c0_50, %c0_51] : memref<2x18x18x4xbf16, #tpu.memory_space<vmem>>, vector<2x16x16x4xbf16>
    %30 = vector.shape_cast %29 : vector<2x16x16x4xbf16> to vector<512x4xbf16>
    %c3 = arith.constant 3 : index
    %c0_52 = arith.constant 0 : index
    %c0_53 = arith.constant 0 : index
    %31 = vector.load %arg2[%c3, %c0_52, %c0_53] : memref<9x4x4xbf16, #tpu.memory_space<vmem>>, vector<1x4x4xbf16>
    %32 = vector.shape_cast %31 : vector<1x4x4xbf16> to vector<4x4xbf16>
    %cst_54 = arith.constant dense<0.000000e+00> : vector<512x4xf32>
    %33 = tpu.matmul %30, %32, %cst_54 {dimension_numbers = #tpu.dot_dimension_numbers<[1], [0], [0], [1], [0, 0, 1, 1], [], []>} : vector<512x4xbf16>, vector<4x4xbf16>, vector<512x4xf32> -> vector<512x4xf32>
    %34 = arith.addf %28, %33 : vector<512x4xf32>
    %c0_55 = arith.constant 0 : index
    %c1_56 = arith.constant 1 : index
    %c1_57 = arith.constant 1 : index
    %c0_58 = arith.constant 0 : index
    %35 = vector.load %arg5[%c0_55, %c1_56, %c1_57, %c0_58] : memref<2x18x18x4xbf16, #tpu.memory_space<vmem>>, vector<2x16x16x4xbf16>
    %36 = vector.shape_cast %35 : vector<2x16x16x4xbf16> to vector<512x4xbf16>
    %c4 = arith.constant 4 : index
    %c0_59 = arith.constant 0 : index
    %c0_60 = arith.constant 0 : index
    %37 = vector.load %arg2[%c4, %c0_59, %c0_60] : memref<9x4x4xbf16, #tpu.memory_space<vmem>>, vector<1x4x4xbf16>
    %38 = vector.shape_cast %37 : vector<1x4x4xbf16> to vector<4x4xbf16>
    %cst_61 = arith.constant dense<0.000000e+00> : vector<512x4xf32>
    %39 = tpu.matmul %36, %38, %cst_61 {dimension_numbers = #tpu.dot_dimension_numbers<[1], [0], [0], [1], [0, 0, 1, 1], [], []>} : vector<512x4xbf16>, vector<4x4xbf16>, vector<512x4xf32> -> vector<512x4xf32>
    %40 = arith.addf %34, %39 : vector<512x4xf32>
    %c0_62 = arith.constant 0 : index
    %c1_63 = arith.constant 1 : index
    %c2_64 = arith.constant 2 : index
    %c0_65 = arith.constant 0 : index
    %41 = vector.load %arg5[%c0_62, %c1_63, %c2_64, %c0_65] : memref<2x18x18x4xbf16, #tpu.memory_space<vmem>>, vector<2x16x16x4xbf16>
    %42 = vector.shape_cast %41 : vector<2x16x16x4xbf16> to vector<512x4xbf16>
    %c5 = arith.constant 5 : index
    %c0_66 = arith.constant 0 : index
    %c0_67 = arith.constant 0 : index
    %43 = vector.load %arg2[%c5, %c0_66, %c0_67] : memref<9x4x4xbf16, #tpu.memory_space<vmem>>, vector<1x4x4xbf16>
    %44 = vector.shape_cast %43 : vector<1x4x4xbf16> to vector<4x4xbf16>
    %cst_68 = arith.constant dense<0.000000e+00> : vector<512x4xf32>
    %45 = tpu.matmul %42, %44, %cst_68 {dimension_numbers = #tpu.dot_dimension_numbers<[1], [0], [0], [1], [0, 0, 1, 1], [], []>} : vector<512x4xbf16>, vector<4x4xbf16>, vector<512x4xf32> -> vector<512x4xf32>
    %46 = arith.addf %40, %45 : vector<512x4xf32>
    %c0_69 = arith.constant 0 : index
    %c2_70 = arith.constant 2 : index
    %c0_71 = arith.constant 0 : index
    %c0_72 = arith.constant 0 : index
    %47 = vector.load %arg5[%c0_69, %c2_70, %c0_71, %c0_72] : memref<2x18x18x4xbf16, #tpu.memory_space<vmem>>, vector<2x16x16x4xbf16>
    %48 = vector.shape_cast %47 : vector<2x16x16x4xbf16> to vector<512x4xbf16>
    %c6 = arith.constant 6 : index
    %c0_73 = arith.constant 0 : index
    %c0_74 = arith.constant 0 : index
    %49 = vector.load %arg2[%c6, %c0_73, %c0_74] : memref<9x4x4xbf16, #tpu.memory_space<vmem>>, vector<1x4x4xbf16>
    %50 = vector.shape_cast %49 : vector<1x4x4xbf16> to vector<4x4xbf16>
    %cst_75 = arith.constant dense<0.000000e+00> : vector<512x4xf32>
    %51 = tpu.matmul %48, %50, %cst_75 {dimension_numbers = #tpu.dot_dimension_numbers<[1], [0], [0], [1], [0, 0, 1, 1], [], []>} : vector<512x4xbf16>, vector<4x4xbf16>, vector<512x4xf32> -> vector<512x4xf32>
    %52 = arith.addf %46, %51 : vector<512x4xf32>
    %c0_76 = arith.constant 0 : index
    %c2_77 = arith.constant 2 : index
    %c1_78 = arith.constant 1 : index
    %c0_79 = arith.constant 0 : index
    %53 = vector.load %arg5[%c0_76, %c2_77, %c1_78, %c0_79] : memref<2x18x18x4xbf16, #tpu.memory_space<vmem>>, vector<2x16x16x4xbf16>
    %54 = vector.shape_cast %53 : vector<2x16x16x4xbf16> to vector<512x4xbf16>
    %c7 = arith.constant 7 : index
    %c0_80 = arith.constant 0 : index
    %c0_81 = arith.constant 0 : index
    %55 = vector.load %arg2[%c7, %c0_80, %c0_81] : memref<9x4x4xbf16, #tpu.memory_space<vmem>>, vector<1x4x4xbf16>
    %56 = vector.shape_cast %55 : vector<1x4x4xbf16> to vector<4x4xbf16>
    %cst_82 = arith.constant dense<0.000000e+00> : vector<512x4xf32>
    %57 = tpu.matmul %54, %56, %cst_82 {dimension_numbers = #tpu.dot_dimension_numbers<[1], [0], [0], [1], [0, 0, 1, 1], [], []>} : vector<512x4xbf16>, vector<4x4xbf16>, vector<512x4xf32> -> vector<512x4xf32>
    %58 = arith.addf %52, %57 : vector<512x4xf32>
    %c0_83 = arith.constant 0 : index
    %c2_84 = arith.constant 2 : index
    %c2_85 = arith.constant 2 : index
    %c0_86 = arith.constant 0 : index
    %59 = vector.load %arg5[%c0_83, %c2_84, %c2_85, %c0_86] : memref<2x18x18x4xbf16, #tpu.memory_space<vmem>>, vector<2x16x16x4xbf16>
    %60 = vector.shape_cast %59 : vector<2x16x16x4xbf16> to vector<512x4xbf16>
    %c8 = arith.constant 8 : index
    %c0_87 = arith.constant 0 : index
    %c0_88 = arith.constant 0 : index
    %61 = vector.load %arg2[%c8, %c0_87, %c0_88] : memref<9x4x4xbf16, #tpu.memory_space<vmem>>, vector<1x4x4xbf16>
    %62 = vector.shape_cast %61 : vector<1x4x4xbf16> to vector<4x4xbf16>
    %cst_89 = arith.constant dense<0.000000e+00> : vector<512x4xf32>
    %63 = tpu.matmul %60, %62, %cst_89 {dimension_numbers = #tpu.dot_dimension_numbers<[1], [0], [0], [1], [0, 0, 1, 1], [], []>} : vector<512x4xbf16>, vector<4x4xbf16>, vector<512x4xf32> -> vector<512x4xf32>
    %64 = arith.addf %58, %63 : vector<512x4xf32>
    %65 = arith.truncf %64 : vector<512x4xf32> to vector<512x4xbf16>
    %66 = vector.shape_cast %65 : vector<512x4xbf16> to vector<2x16x16x4xbf16>
    %c0_90 = arith.constant 0 : index
    %c0_91 = arith.constant 0 : index
    %c0_92 = arith.constant 0 : index
    %c0_93 = arith.constant 0 : index
    %67 = vector.load %arg3[%c0_90, %c0_91, %c0_92, %c0_93] : memref<2x16x16x4xbf16, #tpu.memory_space<vmem>>, vector<2x16x16x4xbf16>
    tpu.vector_store %arg3[%c0_90, %c0_91, %c0_92, %c0_93], %66 {strides = array<i32>} : memref<2x16x16x4xbf16, #tpu.memory_space<vmem>>, vector<2x16x16x4xbf16>,
    %68 = arith.extf %65 : vector<512x4xbf16> to vector<512x4xf32>
    %cst_94 = arith.constant dense<0.000000e+00> : vector<4xf32>
    %69 = vector.multi_reduction <add>, %68, %cst_94 [0] : vector<512x4xf32> to vector<4xf32>
    %70 = vector.shape_cast %69 : vector<4xf32> to vector<1x4xf32>
    %cst_95 = arith.constant 5.120000e+02 : f32
    %71 = vector.broadcast %cst_95 : f32 to vector<1x4xf32>
    %72 = arith.divf %70, %71 : vector<1x4xf32>
    %73 = vector.broadcast %72 : vector<1x4xf32> to vector<512x4xf32>
    %74 = arith.subf %68, %73 : vector<512x4xf32>
    %75 = arith.mulf %74, %74 : vector<512x4xf32>
    %cst_96 = arith.constant dense<0.000000e+00> : vector<4xf32>
    %76 = vector.multi_reduction <add>, %75, %cst_96 [0] : vector<512x4xf32> to vector<4xf32>
    %77 = vector.shape_cast %76 : vector<4xf32> to vector<1x4xf32>
    %78 = tpu.concatenate %70, %77 in 0 : vector<1x4xf32>, vector<1x4xf32> -> vector<2x4xf32>
    %79 = vector.shape_cast %78 : vector<2x4xf32> to vector<1x2x4xf32>
    %c0_97 = arith.constant 0 : index
    %c0_98 = arith.constant 0 : index
    %c0_99 = arith.constant 0 : index
    %80 = vector.load %arg4[%c0_97, %c0_98, %c0_99] : memref<1x2x4xf32, #tpu.memory_space<vmem>>, vector<1x2x4xf32>
    tpu.vector_store %arg4[%c0_97, %c0_98, %c0_99], %79 {strides = array<i32>} : memref<1x2x4xf32, #tpu.memory_space<vmem>>, vector<1x2x4xf32>,
    return
  }
  func.func @transform_0(%arg0: i32) -> (i32, i32, i32, i32) {
    %c0_i32 = arith.constant 0 : i32
    %c0_i32_0 = arith.constant 0 : i32
    %c0_i32_1 = arith.constant 0 : i32
    %c0_i32_2 = arith.constant 0 : i32
    return %arg0, %c0_i32, %c0_i32_0, %c0_i32_1 : i32, i32, i32, i32
  }
  func.func @transform_1(%arg0: i32) -> (i32, i32, i32) {
    %c0_i32 = arith.constant 0 : i32
    %c0_i32_0 = arith.constant 0 : i32
    %c0_i32_1 = arith.constant 0 : i32
    %c0_i32_2 = arith.constant 0 : i32
    return %c0_i32, %c0_i32_0, %c0_i32_1 : i32, i32, i32
  }
  func.func @transform_2(%arg0: i32) -> (i32, i32, i32, i32) {
    %c0_i32 = arith.constant 0 : i32
    %c0_i32_0 = arith.constant 0 : i32
    %c0_i32_1 = arith.constant 0 : i32
    %c0_i32_2 = arith.constant 0 : i32
    return %arg0, %c0_i32, %c0_i32_0, %c0_i32_1 : i32, i32, i32, i32
  }
  func.func @transform_3(%arg0: i32) -> (i32, i32, i32) {
    %c0_i32 = arith.constant 0 : i32
    %c0_i32_0 = arith.constant 0 : i32
    %c0_i32_1 = arith.constant 0 : i32
    return %arg0, %c0_i32, %c0_i32_0 : i32, i32, i32
  }
}

</mosaic_0001>

<llo_original>
// kernel: tpu_custom_call.1
$region0: #{tpu_custom_call.1}
  #allocation0 [shape = 'u32[]', space=smem, size = 0x4, offset = 0x4, fixed_abs, tag = 'smem constant byte address 0x4 - core index']
  #allocation1 [shape = 'u32[72,128]{1,0:T(1,128)}', space=vmem, size = 0x9000, scoped, tag = 'internal scratch']
  #allocation2 [shape = 'bf16[2,18,18,4]{3,2,1,0:T(8,128)(2,1)}', space=vmem, size = 0x36000, scoped, tag = 'scratch operand']
  %s0 = inlined_call_operand.vmem [shape: bf16[2,16,16,4], index: 0, kind: input, shape index: {}]
  %s1 = inlined_call_operand.vmem [shape: bf16[9,4,4], index: 1, kind: input, shape index: {}]
  %s2 = inlined_call_operand.vmem [shape: bf16[2,16,16,4], index: 2, kind: output, shape index: {0}]
  %s3 = inlined_call_operand.hbm [shape: f32[1,2,4], index: 3, kind: output, shape index: {1}]
  %4 = xla_tuple %s2, %s3
  %s5 = sld [smem:[#allocation0]]
  $region26: #{tpu_custom_call.1} parent=0
    _
  %s7 = ssub.s32 1, %s5
  %s8 = scalar_select 0, %s7, %s5
  $region1: #{tpu_custom_call.1} parent=0
    #allocation3 [shape = 'u8[1024]{0}', space=vmem, size = 0x400, scoped, tag = 'output window, operand 1, single buffered']
    #allocation4 [shape = 's32[1]{0}', space=sflag, size = 0x4, scoped, tag = 'scoped memory for tpu_custom_call.1']
    %9 = vsyncpa [#allocation4], 0
    // Predicated region
    $region2: #{tpu_custom_call.1} parent=1 // pred_check
      _
    $region3: #{tpu_custom_call.1} parent=1 // pred_check_branch
      %11 = sbr.rel (0) target = $region5
    $region4: #{tpu_custom_call.1} parent=1 // pred_region
      _
    $region5: #{tpu_custom_call.1} parent=1 // pred_fallthru
      _
    // Predicated region
    $region6: #{tpu_custom_call.1} parent=1 // pred_check
      _
    $region7: #{tpu_custom_call.1} parent=1 // pred_check_branch
      %13 = sbr.rel (0) target = $region9
    $region8: #{tpu_custom_call.1} parent=1 // pred_region
      _
    $region9: #{tpu_custom_call.1} parent=1 // pred_fallthru
      _
    %vm15 = vcmask 27648
    %16 = vst.msk [vmem:[#allocation2] sm:$0xf] %vm15, 0
    %17 = vst.msk [vmem:[#allocation2 + $0x4] sm:$0xf] %vm15, 0
    %vm18 = vcmask 24576
    %19 = vst.msk [vmem:[#allocation2 + $0x8] sm:$0x1] %vm18, 0
    %20 = vst.msk [vmem:[#allocation2 + $0xd8] sm:$0xf] %vm15, 0
    %21 = vst.msk [vmem:[#allocation2 + $0xdc] sm:$0xf] %vm15, 0
    %22 = vst.msk [vmem:[#allocation2 + $0xe0] sm:$0x1] %vm18, 0
    %s23 = scalar_lea.vmem [#allocation2], 204
    %24 = vst.msk [vmem:[%s23] sm:$0xf] %vm15, 0
    %25 = vst.msk [vmem:[%s23 + $0x4] sm:$0xf] %vm15, 0
    %26 = vst.msk [vmem:[%s23 + $0x8] sm:$0x1] %vm18, 0
    %27 = vst.msk [vmem:[%s23 + $0xd8] sm:$0xf] %vm15, 0
    %28 = vst.msk [vmem:[%s23 + $0xdc] sm:$0xf] %vm15, 0
    %29 = vst.msk [vmem:[%s23 + $0xe0] sm:$0x1] %vm18, 0
    %vm30 = vcmask 24576
    %vm31 = vsmask.f32 256
    %vm32 = vmand %vm30, %vm31
    %v33 = vld [vmem:[#allocation2] sm:$0x1]
    %v34 = vsel %vm32, 0, %v33
    %35 = vst [vmem:[#allocation2] sm:$0x1] %v34
    %v36 = vld [vmem:[#allocation2 + $0xc] sm:$0x1]
    %v37 = vsel %vm32, 0, %v36
    %38 = vst [vmem:[#allocation2 + $0xc] sm:$0x1] %v37
    %v39 = vld [vmem:[#allocation2 + $0x18] sm:$0x1]
    %v40 = vsel %vm32, 0, %v39
    %41 = vst [vmem:[#allocation2 + $0x18] sm:$0x1] %v40
    %v42 = vld [vmem:[#allocation2 + $0x24] sm:$0x1]
    %v43 = vsel %vm32, 0, %v42
    %44 = vst [vmem:[#allocation2 + $0x24] sm:$0x1] %v43
    %v45 = vld [vmem:[#allocation2 + $0x30] sm:$0x1]
    %v46 = vsel %vm32, 0, %v45
    %47 = vst [vmem:[#allocation2 + $0x30] sm:$0x1] %v46
    %v48 = vld [vmem:[#allocation2 + $0x3c] sm:$0x1]
    %v49 = vsel %vm32, 0, %v48
    %50 = vst [vmem:[#allocation2 + $0x3c] sm:$0x1] %v49
    %v51 = vld [vmem:[#allocation2 + $0x48] sm:$0x1]
    %v52 = vsel %vm32, 0, %v51
    %53 = vst [vmem:[#allocation2 + $0x48] sm:$0x1] %v52
    %v54 = vld [vmem:[#allocation2 + $0x54] sm:$0x1]
    %v55 = vsel %vm32, 0, %v54
    %56 = vst [vmem:[#allocation2 + $0x54] sm:$0x1] %v55
    %v57 = vld [vmem:[#allocation2 + $0x60] sm:$0x1]
    %v58 = vsel %vm32, 0, %v57
    %59 = vst [vmem:[#allocation2 + $0x60] sm:$0x1] %v58
    %v60 = vld [vmem:[#allocation2 + $0x6c] sm:$0x1]
    %v61 = vsel %vm32, 0, %v60
    %62 = vst [vmem:[#allocation2 + $0x6c] sm:$0x1] %v61
    %v63 = vld [vmem:[#allocation2 + $0x78] sm:$0x1]
    %v64 = vsel %vm32, 0, %v63
    %65 = vst [vmem:[#allocation2 + $0x78] sm:$0x1] %v64
    %v66 = vld [vmem:[#allocation2 + $0x84] sm:$0x1]
    %v67 = vsel %vm32, 0, %v66
    %68 = vst [vmem:[#allocation2 + $0x84] sm:$0x1] %v67
    %v69 = vld [vmem:[#allocation2 + $0x90] sm:$0x1]
    %v70 = vsel %vm32, 0, %v69
    %71 = vst [vmem:[#allocation2 + $0x90] sm:$0x1] %v70
    %v72 = vld [vmem:[#allocation2 + $0x9c] sm:$0x1]
    %v73 = vsel %vm32, 0, %v72
    %74 = vst [vmem:[#allocation2 + $0x9c] sm:$0x1] %v73
    %v75 = vld [vmem:[#allocation2 + $0xa8] sm:$0x1]
    %v76 = vsel %vm32, 0, %v75
    %77 = vst [vmem:[#allocation2 + $0xa8] sm:$0x1] %v76
    %v78 = vld [vmem:[#allocation2 + $0xb4] sm:$0x1]
    %v79 = vsel %vm32, 0, %v78
    %80 = vst [vmem:[#allocation2 + $0xb4] sm:$0x1] %v79
    %v81 = vld [vmem:[#allocation2 + $0xc0] sm:$0x1]
    %v82 = vsel %vm32, 0, %v81
    %83 = vst [vmem:[#allocation2 + $0xc0] sm:$0x1] %v82
    %v84 = vld [vmem:[#allocation2 + $0xcc] sm:$0x1]
    %v85 = vsel %vm32, 0, %v84
    %86 = vst [vmem:[#allocation2 + $0xcc] sm:$0x1] %v85
    %v87 = vld [vmem:[#allocation2 + $0xd8] sm:$0x1]
    %v88 = vsel %vm32, 0, %v87
    %89 = vst [vmem:[#allocation2 + $0xd8] sm:$0x1] %v88
    %v90 = vld [vmem:[#allocation2 + $0xe4] sm:$0x1]
    %v91 = vsel %vm32, 0, %v90
    %92 = vst [vmem:[#allocation2 + $0xe4] sm:$0x1] %v91
    %v93 = vld [vmem:[#allocation2 + $0xf0] sm:$0x1]
    %v94 = vsel %vm32, 0, %v93
    %95 = vst [vmem:[#allocation2 + $0xf0] sm:$0x1] %v94
    %v96 = vld [vmem:[#allocation2 + $0xfc] sm:$0x1]
    %v97 = vsel %vm32, 0, %v96
    %98 = vst [vmem:[#allocation2 + $0xfc] sm:$0x1] %v97
    %v99 = vld [vmem:[#allocation2 + $0x108] sm:$0x1]
    %v100 = vsel %vm32, 0, %v99
    %101 = vst [vmem:[#allocation2 + $0x108] sm:$0x1] %v100
    %v102 = vld [vmem:[#allocation2 + $0x114] sm:$0x1]
    %v103 = vsel %vm32, 0, %v102
    %104 = vst [vmem:[#allocation2 + $0x114] sm:$0x1] %v103
    %v105 = vld [vmem:[#allocation2 + $0x120] sm:$0x1]
    %v106 = vsel %vm32, 0, %v105
    %107 = vst [vmem:[#allocation2 + $0x120] sm:$0x1] %v106
    %v108 = vld [vmem:[#allocation2 + $0x12c] sm:$0x1]
    %v109 = vsel %vm32, 0, %v108
    %110 = vst [vmem:[#allocation2 + $0x12c] sm:$0x1] %v109
    %v111 = vld [vmem:[#allocation2 + $0x138] sm:$0x1]
    %v112 = vsel %vm32, 0, %v111
    %113 = vst [vmem:[#allocation2 + $0x138] sm:$0x1] %v112
    %v114 = vld [vmem:[#allocation2 + $0x144] sm:$0x1]
    %v115 = vsel %vm32, 0, %v114
    %116 = vst [vmem:[#allocation2 + $0x144] sm:$0x1] %v115
    %v117 = vld [vmem:[#allocation2 + $0x150] sm:$0x1]
    %v118 = vsel %vm32, 0, %v117
    %119 = vst [vmem:[#allocation2 + $0x150] sm:$0x1] %v118
    %v120 = vld [vmem:[#allocation2 + $0x15c] sm:$0x1]
    %v121 = vsel %vm32, 0, %v120
    %122 = vst [vmem:[#allocation2 + $0x15c] sm:$0x1] %v121
    %v123 = vld [vmem:[#allocation2 + $0x168] sm:$0x1]
    %v124 = vsel %vm32, 0, %v123
    %125 = vst [vmem:[#allocation2 + $0x168] sm:$0x1] %v124
    %v126 = vld [vmem:[#allocation2 + $0x174] sm:$0x1]
    %v127 = vsel %vm32, 0, %v126
    %128 = vst [vmem:[#allocation2 + $0x174] sm:$0x1] %v127
    %v129 = vld [vmem:[#allocation2 + $0x180] sm:$0x1]
    %v130 = vsel %vm32, 0, %v129
    %131 = vst [vmem:[#allocation2 + $0x180] sm:$0x1] %v130
    %v132 = vld [vmem:[#allocation2 + $0x18c] sm:$0x1]
    %v133 = vsel %vm32, 0, %v132
    %134 = vst [vmem:[#allocation2 + $0x18c] sm:$0x1] %v133
    %v135 = vld [vmem:[#allocation2 + $0x198] sm:$0x1]
    %v136 = vsel %vm32, 0, %v135
    %137 = vst [vmem:[#allocation2 + $0x198] sm:$0x1] %v136
    %v138 = vld [vmem:[#allocation2 + $0x1a4] sm:$0x1]
    %v139 = vsel %vm32, 0, %v138
    %140 = vst [vmem:[#allocation2 + $0x1a4] sm:$0x1] %v139
    %vm141 = vsmask.f32 7938
    %vm142 = vmand %vm30, %vm141
    %v143 = vld [vmem:[#allocation2 + $0x8] sm:$0x1]
    %v144 = vsel %vm142, 0, %v143
    %145 = vst [vmem:[#allocation2 + $0x8] sm:$0x1] %v144
    %v146 = vld [vmem:[#allocation2 + $0x14] sm:$0x1]
    %v147 = vsel %vm142, 0, %v146
    %148 = vst [vmem:[#allocation2 + $0x14] sm:$0x1] %v147
    %v149 = vld [vmem:[#allocation2 + $0x20] sm:$0x1]
    %v150 = vsel %vm142, 0, %v149
    %151 = vst [vmem:[#allocation2 + $0x20] sm:$0x1] %v150
    %v152 = vld [vmem:[#allocation2 + $0x2c] sm:$0x1]
    %v153 = vsel %vm142, 0, %v152
    %154 = vst [vmem:[#allocation2 + $0x2c] sm:$0x1] %v153
    %v155 = vld [vmem:[#allocation2 + $0x38] sm:$0x1]
    %v156 = vsel %vm142, 0, %v155
    %157 = vst [vmem:[#allocation2 + $0x38] sm:$0x1] %v156
    %v158 = vld [vmem:[#allocation2 + $0x44] sm:$0x1]
    %v159 = vsel %vm142, 0, %v158
    %160 = vst [vmem:[#allocation2 + $0x44] sm:$0x1] %v159
    %v161 = vld [vmem:[#allocation2 + $0x50] sm:$0x1]
    %v162 = vsel %vm142, 0, %v161
    %163 = vst [vmem:[#allocation2 + $0x50] sm:$0x1] %v162
    %v164 = vld [vmem:[#allocation2 + $0x5c] sm:$0x1]
    %v165 = vsel %vm142, 0, %v164
    %166 = vst [vmem:[#allocation2 + $0x5c] sm:$0x1] %v165
    %v167 = vld [vmem:[#allocation2 + $0x68] sm:$0x1]
    %v168 = vsel %vm142, 0, %v167
    %169 = vst [vmem:[#allocation2 + $0x68] sm:$0x1] %v168
    %v170 = vld [vmem:[#allocation2 + $0x74] sm:$0x1]
    %v171 = vsel %vm142, 0, %v170
    %172 = vst [vmem:[#allocation2 + $0x74] sm:$0x1] %v171
    %v173 = vld [vmem:[#allocation2 + $0x80] sm:$0x1]
    %v174 = vsel %vm142, 0, %v173
    %175 = vst [vmem:[#allocation2 + $0x80] sm:$0x1] %v174
    %v176 = vld [vmem:[#allocation2 + $0x8c] sm:$0x1]
    %v177 = vsel %vm142, 0, %v176
    %178 = vst [vmem:[#allocation2 + $0x8c] sm:$0x1] %v177
    %v179 = vld [vmem:[#allocation2 + $0x98] sm:$0x1]
    %v180 = vsel %vm142, 0, %v179
    %181 = vst [vmem:[#allocation2 + $0x98] sm:$0x1] %v180
    %v182 = vld [vmem:[#allocation2 + $0xa4] sm:$0x1]
    %v183 = vsel %vm142, 0, %v182
    %184 = vst [vmem:[#allocation2 + $0xa4] sm:$0x1] %v183
    %v185 = vld [vmem:[#allocation2 + $0xb0] sm:$0x1]
    %v186 = vsel %vm142, 0, %v185
    %187 = vst [vmem:[#allocation2 + $0xb0] sm:$0x1] %v186
    %v188 = vld [vmem:[#allocation2 + $0xbc] sm:$0x1]
    %v189 = vsel %vm142, 0, %v188
    %190 = vst [vmem:[#allocation2 + $0xbc] sm:$0x1] %v189
    %v191 = vld [vmem:[#allocation2 + $0xc8] sm:$0x1]
    %v192 = vsel %vm142, 0, %v191
    %193 = vst [vmem:[#allocation2 + $0xc8] sm:$0x1] %v192
    %v194 = vld [vmem:[#allocation2 + $0xd4] sm:$0x1]
    %v195 = vsel %vm142, 0, %v194
    %196 = vst [vmem:[#allocation2 + $0xd4] sm:$0x1] %v195
    %v197 = vld [vmem:[#allocation2 + $0xe0] sm:$0x1]
    %v198 = vsel %vm142, 0, %v197
    %199 = vst [vmem:[#allocation2 + $0xe0] sm:$0x1] %v198
    %v200 = vld [vmem:[#allocation2 + $0xec] sm:$0x1]
    %v201 = vsel %vm142, 0, %v200
    %202 = vst [vmem:[#allocation2 + $0xec] sm:$0x1] %v201
    %v203 = vld [vmem:[#allocation2 + $0xf8] sm:$0x1]
    %v204 = vsel %vm142, 0, %v203
    %205 = vst [vmem:[#allocation2 + $0xf8] sm:$0x1] %v204
    %v206 = vld [vmem:[#allocation2 + $0x104] sm:$0x1]
    %v207 = vsel %vm142, 0, %v206
    %208 = vst [vmem:[#allocation2 + $0x104] sm:$0x1] %v207
    %v209 = vld [vmem:[#allocation2 + $0x110] sm:$0x1]
    %v210 = vsel %vm142, 0, %v209
    %211 = vst [vmem:[#allocation2 + $0x110] sm:$0x1] %v210
    %v212 = vld [vmem:[#allocation2 + $0x11c] sm:$0x1]
    %v213 = vsel %vm142, 0, %v212
    %214 = vst [vmem:[#allocation2 + $0x11c] sm:$0x1] %v213
    %v215 = vld [vmem:[#allocation2 + $0x128] sm:$0x1]
    %v216 = vsel %vm142, 0, %v215
    %217 = vst [vmem:[#allocation2 + $0x128] sm:$0x1] %v216
    %v218 = vld [vmem:[#allocation2 + $0x134] sm:$0x1]
    %v219 = vsel %vm142, 0, %v218
    %220 = vst [vmem:[#allocation2 + $0x134] sm:$0x1] %v219
    %v221 = vld [vmem:[#allocation2 + $0x140] sm:$0x1]
    %v222 = vsel %vm142, 0, %v221
    %223 = vst [vmem:[#allocation2 + $0x140] sm:$0x1] %v222
    %v224 = vld [vmem:[#allocation2 + $0x14c] sm:$0x1]
    %v225 = vsel %vm142, 0, %v224
    %226 = vst [vmem:[#allocation2 + $0x14c] sm:$0x1] %v225
    %v227 = vld [vmem:[#allocation2 + $0x158] sm:$0x1]
    %v228 = vsel %vm142, 0, %v227
    %229 = vst [vmem:[#allocation2 + $0x158] sm:$0x1] %v228
    %v230 = vld [vmem:[#allocation2 + $0x164] sm:$0x1]
    %v231 = vsel %vm142, 0, %v230
    %232 = vst [vmem:[#allocation2 + $0x164] sm:$0x1] %v231
    %v233 = vld [vmem:[#allocation2 + $0x170] sm:$0x1]
    %v234 = vsel %vm142, 0, %v233
    %235 = vst [vmem:[#allocation2 + $0x170] sm:$0x1] %v234
    %v236 = vld [vmem:[#allocation2 + $0x17c] sm:$0x1]
    %v237 = vsel %vm142, 0, %v236
    %238 = vst [vmem:[#allocation2 + $0x17c] sm:$0x1] %v237
    %v239 = vld [vmem:[#allocation2 + $0x188] sm:$0x1]
    %v240 = vsel %vm142, 0, %v239
    %241 = vst [vmem:[#allocation2 + $0x188] sm:$0x1] %v240
    %v242 = vld [vmem:[#allocation2 + $0x194] sm:$0x1]
    %v243 = vsel %vm142, 0, %v242
    %244 = vst [vmem:[#allocation2 + $0x194] sm:$0x1] %v243
    %v245 = vld [vmem:[#allocation2 + $0x1a0] sm:$0x1]
    %v246 = vsel %vm142, 0, %v245
    %247 = vst [vmem:[#allocation2 + $0x1a0] sm:$0x1] %v246
    %v248 = vld [vmem:[#allocation2 + $0x1ac] sm:$0x1]
    %v249 = vsel %vm142, 0, %v248
    %250 = vst [vmem:[#allocation2 + $0x1ac] sm:$0x1] %v249
    %v251 = vld [vmem:[%s0] sm:$0xf]
    %v252 = vld [vmem:[%s0 + $0x4] sm:$0xf]
    %v253 = vld [vmem:[%s0 + $0x8] sm:$0xf]
    %v254 = vld [vmem:[%s0 + $0xc] sm:$0xf]
    %v255 = vld [vmem:[%s0 + $0x10] sm:$0xf]
    %v256 = vld [vmem:[%s0 + $0x14] sm:$0xf]
    %v257 = vld [vmem:[%s0 + $0x18] sm:$0xf]
    %v258 = vld [vmem:[%s0 + $0x1c] sm:$0xf]
    %v259 = vld [vmem:[%s0 + $0x20] sm:$0xf]
    %v260 = vld [vmem:[%s0 + $0x24] sm:$0xf]
    %v261 = vld [vmem:[%s0 + $0x28] sm:$0xf]
    %v262 = vld [vmem:[%s0 + $0x2c] sm:$0xf]
    %v263 = vld [vmem:[%s0 + $0x30] sm:$0xf]
    %v264 = vld [vmem:[%s0 + $0x34] sm:$0xf]
    %v265 = vld [vmem:[%s0 + $0x38] sm:$0xf]
    %v266 = vld [vmem:[%s0 + $0x3c] sm:$0xf]
    %v267 = vld [vmem:[%s0 + $0x40] sm:$0xf]
    %v268 = vld [vmem:[%s0 + $0x44] sm:$0xf]
    %v269 = vld [vmem:[%s0 + $0x48] sm:$0xf]
    %v270 = vld [vmem:[%s0 + $0x4c] sm:$0xf]
    %v271 = vld [vmem:[%s0 + $0x50] sm:$0xf]
    %v272 = vld [vmem:[%s0 + $0x54] sm:$0xf]
    %v273 = vld [vmem:[%s0 + $0x58] sm:$0xf]
    %v274 = vld [vmem:[%s0 + $0x5c] sm:$0xf]
    %v275 = vld [vmem:[%s0 + $0x60] sm:$0xf]
    %v276 = vld [vmem:[%s0 + $0x64] sm:$0xf]
    %v277 = vld [vmem:[%s0 + $0x68] sm:$0xf]
    %v278 = vld [vmem:[%s0 + $0x6c] sm:$0xf]
    %v279 = vld [vmem:[%s0 + $0x70] sm:$0xf]
    %v280 = vld [vmem:[%s0 + $0x74] sm:$0xf]
    %v281 = vld [vmem:[%s0 + $0x78] sm:$0xf]
    %v282 = vld [vmem:[%s0 + $0x7c] sm:$0xf]
    %v283 = vld [vmem:[%s0 + $0x80] sm:$0xf]
    %v284 = vld [vmem:[%s0 + $0x84] sm:$0xf]
    %v285 = vld [vmem:[%s0 + $0x88] sm:$0xf]
    %v286 = vld [vmem:[%s0 + $0x8c] sm:$0xf]
    %v287 = vld [vmem:[%s0 + $0x90] sm:$0xf]
    %v288 = vld [vmem:[%s0 + $0x94] sm:$0xf]
    %v289 = vld [vmem:[%s0 + $0x98] sm:$0xf]
    %v290 = vld [vmem:[%s0 + $0x9c] sm:$0xf]
    %v291 = vld [vmem:[%s0 + $0xa0] sm:$0xf]
    %v292 = vld [vmem:[%s0 + $0xa4] sm:$0xf]
    %v293 = vld [vmem:[%s0 + $0xa8] sm:$0xf]
    %v294 = vld [vmem:[%s0 + $0xac] sm:$0xf]
    %v295 = vld [vmem:[%s0 + $0xb0] sm:$0xf]
    %v296 = vld [vmem:[%s0 + $0xb4] sm:$0xf]
    %v297 = vld [vmem:[%s0 + $0xb8] sm:$0xf]
    %v298 = vld [vmem:[%s0 + $0xbc] sm:$0xf]
    %v299 = vld [vmem:[%s0 + $0xc0] sm:$0xf]
    %v300 = vld [vmem:[%s0 + $0xc4] sm:$0xf]
    %v301 = vld [vmem:[%s0 + $0xc8] sm:$0xf]
    %v302 = vld [vmem:[%s0 + $0xcc] sm:$0xf]
    %v303 = vld [vmem:[%s0 + $0xd0] sm:$0xf]
    %v304 = vld [vmem:[%s0 + $0xd4] sm:$0xf]
    %v305 = vld [vmem:[%s0 + $0xd8] sm:$0xf]
    %v306 = vld [vmem:[%s0 + $0xdc] sm:$0xf]
    %v307 = vld [vmem:[%s0 + $0xe0] sm:$0xf]
    %v308 = vld [vmem:[%s0 + $0xe4] sm:$0xf]
    %v309 = vld [vmem:[%s0 + $0xe8] sm:$0xf]
    %v310 = vld [vmem:[%s0 + $0xec] sm:$0xf]
    %v311 = vld [vmem:[%s0 + $0xf0] sm:$0xf]
    %v312 = vld [vmem:[%s0 + $0xf4] sm:$0xf]
    %v313 = vld [vmem:[%s0 + $0xf8] sm:$0xf]
    %v314 = vld [vmem:[%s0 + $0xfc] sm:$0xf]
    %vm315 = vsmask.f32 4368
    %vm316 = vmor %vm31, %vm315
    %v318 = vshrl.u32 %v251, 16
    %v320 = vrot.slane %v318, 7
    %v321 = vshll.u32 %v251, 16
    %v323 = vor.u32 %v320, %v321
    %v324 = vrot.slane %v320, 4
    %v326 = vshrl.u32 %v252, 16
    %v328 = vrot.slane %v326, 7
    %v329 = vshll.u32 %v252, 16
    %v331 = vor.u32 %v328, %v329
    %v332 = vsel %vm316, %v324, %v331
    %v333 = vrot.slane %v328, 4
    %v335 = vshrl.u32 %v253, 16
    %v337 = vrot.slane %v335, 7
    %v338 = vshll.u32 %v253, 16
    %v340 = vor.u32 %v337, %v338
    %v341 = vrot.slane %v337, 4
    %v343 = vshrl.u32 %v254, 16
    %v345 = vrot.slane %v343, 7
    %v346 = vshll.u32 %v254, 16
    %v348 = vor.u32 %v345, %v346
    %v349 = vsel %vm316, %v341, %v348
    %v350 = vrot.slane %v345, 4
    %v352 = vshrl.u32 %v255, 16
    %v354 = vrot.slane %v352, 7
    %v355 = vshll.u32 %v255, 16
    %v357 = vor.u32 %v354, %v355
    %v358 = vrot.slane %v354, 4
    %v360 = vshrl.u32 %v256, 16
    %v362 = vrot.slane %v360, 7
    %v363 = vshll.u32 %v256, 16
    %v365 = vor.u32 %v362, %v363
    %v366 = vsel %vm316, %v358, %v365
    %v367 = vrot.slane %v362, 4
    %v369 = vshrl.u32 %v257, 16
    %v371 = vrot.slane %v369, 7
    %v372 = vshll.u32 %v257, 16
    %v374 = vor.u32 %v371, %v372
    %v375 = vrot.slane %v371, 4
    %v377 = vshrl.u32 %v258, 16
    %v379 = vrot.slane %v377, 7
    %v380 = vshll.u32 %v258, 16
    %v382 = vor.u32 %v379, %v380
    %v383 = vsel %vm316, %v375, %v382
    %v384 = vrot.slane %v379, 4
    %v386 = vshrl.u32 %v259, 16
    %v388 = vrot.slane %v386, 7
    %v389 = vshll.u32 %v259, 16
    %v391 = vor.u32 %v388, %v389
    %v392 = vrot.slane %v388, 4
    %v394 = vshrl.u32 %v260, 16
    %v396 = vrot.slane %v394, 7
    %v397 = vshll.u32 %v260, 16
    %v399 = vor.u32 %v396, %v397
    %v400 = vsel %vm316, %v392, %v399
    %v401 = vrot.slane %v396, 4
    %v403 = vshrl.u32 %v261, 16
    %v405 = vrot.slane %v403, 7
    %v406 = vshll.u32 %v261, 16
    %v408 = vor.u32 %v405, %v406
    %v409 = vrot.slane %v405, 4
    %v411 = vshrl.u32 %v262, 16
    %v413 = vrot.slane %v411, 7
    %v414 = vshll.u32 %v262, 16
    %v416 = vor.u32 %v413, %v414
    %v417 = vsel %vm316, %v409, %v416
    %v418 = vrot.slane %v413, 4
    %v420 = vshrl.u32 %v263, 16
    %v422 = vrot.slane %v420, 7
    %v423 = vshll.u32 %v263, 16
    %v425 = vor.u32 %v422, %v423
    %v426 = vrot.slane %v422, 4
    %v428 = vshrl.u32 %v264, 16
    %v430 = vrot.slane %v428, 7
    %v431 = vshll.u32 %v264, 16
    %v433 = vor.u32 %v430, %v431
    %v434 = vsel %vm316, %v426, %v433
    %v435 = vrot.slane %v430, 4
    %v437 = vshrl.u32 %v265, 16
    %v439 = vrot.slane %v437, 7
    %v440 = vshll.u32 %v265, 16
    %v442 = vor.u32 %v439, %v440
    %v443 = vrot.slane %v439, 4
    %v445 = vshrl.u32 %v266, 16
    %v447 = vrot.slane %v445, 7
    %v448 = vshll.u32 %v266, 16
    %v450 = vor.u32 %v447, %v448
    %v451 = vsel %vm316, %v443, %v450
    %v452 = vrot.slane %v447, 4
    %v454 = vshrl.u32 %v267, 16
    %v456 = vrot.slane %v454, 7
    %v457 = vshll.u32 %v267, 16
    %v459 = vor.u32 %v456, %v457
    %v460 = vrot.slane %v456, 4
    %v462 = vshrl.u32 %v268, 16
    %v464 = vrot.slane %v462, 7
    %v465 = vshll.u32 %v268, 16
    %v467 = vor.u32 %v464, %v465
    %v468 = vsel %vm316, %v460, %v467
    %v469 = vrot.slane %v464, 4
    %v471 = vshrl.u32 %v269, 16
    %v473 = vrot.slane %v471, 7
    %v474 = vshll.u32 %v269, 16
    %v476 = vor.u32 %v473, %v474
    %v477 = vrot.slane %v473, 4
    %v479 = vshrl.u32 %v270, 16
    %v481 = vrot.slane %v479, 7
    %v482 = vshll.u32 %v270, 16
    %v484 = vor.u32 %v481, %v482
    %v485 = vsel %vm316, %v477, %v484
    %v486 = vrot.slane %v481, 4
    %v488 = vshrl.u32 %v271, 16
    %v490 = vrot.slane %v488, 7
    %v491 = vshll.u32 %v271, 16
    %v493 = vor.u32 %v490, %v491
    %v494 = vrot.slane %v490, 4
    %v496 = vshrl.u32 %v272, 16
    %v498 = vrot.slane %v496, 7
    %v499 = vshll.u32 %v272, 16
    %v501 = vor.u32 %v498, %v499
    %v502 = vsel %vm316, %v494, %v501
    %v503 = vrot.slane %v498, 4
    %v505 = vshrl.u32 %v273, 16
    %v507 = vrot.slane %v505, 7
    %v508 = vshll.u32 %v273, 16
    %v510 = vor.u32 %v507, %v508
    %v511 = vrot.slane %v507, 4
    %v513 = vshrl.u32 %v274, 16
    %v515 = vrot.slane %v513, 7
    %v516 = vshll.u32 %v274, 16
    %v518 = vor.u32 %v515, %v516
    %v519 = vsel %vm316, %v511, %v518
    %v520 = vrot.slane %v515, 4
    %v522 = vshrl.u32 %v275, 16
    %v524 = vrot.slane %v522, 7
    %v525 = vshll.u32 %v275, 16
    %v527 = vor.u32 %v524, %v525
    %v528 = vrot.slane %v524, 4
    %v530 = vshrl.u32 %v276, 16
    %v532 = vrot.slane %v530, 7
    %v533 = vshll.u32 %v276, 16
    %v535 = vor.u32 %v532, %v533
    %v536 = vsel %vm316, %v528, %v535
    %v537 = vrot.slane %v532, 4
    %v539 = vshrl.u32 %v277, 16
    %v541 = vrot.slane %v539, 7
    %v542 = vshll.u32 %v277, 16
    %v544 = vor.u32 %v541, %v542
    %v545 = vrot.slane %v541, 4
    %v547 = vshrl.u32 %v278, 16
    %v549 = vrot.slane %v547, 7
    %v550 = vshll.u32 %v278, 16
    %v552 = vor.u32 %v549, %v550
    %v553 = vsel %vm316, %v545, %v552
    %v554 = vrot.slane %v549, 4
    %v556 = vshrl.u32 %v279, 16
    %v558 = vrot.slane %v556, 7
    %v559 = vshll.u32 %v279, 16
    %v561 = vor.u32 %v558, %v559
    %v562 = vrot.slane %v558, 4
    %v564 = vshrl.u32 %v280, 16
    %v566 = vrot.slane %v564, 7
    %v567 = vshll.u32 %v280, 16
    %v569 = vor.u32 %v566, %v567
    %v570 = vsel %vm316, %v562, %v569
    %v571 = vrot.slane %v566, 4
    %v573 = vshrl.u32 %v281, 16
    %v575 = vrot.slane %v573, 7
    %v576 = vshll.u32 %v281, 16
    %v578 = vor.u32 %v575, %v576
    %v579 = vrot.slane %v575, 4
    %v581 = vshrl.u32 %v282, 16
    %v583 = vrot.slane %v581, 7
    %v584 = vshll.u32 %v282, 16
    %v586 = vor.u32 %v583, %v584
    %v587 = vsel %vm316, %v579, %v586
    %v588 = vrot.slane %v583, 4
    %v590 = vshrl.u32 %v283, 16
    %v592 = vrot.slane %v590, 7
    %v593 = vshll.u32 %v283, 16
    %v595 = vor.u32 %v592, %v593
    %v596 = vrot.slane %v592, 4
    %v598 = vshrl.u32 %v284, 16
    %v600 = vrot.slane %v598, 7
    %v601 = vshll.u32 %v284, 16
    %v603 = vor.u32 %v600, %v601
    %v604 = vsel %vm316, %v596, %v603
    %v605 = vrot.slane %v600, 4
    %v607 = vshrl.u32 %v285, 16
    %v609 = vrot.slane %v607, 7
    %v610 = vshll.u32 %v285, 16
    %v612 = vor.u32 %v609, %v610
    %v613 = vrot.slane %v609, 4
    %v615 = vshrl.u32 %v286, 16
    %v617 = vrot.slane %v615, 7
    %v618 = vshll.u32 %v286, 16
    %v620 = vor.u32 %v617, %v618
    %v621 = vsel %vm316, %v613, %v620
    %v622 = vrot.slane %v617, 4
    %v624 = vshrl.u32 %v287, 16
    %v626 = vrot.slane %v624, 7
    %v627 = vshll.u32 %v287, 16
    %v629 = vor.u32 %v626, %v627
    %v630 = vrot.slane %v626, 4
    %v632 = vshrl.u32 %v288, 16
    %v634 = vrot.slane %v632, 7
    %v635 = vshll.u32 %v288, 16
    %v637 = vor.u32 %v634, %v635
    %v638 = vsel %vm316, %v630, %v637
    %v639 = vrot.slane %v634, 4
    %v641 = vshrl.u32 %v289, 16
    %v643 = vrot.slane %v641, 7
    %v644 = vshll.u32 %v289, 16
    %v646 = vor.u32 %v643, %v644
    %v647 = vrot.slane %v643, 4
    %v649 = vshrl.u32 %v290, 16
    %v651 = vrot.slane %v649, 7
    %v652 = vshll.u32 %v290, 16
    %v654 = vor.u32 %v651, %v652
    %v655 = vsel %vm316, %v647, %v654
    %v656 = vrot.slane %v651, 4
    %v658 = vshrl.u32 %v291, 16
    %v660 = vrot.slane %v658, 7
    %v661 = vshll.u32 %v291, 16
    %v663 = vor.u32 %v660, %v661
    %v664 = vrot.slane %v660, 4
    %v666 = vshrl.u32 %v292, 16
    %v668 = vrot.slane %v666, 7
    %v669 = vshll.u32 %v292, 16
    %v671 = vor.u32 %v668, %v669
    %v672 = vsel %vm316, %v664, %v671
    %v673 = vrot.slane %v668, 4
    %v675 = vshrl.u32 %v293, 16
    %v677 = vrot.slane %v675, 7
    %v678 = vshll.u32 %v293, 16
    %v680 = vor.u32 %v677, %v678
    %v681 = vrot.slane %v677, 4
    %v683 = vshrl.u32 %v294, 16
    %v685 = vrot.slane %v683, 7
    %v686 = vshll.u32 %v294, 16
    %v688 = vor.u32 %v685, %v686
    %v689 = vsel %vm316, %v681, %v688
    %v690 = vrot.slane %v685, 4
    %v692 = vshrl.u32 %v295, 16
    %v694 = vrot.slane %v692, 7
    %v695 = vshll.u32 %v295, 16
    %v697 = vor.u32 %v694, %v695
    %v698 = vrot.slane %v694, 4
    %v700 = vshrl.u32 %v296, 16
    %v702 = vrot.slane %v700, 7
    %v703 = vshll.u32 %v296, 16
    %v705 = vor.u32 %v702, %v703
    %v706 = vsel %vm316, %v698, %v705
    %v707 = vrot.slane %v702, 4
    %v709 = vshrl.u32 %v297, 16
    %v711 = vrot.slane %v709, 7
    %v712 = vshll.u32 %v297, 16
    %v714 = vor.u32 %v711, %v712
    %v715 = vrot.slane %v711, 4
    %v717 = vshrl.u32 %v298, 16
    %v719 = vrot.slane %v717, 7
    %v720 = vshll.u32 %v298, 16
    %v722 = vor.u32 %v719, %v720
    %v723 = vsel %vm316, %v715, %v722
    %v724 = vrot.slane %v719, 4
    %v726 = vshrl.u32 %v299, 16
    %v728 = vrot.slane %v726, 7
    %v729 = vshll.u32 %v299, 16
    %v731 = vor.u32 %v728, %v729
    %v732 = vrot.slane %v728, 4
    %v734 = vshrl.u32 %v300, 16
    %v736 = vrot.slane %v734, 7
    %v737 = vshll.u32 %v300, 16
    %v739 = vor.u32 %v736, %v737
    %v740 = vsel %vm316, %v732, %v739
    %v741 = vrot.slane %v736, 4
    %v743 = vshrl.u32 %v301, 16
    %v745 = vrot.slane %v743, 7
    %v746 = vshll.u32 %v301, 16
    %v748 = vor.u32 %v745, %v746
    %v749 = vrot.slane %v745, 4
    %v751 = vshrl.u32 %v302, 16
    %v753 = vrot.slane %v751, 7
    %v754 = vshll.u32 %v302, 16
    %v756 = vor.u32 %v753, %v754
    %v757 = vsel %vm316, %v749, %v756
    %v758 = vrot.slane %v753, 4
    %v760 = vshrl.u32 %v303, 16
    %v762 = vrot.slane %v760, 7
    %v763 = vshll.u32 %v303, 16
    %v765 = vor.u32 %v762, %v763
    %v766 = vrot.slane %v762, 4
    %v768 = vshrl.u32 %v304, 16
    %v770 = vrot.slane %v768, 7
    %v771 = vshll.u32 %v304, 16
    %v773 = vor.u32 %v770, %v771
    %v774 = vsel %vm316, %v766, %v773
    %v775 = vrot.slane %v770, 4
    %v777 = vshrl.u32 %v305, 16
    %v779 = vrot.slane %v777, 7
    %v780 = vshll.u32 %v305, 16
    %v782 = vor.u32 %v779, %v780
    %v783 = vrot.slane %v779, 4
    %v785 = vshrl.u32 %v306, 16
    %v787 = vrot.slane %v785, 7
    %v788 = vshll.u32 %v306, 16
    %v790 = vor.u32 %v787, %v788
    %v791 = vsel %vm316, %v783, %v790
    %v792 = vrot.slane %v787, 4
    %v794 = vshrl.u32 %v307, 16
    %v796 = vrot.slane %v794, 7
    %v797 = vshll.u32 %v307, 16
    %v799 = vor.u32 %v796, %v797
    %v800 = vrot.slane %v796, 4
    %v802 = vshrl.u32 %v308, 16
    %v804 = vrot.slane %v802, 7
    %v805 = vshll.u32 %v308, 16
    %v807 = vor.u32 %v804, %v805
    %v808 = vsel %vm316, %v800, %v807
    %v809 = vrot.slane %v804, 4
    %v811 = vshrl.u32 %v309, 16
    %v813 = vrot.slane %v811, 7
    %v814 = vshll.u32 %v309, 16
    %v816 = vor.u32 %v813, %v814
    %v817 = vrot.slane %v813, 4
    %v819 = vshrl.u32 %v310, 16
    %v821 = vrot.slane %v819, 7
    %v822 = vshll.u32 %v310, 16
    %v824 = vor.u32 %v821, %v822
    %v825 = vsel %vm316, %v817, %v824
    %v826 = vrot.slane %v821, 4
    %v828 = vshrl.u32 %v311, 16
    %v830 = vrot.slane %v828, 7
    %v831 = vshll.u32 %v311, 16
    %v833 = vor.u32 %v830, %v831
    %v834 = vrot.slane %v830, 4
    %v836 = vshrl.u32 %v312, 16
    %v838 = vrot.slane %v836, 7
    %v839 = vshll.u32 %v312, 16
    %v841 = vor.u32 %v838, %v839
    %v842 = vsel %vm316, %v834, %v841
    %v843 = vrot.slane %v838, 4
    %v845 = vshrl.u32 %v313, 16
    %v847 = vrot.slane %v845, 7
    %v848 = vshll.u32 %v313, 16
    %v850 = vor.u32 %v847, %v848
    %v851 = vrot.slane %v847, 4
    %v853 = vshrl.u32 %v314, 16
    %v855 = vrot.slane %v853, 7
    %v856 = vshll.u32 %v314, 16
    %v858 = vor.u32 %v855, %v856
    %v859 = vsel %vm316, %v851, %v858
    %v860 = vrot.slane %v855, 4
    %s957 = scalar_lea.vmem [#allocation2], 12
    %vm958 = vcmask 27648
    %vm959 = vmand %vm958, %vm141
    %v960 = vld [vmem:[%s957] sm:$0xf]
    %v961 = vsel %vm959, %v323, %v960
    %962 = vst [vmem:[%s957] sm:$0xf] %v961
    %963 = vst.msk [vmem:[%s957 + $0x4] sm:$0xf] %vm15, %v332
    %v964 = vld [vmem:[%s957 + $0x8] sm:$0x1]
    %v965 = vsel %vm32, %v333, %v964
    %966 = vst [vmem:[%s957 + $0x8] sm:$0x1] %v965
    %v967 = vld [vmem:[%s957 + $0xc] sm:$0xf]
    %v968 = vsel %vm959, %v340, %v967
    %969 = vst [vmem:[%s957 + $0xc] sm:$0xf] %v968
    %970 = vst.msk [vmem:[%s957 + $0x10] sm:$0xf] %vm15, %v349
    %v971 = vld [vmem:[%s957 + $0x14] sm:$0x1]
    %v972 = vsel %vm32, %v350, %v971
    %973 = vst [vmem:[%s957 + $0x14] sm:$0x1] %v972
    %v974 = vld [vmem:[%s957 + $0x18] sm:$0xf]
    %v975 = vsel %vm959, %v357, %v974
    %976 = vst [vmem:[%s957 + $0x18] sm:$0xf] %v975
    %977 = vst.msk [vmem:[%s957 + $0x1c] sm:$0xf] %vm15, %v366
    %v978 = vld [vmem:[%s957 + $0x20] sm:$0x1]
    %v979 = vsel %vm32, %v367, %v978
    %980 = vst [vmem:[%s957 + $0x20] sm:$0x1] %v979
    %v981 = vld [vmem:[%s957 + $0x24] sm:$0xf]
    %v982 = vsel %vm959, %v374, %v981
    %983 = vst [vmem:[%s957 + $0x24] sm:$0xf] %v982
    %984 = vst.msk [vmem:[%s957 + $0x28] sm:$0xf] %vm15, %v383
    %v985 = vld [vmem:[%s957 + $0x2c] sm:$0x1]
    %v986 = vsel %vm32, %v384, %v985
    %987 = vst [vmem:[%s957 + $0x2c] sm:$0x1] %v986
    %v988 = vld [vmem:[%s957 + $0x30] sm:$0xf]
    %v989 = vsel %vm959, %v391, %v988
    %990 = vst [vmem:[%s957 + $0x30] sm:$0xf] %v989
    %991 = vst.msk [vmem:[%s957 + $0x34] sm:$0xf] %vm15, %v400
    %v992 = vld [vmem:[%s957 + $0x38] sm:$0x1]
    %v993 = vsel %vm32, %v401, %v992
    %994 = vst [vmem:[%s957 + $0x38] sm:$0x1] %v993
    %v995 = vld [vmem:[%s957 + $0x3c] sm:$0xf]
    %v996 = vsel %vm959, %v408, %v995
    %997 = vst [vmem:[%s957 + $0x3c] sm:$0xf] %v996
    %998 = vst.msk [vmem:[%s957 + $0x40] sm:$0xf] %vm15, %v417
    %v999 = vld [vmem:[%s957 + $0x44] sm:$0x1]
    %v1000 = vsel %vm32, %v418, %v999
    %1001 = vst [vmem:[%s957 + $0x44] sm:$0x1] %v1000
    %v1002 = vld [vmem:[%s957 + $0x48] sm:$0xf]
    %v1003 = vsel %vm959, %v425, %v1002
    %1004 = vst [vmem:[%s957 + $0x48] sm:$0xf] %v1003
    %1005 = vst.msk [vmem:[%s957 + $0x4c] sm:$0xf] %vm15, %v434
    %v1006 = vld [vmem:[%s957 + $0x50] sm:$0x1]
    %v1007 = vsel %vm32, %v435, %v1006
    %1008 = vst [vmem:[%s957 + $0x50] sm:$0x1] %v1007
    %v1009 = vld [vmem:[%s957 + $0x54] sm:$0xf]
    %v1010 = vsel %vm959, %v442, %v1009
    %1011 = vst [vmem:[%s957 + $0x54] sm:$0xf] %v1010
    %1012 = vst.msk [vmem:[%s957 + $0x58] sm:$0xf] %vm15, %v451
    %v1013 = vld [vmem:[%s957 + $0x5c] sm:$0x1]
    %v1014 = vsel %vm32, %v452, %v1013
    %1015 = vst [vmem:[%s957 + $0x5c] sm:$0x1] %v1014
    %v1016 = vld [vmem:[%s957 + $0x60] sm:$0xf]
    %v1017 = vsel %vm959, %v459, %v1016
    %1018 = vst [vmem:[%s957 + $0x60] sm:$0xf] %v1017
    %1019 = vst.msk [vmem:[%s957 + $0x64] sm:$0xf] %vm15, %v468
    %v1020 = vld [vmem:[%s957 + $0x68] sm:$0x1]
    %v1021 = vsel %vm32, %v469, %v1020
    %1022 = vst [vmem:[%s957 + $0x68] sm:$0x1] %v1021
    %v1023 = vld [vmem:[%s957 + $0x6c] sm:$0xf]
    %v1024 = vsel %vm959, %v476, %v1023
    %1025 = vst [vmem:[%s957 + $0x6c] sm:$0xf] %v1024
    %1026 = vst.msk [vmem:[%s957 + $0x70] sm:$0xf] %vm15, %v485
    %v1027 = vld [vmem:[%s957 + $0x74] sm:$0x1]
    %v1028 = vsel %vm32, %v486, %v1027
    %1029 = vst [vmem:[%s957 + $0x74] sm:$0x1] %v1028
    %v1030 = vld [vmem:[%s957 + $0x78] sm:$0xf]
    %v1031 = vsel %vm959, %v493, %v1030
    %1032 = vst [vmem:[%s957 + $0x78] sm:$0xf] %v1031
    %1033 = vst.msk [vmem:[%s957 + $0x7c] sm:$0xf] %vm15, %v502
    %v1034 = vld [vmem:[%s957 + $0x80] sm:$0x1]
    %v1035 = vsel %vm32, %v503, %v1034
    %1036 = vst [vmem:[%s957 + $0x80] sm:$0x1] %v1035
    %v1037 = vld [vmem:[%s957 + $0x84] sm:$0xf]
    %v1038 = vsel %vm959, %v510, %v1037
    %1039 = vst [vmem:[%s957 + $0x84] sm:$0xf] %v1038
    %1040 = vst.msk [vmem:[%s957 + $0x88] sm:$0xf] %vm15, %v519
    %v1041 = vld [vmem:[%s957 + $0x8c] sm:$0x1]
    %v1042 = vsel %vm32, %v520, %v1041
    %1043 = vst [vmem:[%s957 + $0x8c] sm:$0x1] %v1042
    %v1044 = vld [vmem:[%s957 + $0x90] sm:$0xf]
    %v1045 = vsel %vm959, %v527, %v1044
    %1046 = vst [vmem:[%s957 + $0x90] sm:$0xf] %v1045
    %1047 = vst.msk [vmem:[%s957 + $0x94] sm:$0xf] %vm15, %v536
    %v1048 = vld [vmem:[%s957 + $0x98] sm:$0x1]
    %v1049 = vsel %vm32, %v537, %v1048
    %1050 = vst [vmem:[%s957 + $0x98] sm:$0x1] %v1049
    %v1051 = vld [vmem:[%s957 + $0x9c] sm:$0xf]
    %v1052 = vsel %vm959, %v544, %v1051
    %1053 = vst [vmem:[%s957 + $0x9c] sm:$0xf] %v1052
    %1054 = vst.msk [vmem:[%s957 + $0xa0] sm:$0xf] %vm15, %v553
    %v1055 = vld [vmem:[%s957 + $0xa4] sm:$0x1]
    %v1056 = vsel %vm32, %v554, %v1055
    %1057 = vst [vmem:[%s957 + $0xa4] sm:$0x1] %v1056
    %v1058 = vld [vmem:[%s957 + $0xa8] sm:$0xf]
    %v1059 = vsel %vm959, %v561, %v1058
    %1060 = vst [vmem:[%s957 + $0xa8] sm:$0xf] %v1059
    %1061 = vst.msk [vmem:[%s957 + $0xac] sm:$0xf] %vm15, %v570
    %v1062 = vld [vmem:[%s957 + $0xb0] sm:$0x1]
    %v1063 = vsel %vm32, %v571, %v1062
    %1064 = vst [vmem:[%s957 + $0xb0] sm:$0x1] %v1063
    %v1065 = vld [vmem:[%s957 + $0xb4] sm:$0xf]
    %v1066 = vsel %vm959, %v578, %v1065
    %1067 = vst [vmem:[%s957 + $0xb4] sm:$0xf] %v1066
    %1068 = vst.msk [vmem:[%s957 + $0xb8] sm:$0xf] %vm15, %v587
    %v1069 = vld [vmem:[%s957 + $0xbc] sm:$0x1]
    %v1070 = vsel %vm32, %v588, %v1069
    %1071 = vst [vmem:[%s957 + $0xbc] sm:$0x1] %v1070
    %v1072 = vld [vmem:[%s957 + $0xd8] sm:$0xf]
    %v1073 = vsel %vm959, %v595, %v1072
    %1074 = vst [vmem:[%s957 + $0xd8] sm:$0xf] %v1073
    %1075 = vst.msk [vmem:[%s957 + $0xdc] sm:$0xf] %vm15, %v604
    %v1076 = vld [vmem:[%s957 + $0xe0] sm:$0x1]
    %v1077 = vsel %vm32, %v605, %v1076
    %1078 = vst [vmem:[%s957 + $0xe0] sm:$0x1] %v1077
    %v1079 = vld [vmem:[%s957 + $0xe4] sm:$0xf]
    %v1080 = vsel %vm959, %v612, %v1079
    %1081 = vst [vmem:[%s957 + $0xe4] sm:$0xf] %v1080
    %1082 = vst.msk [vmem:[%s957 + $0xe8] sm:$0xf] %vm15, %v621
    %v1083 = vld [vmem:[%s957 + $0xec] sm:$0x1]
    %v1084 = vsel %vm32, %v622, %v1083
    %1085 = vst [vmem:[%s957 + $0xec] sm:$0x1] %v1084
    %v1086 = vld [vmem:[%s957 + $0xf0] sm:$0xf]
    %v1087 = vsel %vm959, %v629, %v1086
    %1088 = vst [vmem:[%s957 + $0xf0] sm:$0xf] %v1087
    %1089 = vst.msk [vmem:[%s957 + $0xf4] sm:$0xf] %vm15, %v638
    %v1090 = vld [vmem:[%s957 + $0xf8] sm:$0x1]
    %v1091 = vsel %vm32, %v639, %v1090
    %1092 = vst [vmem:[%s957 + $0xf8] sm:$0x1] %v1091
    %v1093 = vld [vmem:[%s957 + $0xfc] sm:$0xf]
    %v1094 = vsel %vm959, %v646, %v1093
    %1095 = vst [vmem:[%s957 + $0xfc] sm:$0xf] %v1094
    %1096 = vst.msk [vmem:[%s957 + $0x100] sm:$0xf] %vm15, %v655
    %v1097 = vld [vmem:[%s957 + $0x104] sm:$0x1]
    %v1098 = vsel %vm32, %v656, %v1097
    %1099 = vst [vmem:[%s957 + $0x104] sm:$0x1] %v1098
    %v1100 = vld [vmem:[%s957 + $0x108] sm:$0xf]
    %v1101 = vsel %vm959, %v663, %v1100
    %1102 = vst [vmem:[%s957 + $0x108] sm:$0xf] %v1101
    %1103 = vst.msk [vmem:[%s957 + $0x10c] sm:$0xf] %vm15, %v672
    %v1104 = vld [vmem:[%s957 + $0x110] sm:$0x1]
    %v1105 = vsel %vm32, %v673, %v1104
    %1106 = vst [vmem:[%s957 + $0x110] sm:$0x1] %v1105
    %v1107 = vld [vmem:[%s957 + $0x114] sm:$0xf]
    %v1108 = vsel %vm959, %v680, %v1107
    %1109 = vst [vmem:[%s957 + $0x114] sm:$0xf] %v1108
    %1110 = vst.msk [vmem:[%s957 + $0x118] sm:$0xf] %vm15, %v689
    %v1111 = vld [vmem:[%s957 + $0x11c] sm:$0x1]
    %v1112 = vsel %vm32, %v690, %v1111
    %1113 = vst [vmem:[%s957 + $0x11c] sm:$0x1] %v1112
    %v1114 = vld [vmem:[%s957 + $0x120] sm:$0xf]
    %v1115 = vsel %vm959, %v697, %v1114
    %1116 = vst [vmem:[%s957 + $0x120] sm:$0xf] %v1115
    %1117 = vst.msk [vmem:[%s957 + $0x124] sm:$0xf] %vm15, %v706
    %v1118 = vld [vmem:[%s957 + $0x128] sm:$0x1]
    %v1119 = vsel %vm32, %v707, %v1118
    %1120 = vst [vmem:[%s957 + $0x128] sm:$0x1] %v1119
    %v1121 = vld [vmem:[%s957 + $0x12c] sm:$0xf]
    %v1122 = vsel %vm959, %v714, %v1121
    %1123 = vst [vmem:[%s957 + $0x12c] sm:$0xf] %v1122
    %1124 = vst.msk [vmem:[%s957 + $0x130] sm:$0xf] %vm15, %v723
    %v1125 = vld [vmem:[%s957 + $0x134] sm:$0x1]
    %v1126 = vsel %vm32, %v724, %v1125
    %1127 = vst [vmem:[%s957 + $0x134] sm:$0x1] %v1126
    %v1128 = vld [vmem:[%s957 + $0x138] sm:$0xf]
    %v1129 = vsel %vm959, %v731, %v1128
    %1130 = vst [vmem:[%s957 + $0x138] sm:$0xf] %v1129
    %1131 = vst.msk [vmem:[%s957 + $0x13c] sm:$0xf] %vm15, %v740
    %v1132 = vld [vmem:[%s957 + $0x140] sm:$0x1]
    %v1133 = vsel %vm32, %v741, %v1132
    %1134 = vst [vmem:[%s957 + $0x140] sm:$0x1] %v1133
    %v1135 = vld [vmem:[%s957 + $0x144] sm:$0xf]
    %v1136 = vsel %vm959, %v748, %v1135
    %1137 = vst [vmem:[%s957 + $0x144] sm:$0xf] %v1136
    %1138 = vst.msk [vmem:[%s957 + $0x148] sm:$0xf] %vm15, %v757
    %v1139 = vld [vmem:[%s957 + $0x14c] sm:$0x1]
    %v1140 = vsel %vm32, %v758, %v1139
    %1141 = vst [vmem:[%s957 + $0x14c] sm:$0x1] %v1140
    %v1142 = vld [vmem:[%s957 + $0x150] sm:$0xf]
    %v1143 = vsel %vm959, %v765, %v1142
    %1144 = vst [vmem:[%s957 + $0x150] sm:$0xf] %v1143
    %1145 = vst.msk [vmem:[%s957 + $0x154] sm:$0xf] %vm15, %v774
    %v1146 = vld [vmem:[%s957 + $0x158] sm:$0x1]
    %v1147 = vsel %vm32, %v775, %v1146
    %1148 = vst [vmem:[%s957 + $0x158] sm:$0x1] %v1147
    %v1149 = vld [vmem:[%s957 + $0x15c] sm:$0xf]
    %v1150 = vsel %vm959, %v782, %v1149
    %1151 = vst [vmem:[%s957 + $0x15c] sm:$0xf] %v1150
    %1152 = vst.msk [vmem:[%s957 + $0x160] sm:$0xf] %vm15, %v791
    %v1153 = vld [vmem:[%s957 + $0x164] sm:$0x1]
    %v1154 = vsel %vm32, %v792, %v1153
    %1155 = vst [vmem:[%s957 + $0x164] sm:$0x1] %v1154
    %v1156 = vld [vmem:[%s957 + $0x168] sm:$0xf]
    %v1157 = vsel %vm959, %v799, %v1156
    %1158 = vst [vmem:[%s957 + $0x168] sm:$0xf] %v1157
    %1159 = vst.msk [vmem:[%s957 + $0x16c] sm:$0xf] %vm15, %v808
    %v1160 = vld [vmem:[%s957 + $0x170] sm:$0x1]
    %v1161 = vsel %vm32, %v809, %v1160
    %1162 = vst [vmem:[%s957 + $0x170] sm:$0x1] %v1161
    %v1163 = vld [vmem:[%s957 + $0x174] sm:$0xf]
    %v1164 = vsel %vm959, %v816, %v1163
    %1165 = vst [vmem:[%s957 + $0x174] sm:$0xf] %v1164
    %1166 = vst.msk [vmem:[%s957 + $0x178] sm:$0xf] %vm15, %v825
    %v1167 = vld [vmem:[%s957 + $0x17c] sm:$0x1]
    %v1168 = vsel %vm32, %v826, %v1167
    %1169 = vst [vmem:[%s957 + $0x17c] sm:$0x1] %v1168
    %v1170 = vld [vmem:[%s957 + $0x180] sm:$0xf]
    %v1171 = vsel %vm959, %v833, %v1170
    %1172 = vst [vmem:[%s957 + $0x180] sm:$0xf] %v1171
    %1173 = vst.msk [vmem:[%s957 + $0x184] sm:$0xf] %vm15, %v842
    %v1174 = vld [vmem:[%s957 + $0x188] sm:$0x1]
    %v1175 = vsel %vm32, %v843, %v1174
    %1176 = vst [vmem:[%s957 + $0x188] sm:$0x1] %v1175
    %v1177 = vld [vmem:[%s957 + $0x18c] sm:$0xf]
    %v1178 = vsel %vm959, %v850, %v1177
    %1179 = vst [vmem:[%s957 + $0x18c] sm:$0xf] %v1178
    %1180 = vst.msk [vmem:[%s957 + $0x190] sm:$0xf] %vm15, %v859
    %v1181 = vld [vmem:[%s957 + $0x194] sm:$0x1]
    %v1182 = vsel %vm32, %v860, %v1181
    %1183 = vst [vmem:[%s957 + $0x194] sm:$0x1] %v1182
    %v1184 = vld [vmem:[#allocation2] sm:$0xf]
    %v1185 = vld [vmem:[#allocation2 + $0x4] sm:$0xf]
    %v1186 = vld [vmem:[#allocation2 + $0xc] sm:$0xf]
    %v1187 = vld [vmem:[#allocation2 + $0x10] sm:$0xf]
    %v1188 = vld [vmem:[#allocation2 + $0x18] sm:$0xf]
    %v1189 = vld [vmem:[#allocation2 + $0x1c] sm:$0xf]
    %v1190 = vld [vmem:[#allocation2 + $0x24] sm:$0xf]
    %v1191 = vld [vmem:[#allocation2 + $0x28] sm:$0xf]
    %v1192 = vld [vmem:[#allocation2 + $0x30] sm:$0xf]
    %v1193 = vld [vmem:[#allocation2 + $0x34] sm:$0xf]
    %v1194 = vld [vmem:[#allocation2 + $0x3c] sm:$0xf]
    %v1195 = vld [vmem:[#allocation2 + $0x40] sm:$0xf]
    %v1196 = vld [vmem:[#allocation2 + $0x48] sm:$0xf]
    %v1197 = vld [vmem:[#allocation2 + $0x4c] sm:$0xf]
    %v1198 = vld [vmem:[#allocation2 + $0x54] sm:$0xf]
    %v1199 = vld [vmem:[#allocation2 + $0x58] sm:$0xf]
    %v1200 = vld [vmem:[#allocation2 + $0x60] sm:$0xf]
    %v1201 = vld [vmem:[#allocation2 + $0x64] sm:$0xf]
    %v1202 = vld [vmem:[#allocation2 + $0x6c] sm:$0xf]
    %v1203 = vld [vmem:[#allocation2 + $0x70] sm:$0xf]
    %v1204 = vld [vmem:[#allocation2 + $0x78] sm:$0xf]
    %v1205 = vld [vmem:[#allocation2 + $0x7c] sm:$0xf]
    %v1206 = vld [vmem:[#allocation2 + $0x84] sm:$0xf]
    %v1207 = vld [vmem:[#allocation2 + $0x88] sm:$0xf]
    %v1208 = vld [vmem:[#allocation2 + $0x90] sm:$0xf]
    %v1209 = vld [vmem:[#allocation2 + $0x94] sm:$0xf]
    %v1210 = vld [vmem:[#allocation2 + $0x9c] sm:$0xf]
    %v1211 = vld [vmem:[#allocation2 + $0xa0] sm:$0xf]
    %v1212 = vld [vmem:[#allocation2 + $0xa8] sm:$0xf]
    %v1213 = vld [vmem:[#allocation2 + $0xac] sm:$0xf]
    %v1214 = vld [vmem:[#allocation2 + $0xb4] sm:$0xf]
    %v1215 = vld [vmem:[#allocation2 + $0xb8] sm:$0xf]
    %v1216 = vld [vmem:[#allocation2 + $0xd8] sm:$0xf]
    %v1217 = vld [vmem:[#allocation2 + $0xdc] sm:$0xf]
    %v1218 = vld [vmem:[#allocation2 + $0xe4] sm:$0xf]
    %v1219 = vld [vmem:[#allocation2 + $0xe8] sm:$0xf]
    %v1220 = vld [vmem:[#allocation2 + $0xf0] sm:$0xf]
    %v1221 = vld [vmem:[#allocation2 + $0xf4] sm:$0xf]
    %v1222 = vld [vmem:[#allocation2 + $0xfc] sm:$0xf]
    %v1223 = vld [vmem:[#allocation2 + $0x100] sm:$0xf]
    %v1224 = vld [vmem:[#allocation2 + $0x108] sm:$0xf]
    %v1225 = vld [vmem:[#allocation2 + $0x10c] sm:$0xf]
    %v1226 = vld [vmem:[#allocation2 + $0x114] sm:$0xf]
    %v1227 = vld [vmem:[#allocation2 + $0x118] sm:$0xf]
    %v1228 = vld [vmem:[#allocation2 + $0x120] sm:$0xf]
    %v1229 = vld [vmem:[#allocation2 + $0x124] sm:$0xf]
    %v1230 = vld [vmem:[#allocation2 + $0x12c] sm:$0xf]
    %v1231 = vld [vmem:[#allocation2 + $0x130] sm:$0xf]
    %v1232 = vld [vmem:[#allocation2 + $0x138] sm:$0xf]
    %v1233 = vld [vmem:[#allocation2 + $0x13c] sm:$0xf]
    %v1234 = vld [vmem:[#allocation2 + $0x144] sm:$0xf]
    %v1235 = vld [vmem:[#allocation2 + $0x148] sm:$0xf]
    %v1236 = vld [vmem:[#allocation2 + $0x150] sm:$0xf]
    %v1237 = vld [vmem:[#allocation2 + $0x154] sm:$0xf]
    %v1238 = vld [vmem:[#allocation2 + $0x15c] sm:$0xf]
    %v1239 = vld [vmem:[#allocation2 + $0x160] sm:$0xf]
    %v1240 = vld [vmem:[#allocation2 + $0x168] sm:$0xf]
    %v1241 = vld [vmem:[#allocation2 + $0x16c] sm:$0xf]
    %v1242 = vld [vmem:[#allocation2 + $0x174] sm:$0xf]
    %v1243 = vld [vmem:[#allocation2 + $0x178] sm:$0xf]
    %v1244 = vld [vmem:[#allocation2 + $0x180] sm:$0xf]
    %v1245 = vld [vmem:[#allocation2 + $0x184] sm:$0xf]
    %v1246 = vld [vmem:[#allocation2 + $0x18c] sm:$0xf]
    %v1247 = vld [vmem:[#allocation2 + $0x190] sm:$0xf]
    %v1248 = vld [vmem:[%s1] sm:$0x3]
    %v1249 = vld [vmem:[#allocation2 + $0x8] sm:$0x1]
    %v1250 = vld [vmem:[#allocation2 + $0x14] sm:$0x1]
    %v1251 = vld [vmem:[#allocation2 + $0x20] sm:$0x1]
    %v1252 = vld [vmem:[#allocation2 + $0x2c] sm:$0x1]
    %v1253 = vld [vmem:[#allocation2 + $0x38] sm:$0x1]
    %v1254 = vld [vmem:[#allocation2 + $0x44] sm:$0x1]
    %v1255 = vld [vmem:[#allocation2 + $0x50] sm:$0x1]
    %v1256 = vld [vmem:[#allocation2 + $0x5c] sm:$0x1]
    %v1257 = vld [vmem:[#allocation2 + $0x68] sm:$0x1]
    %v1258 = vld [vmem:[#allocation2 + $0x74] sm:$0x1]
    %v1259 = vld [vmem:[#allocation2 + $0x80] sm:$0x1]
    %v1260 = vld [vmem:[#allocation2 + $0x8c] sm:$0x1]
    %v1261 = vld [vmem:[#allocation2 + $0x98] sm:$0x1]
    %v1262 = vld [vmem:[#allocation2 + $0xa4] sm:$0x1]
    %v1263 = vld [vmem:[#allocation2 + $0xb0] sm:$0x1]
    %v1264 = vld [vmem:[#allocation2 + $0xbc] sm:$0x1]
    %v1265 = vld [vmem:[#allocation2 + $0xe0] sm:$0x1]
    %v1266 = vld [vmem:[#allocation2 + $0xec] sm:$0x1]
    %v1267 = vld [vmem:[#allocation2 + $0xf8] sm:$0x1]
    %v1268 = vld [vmem:[#allocation2 + $0x104] sm:$0x1]
    %v1269 = vld [vmem:[#allocation2 + $0x110] sm:$0x1]
    %v1270 = vld [vmem:[#allocation2 + $0x11c] sm:$0x1]
    %v1271 = vld [vmem:[#allocation2 + $0x128] sm:$0x1]
    %v1272 = vld [vmem:[#allocation2 + $0x134] sm:$0x1]
    %v1273 = vld [vmem:[#allocation2 + $0x140] sm:$0x1]
    %v1274 = vld [vmem:[#allocation2 + $0x14c] sm:$0x1]
    %v1275 = vld [vmem:[#allocation2 + $0x158] sm:$0x1]
    %v1276 = vld [vmem:[#allocation2 + $0x164] sm:$0x1]
    %v1277 = vld [vmem:[#allocation2 + $0x170] sm:$0x1]
    %v1278 = vld [vmem:[#allocation2 + $0x17c] sm:$0x1]
    %v1279 = vld [vmem:[#allocation2 + $0x188] sm:$0x1]
    %v1280 = vld [vmem:[#allocation2 + $0x194] sm:$0x1]
    %vm1281 = vsmask.f32 3328
    %vm1282 = vsmask.f32 7440
    %vm1283 = vmor %vm1281, %vm1282
    %v1285 = vshrl.u32 %v1184, 16
    %v1287 = vrot.slane %v1285, 4
    %v1288 = vshll.u32 %v1184, 16
    %v1290 = vrot.slane %v1288, 5
    %v1291 = vor.u32 %v1287, %v1290
    %v1292 = vrot.slane %v1291, 4
    %v1294 = vshll.u32 %v1185, 16
    %v1296 = vrot.slane %v1294, 5
    %v1297 = vsel %vm1283, %v1292, %v1296
    %v1298 = vshrl.u32 %v1185, 16
    %v1300 = vrot.slane %v1298, 4
    %v1301 = vor.u32 %v1300, %v1296
    %v1302 = vrot.slane %v1301, 4
    %v1304 = vshll.u32 %v1249, 16
    %v1306 = vrot.slane %v1304, 5
    %v1307 = vsel %vm1283, %v1302, %v1306
    %v1309 = vshrl.u32 %v1186, 16
    %v1311 = vrot.slane %v1309, 4
    %v1312 = vshll.u32 %v1186, 16
    %v1314 = vrot.slane %v1312, 5
    %v1315 = vor.u32 %v1311, %v1314
    %v1316 = vrot.slane %v1315, 4
    %v1318 = vshll.u32 %v1187, 16
    %v1320 = vrot.slane %v1318, 5
    %v1321 = vsel %vm1283, %v1316, %v1320
    %v1322 = vshrl.u32 %v1187, 16
    %v1324 = vrot.slane %v1322, 4
    %v1325 = vor.u32 %v1324, %v1320
    %v1326 = vrot.slane %v1325, 4
    %v1328 = vshll.u32 %v1250, 16
    %v1330 = vrot.slane %v1328, 5
    %v1331 = vsel %vm1283, %v1326, %v1330
    %v1333 = vshrl.u32 %v1188, 16
    %v1335 = vrot.slane %v1333, 4
    %v1336 = vshll.u32 %v1188, 16
    %v1338 = vrot.slane %v1336, 5
    %v1339 = vor.u32 %v1335, %v1338
    %v1340 = vrot.slane %v1339, 4
    %v1342 = vshll.u32 %v1189, 16
    %v1344 = vrot.slane %v1342, 5
    %v1345 = vsel %vm1283, %v1340, %v1344
    %v1346 = vshrl.u32 %v1189, 16
    %v1348 = vrot.slane %v1346, 4
    %v1349 = vor.u32 %v1348, %v1344
    %v1350 = vrot.slane %v1349, 4
    %v1352 = vshll.u32 %v1251, 16
    %v1354 = vrot.slane %v1352, 5
    %v1355 = vsel %vm1283, %v1350, %v1354
    %v1357 = vshrl.u32 %v1190, 16
    %v1359 = vrot.slane %v1357, 4
    %v1360 = vshll.u32 %v1190, 16
    %v1362 = vrot.slane %v1360, 5
    %v1363 = vor.u32 %v1359, %v1362
    %v1364 = vrot.slane %v1363, 4
    %v1366 = vshll.u32 %v1191, 16
    %v1368 = vrot.slane %v1366, 5
    %v1369 = vsel %vm1283, %v1364, %v1368
    %v1370 = vshrl.u32 %v1191, 16
    %v1372 = vrot.slane %v1370, 4
    %v1373 = vor.u32 %v1372, %v1368
    %v1374 = vrot.slane %v1373, 4
    %v1376 = vshll.u32 %v1252, 16
    %v1378 = vrot.slane %v1376, 5
    %v1379 = vsel %vm1283, %v1374, %v1378
    %v1381 = vshrl.u32 %v1192, 16
    %v1383 = vrot.slane %v1381, 4
    %v1384 = vshll.u32 %v1192, 16
    %v1386 = vrot.slane %v1384, 5
    %v1387 = vor.u32 %v1383, %v1386
    %v1388 = vrot.slane %v1387, 4
    %v1390 = vshll.u32 %v1193, 16
    %v1392 = vrot.slane %v1390, 5
    %v1393 = vsel %vm1283, %v1388, %v1392
    %v1394 = vshrl.u32 %v1193, 16
    %v1396 = vrot.slane %v1394, 4
    %v1397 = vor.u32 %v1396, %v1392
    %v1398 = vrot.slane %v1397, 4
    %v1400 = vshll.u32 %v1253, 16
    %v1402 = vrot.slane %v1400, 5
    %v1403 = vsel %vm1283, %v1398, %v1402
    %v1405 = vshrl.u32 %v1194, 16
    %v1407 = vrot.slane %v1405, 4
    %v1408 = vshll.u32 %v1194, 16
    %v1410 = vrot.slane %v1408, 5
    %v1411 = vor.u32 %v1407, %v1410
    %v1412 = vrot.slane %v1411, 4
    %v1414 = vshll.u32 %v1195, 16
    %v1416 = vrot.slane %v1414, 5
    %v1417 = vsel %vm1283, %v1412, %v1416
    %v1418 = vshrl.u32 %v1195, 16
    %v1420 = vrot.slane %v1418, 4
    %v1421 = vor.u32 %v1420, %v1416
    %v1422 = vrot.slane %v1421, 4
    %v1424 = vshll.u32 %v1254, 16
    %v1426 = vrot.slane %v1424, 5
    %v1427 = vsel %vm1283, %v1422, %v1426
    %v1429 = vshrl.u32 %v1196, 16
    %v1431 = vrot.slane %v1429, 4
    %v1432 = vshll.u32 %v1196, 16
    %v1434 = vrot.slane %v1432, 5
    %v1435 = vor.u32 %v1431, %v1434
    %v1436 = vrot.slane %v1435, 4
    %v1438 = vshll.u32 %v1197, 16
    %v1440 = vrot.slane %v1438, 5
    %v1441 = vsel %vm1283, %v1436, %v1440
    %v1442 = vshrl.u32 %v1197, 16
    %v1444 = vrot.slane %v1442, 4
    %v1445 = vor.u32 %v1444, %v1440
    %v1446 = vrot.slane %v1445, 4
    %v1448 = vshll.u32 %v1255, 16
    %v1450 = vrot.slane %v1448, 5
    %v1451 = vsel %vm1283, %v1446, %v1450
    %v1453 = vshrl.u32 %v1198, 16
    %v1455 = vrot.slane %v1453, 4
    %v1456 = vshll.u32 %v1198, 16
    %v1458 = vrot.slane %v1456, 5
    %v1459 = vor.u32 %v1455, %v1458
    %v1460 = vrot.slane %v1459, 4
    %v1462 = vshll.u32 %v1199, 16
    %v1464 = vrot.slane %v1462, 5
    %v1465 = vsel %vm1283, %v1460, %v1464
    %v1466 = vshrl.u32 %v1199, 16
    %v1468 = vrot.slane %v1466, 4
    %v1469 = vor.u32 %v1468, %v1464
    %v1470 = vrot.slane %v1469, 4
    %v1472 = vshll.u32 %v1256, 16
    %v1474 = vrot.slane %v1472, 5
    %v1475 = vsel %vm1283, %v1470, %v1474
    %v1477 = vshrl.u32 %v1200, 16
    %v1479 = vrot.slane %v1477, 4
    %v1480 = vshll.u32 %v1200, 16
    %v1482 = vrot.slane %v1480, 5
    %v1483 = vor.u32 %v1479, %v1482
    %v1484 = vrot.slane %v1483, 4
    %v1486 = vshll.u32 %v1201, 16
    %v1488 = vrot.slane %v1486, 5
    %v1489 = vsel %vm1283, %v1484, %v1488
    %v1490 = vshrl.u32 %v1201, 16
    %v1492 = vrot.slane %v1490, 4
    %v1493 = vor.u32 %v1492, %v1488
    %v1494 = vrot.slane %v1493, 4
    %v1496 = vshll.u32 %v1257, 16
    %v1498 = vrot.slane %v1496, 5
    %v1499 = vsel %vm1283, %v1494, %v1498
    %v1501 = vshrl.u32 %v1202, 16
    %v1503 = vrot.slane %v1501, 4
    %v1504 = vshll.u32 %v1202, 16
    %v1506 = vrot.slane %v1504, 5
    %v1507 = vor.u32 %v1503, %v1506
    %v1508 = vrot.slane %v1507, 4
    %v1510 = vshll.u32 %v1203, 16
    %v1512 = vrot.slane %v1510, 5
    %v1513 = vsel %vm1283, %v1508, %v1512
    %v1514 = vshrl.u32 %v1203, 16
    %v1516 = vrot.slane %v1514, 4
    %v1517 = vor.u32 %v1516, %v1512
    %v1518 = vrot.slane %v1517, 4
    %v1520 = vshll.u32 %v1258, 16
    %v1522 = vrot.slane %v1520, 5
    %v1523 = vsel %vm1283, %v1518, %v1522
    %v1525 = vshrl.u32 %v1204, 16
    %v1527 = vrot.slane %v1525, 4
    %v1528 = vshll.u32 %v1204, 16
    %v1530 = vrot.slane %v1528, 5
    %v1531 = vor.u32 %v1527, %v1530
    %v1532 = vrot.slane %v1531, 4
    %v1534 = vshll.u32 %v1205, 16
    %v1536 = vrot.slane %v1534, 5
    %v1537 = vsel %vm1283, %v1532, %v1536
    %v1538 = vshrl.u32 %v1205, 16
    %v1540 = vrot.slane %v1538, 4
    %v1541 = vor.u32 %v1540, %v1536
    %v1542 = vrot.slane %v1541, 4
    %v1544 = vshll.u32 %v1259, 16
    %v1546 = vrot.slane %v1544, 5
    %v1547 = vsel %vm1283, %v1542, %v1546
    %v1549 = vshrl.u32 %v1206, 16
    %v1551 = vrot.slane %v1549, 4
    %v1552 = vshll.u32 %v1206, 16
    %v1554 = vrot.slane %v1552, 5
    %v1555 = vor.u32 %v1551, %v1554
    %v1556 = vrot.slane %v1555, 4
    %v1558 = vshll.u32 %v1207, 16
    %v1560 = vrot.slane %v1558, 5
    %v1561 = vsel %vm1283, %v1556, %v1560
    %v1562 = vshrl.u32 %v1207, 16
    %v1564 = vrot.slane %v1562, 4
    %v1565 = vor.u32 %v1564, %v1560
    %v1566 = vrot.slane %v1565, 4
    %v1568 = vshll.u32 %v1260, 16
    %v1570 = vrot.slane %v1568, 5
    %v1571 = vsel %vm1283, %v1566, %v1570
    %v1573 = vshrl.u32 %v1208, 16
    %v1575 = vrot.slane %v1573, 4
    %v1576 = vshll.u32 %v1208, 16
    %v1578 = vrot.slane %v1576, 5
    %v1579 = vor.u32 %v1575, %v1578
    %v1580 = vrot.slane %v1579, 4
    %v1582 = vshll.u32 %v1209, 16
    %v1584 = vrot.slane %v1582, 5
    %v1585 = vsel %vm1283, %v1580, %v1584
    %v1586 = vshrl.u32 %v1209, 16
    %v1588 = vrot.slane %v1586, 4
    %v1589 = vor.u32 %v1588, %v1584
    %v1590 = vrot.slane %v1589, 4
    %v1592 = vshll.u32 %v1261, 16
    %v1594 = vrot.slane %v1592, 5
    %v1595 = vsel %vm1283, %v1590, %v1594
    %v1597 = vshrl.u32 %v1210, 16
    %v1599 = vrot.slane %v1597, 4
    %v1600 = vshll.u32 %v1210, 16
    %v1602 = vrot.slane %v1600, 5
    %v1603 = vor.u32 %v1599, %v1602
    %v1604 = vrot.slane %v1603, 4
    %v1606 = vshll.u32 %v1211, 16
    %v1608 = vrot.slane %v1606, 5
    %v1609 = vsel %vm1283, %v1604, %v1608
    %v1610 = vshrl.u32 %v1211, 16
    %v1612 = vrot.slane %v1610, 4
    %v1613 = vor.u32 %v1612, %v1608
    %v1614 = vrot.slane %v1613, 4
    %v1616 = vshll.u32 %v1262, 16
    %v1618 = vrot.slane %v1616, 5
    %v1619 = vsel %vm1283, %v1614, %v1618
    %v1621 = vshrl.u32 %v1212, 16
    %v1623 = vrot.slane %v1621, 4
    %v1624 = vshll.u32 %v1212, 16
    %v1626 = vrot.slane %v1624, 5
    %v1627 = vor.u32 %v1623, %v1626
    %v1628 = vrot.slane %v1627, 4
    %v1630 = vshll.u32 %v1213, 16
    %v1632 = vrot.slane %v1630, 5
    %v1633 = vsel %vm1283, %v1628, %v1632
    %v1634 = vshrl.u32 %v1213, 16
    %v1636 = vrot.slane %v1634, 4
    %v1637 = vor.u32 %v1636, %v1632
    %v1638 = vrot.slane %v1637, 4
    %v1640 = vshll.u32 %v1263, 16
    %v1642 = vrot.slane %v1640, 5
    %v1643 = vsel %vm1283, %v1638, %v1642
    %v1645 = vshrl.u32 %v1214, 16
    %v1647 = vrot.slane %v1645, 4
    %v1648 = vshll.u32 %v1214, 16
    %v1650 = vrot.slane %v1648, 5
    %v1651 = vor.u32 %v1647, %v1650
    %v1652 = vrot.slane %v1651, 4
    %v1654 = vshll.u32 %v1215, 16
    %v1656 = vrot.slane %v1654, 5
    %v1657 = vsel %vm1283, %v1652, %v1656
    %v1658 = vshrl.u32 %v1215, 16
    %v1660 = vrot.slane %v1658, 4
    %v1661 = vor.u32 %v1660, %v1656
    %v1662 = vrot.slane %v1661, 4
    %v1664 = vshll.u32 %v1264, 16
    %v1666 = vrot.slane %v1664, 5
    %v1667 = vsel %vm1283, %v1662, %v1666
    %v1669 = vshrl.u32 %v1216, 16
    %v1671 = vrot.slane %v1669, 4
    %v1672 = vshll.u32 %v1216, 16
    %v1674 = vrot.slane %v1672, 5
    %v1675 = vor.u32 %v1671, %v1674
    %v1676 = vrot.slane %v1675, 4
    %v1678 = vshll.u32 %v1217, 16
    %v1680 = vrot.slane %v1678, 5
    %v1681 = vsel %vm1283, %v1676, %v1680
    %v1682 = vshrl.u32 %v1217, 16
    %v1684 = vrot.slane %v1682, 4
    %v1685 = vor.u32 %v1684, %v1680
    %v1686 = vrot.slane %v1685, 4
    %v1688 = vshll.u32 %v1265, 16
    %v1690 = vrot.slane %v1688, 5
    %v1691 = vsel %vm1283, %v1686, %v1690
    %v1693 = vshrl.u32 %v1218, 16
    %v1695 = vrot.slane %v1693, 4
    %v1696 = vshll.u32 %v1218, 16
    %v1698 = vrot.slane %v1696, 5
    %v1699 = vor.u32 %v1695, %v1698
    %v1700 = vrot.slane %v1699, 4
    %v1702 = vshll.u32 %v1219, 16
    %v1704 = vrot.slane %v1702, 5
    %v1705 = vsel %vm1283, %v1700, %v1704
    %v1706 = vshrl.u32 %v1219, 16
    %v1708 = vrot.slane %v1706, 4
    %v1709 = vor.u32 %v1708, %v1704
    %v1710 = vrot.slane %v1709, 4
    %v1712 = vshll.u32 %v1266, 16
    %v1714 = vrot.slane %v1712, 5
    %v1715 = vsel %vm1283, %v1710, %v1714
    %v1717 = vshrl.u32 %v1220, 16
    %v1719 = vrot.slane %v1717, 4
    %v1720 = vshll.u32 %v1220, 16
    %v1722 = vrot.slane %v1720, 5
    %v1723 = vor.u32 %v1719, %v1722
    %v1724 = vrot.slane %v1723, 4
    %v1726 = vshll.u32 %v1221, 16
    %v1728 = vrot.slane %v1726, 5
    %v1729 = vsel %vm1283, %v1724, %v1728
    %v1730 = vshrl.u32 %v1221, 16
    %v1732 = vrot.slane %v1730, 4
    %v1733 = vor.u32 %v1732, %v1728
    %v1734 = vrot.slane %v1733, 4
    %v1736 = vshll.u32 %v1267, 16
    %v1738 = vrot.slane %v1736, 5
    %v1739 = vsel %vm1283, %v1734, %v1738
    %v1741 = vshrl.u32 %v1222, 16
    %v1743 = vrot.slane %v1741, 4
    %v1744 = vshll.u32 %v1222, 16
    %v1746 = vrot.slane %v1744, 5
    %v1747 = vor.u32 %v1743, %v1746
    %v1748 = vrot.slane %v1747, 4
    %v1750 = vshll.u32 %v1223, 16
    %v1752 = vrot.slane %v1750, 5
    %v1753 = vsel %vm1283, %v1748, %v1752
    %v1754 = vshrl.u32 %v1223, 16
    %v1756 = vrot.slane %v1754, 4
    %v1757 = vor.u32 %v1756, %v1752
    %v1758 = vrot.slane %v1757, 4
    %v1760 = vshll.u32 %v1268, 16
    %v1762 = vrot.slane %v1760, 5
    %v1763 = vsel %vm1283, %v1758, %v1762
    %v1765 = vshrl.u32 %v1224, 16
    %v1767 = vrot.slane %v1765, 4
    %v1768 = vshll.u32 %v1224, 16
    %v1770 = vrot.slane %v1768, 5
    %v1771 = vor.u32 %v1767, %v1770
    %v1772 = vrot.slane %v1771, 4
    %v1774 = vshll.u32 %v1225, 16
    %v1776 = vrot.slane %v1774, 5
    %v1777 = vsel %vm1283, %v1772, %v1776
    %v1778 = vshrl.u32 %v1225, 16
    %v1780 = vrot.slane %v1778, 4
    %v1781 = vor.u32 %v1780, %v1776
    %v1782 = vrot.slane %v1781, 4
    %v1784 = vshll.u32 %v1269, 16
    %v1786 = vrot.slane %v1784, 5
    %v1787 = vsel %vm1283, %v1782, %v1786
    %v1789 = vshrl.u32 %v1226, 16
    %v1791 = vrot.slane %v1789, 4
    %v1792 = vshll.u32 %v1226, 16
    %v1794 = vrot.slane %v1792, 5
    %v1795 = vor.u32 %v1791, %v1794
    %v1796 = vrot.slane %v1795, 4
    %v1798 = vshll.u32 %v1227, 16
    %v1800 = vrot.slane %v1798, 5
    %v1801 = vsel %vm1283, %v1796, %v1800
    %v1802 = vshrl.u32 %v1227, 16
    %v1804 = vrot.slane %v1802, 4
    %v1805 = vor.u32 %v1804, %v1800
    %v1806 = vrot.slane %v1805, 4
    %v1808 = vshll.u32 %v1270, 16
    %v1810 = vrot.slane %v1808, 5
    %v1811 = vsel %vm1283, %v1806, %v1810
    %v1813 = vshrl.u32 %v1228, 16
    %v1815 = vrot.slane %v1813, 4
    %v1816 = vshll.u32 %v1228, 16
    %v1818 = vrot.slane %v1816, 5
    %v1819 = vor.u32 %v1815, %v1818
    %v1820 = vrot.slane %v1819, 4
    %v1822 = vshll.u32 %v1229, 16
    %v1824 = vrot.slane %v1822, 5
    %v1825 = vsel %vm1283, %v1820, %v1824
    %v1826 = vshrl.u32 %v1229, 16
    %v1828 = vrot.slane %v1826, 4
    %v1829 = vor.u32 %v1828, %v1824
    %v1830 = vrot.slane %v1829, 4
    %v1832 = vshll.u32 %v1271, 16
    %v1834 = vrot.slane %v1832, 5
    %v1835 = vsel %vm1283, %v1830, %v1834
    %v1837 = vshrl.u32 %v1230, 16
    %v1839 = vrot.slane %v1837, 4
    %v1840 = vshll.u32 %v1230, 16
    %v1842 = vrot.slane %v1840, 5
    %v1843 = vor.u32 %v1839, %v1842
    %v1844 = vrot.slane %v1843, 4
    %v1846 = vshll.u32 %v1231, 16
    %v1848 = vrot.slane %v1846, 5
    %v1849 = vsel %vm1283, %v1844, %v1848
    %v1850 = vshrl.u32 %v1231, 16
    %v1852 = vrot.slane %v1850, 4
    %v1853 = vor.u32 %v1852, %v1848
    %v1854 = vrot.slane %v1853, 4
    %v1856 = vshll.u32 %v1272, 16
    %v1858 = vrot.slane %v1856, 5
    %v1859 = vsel %vm1283, %v1854, %v1858
    %v1861 = vshrl.u32 %v1232, 16
    %v1863 = vrot.slane %v1861, 4
    %v1864 = vshll.u32 %v1232, 16
    %v1866 = vrot.slane %v1864, 5
    %v1867 = vor.u32 %v1863, %v1866
    %v1868 = vrot.slane %v1867, 4
    %v1870 = vshll.u32 %v1233, 16
    %v1872 = vrot.slane %v1870, 5
    %v1873 = vsel %vm1283, %v1868, %v1872
    %v1874 = vshrl.u32 %v1233, 16
    %v1876 = vrot.slane %v1874, 4
    %v1877 = vor.u32 %v1876, %v1872
    %v1878 = vrot.slane %v1877, 4
    %v1880 = vshll.u32 %v1273, 16
    %v1882 = vrot.slane %v1880, 5
    %v1883 = vsel %vm1283, %v1878, %v1882
    %v1885 = vshrl.u32 %v1234, 16
    %v1887 = vrot.slane %v1885, 4
    %v1888 = vshll.u32 %v1234, 16
    %v1890 = vrot.slane %v1888, 5
    %v1891 = vor.u32 %v1887, %v1890
    %v1892 = vrot.slane %v1891, 4
    %v1894 = vshll.u32 %v1235, 16
    %v1896 = vrot.slane %v1894, 5
    %v1897 = vsel %vm1283, %v1892, %v1896
    %v1898 = vshrl.u32 %v1235, 16
    %v1900 = vrot.slane %v1898, 4
    %v1901 = vor.u32 %v1900, %v1896
    %v1902 = vrot.slane %v1901, 4
    %v1904 = vshll.u32 %v1274, 16
    %v1906 = vrot.slane %v1904, 5
    %v1907 = vsel %vm1283, %v1902, %v1906
    %v1909 = vshrl.u32 %v1236, 16
    %v1911 = vrot.slane %v1909, 4
    %v1912 = vshll.u32 %v1236, 16
    %v1914 = vrot.slane %v1912, 5
    %v1915 = vor.u32 %v1911, %v1914
    %v1916 = vrot.slane %v1915, 4
    %v1918 = vshll.u32 %v1237, 16
    %v1920 = vrot.slane %v1918, 5
    %v1921 = vsel %vm1283, %v1916, %v1920
    %v1922 = vshrl.u32 %v1237, 16
    %v1924 = vrot.slane %v1922, 4
    %v1925 = vor.u32 %v1924, %v1920
    %v1926 = vrot.slane %v1925, 4
    %v1928 = vshll.u32 %v1275, 16
    %v1930 = vrot.slane %v1928, 5
    %v1931 = vsel %vm1283, %v1926, %v1930
    %v1933 = vshrl.u32 %v1238, 16
    %v1935 = vrot.slane %v1933, 4
    %v1936 = vshll.u32 %v1238, 16
    %v1938 = vrot.slane %v1936, 5
    %v1939 = vor.u32 %v1935, %v1938
    %v1940 = vrot.slane %v1939, 4
    %v1942 = vshll.u32 %v1239, 16
    %v1944 = vrot.slane %v1942, 5
    %v1945 = vsel %vm1283, %v1940, %v1944
    %v1946 = vshrl.u32 %v1239, 16
    %v1948 = vrot.slane %v1946, 4
    %v1949 = vor.u32 %v1948, %v1944
    %v1950 = vrot.slane %v1949, 4
    %v1952 = vshll.u32 %v1276, 16
    %v1954 = vrot.slane %v1952, 5
    %v1955 = vsel %vm1283, %v1950, %v1954
    %v1957 = vshrl.u32 %v1240, 16
    %v1959 = vrot.slane %v1957, 4
    %v1960 = vshll.u32 %v1240, 16
    %v1962 = vrot.slane %v1960, 5
    %v1963 = vor.u32 %v1959, %v1962
    %v1964 = vrot.slane %v1963, 4
    %v1966 = vshll.u32 %v1241, 16
    %v1968 = vrot.slane %v1966, 5
    %v1969 = vsel %vm1283, %v1964, %v1968
    %v1970 = vshrl.u32 %v1241, 16
    %v1972 = vrot.slane %v1970, 4
    %v1973 = vor.u32 %v1972, %v1968
    %v1974 = vrot.slane %v1973, 4
    %v1976 = vshll.u32 %v1277, 16
    %v1978 = vrot.slane %v1976, 5
    %v1979 = vsel %vm1283, %v1974, %v1978
    %v1981 = vshrl.u32 %v1242, 16
    %v1983 = vrot.slane %v1981, 4
    %v1984 = vshll.u32 %v1242, 16
    %v1986 = vrot.slane %v1984, 5
    %v1987 = vor.u32 %v1983, %v1986
    %v1988 = vrot.slane %v1987, 4
    %v1990 = vshll.u32 %v1243, 16
    %v1992 = vrot.slane %v1990, 5
    %v1993 = vsel %vm1283, %v1988, %v1992
    %v1994 = vshrl.u32 %v1243, 16
    %v1996 = vrot.slane %v1994, 4
    %v1997 = vor.u32 %v1996, %v1992
    %v1998 = vrot.slane %v1997, 4
    %v2000 = vshll.u32 %v1278, 16
    %v2002 = vrot.slane %v2000, 5
    %v2003 = vsel %vm1283, %v1998, %v2002
    %v2005 = vshrl.u32 %v1244, 16
    %v2007 = vrot.slane %v2005, 4
    %v2008 = vshll.u32 %v1244, 16
    %v2010 = vrot.slane %v2008, 5
    %v2011 = vor.u32 %v2007, %v2010
    %v2012 = vrot.slane %v2011, 4
    %v2014 = vshll.u32 %v1245, 16
    %v2016 = vrot.slane %v2014, 5
    %v2017 = vsel %vm1283, %v2012, %v2016
    %v2018 = vshrl.u32 %v1245, 16
    %v2020 = vrot.slane %v2018, 4
    %v2021 = vor.u32 %v2020, %v2016
    %v2022 = vrot.slane %v2021, 4
    %v2024 = vshll.u32 %v1279, 16
    %v2026 = vrot.slane %v2024, 5
    %v2027 = vsel %vm1283, %v2022, %v2026
    %v2029 = vshrl.u32 %v1246, 16
    %v2031 = vrot.slane %v2029, 4
    %v2032 = vshll.u32 %v1246, 16
    %v2034 = vrot.slane %v2032, 5
    %v2035 = vor.u32 %v2031, %v2034
    %v2036 = vrot.slane %v2035, 4
    %v2038 = vshll.u32 %v1247, 16
    %v2040 = vrot.slane %v2038, 5
    %v2041 = vsel %vm1283, %v2036, %v2040
    %v2042 = vshrl.u32 %v1247, 16
    %v2044 = vrot.slane %v2042, 4
    %v2045 = vor.u32 %v2044, %v2040
    %v2046 = vrot.slane %v2045, 4
    %v2048 = vshll.u32 %v1280, 16
    %v2050 = vrot.slane %v2048, 5
    %v2051 = vsel %vm1283, %v2046, %v2050
    %s2052 = scalar_lea.vmem %s1, 2
    %v2053 = vld [vmem:[%s2052] sm:$0x3]
    %v2054 = vunpack.c.l.b16 %v1297
    %v2055 = vunpack.c.l.b16 %v1307
    %v2056 = vunpack.c.l.b16 %v1321
    %v2057 = vunpack.c.l.b16 %v1331
    %v2058 = vunpack.c.l.b16 %v1345
    %v2059 = vunpack.c.l.b16 %v1355
    %v2060 = vunpack.c.l.b16 %v1369
    %v2061 = vunpack.c.l.b16 %v1379
    %v2062 = vunpack.c.l.b16 %v1393
    %v2063 = vunpack.c.l.b16 %v1403
    %v2064 = vunpack.c.l.b16 %v1417
    %v2065 = vunpack.c.l.b16 %v1427
    %v2066 = vunpack.c.l.b16 %v1441
    %v2067 = vunpack.c.l.b16 %v1451
    %v2068 = vunpack.c.l.b16 %v1465
    %v2069 = vunpack.c.l.b16 %v1475
    %v2070 = vunpack.c.l.b16 %v1489
    %v2071 = vunpack.c.l.b16 %v1499
    %v2072 = vunpack.c.l.b16 %v1513
    %v2073 = vunpack.c.l.b16 %v1523
    %v2074 = vunpack.c.l.b16 %v1537
    %v2075 = vunpack.c.l.b16 %v1547
    %v2076 = vunpack.c.l.b16 %v1561
    %v2077 = vunpack.c.l.b16 %v1571
    %v2078 = vunpack.c.l.b16 %v1585
    %v2079 = vunpack.c.l.b16 %v1595
    %v2080 = vunpack.c.l.b16 %v1609
    %v2081 = vunpack.c.l.b16 %v1619
    %v2082 = vunpack.c.l.b16 %v1633
    %v2083 = vunpack.c.l.b16 %v1643
    %v2084 = vunpack.c.l.b16 %v1657
    %v2085 = vunpack.c.l.b16 %v1667
    %v2086 = vunpack.c.l.b16 %v1681
    %v2087 = vunpack.c.l.b16 %v1691
    %v2088 = vunpack.c.l.b16 %v1705
    %v2089 = vunpack.c.l.b16 %v1715
    %v2090 = vunpack.c.l.b16 %v1729
    %v2091 = vunpack.c.l.b16 %v1739
    %v2092 = vunpack.c.l.b16 %v1753
    %v2093 = vunpack.c.l.b16 %v1763
    %v2094 = vunpack.c.l.b16 %v1777
    %v2095 = vunpack.c.l.b16 %v1787
    %v2096 = vunpack.c.l.b16 %v1801
    %v2097 = vunpack.c.l.b16 %v1811
    %v2098 = vunpack.c.l.b16 %v1825
    %v2099 = vunpack.c.l.b16 %v1835
    %v2100 = vunpack.c.l.b16 %v1849
    %v2101 = vunpack.c.l.b16 %v1859
    %v2102 = vunpack.c.l.b16 %v1873
    %v2103 = vunpack.c.l.b16 %v1883
    %v2104 = vunpack.c.l.b16 %v1897
    %v2105 = vunpack.c.l.b16 %v1907
    %v2106 = vunpack.c.l.b16 %v1921
    %v2107 = vunpack.c.l.b16 %v1931
    %v2108 = vunpack.c.l.b16 %v1945
    %v2109 = vunpack.c.l.b16 %v1955
    %v2110 = vunpack.c.l.b16 %v1969
    %v2111 = vunpack.c.l.b16 %v1979
    %v2112 = vunpack.c.l.b16 %v1993
    %v2113 = vunpack.c.l.b16 %v2003
    %v2114 = vunpack.c.l.b16 %v2017
    %v2115 = vunpack.c.l.b16 %v2027
    %v2116 = vunpack.c.l.b16 %v2041
    %v2117 = vunpack.c.l.b16 %v2051
    %v2118 = vpack.c.b16 %v2055, %v2054
    %v2119 = vpack.c.b16 %v2057, %v2056
    %v2120 = vpack.c.b16 %v2059, %v2058
    %v2121 = vpack.c.b16 %v2061, %v2060
    %v2122 = vpack.c.b16 %v2063, %v2062
    %v2123 = vpack.c.b16 %v2065, %v2064
    %v2124 = vpack.c.b16 %v2067, %v2066
    %v2125 = vpack.c.b16 %v2069, %v2068
    %v2126 = vpack.c.b16 %v2071, %v2070
    %v2127 = vpack.c.b16 %v2073, %v2072
    %v2128 = vpack.c.b16 %v2075, %v2074
    %v2129 = vpack.c.b16 %v2077, %v2076
    %v2130 = vpack.c.b16 %v2079, %v2078
    %v2131 = vpack.c.b16 %v2081, %v2080
    %v2132 = vpack.c.b16 %v2083, %v2082
    %v2133 = vpack.c.b16 %v2085, %v2084
    %v2134 = vpack.c.b16 %v2087, %v2086
    %v2135 = vpack.c.b16 %v2089, %v2088
    %v2136 = vpack.c.b16 %v2091, %v2090
    %v2137 = vpack.c.b16 %v2093, %v2092
    %v2138 = vpack.c.b16 %v2095, %v2094
    %v2139 = vpack.c.b16 %v2097, %v2096
    %v2140 = vpack.c.b16 %v2099, %v2098
    %v2141 = vpack.c.b16 %v2101, %v2100
    %v2142 = vpack.c.b16 %v2103, %v2102
    %v2143 = vpack.c.b16 %v2105, %v2104
    %v2144 = vpack.c.b16 %v2107, %v2106
    %v2145 = vpack.c.b16 %v2109, %v2108
    %v2146 = vpack.c.b16 %v2111, %v2110
    %v2147 = vpack.c.b16 %v2113, %v2112
    %v2148 = vpack.c.b16 %v2115, %v2114
    %v2149 = vpack.c.b16 %v2117, %v2116
    %vm2150 = vcmask 31744
    %v2152 = vsel %vm2150, %v2118, 0
    %v2155 = vsel %vm2150, %v2119, 0
    %v2158 = vsel %vm2150, %v2120, 0
    %v2161 = vsel %vm2150, %v2121, 0
    %v2164 = vsel %vm2150, %v2122, 0
    %v2167 = vsel %vm2150, %v2123, 0
    %v2170 = vsel %vm2150, %v2124, 0
    %v2173 = vsel %vm2150, %v2125, 0
    %v2176 = vsel %vm2150, %v2126, 0
    %v2179 = vsel %vm2150, %v2127, 0
    %v2182 = vsel %vm2150, %v2128, 0
    %v2185 = vsel %vm2150, %v2129, 0
    %v2188 = vsel %vm2150, %v2130, 0
    %v2191 = vsel %vm2150, %v2131, 0
    %v2194 = vsel %vm2150, %v2132, 0
    %v2197 = vsel %vm2150, %v2133, 0
    %v2200 = vsel %vm2150, %v2134, 0
    %v2203 = vsel %vm2150, %v2135, 0
    %v2206 = vsel %vm2150, %v2136, 0
    %v2209 = vsel %vm2150, %v2137, 0
    %v2212 = vsel %vm2150, %v2138, 0
    %v2215 = vsel %vm2150, %v2139, 0
    %v2218 = vsel %vm2150, %v2140, 0
    %v2221 = vsel %vm2150, %v2141, 0
    %v2224 = vsel %vm2150, %v2142, 0
    %v2227 = vsel %vm2150, %v2143, 0
    %v2230 = vsel %vm2150, %v2144, 0
    %v2233 = vsel %vm2150, %v2145, 0
    %v2236 = vsel %vm2150, %v2146, 0
    %v2239 = vsel %vm2150, %v2147, 0
    %v2242 = vsel %vm2150, %v2148, 0
    %v2245 = vsel %vm2150, %v2149, 0
    %vm2247 = vcmask 1041408
    %v2249 = vsel %vm2247, %v2053, 0
    %2251 = vmatpush.bf16.msra.mxu0 0
    %2252 = vmatpush.bf16.msra.mxu0 0
    %2253 = vmatpush.bf16.msra.mxu0 0
    %2254 = vmatpush.bf16.msra.mxu0 0
    %2255 = vmatpush.bf16.msra.mxu0 0
    %2256 = vmatpush.bf16.msra.mxu0 0
    %2257 = vmatpush.bf16.msra.mxu0 0
    %2258 = vmatpush.bf16.msra.mxu0 %v2249
    %2259 = vmatmul.bf16.gmra.mxu0 %v2152
    %v2260 = vpop.f32.mrf.mxu0
    %v2261 = vadd.f32 0.0, %v2260
    %v2262 = vpop.f32.mrf.mxu0
    %v2263 = vadd.f32 0.0, %v2262
    %2264 = vmatmul.bf16.gmra.mxu0 %v2155
    %v2265 = vpop.f32.mrf.mxu0
    %v2266 = vadd.f32 0.0, %v2265
    %v2267 = vpop.f32.mrf.mxu0
    %v2268 = vadd.f32 0.0, %v2267
    %2269 = vmatmul.bf16.gmra.mxu0 %v2158
    %v2270 = vpop.f32.mrf.mxu0
    %v2271 = vadd.f32 0.0, %v2270
    %v2272 = vpop.f32.mrf.mxu0
    %v2273 = vadd.f32 0.0, %v2272
    %2274 = vmatmul.bf16.gmra.mxu0 %v2161
    %v2275 = vpop.f32.mrf.mxu0
    %v2276 = vadd.f32 0.0, %v2275
    %v2277 = vpop.f32.mrf.mxu0
    %v2278 = vadd.f32 0.0, %v2277
    %2279 = vmatmul.bf16.gmra.mxu0 %v2164
    %v2280 = vpop.f32.mrf.mxu0
    %v2281 = vadd.f32 0.0, %v2280
    %v2282 = vpop.f32.mrf.mxu0
    %v2283 = vadd.f32 0.0, %v2282
    %2284 = vmatmul.bf16.gmra.mxu0 %v2167
    %v2285 = vpop.f32.mrf.mxu0
    %v2286 = vadd.f32 0.0, %v2285
    %v2287 = vpop.f32.mrf.mxu0
    %v2288 = vadd.f32 0.0, %v2287
    %2289 = vmatmul.bf16.gmra.mxu0 %v2170
    %v2290 = vpop.f32.mrf.mxu0
    %v2291 = vadd.f32 0.0, %v2290
    %v2292 = vpop.f32.mrf.mxu0
    %v2293 = vadd.f32 0.0, %v2292
    %2294 = vmatmul.bf16.gmra.mxu0 %v2173
    %v2295 = vpop.f32.mrf.mxu0
    %v2296 = vadd.f32 0.0, %v2295
    %v2297 = vpop.f32.mrf.mxu0
    %v2298 = vadd.f32 0.0, %v2297
    %2299 = vmatmul.bf16.gmra.mxu0 %v2176
    %v2300 = vpop.f32.mrf.mxu0
    %v2301 = vadd.f32 0.0, %v2300
    %v2302 = vpop.f32.mrf.mxu0
    %v2303 = vadd.f32 0.0, %v2302
    %2304 = vmatmul.bf16.gmra.mxu0 %v2179
    %v2305 = vpop.f32.mrf.mxu0
    %v2306 = vadd.f32 0.0, %v2305
    %v2307 = vpop.f32.mrf.mxu0
    %v2308 = vadd.f32 0.0, %v2307
    %2309 = vmatmul.bf16.gmra.mxu0 %v2182
    %v2310 = vpop.f32.mrf.mxu0
    %v2311 = vadd.f32 0.0, %v2310
    %v2312 = vpop.f32.mrf.mxu0
    %v2313 = vadd.f32 0.0, %v2312
    %2314 = vmatmul.bf16.gmra.mxu0 %v2185
    %v2315 = vpop.f32.mrf.mxu0
    %v2316 = vadd.f32 0.0, %v2315
    %v2317 = vpop.f32.mrf.mxu0
    %v2318 = vadd.f32 0.0, %v2317
    %2319 = vmatmul.bf16.gmra.mxu0 %v2188
    %v2320 = vpop.f32.mrf.mxu0
    %v2321 = vadd.f32 0.0, %v2320
    %v2322 = vpop.f32.mrf.mxu0
    %v2323 = vadd.f32 0.0, %v2322
    %2324 = vmatmul.bf16.gmra.mxu0 %v2191
    %v2325 = vpop.f32.mrf.mxu0
    %v2326 = vadd.f32 0.0, %v2325
    %v2327 = vpop.f32.mrf.mxu0
    %v2328 = vadd.f32 0.0, %v2327
    %2329 = vmatmul.bf16.gmra.mxu0 %v2194
    %v2330 = vpop.f32.mrf.mxu0
    %v2331 = vadd.f32 0.0, %v2330
    %v2332 = vpop.f32.mrf.mxu0
    %v2333 = vadd.f32 0.0, %v2332
    %2334 = vmatmul.bf16.gmra.mxu0 %v2197
    %v2335 = vpop.f32.mrf.mxu0
    %v2336 = vadd.f32 0.0, %v2335
    %v2337 = vpop.f32.mrf.mxu0
    %v2338 = vadd.f32 0.0, %v2337
    %2339 = vmatmul.bf16.gmra.mxu0 %v2200
    %v2340 = vpop.f32.mrf.mxu0
    %v2341 = vadd.f32 0.0, %v2340
    %v2342 = vpop.f32.mrf.mxu0
    %v2343 = vadd.f32 0.0, %v2342
    %2344 = vmatmul.bf16.gmra.mxu0 %v2203
    %v2345 = vpop.f32.mrf.mxu0
    %v2346 = vadd.f32 0.0, %v2345
    %v2347 = vpop.f32.mrf.mxu0
    %v2348 = vadd.f32 0.0, %v2347
    %2349 = vmatmul.bf16.gmra.mxu0 %v2206
    %v2350 = vpop.f32.mrf.mxu0
    %v2351 = vadd.f32 0.0, %v2350
    %v2352 = vpop.f32.mrf.mxu0
    %v2353 = vadd.f32 0.0, %v2352
    %2354 = vmatmul.bf16.gmra.mxu0 %v2209
    %v2355 = vpop.f32.mrf.mxu0
    %v2356 = vadd.f32 0.0, %v2355
    %v2357 = vpop.f32.mrf.mxu0
    %v2358 = vadd.f32 0.0, %v2357
    %2359 = vmatmul.bf16.gmra.mxu0 %v2212
    %v2360 = vpop.f32.mrf.mxu0
    %v2361 = vadd.f32 0.0, %v2360
    %v2362 = vpop.f32.mrf.mxu0
    %v2363 = vadd.f32 0.0, %v2362
    %2364 = vmatmul.bf16.gmra.mxu0 %v2215
    %v2365 = vpop.f32.mrf.mxu0
    %v2366 = vadd.f32 0.0, %v2365
    %v2367 = vpop.f32.mrf.mxu0
    %v2368 = vadd.f32 0.0, %v2367
    %2369 = vmatmul.bf16.gmra.mxu0 %v2218
    %v2370 = vpop.f32.mrf.mxu0
    %v2371 = vadd.f32 0.0, %v2370
    %v2372 = vpop.f32.mrf.mxu0
    %v2373 = vadd.f32 0.0, %v2372
    %2374 = vmatmul.bf16.gmra.mxu0 %v2221
    %v2375 = vpop.f32.mrf.mxu0
    %v2376 = vadd.f32 0.0, %v2375
    %v2377 = vpop.f32.mrf.mxu0
    %v2378 = vadd.f32 0.0, %v2377
    %2379 = vmatmul.bf16.gmra.mxu0 %v2224
    %v2380 = vpop.f32.mrf.mxu0
    %v2381 = vadd.f32 0.0, %v2380
    %v2382 = vpop.f32.mrf.mxu0
    %v2383 = vadd.f32 0.0, %v2382
    %2384 = vmatmul.bf16.gmra.mxu0 %v2227
    %v2385 = vpop.f32.mrf.mxu0
    %v2386 = vadd.f32 0.0, %v2385
    %v2387 = vpop.f32.mrf.mxu0
    %v2388 = vadd.f32 0.0, %v2387
    %2389 = vmatmul.bf16.gmra.mxu0 %v2230
    %v2390 = vpop.f32.mrf.mxu0
    %v2391 = vadd.f32 0.0, %v2390
    %v2392 = vpop.f32.mrf.mxu0
    %v2393 = vadd.f32 0.0, %v2392
    %2394 = vmatmul.bf16.gmra.mxu0 %v2233
    %v2395 = vpop.f32.mrf.mxu0
    %v2396 = vadd.f32 0.0, %v2395
    %v2397 = vpop.f32.mrf.mxu0
    %v2398 = vadd.f32 0.0, %v2397
    %2399 = vmatmul.bf16.gmra.mxu0 %v2236
    %v2400 = vpop.f32.mrf.mxu0
    %v2401 = vadd.f32 0.0, %v2400
    %v2402 = vpop.f32.mrf.mxu0
    %v2403 = vadd.f32 0.0, %v2402
    %2404 = vmatmul.bf16.gmra.mxu0 %v2239
    %v2405 = vpop.f32.mrf.mxu0
    %v2406 = vadd.f32 0.0, %v2405
    %v2407 = vpop.f32.mrf.mxu0
    %v2408 = vadd.f32 0.0, %v2407
    %2409 = vmatmul.bf16.gmra.mxu0 %v2242
    %v2410 = vpop.f32.mrf.mxu0
    %v2411 = vadd.f32 0.0, %v2410
    %v2412 = vpop.f32.mrf.mxu0
    %v2413 = vadd.f32 0.0, %v2412
    %2414 = vmatmul.bf16.gmra.mxu0 %v2245
    %v2415 = vpop.f32.mrf.mxu0
    %v2416 = vadd.f32 0.0, %v2415
    %v2417 = vpop.f32.mrf.mxu0
    %v2418 = vadd.f32 0.0, %v2417
    %2419 = vdwg.mxu0
    %v2484 = vunpack.c.l.b16 %v1184
    %v2485 = vunpack.c.l.b16 %v1185
    %v2486 = vunpack.c.l.b16 %v1186
    %v2487 = vunpack.c.l.b16 %v1187
    %v2488 = vunpack.c.l.b16 %v1188
    %v2489 = vunpack.c.l.b16 %v1189
    %v2490 = vunpack.c.l.b16 %v1190
    %v2491 = vunpack.c.l.b16 %v1191
    %v2492 = vunpack.c.l.b16 %v1192
    %v2493 = vunpack.c.l.b16 %v1193
    %v2494 = vunpack.c.l.b16 %v1194
    %v2495 = vunpack.c.l.b16 %v1195
    %v2496 = vunpack.c.l.b16 %v1196
    %v2497 = vunpack.c.l.b16 %v1197
    %v2498 = vunpack.c.l.b16 %v1198
    %v2499 = vunpack.c.l.b16 %v1199
    %v2500 = vunpack.c.l.b16 %v1200
    %v2501 = vunpack.c.l.b16 %v1201
    %v2502 = vunpack.c.l.b16 %v1202
    %v2503 = vunpack.c.l.b16 %v1203
    %v2504 = vunpack.c.l.b16 %v1204
    %v2505 = vunpack.c.l.b16 %v1205
    %v2506 = vunpack.c.l.b16 %v1206
    %v2507 = vunpack.c.l.b16 %v1207
    %v2508 = vunpack.c.l.b16 %v1208
    %v2509 = vunpack.c.l.b16 %v1209
    %v2510 = vunpack.c.l.b16 %v1210
    %v2511 = vunpack.c.l.b16 %v1211
    %v2512 = vunpack.c.l.b16 %v1212
    %v2513 = vunpack.c.l.b16 %v1213
    %v2514 = vunpack.c.l.b16 %v1214
    %v2515 = vunpack.c.l.b16 %v1215
    %v2516 = vunpack.c.l.b16 %v1216
    %v2517 = vunpack.c.l.b16 %v1217
    %v2518 = vunpack.c.l.b16 %v1218
    %v2519 = vunpack.c.l.b16 %v1219
    %v2520 = vunpack.c.l.b16 %v1220
    %v2521 = vunpack.c.l.b16 %v1221
    %v2522 = vunpack.c.l.b16 %v1222
    %v2523 = vunpack.c.l.b16 %v1223
    %v2524 = vunpack.c.l.b16 %v1224
    %v2525 = vunpack.c.l.b16 %v1225
    %v2526 = vunpack.c.l.b16 %v1226
    %v2527 = vunpack.c.l.b16 %v1227
    %v2528 = vunpack.c.l.b16 %v1228
    %v2529 = vunpack.c.l.b16 %v1229
    %v2530 = vunpack.c.l.b16 %v1230
    %v2531 = vunpack.c.l.b16 %v1231
    %v2532 = vunpack.c.l.b16 %v1232
    %v2533 = vunpack.c.l.b16 %v1233
    %v2534 = vunpack.c.l.b16 %v1234
    %v2535 = vunpack.c.l.b16 %v1235
    %v2536 = vunpack.c.l.b16 %v1236
    %v2537 = vunpack.c.l.b16 %v1237
    %v2538 = vunpack.c.l.b16 %v1238
    %v2539 = vunpack.c.l.b16 %v1239
    %v2540 = vunpack.c.l.b16 %v1240
    %v2541 = vunpack.c.l.b16 %v1241
    %v2542 = vunpack.c.l.b16 %v1242
    %v2543 = vunpack.c.l.b16 %v1243
    %v2544 = vunpack.c.l.b16 %v1244
    %v2545 = vunpack.c.l.b16 %v1245
    %v2546 = vunpack.c.l.b16 %v1246
    %v2547 = vunpack.c.l.b16 %v1247
    %v2548 = vpack.c.b16 %v2485, %v2484
    %v2549 = vpack.c.b16 %v2487, %v2486
    %v2550 = vpack.c.b16 %v2489, %v2488
    %v2551 = vpack.c.b16 %v2491, %v2490
    %v2552 = vpack.c.b16 %v2493, %v2492
    %v2553 = vpack.c.b16 %v2495, %v2494
    %v2554 = vpack.c.b16 %v2497, %v2496
    %v2555 = vpack.c.b16 %v2499, %v2498
    %v2556 = vpack.c.b16 %v2501, %v2500
    %v2557 = vpack.c.b16 %v2503, %v2502
    %v2558 = vpack.c.b16 %v2505, %v2504
    %v2559 = vpack.c.b16 %v2507, %v2506
    %v2560 = vpack.c.b16 %v2509, %v2508
    %v2561 = vpack.c.b16 %v2511, %v2510
    %v2562 = vpack.c.b16 %v2513, %v2512
    %v2563 = vpack.c.b16 %v2515, %v2514
    %v2564 = vpack.c.b16 %v2517, %v2516
    %v2565 = vpack.c.b16 %v2519, %v2518
    %v2566 = vpack.c.b16 %v2521, %v2520
    %v2567 = vpack.c.b16 %v2523, %v2522
    %v2568 = vpack.c.b16 %v2525, %v2524
    %v2569 = vpack.c.b16 %v2527, %v2526
    %v2570 = vpack.c.b16 %v2529, %v2528
    %v2571 = vpack.c.b16 %v2531, %v2530
    %v2572 = vpack.c.b16 %v2533, %v2532
    %v2573 = vpack.c.b16 %v2535, %v2534
    %v2574 = vpack.c.b16 %v2537, %v2536
    %v2575 = vpack.c.b16 %v2539, %v2538
    %v2576 = vpack.c.b16 %v2541, %v2540
    %v2577 = vpack.c.b16 %v2543, %v2542
    %v2578 = vpack.c.b16 %v2545, %v2544
    %v2579 = vpack.c.b16 %v2547, %v2546
    %v2581 = vsel %vm2150, %v2548, 0
    %v2584 = vsel %vm2150, %v2549, 0
    %v2587 = vsel %vm2150, %v2550, 0
    %v2590 = vsel %vm2150, %v2551, 0
    %v2593 = vsel %vm2150, %v2552, 0
    %v2596 = vsel %vm2150, %v2553, 0
    %v2599 = vsel %vm2150, %v2554, 0
    %v2602 = vsel %vm2150, %v2555, 0
    %v2605 = vsel %vm2150, %v2556, 0
    %v2608 = vsel %vm2150, %v2557, 0
    %v2611 = vsel %vm2150, %v2558, 0
    %v2614 = vsel %vm2150, %v2559, 0
    %v2617 = vsel %vm2150, %v2560, 0
    %v2620 = vsel %vm2150, %v2561, 0
    %v2623 = vsel %vm2150, %v2562, 0
    %v2626 = vsel %vm2150, %v2563, 0
    %v2629 = vsel %vm2150, %v2564, 0
    %v2632 = vsel %vm2150, %v2565, 0
    %v2635 = vsel %vm2150, %v2566, 0
    %v2638 = vsel %vm2150, %v2567, 0
    %v2641 = vsel %vm2150, %v2568, 0
    %v2644 = vsel %vm2150, %v2569, 0
    %v2647 = vsel %vm2150, %v2570, 0
    %v2650 = vsel %vm2150, %v2571, 0
    %v2653 = vsel %vm2150, %v2572, 0
    %v2656 = vsel %vm2150, %v2573, 0
    %v2659 = vsel %vm2150, %v2574, 0
    %v2662 = vsel %vm2150, %v2575, 0
    %v2665 = vsel %vm2150, %v2576, 0
    %v2668 = vsel %vm2150, %v2577, 0
    %v2671 = vsel %vm2150, %v2578, 0
    %v2674 = vsel %vm2150, %v2579, 0
    %v2677 = vsel %vm2247, %v1248, 0
    %2679 = vmatpush.bf16.msra.mxu0 0
    %2680 = vmatpush.bf16.msra.mxu0 0
    %2681 = vmatpush.bf16.msra.mxu0 0
    %2682 = vmatpush.bf16.msra.mxu0 0
    %2683 = vmatpush.bf16.msra.mxu0 0
    %2684 = vmatpush.bf16.msra.mxu0 0
    %2685 = vmatpush.bf16.msra.mxu0 0
    %2686 = vmatpush.bf16.msra.mxu0 %v2677
    %2687 = vmatmul.bf16.gmra.mxu0 %v2581
    %v2688 = vpop.f32.mrf.mxu0
    %v2689 = vadd.f32 %v2261, %v2688
    %v2690 = vpop.f32.mrf.mxu0
    %v2691 = vadd.f32 %v2263, %v2690
    %2692 = vmatmul.bf16.gmra.mxu0 %v2584
    %v2693 = vpop.f32.mrf.mxu0
    %v2694 = vadd.f32 %v2266, %v2693
    %v2695 = vpop.f32.mrf.mxu0
    %v2696 = vadd.f32 %v2268, %v2695
    %2697 = vmatmul.bf16.gmra.mxu0 %v2587
    %v2698 = vpop.f32.mrf.mxu0
    %v2699 = vadd.f32 %v2271, %v2698
    %v2700 = vpop.f32.mrf.mxu0
    %v2701 = vadd.f32 %v2273, %v2700
    %2702 = vmatmul.bf16.gmra.mxu0 %v2590
    %v2703 = vpop.f32.mrf.mxu0
    %v2704 = vadd.f32 %v2276, %v2703
    %v2705 = vpop.f32.mrf.mxu0
    %v2706 = vadd.f32 %v2278, %v2705
    %2707 = vmatmul.bf16.gmra.mxu0 %v2593
    %v2708 = vpop.f32.mrf.mxu0
    %v2709 = vadd.f32 %v2281, %v2708
    %v2710 = vpop.f32.mrf.mxu0
    %v2711 = vadd.f32 %v2283, %v2710
    %2712 = vmatmul.bf16.gmra.mxu0 %v2596
    %v2713 = vpop.f32.mrf.mxu0
    %v2714 = vadd.f32 %v2286, %v2713
    %v2715 = vpop.f32.mrf.mxu0
    %v2716 = vadd.f32 %v2288, %v2715
    %2717 = vmatmul.bf16.gmra.mxu0 %v2599
    %v2718 = vpop.f32.mrf.mxu0
    %v2719 = vadd.f32 %v2291, %v2718
    %v2720 = vpop.f32.mrf.mxu0
    %v2721 = vadd.f32 %v2293, %v2720
    %2722 = vmatmul.bf16.gmra.mxu0 %v2602
    %v2723 = vpop.f32.mrf.mxu0
    %v2724 = vadd.f32 %v2296, %v2723
    %v2725 = vpop.f32.mrf.mxu0
    %v2726 = vadd.f32 %v2298, %v2725
    %2727 = vmatmul.bf16.gmra.mxu0 %v2605
    %v2728 = vpop.f32.mrf.mxu0
    %v2729 = vadd.f32 %v2301, %v2728
    %v2730 = vpop.f32.mrf.mxu0
    %v2731 = vadd.f32 %v2303, %v2730
    %2732 = vmatmul.bf16.gmra.mxu0 %v2608
    %v2733 = vpop.f32.mrf.mxu0
    %v2734 = vadd.f32 %v2306, %v2733
    %v2735 = vpop.f32.mrf.mxu0
    %v2736 = vadd.f32 %v2308, %v2735
    %2737 = vmatmul.bf16.gmra.mxu0 %v2611
    %v2738 = vpop.f32.mrf.mxu0
    %v2739 = vadd.f32 %v2311, %v2738
    %v2740 = vpop.f32.mrf.mxu0
    %v2741 = vadd.f32 %v2313, %v2740
    %2742 = vmatmul.bf16.gmra.mxu0 %v2614
    %v2743 = vpop.f32.mrf.mxu0
    %v2744 = vadd.f32 %v2316, %v2743
    %v2745 = vpop.f32.mrf.mxu0
    %v2746 = vadd.f32 %v2318, %v2745
    %2747 = vmatmul.bf16.gmra.mxu0 %v2617
    %v2748 = vpop.f32.mrf.mxu0
    %v2749 = vadd.f32 %v2321, %v2748
    %v2750 = vpop.f32.mrf.mxu0
    %v2751 = vadd.f32 %v2323, %v2750
    %2752 = vmatmul.bf16.gmra.mxu0 %v2620
    %v2753 = vpop.f32.mrf.mxu0
    %v2754 = vadd.f32 %v2326, %v2753
    %v2755 = vpop.f32.mrf.mxu0
    %v2756 = vadd.f32 %v2328, %v2755
    %2757 = vmatmul.bf16.gmra.mxu0 %v2623
    %v2758 = vpop.f32.mrf.mxu0
    %v2759 = vadd.f32 %v2331, %v2758
    %v2760 = vpop.f32.mrf.mxu0
    %v2761 = vadd.f32 %v2333, %v2760
    %2762 = vmatmul.bf16.gmra.mxu0 %v2626
    %v2763 = vpop.f32.mrf.mxu0
    %v2764 = vadd.f32 %v2336, %v2763
    %v2765 = vpop.f32.mrf.mxu0
    %v2766 = vadd.f32 %v2338, %v2765
    %2767 = vmatmul.bf16.gmra.mxu0 %v2629
    %v2768 = vpop.f32.mrf.mxu0
    %v2769 = vadd.f32 %v2341, %v2768
    %v2770 = vpop.f32.mrf.mxu0
    %v2771 = vadd.f32 %v2343, %v2770
    %2772 = vmatmul.bf16.gmra.mxu0 %v2632
    %v2773 = vpop.f32.mrf.mxu0
    %v2774 = vadd.f32 %v2346, %v2773
    %v2775 = vpop.f32.mrf.mxu0
    %v2776 = vadd.f32 %v2348, %v2775
    %2777 = vmatmul.bf16.gmra.mxu0 %v2635
    %v2778 = vpop.f32.mrf.mxu0
    %v2779 = vadd.f32 %v2351, %v2778
    %v2780 = vpop.f32.mrf.mxu0
    %v2781 = vadd.f32 %v2353, %v2780
    %2782 = vmatmul.bf16.gmra.mxu0 %v2638
    %v2783 = vpop.f32.mrf.mxu0
    %v2784 = vadd.f32 %v2356, %v2783
    %v2785 = vpop.f32.mrf.mxu0
    %v2786 = vadd.f32 %v2358, %v2785
    %2787 = vmatmul.bf16.gmra.mxu0 %v2641
    %v2788 = vpop.f32.mrf.mxu0
    %v2789 = vadd.f32 %v2361, %v2788
    %v2790 = vpop.f32.mrf.mxu0
    %v2791 = vadd.f32 %v2363, %v2790
    %2792 = vmatmul.bf16.gmra.mxu0 %v2644
    %v2793 = vpop.f32.mrf.mxu0
    %v2794 = vadd.f32 %v2366, %v2793
    %v2795 = vpop.f32.mrf.mxu0
    %v2796 = vadd.f32 %v2368, %v2795
    %2797 = vmatmul.bf16.gmra.mxu0 %v2647
    %v2798 = vpop.f32.mrf.mxu0
    %v2799 = vadd.f32 %v2371, %v2798
    %v2800 = vpop.f32.mrf.mxu0
    %v2801 = vadd.f32 %v2373, %v2800
    %2802 = vmatmul.bf16.gmra.mxu0 %v2650
    %v2803 = vpop.f32.mrf.mxu0
    %v2804 = vadd.f32 %v2376, %v2803
    %v2805 = vpop.f32.mrf.mxu0
    %v2806 = vadd.f32 %v2378, %v2805
    %2807 = vmatmul.bf16.gmra.mxu0 %v2653
    %v2808 = vpop.f32.mrf.mxu0
    %v2809 = vadd.f32 %v2381, %v2808
    %v2810 = vpop.f32.mrf.mxu0
    %v2811 = vadd.f32 %v2383, %v2810
    %2812 = vmatmul.bf16.gmra.mxu0 %v2656
    %v2813 = vpop.f32.mrf.mxu0
    %v2814 = vadd.f32 %v2386, %v2813
    %v2815 = vpop.f32.mrf.mxu0
    %v2816 = vadd.f32 %v2388, %v2815
    %2817 = vmatmul.bf16.gmra.mxu0 %v2659
    %v2818 = vpop.f32.mrf.mxu0
    %v2819 = vadd.f32 %v2391, %v2818
    %v2820 = vpop.f32.mrf.mxu0
    %v2821 = vadd.f32 %v2393, %v2820
    %2822 = vmatmul.bf16.gmra.mxu0 %v2662
    %v2823 = vpop.f32.mrf.mxu0
    %v2824 = vadd.f32 %v2396, %v2823
    %v2825 = vpop.f32.mrf.mxu0
    %v2826 = vadd.f32 %v2398, %v2825
    %2827 = vmatmul.bf16.gmra.mxu0 %v2665
    %v2828 = vpop.f32.mrf.mxu0
    %v2829 = vadd.f32 %v2401, %v2828
    %v2830 = vpop.f32.mrf.mxu0
    %v2831 = vadd.f32 %v2403, %v2830
    %2832 = vmatmul.bf16.gmra.mxu0 %v2668
    %v2833 = vpop.f32.mrf.mxu0
    %v2834 = vadd.f32 %v2406, %v2833
    %v2835 = vpop.f32.mrf.mxu0
    %v2836 = vadd.f32 %v2408, %v2835
    %2837 = vmatmul.bf16.gmra.mxu0 %v2671
    %v2838 = vpop.f32.mrf.mxu0
    %v2839 = vadd.f32 %v2411, %v2838
    %v2840 = vpop.f32.mrf.mxu0
    %v2841 = vadd.f32 %v2413, %v2840
    %2842 = vmatmul.bf16.gmra.mxu0 %v2674
    %v2843 = vpop.f32.mrf.mxu0
    %v2844 = vadd.f32 %v2416, %v2843
    %v2845 = vpop.f32.mrf.mxu0
    %v2846 = vadd.f32 %v2418, %v2845
    %2847 = vdwg.mxu0
    %v2848 = vld [vmem:[#allocation2] sm:$0xe]
    %v2849 = vld [vmem:[#allocation2 + $0xc] sm:$0xe]
    %v2850 = vld [vmem:[#allocation2 + $0x18] sm:$0xe]
    %v2851 = vld [vmem:[#allocation2 + $0x24] sm:$0xe]
    %v2852 = vld [vmem:[#allocation2 + $0x30] sm:$0xe]
    %v2853 = vld [vmem:[#allocation2 + $0x3c] sm:$0xe]
    %v2854 = vld [vmem:[#allocation2 + $0x48] sm:$0xe]
    %v2855 = vld [vmem:[#allocation2 + $0x54] sm:$0xe]
    %v2856 = vld [vmem:[#allocation2 + $0x60] sm:$0xe]
    %v2857 = vld [vmem:[#allocation2 + $0x6c] sm:$0xe]
    %v2858 = vld [vmem:[#allocation2 + $0x78] sm:$0xe]
    %v2859 = vld [vmem:[#allocation2 + $0x84] sm:$0xe]
    %v2860 = vld [vmem:[#allocation2 + $0x90] sm:$0xe]
    %v2861 = vld [vmem:[#allocation2 + $0x9c] sm:$0xe]
    %v2862 = vld [vmem:[#allocation2 + $0xa8] sm:$0xe]
    %v2863 = vld [vmem:[#allocation2 + $0xb4] sm:$0xe]
    %v2864 = vld [vmem:[#allocation2 + $0xd8] sm:$0xe]
    %v2865 = vld [vmem:[#allocation2 + $0xe4] sm:$0xe]
    %v2866 = vld [vmem:[#allocation2 + $0xf0] sm:$0xe]
    %v2867 = vld [vmem:[#allocation2 + $0xfc] sm:$0xe]
    %v2868 = vld [vmem:[#allocation2 + $0x108] sm:$0xe]
    %v2869 = vld [vmem:[#allocation2 + $0x114] sm:$0xe]
    %v2870 = vld [vmem:[#allocation2 + $0x120] sm:$0xe]
    %v2871 = vld [vmem:[#allocation2 + $0x12c] sm:$0xe]
    %v2872 = vld [vmem:[#allocation2 + $0x138] sm:$0xe]
    %v2873 = vld [vmem:[#allocation2 + $0x144] sm:$0xe]
    %v2874 = vld [vmem:[#allocation2 + $0x150] sm:$0xe]
    %v2875 = vld [vmem:[#allocation2 + $0x15c] sm:$0xe]
    %v2876 = vld [vmem:[#allocation2 + $0x168] sm:$0xe]
    %v2877 = vld [vmem:[#allocation2 + $0x174] sm:$0xe]
    %v2878 = vld [vmem:[#allocation2 + $0x180] sm:$0xe]
    %v2879 = vld [vmem:[#allocation2 + $0x18c] sm:$0xe]
    %vm2944 = vcmask 1042432
    %vm2945 = vcmask 1046532
    %vm2946 = vmor %vm2944, %vm2945
    %v2947 = vrot.slane %v2848, 5
    %v2948 = vrot.slane %v2947, 4
    %v2949 = vrot.slane %v1185, 5
    %v2950 = vsel %vm2946, %v2948, %v2949
    %v2951 = vrot.slane %v2949, 4
    %v2952 = vrot.slane %v1249, 5
    %v2953 = vsel %vm2946, %v2951, %v2952
    %v2954 = vrot.slane %v2849, 5
    %v2955 = vrot.slane %v2954, 4
    %v2956 = vrot.slane %v1187, 5
    %v2957 = vsel %vm2946, %v2955, %v2956
    %v2958 = vrot.slane %v2956, 4
    %v2959 = vrot.slane %v1250, 5
    %v2960 = vsel %vm2946, %v2958, %v2959
    %v2961 = vrot.slane %v2850, 5
    %v2962 = vrot.slane %v2961, 4
    %v2963 = vrot.slane %v1189, 5
    %v2964 = vsel %vm2946, %v2962, %v2963
    %v2965 = vrot.slane %v2963, 4
    %v2966 = vrot.slane %v1251, 5
    %v2967 = vsel %vm2946, %v2965, %v2966
    %v2968 = vrot.slane %v2851, 5
    %v2969 = vrot.slane %v2968, 4
    %v2970 = vrot.slane %v1191, 5
    %v2971 = vsel %vm2946, %v2969, %v2970
    %v2972 = vrot.slane %v2970, 4
    %v2973 = vrot.slane %v1252, 5
    %v2974 = vsel %vm2946, %v2972, %v2973
    %v2975 = vrot.slane %v2852, 5
    %v2976 = vrot.slane %v2975, 4
    %v2977 = vrot.slane %v1193, 5
    %v2978 = vsel %vm2946, %v2976, %v2977
    %v2979 = vrot.slane %v2977, 4
    %v2980 = vrot.slane %v1253, 5
    %v2981 = vsel %vm2946, %v2979, %v2980
    %v2982 = vrot.slane %v2853, 5
    %v2983 = vrot.slane %v2982, 4
    %v2984 = vrot.slane %v1195, 5
    %v2985 = vsel %vm2946, %v2983, %v2984
    %v2986 = vrot.slane %v2984, 4
    %v2987 = vrot.slane %v1254, 5
    %v2988 = vsel %vm2946, %v2986, %v2987
    %v2989 = vrot.slane %v2854, 5
    %v2990 = vrot.slane %v2989, 4
    %v2991 = vrot.slane %v1197, 5
    %v2992 = vsel %vm2946, %v2990, %v2991
    %v2993 = vrot.slane %v2991, 4
    %v2994 = vrot.slane %v1255, 5
    %v2995 = vsel %vm2946, %v2993, %v2994
    %v2996 = vrot.slane %v2855, 5
    %v2997 = vrot.slane %v2996, 4
    %v2998 = vrot.slane %v1199, 5
    %v2999 = vsel %vm2946, %v2997, %v2998
    %v3000 = vrot.slane %v2998, 4
    %v3001 = vrot.slane %v1256, 5
    %v3002 = vsel %vm2946, %v3000, %v3001
    %v3003 = vrot.slane %v2856, 5
    %v3004 = vrot.slane %v3003, 4
    %v3005 = vrot.slane %v1201, 5
    %v3006 = vsel %vm2946, %v3004, %v3005
    %v3007 = vrot.slane %v3005, 4
    %v3008 = vrot.slane %v1257, 5
    %v3009 = vsel %vm2946, %v3007, %v3008
    %v3010 = vrot.slane %v2857, 5
    %v3011 = vrot.slane %v3010, 4
    %v3012 = vrot.slane %v1203, 5
    %v3013 = vsel %vm2946, %v3011, %v3012
    %v3014 = vrot.slane %v3012, 4
    %v3015 = vrot.slane %v1258, 5
    %v3016 = vsel %vm2946, %v3014, %v3015
    %v3017 = vrot.slane %v2858, 5
    %v3018 = vrot.slane %v3017, 4
    %v3019 = vrot.slane %v1205, 5
    %v3020 = vsel %vm2946, %v3018, %v3019
    %v3021 = vrot.slane %v3019, 4
    %v3022 = vrot.slane %v1259, 5
    %v3023 = vsel %vm2946, %v3021, %v3022
    %v3024 = vrot.slane %v2859, 5
    %v3025 = vrot.slane %v3024, 4
    %v3026 = vrot.slane %v1207, 5
    %v3027 = vsel %vm2946, %v3025, %v3026
    %v3028 = vrot.slane %v3026, 4
    %v3029 = vrot.slane %v1260, 5
    %v3030 = vsel %vm2946, %v3028, %v3029
    %v3031 = vrot.slane %v2860, 5
    %v3032 = vrot.slane %v3031, 4
    %v3033 = vrot.slane %v1209, 5
    %v3034 = vsel %vm2946, %v3032, %v3033
    %v3035 = vrot.slane %v3033, 4
    %v3036 = vrot.slane %v1261, 5
    %v3037 = vsel %vm2946, %v3035, %v3036
    %v3038 = vrot.slane %v2861, 5
    %v3039 = vrot.slane %v3038, 4
    %v3040 = vrot.slane %v1211, 5
    %v3041 = vsel %vm2946, %v3039, %v3040
    %v3042 = vrot.slane %v3040, 4
    %v3043 = vrot.slane %v1262, 5
    %v3044 = vsel %vm2946, %v3042, %v3043
    %v3045 = vrot.slane %v2862, 5
    %v3046 = vrot.slane %v3045, 4
    %v3047 = vrot.slane %v1213, 5
    %v3048 = vsel %vm2946, %v3046, %v3047
    %v3049 = vrot.slane %v3047, 4
    %v3050 = vrot.slane %v1263, 5
    %v3051 = vsel %vm2946, %v3049, %v3050
    %v3052 = vrot.slane %v2863, 5
    %v3053 = vrot.slane %v3052, 4
    %v3054 = vrot.slane %v1215, 5
    %v3055 = vsel %vm2946, %v3053, %v3054
    %v3056 = vrot.slane %v3054, 4
    %v3057 = vrot.slane %v1264, 5
    %v3058 = vsel %vm2946, %v3056, %v3057
    %v3059 = vrot.slane %v2864, 5
    %v3060 = vrot.slane %v3059, 4
    %v3061 = vrot.slane %v1217, 5
    %v3062 = vsel %vm2946, %v3060, %v3061
    %v3063 = vrot.slane %v3061, 4
    %v3064 = vrot.slane %v1265, 5
    %v3065 = vsel %vm2946, %v3063, %v3064
    %v3066 = vrot.slane %v2865, 5
    %v3067 = vrot.slane %v3066, 4
    %v3068 = vrot.slane %v1219, 5
    %v3069 = vsel %vm2946, %v3067, %v3068
    %v3070 = vrot.slane %v3068, 4
    %v3071 = vrot.slane %v1266, 5
    %v3072 = vsel %vm2946, %v3070, %v3071
    %v3073 = vrot.slane %v2866, 5
    %v3074 = vrot.slane %v3073, 4
    %v3075 = vrot.slane %v1221, 5
    %v3076 = vsel %vm2946, %v3074, %v3075
    %v3077 = vrot.slane %v3075, 4
    %v3078 = vrot.slane %v1267, 5
    %v3079 = vsel %vm2946, %v3077, %v3078
    %v3080 = vrot.slane %v2867, 5
    %v3081 = vrot.slane %v3080, 4
    %v3082 = vrot.slane %v1223, 5
    %v3083 = vsel %vm2946, %v3081, %v3082
    %v3084 = vrot.slane %v3082, 4
    %v3085 = vrot.slane %v1268, 5
    %v3086 = vsel %vm2946, %v3084, %v3085
    %v3087 = vrot.slane %v2868, 5
    %v3088 = vrot.slane %v3087, 4
    %v3089 = vrot.slane %v1225, 5
    %v3090 = vsel %vm2946, %v3088, %v3089
    %v3091 = vrot.slane %v3089, 4
    %v3092 = vrot.slane %v1269, 5
    %v3093 = vsel %vm2946, %v3091, %v3092
    %v3094 = vrot.slane %v2869, 5
    %v3095 = vrot.slane %v3094, 4
    %v3096 = vrot.slane %v1227, 5
    %v3097 = vsel %vm2946, %v3095, %v3096
    %v3098 = vrot.slane %v3096, 4
    %v3099 = vrot.slane %v1270, 5
    %v3100 = vsel %vm2946, %v3098, %v3099
    %v3101 = vrot.slane %v2870, 5
    %v3102 = vrot.slane %v3101, 4
    %v3103 = vrot.slane %v1229, 5
    %v3104 = vsel %vm2946, %v3102, %v3103
    %v3105 = vrot.slane %v3103, 4
    %v3106 = vrot.slane %v1271, 5
    %v3107 = vsel %vm2946, %v3105, %v3106
    %v3108 = vrot.slane %v2871, 5
    %v3109 = vrot.slane %v3108, 4
    %v3110 = vrot.slane %v1231, 5
    %v3111 = vsel %vm2946, %v3109, %v3110
    %v3112 = vrot.slane %v3110, 4
    %v3113 = vrot.slane %v1272, 5
    %v3114 = vsel %vm2946, %v3112, %v3113
    %v3115 = vrot.slane %v2872, 5
    %v3116 = vrot.slane %v3115, 4
    %v3117 = vrot.slane %v1233, 5
    %v3118 = vsel %vm2946, %v3116, %v3117
    %v3119 = vrot.slane %v3117, 4
    %v3120 = vrot.slane %v1273, 5
    %v3121 = vsel %vm2946, %v3119, %v3120
    %v3122 = vrot.slane %v2873, 5
    %v3123 = vrot.slane %v3122, 4
    %v3124 = vrot.slane %v1235, 5
    %v3125 = vsel %vm2946, %v3123, %v3124
    %v3126 = vrot.slane %v3124, 4
    %v3127 = vrot.slane %v1274, 5
    %v3128 = vsel %vm2946, %v3126, %v3127
    %v3129 = vrot.slane %v2874, 5
    %v3130 = vrot.slane %v3129, 4
    %v3131 = vrot.slane %v1237, 5
    %v3132 = vsel %vm2946, %v3130, %v3131
    %v3133 = vrot.slane %v3131, 4
    %v3134 = vrot.slane %v1275, 5
    %v3135 = vsel %vm2946, %v3133, %v3134
    %v3136 = vrot.slane %v2875, 5
    %v3137 = vrot.slane %v3136, 4
    %v3138 = vrot.slane %v1239, 5
    %v3139 = vsel %vm2946, %v3137, %v3138
    %v3140 = vrot.slane %v3138, 4
    %v3141 = vrot.slane %v1276, 5
    %v3142 = vsel %vm2946, %v3140, %v3141
    %v3143 = vrot.slane %v2876, 5
    %v3144 = vrot.slane %v3143, 4
    %v3145 = vrot.slane %v1241, 5
    %v3146 = vsel %vm2946, %v3144, %v3145
    %v3147 = vrot.slane %v3145, 4
    %v3148 = vrot.slane %v1277, 5
    %v3149 = vsel %vm2946, %v3147, %v3148
    %v3150 = vrot.slane %v2877, 5
    %v3151 = vrot.slane %v3150, 4
    %v3152 = vrot.slane %v1243, 5
    %v3153 = vsel %vm2946, %v3151, %v3152
    %v3154 = vrot.slane %v3152, 4
    %v3155 = vrot.slane %v1278, 5
    %v3156 = vsel %vm2946, %v3154, %v3155
    %v3157 = vrot.slane %v2878, 5
    %v3158 = vrot.slane %v3157, 4
    %v3159 = vrot.slane %v1245, 5
    %v3160 = vsel %vm2946, %v3158, %v3159
    %v3161 = vrot.slane %v3159, 4
    %v3162 = vrot.slane %v1279, 5
    %v3163 = vsel %vm2946, %v3161, %v3162
    %v3164 = vrot.slane %v2879, 5
    %v3165 = vrot.slane %v3164, 4
    %v3166 = vrot.slane %v1247, 5
    %v3167 = vsel %vm2946, %v3165, %v3166
    %v3168 = vrot.slane %v3166, 4
    %v3169 = vrot.slane %v1280, 5
    %v3170 = vsel %vm2946, %v3168, %v3169
    %s3171 = scalar_lea.vmem %s1, 4
    %v3172 = vld [vmem:[%s3171] sm:$0x3]
    %v3173 = vunpack.c.l.b16 %v2950
    %v3174 = vunpack.c.l.b16 %v2953
    %v3175 = vunpack.c.l.b16 %v2957
    %v3176 = vunpack.c.l.b16 %v2960
    %v3177 = vunpack.c.l.b16 %v2964
    %v3178 = vunpack.c.l.b16 %v2967
    %v3179 = vunpack.c.l.b16 %v2971
    %v3180 = vunpack.c.l.b16 %v2974
    %v3181 = vunpack.c.l.b16 %v2978
    %v3182 = vunpack.c.l.b16 %v2981
    %v3183 = vunpack.c.l.b16 %v2985
    %v3184 = vunpack.c.l.b16 %v2988
    %v3185 = vunpack.c.l.b16 %v2992
    %v3186 = vunpack.c.l.b16 %v2995
    %v3187 = vunpack.c.l.b16 %v2999
    %v3188 = vunpack.c.l.b16 %v3002
    %v3189 = vunpack.c.l.b16 %v3006
    %v3190 = vunpack.c.l.b16 %v3009
    %v3191 = vunpack.c.l.b16 %v3013
    %v3192 = vunpack.c.l.b16 %v3016
    %v3193 = vunpack.c.l.b16 %v3020
    %v3194 = vunpack.c.l.b16 %v3023
    %v3195 = vunpack.c.l.b16 %v3027
    %v3196 = vunpack.c.l.b16 %v3030
    %v3197 = vunpack.c.l.b16 %v3034
    %v3198 = vunpack.c.l.b16 %v3037
    %v3199 = vunpack.c.l.b16 %v3041
    %v3200 = vunpack.c.l.b16 %v3044
    %v3201 = vunpack.c.l.b16 %v3048
    %v3202 = vunpack.c.l.b16 %v3051
    %v3203 = vunpack.c.l.b16 %v3055
    %v3204 = vunpack.c.l.b16 %v3058
    %v3205 = vunpack.c.l.b16 %v3062
    %v3206 = vunpack.c.l.b16 %v3065
    %v3207 = vunpack.c.l.b16 %v3069
    %v3208 = vunpack.c.l.b16 %v3072
    %v3209 = vunpack.c.l.b16 %v3076
    %v3210 = vunpack.c.l.b16 %v3079
    %v3211 = vunpack.c.l.b16 %v3083
    %v3212 = vunpack.c.l.b16 %v3086
    %v3213 = vunpack.c.l.b16 %v3090
    %v3214 = vunpack.c.l.b16 %v3093
    %v3215 = vunpack.c.l.b16 %v3097
    %v3216 = vunpack.c.l.b16 %v3100
    %v3217 = vunpack.c.l.b16 %v3104
    %v3218 = vunpack.c.l.b16 %v3107
    %v3219 = vunpack.c.l.b16 %v3111
    %v3220 = vunpack.c.l.b16 %v3114
    %v3221 = vunpack.c.l.b16 %v3118
    %v3222 = vunpack.c.l.b16 %v3121
    %v3223 = vunpack.c.l.b16 %v3125
    %v3224 = vunpack.c.l.b16 %v3128
    %v3225 = vunpack.c.l.b16 %v3132
    %v3226 = vunpack.c.l.b16 %v3135
    %v3227 = vunpack.c.l.b16 %v3139
    %v3228 = vunpack.c.l.b16 %v3142
    %v3229 = vunpack.c.l.b16 %v3146
    %v3230 = vunpack.c.l.b16 %v3149
    %v3231 = vunpack.c.l.b16 %v3153
    %v3232 = vunpack.c.l.b16 %v3156
    %v3233 = vunpack.c.l.b16 %v3160
    %v3234 = vunpack.c.l.b16 %v3163
    %v3235 = vunpack.c.l.b16 %v3167
    %v3236 = vunpack.c.l.b16 %v3170
    %v3237 = vpack.c.b16 %v3174, %v3173
    %v3238 = vpack.c.b16 %v3176, %v3175
    %v3239 = vpack.c.b16 %v3178, %v3177
    %v3240 = vpack.c.b16 %v3180, %v3179
    %v3241 = vpack.c.b16 %v3182, %v3181
    %v3242 = vpack.c.b16 %v3184, %v3183
    %v3243 = vpack.c.b16 %v3186, %v3185
    %v3244 = vpack.c.b16 %v3188, %v3187
    %v3245 = vpack.c.b16 %v3190, %v3189
    %v3246 = vpack.c.b16 %v3192, %v3191
    %v3247 = vpack.c.b16 %v3194, %v3193
    %v3248 = vpack.c.b16 %v3196, %v3195
    %v3249 = vpack.c.b16 %v3198, %v3197
    %v3250 = vpack.c.b16 %v3200, %v3199
    %v3251 = vpack.c.b16 %v3202, %v3201
    %v3252 = vpack.c.b16 %v3204, %v3203
    %v3253 = vpack.c.b16 %v3206, %v3205
    %v3254 = vpack.c.b16 %v3208, %v3207
    %v3255 = vpack.c.b16 %v3210, %v3209
    %v3256 = vpack.c.b16 %v3212, %v3211
    %v3257 = vpack.c.b16 %v3214, %v3213
    %v3258 = vpack.c.b16 %v3216, %v3215
    %v3259 = vpack.c.b16 %v3218, %v3217
    %v3260 = vpack.c.b16 %v3220, %v3219
    %v3261 = vpack.c.b16 %v3222, %v3221
    %v3262 = vpack.c.b16 %v3224, %v3223
    %v3263 = vpack.c.b16 %v3226, %v3225
    %v3264 = vpack.c.b16 %v3228, %v3227
    %v3265 = vpack.c.b16 %v3230, %v3229
    %v3266 = vpack.c.b16 %v3232, %v3231
    %v3267 = vpack.c.b16 %v3234, %v3233
    %v3268 = vpack.c.b16 %v3236, %v3235
    %v3270 = vsel %vm2150, %v3237, 0
    %v3273 = vsel %vm2150, %v3238, 0
    %v3276 = vsel %vm2150, %v3239, 0
    %v3279 = vsel %vm2150, %v3240, 0
    %v3282 = vsel %vm2150, %v3241, 0
    %v3285 = vsel %vm2150, %v3242, 0
    %v3288 = vsel %vm2150, %v3243, 0
    %v3291 = vsel %vm2150, %v3244, 0
    %v3294 = vsel %vm2150, %v3245, 0
    %v3297 = vsel %vm2150, %v3246, 0
    %v3300 = vsel %vm2150, %v3247, 0
    %v3303 = vsel %vm2150, %v3248, 0
    %v3306 = vsel %vm2150, %v3249, 0
    %v3309 = vsel %vm2150, %v3250, 0
    %v3312 = vsel %vm2150, %v3251, 0
    %v3315 = vsel %vm2150, %v3252, 0
    %v3318 = vsel %vm2150, %v3253, 0
    %v3321 = vsel %vm2150, %v3254, 0
    %v3324 = vsel %vm2150, %v3255, 0
    %v3327 = vsel %vm2150, %v3256, 0
    %v3330 = vsel %vm2150, %v3257, 0
    %v3333 = vsel %vm2150, %v3258, 0
    %v3336 = vsel %vm2150, %v3259, 0
    %v3339 = vsel %vm2150, %v3260, 0
    %v3342 = vsel %vm2150, %v3261, 0
    %v3345 = vsel %vm2150, %v3262, 0
    %v3348 = vsel %vm2150, %v3263, 0
    %v3351 = vsel %vm2150, %v3264, 0
    %v3354 = vsel %vm2150, %v3265, 0
    %v3357 = vsel %vm2150, %v3266, 0
    %v3360 = vsel %vm2150, %v3267, 0
    %v3363 = vsel %vm2150, %v3268, 0
    %v3366 = vsel %vm2247, %v3172, 0
    %3368 = vmatpush.bf16.msra.mxu0 0
    %3369 = vmatpush.bf16.msra.mxu0 0
    %3370 = vmatpush.bf16.msra.mxu0 0
    %3371 = vmatpush.bf16.msra.mxu0 0
    %3372 = vmatpush.bf16.msra.mxu0 0
    %3373 = vmatpush.bf16.msra.mxu0 0
    %3374 = vmatpush.bf16.msra.mxu0 0
    %3375 = vmatpush.bf16.msra.mxu0 %v3366
    %3376 = vmatmul.bf16.gmra.mxu0 %v3270
    %v3377 = vpop.f32.mrf.mxu0
    %v3378 = vadd.f32 0.0, %v3377
    %v3379 = vpop.f32.mrf.mxu0
    %v3380 = vadd.f32 0.0, %v3379
    %3381 = vmatmul.bf16.gmra.mxu0 %v3273
    %v3382 = vpop.f32.mrf.mxu0
    %v3383 = vadd.f32 0.0, %v3382
    %v3384 = vpop.f32.mrf.mxu0
    %v3385 = vadd.f32 0.0, %v3384
    %3386 = vmatmul.bf16.gmra.mxu0 %v3276
    %v3387 = vpop.f32.mrf.mxu0
    %v3388 = vadd.f32 0.0, %v3387
    %v3389 = vpop.f32.mrf.mxu0
    %v3390 = vadd.f32 0.0, %v3389
    %3391 = vmatmul.bf16.gmra.mxu0 %v3279
    %v3392 = vpop.f32.mrf.mxu0
    %v3393 = vadd.f32 0.0, %v3392
    %v3394 = vpop.f32.mrf.mxu0
    %v3395 = vadd.f32 0.0, %v3394
    %3396 = vmatmul.bf16.gmra.mxu0 %v3282
    %v3397 = vpop.f32.mrf.mxu0
    %v3398 = vadd.f32 0.0, %v3397
    %v3399 = vpop.f32.mrf.mxu0
    %v3400 = vadd.f32 0.0, %v3399
    %3401 = vmatmul.bf16.gmra.mxu0 %v3285
    %v3402 = vpop.f32.mrf.mxu0
    %v3403 = vadd.f32 0.0, %v3402
    %v3404 = vpop.f32.mrf.mxu0
    %v3405 = vadd.f32 0.0, %v3404
    %3406 = vmatmul.bf16.gmra.mxu0 %v3288
    %v3407 = vpop.f32.mrf.mxu0
    %v3408 = vadd.f32 0.0, %v3407
    %v3409 = vpop.f32.mrf.mxu0
    %v3410 = vadd.f32 0.0, %v3409
    %3411 = vmatmul.bf16.gmra.mxu0 %v3291
    %v3412 = vpop.f32.mrf.mxu0
    %v3413 = vadd.f32 0.0, %v3412
    %v3414 = vpop.f32.mrf.mxu0
    %v3415 = vadd.f32 0.0, %v3414
    %3416 = vmatmul.bf16.gmra.mxu0 %v3294
    %v3417 = vpop.f32.mrf.mxu0
    %v3418 = vadd.f32 0.0, %v3417
    %v3419 = vpop.f32.mrf.mxu0
    %v3420 = vadd.f32 0.0, %v3419
    %3421 = vmatmul.bf16.gmra.mxu0 %v3297
    %v3422 = vpop.f32.mrf.mxu0
    %v3423 = vadd.f32 0.0, %v3422
    %v3424 = vpop.f32.mrf.mxu0
    %v3425 = vadd.f32 0.0, %v3424
    %3426 = vmatmul.bf16.gmra.mxu0 %v3300
    %v3427 = vpop.f32.mrf.mxu0
    %v3428 = vadd.f32 0.0, %v3427
    %v3429 = vpop.f32.mrf.mxu0
    %v3430 = vadd.f32 0.0, %v3429
    %3431 = vmatmul.bf16.gmra.mxu0 %v3303
    %v3432 = vpop.f32.mrf.mxu0
    %v3433 = vadd.f32 0.0, %v3432
    %v3434 = vpop.f32.mrf.mxu0
    %v3435 = vadd.f32 0.0, %v3434
    %3436 = vmatmul.bf16.gmra.mxu0 %v3306
    %v3437 = vpop.f32.mrf.mxu0
    %v3438 = vadd.f32 0.0, %v3437
    %v3439 = vpop.f32.mrf.mxu0
    %v3440 = vadd.f32 0.0, %v3439
    %3441 = vmatmul.bf16.gmra.mxu0 %v3309
    %v3442 = vpop.f32.mrf.mxu0
    %v3443 = vadd.f32 0.0, %v3442
    %v3444 = vpop.f32.mrf.mxu0
    %v3445 = vadd.f32 0.0, %v3444
    %3446 = vmatmul.bf16.gmra.mxu0 %v3312
    %v3447 = vpop.f32.mrf.mxu0
    %v3448 = vadd.f32 0.0, %v3447
    %v3449 = vpop.f32.mrf.mxu0
    %v3450 = vadd.f32 0.0, %v3449
    %3451 = vmatmul.bf16.gmra.mxu0 %v3315
    %v3452 = vpop.f32.mrf.mxu0
    %v3453 = vadd.f32 0.0, %v3452
    %v3454 = vpop.f32.mrf.mxu0
    %v3455 = vadd.f32 0.0, %v3454
    %3456 = vmatmul.bf16.gmra.mxu0 %v3318
    %v3457 = vpop.f32.mrf.mxu0
    %v3458 = vadd.f32 0.0, %v3457
    %v3459 = vpop.f32.mrf.mxu0
    %v3460 = vadd.f32 0.0, %v3459
    %3461 = vmatmul.bf16.gmra.mxu0 %v3321
    %v3462 = vpop.f32.mrf.mxu0
    %v3463 = vadd.f32 0.0, %v3462
    %v3464 = vpop.f32.mrf.mxu0
    %v3465 = vadd.f32 0.0, %v3464
    %3466 = vmatmul.bf16.gmra.mxu0 %v3324
    %v3467 = vpop.f32.mrf.mxu0
    %v3468 = vadd.f32 0.0, %v3467
    %v3469 = vpop.f32.mrf.mxu0
    %v3470 = vadd.f32 0.0, %v3469
    %3471 = vmatmul.bf16.gmra.mxu0 %v3327
    %v3472 = vpop.f32.mrf.mxu0
    %v3473 = vadd.f32 0.0, %v3472
    %v3474 = vpop.f32.mrf.mxu0
    %v3475 = vadd.f32 0.0, %v3474
    %3476 = vmatmul.bf16.gmra.mxu0 %v3330
    %v3477 = vpop.f32.mrf.mxu0
    %v3478 = vadd.f32 0.0, %v3477
    %v3479 = vpop.f32.mrf.mxu0
    %v3480 = vadd.f32 0.0, %v3479
    %3481 = vmatmul.bf16.gmra.mxu0 %v3333
    %v3482 = vpop.f32.mrf.mxu0
    %v3483 = vadd.f32 0.0, %v3482
    %v3484 = vpop.f32.mrf.mxu0
    %v3485 = vadd.f32 0.0, %v3484
    %3486 = vmatmul.bf16.gmra.mxu0 %v3336
    %v3487 = vpop.f32.mrf.mxu0
    %v3488 = vadd.f32 0.0, %v3487
    %v3489 = vpop.f32.mrf.mxu0
    %v3490 = vadd.f32 0.0, %v3489
    %3491 = vmatmul.bf16.gmra.mxu0 %v3339
    %v3492 = vpop.f32.mrf.mxu0
    %v3493 = vadd.f32 0.0, %v3492
    %v3494 = vpop.f32.mrf.mxu0
    %v3495 = vadd.f32 0.0, %v3494
    %3496 = vmatmul.bf16.gmra.mxu0 %v3342
    %v3497 = vpop.f32.mrf.mxu0
    %v3498 = vadd.f32 0.0, %v3497
    %v3499 = vpop.f32.mrf.mxu0
    %v3500 = vadd.f32 0.0, %v3499
    %3501 = vmatmul.bf16.gmra.mxu0 %v3345
    %v3502 = vpop.f32.mrf.mxu0
    %v3503 = vadd.f32 0.0, %v3502
    %v3504 = vpop.f32.mrf.mxu0
    %v3505 = vadd.f32 0.0, %v3504
    %3506 = vmatmul.bf16.gmra.mxu0 %v3348
    %v3507 = vpop.f32.mrf.mxu0
    %v3508 = vadd.f32 0.0, %v3507
    %v3509 = vpop.f32.mrf.mxu0
    %v3510 = vadd.f32 0.0, %v3509
    %3511 = vmatmul.bf16.gmra.mxu0 %v3351
    %v3512 = vpop.f32.mrf.mxu0
    %v3513 = vadd.f32 0.0, %v3512
    %v3514 = vpop.f32.mrf.mxu0
    %v3515 = vadd.f32 0.0, %v3514
    %3516 = vmatmul.bf16.gmra.mxu0 %v3354
    %v3517 = vpop.f32.mrf.mxu0
    %v3518 = vadd.f32 0.0, %v3517
    %v3519 = vpop.f32.mrf.mxu0
    %v3520 = vadd.f32 0.0, %v3519
    %3521 = vmatmul.bf16.gmra.mxu0 %v3357
    %v3522 = vpop.f32.mrf.mxu0
    %v3523 = vadd.f32 0.0, %v3522
    %v3524 = vpop.f32.mrf.mxu0
    %v3525 = vadd.f32 0.0, %v3524
    %3526 = vmatmul.bf16.gmra.mxu0 %v3360
    %v3527 = vpop.f32.mrf.mxu0
    %v3528 = vadd.f32 0.0, %v3527
    %v3529 = vpop.f32.mrf.mxu0
    %v3530 = vadd.f32 0.0, %v3529
    %3531 = vmatmul.bf16.gmra.mxu0 %v3363
    %v3532 = vpop.f32.mrf.mxu0
    %v3533 = vadd.f32 0.0, %v3532
    %v3534 = vpop.f32.mrf.mxu0
    %v3535 = vadd.f32 0.0, %v3534
    %3536 = vdwg.mxu0
    %v3537 = vadd.f32 %v2689, %v3378
    %v3538 = vadd.f32 %v2691, %v3380
    %v3539 = vadd.f32 %v2694, %v3383
    %v3540 = vadd.f32 %v2696, %v3385
    %v3541 = vadd.f32 %v2699, %v3388
    %v3542 = vadd.f32 %v2701, %v3390
    %v3543 = vadd.f32 %v2704, %v3393
    %v3544 = vadd.f32 %v2706, %v3395
    %v3545 = vadd.f32 %v2709, %v3398
    %v3546 = vadd.f32 %v2711, %v3400
    %v3547 = vadd.f32 %v2714, %v3403
    %v3548 = vadd.f32 %v2716, %v3405
    %v3549 = vadd.f32 %v2719, %v3408
    %v3550 = vadd.f32 %v2721, %v3410
    %v3551 = vadd.f32 %v2724, %v3413
    %v3552 = vadd.f32 %v2726, %v3415
    %v3553 = vadd.f32 %v2729, %v3418
    %v3554 = vadd.f32 %v2731, %v3420
    %v3555 = vadd.f32 %v2734, %v3423
    %v3556 = vadd.f32 %v2736, %v3425
    %v3557 = vadd.f32 %v2739, %v3428
    %v3558 = vadd.f32 %v2741, %v3430
    %v3559 = vadd.f32 %v2744, %v3433
    %v3560 = vadd.f32 %v2746, %v3435
    %v3561 = vadd.f32 %v2749, %v3438
    %v3562 = vadd.f32 %v2751, %v3440
    %v3563 = vadd.f32 %v2754, %v3443
    %v3564 = vadd.f32 %v2756, %v3445
    %v3565 = vadd.f32 %v2759, %v3448
    %v3566 = vadd.f32 %v2761, %v3450
    %v3567 = vadd.f32 %v2764, %v3453
    %v3568 = vadd.f32 %v2766, %v3455
    %v3569 = vadd.f32 %v2769, %v3458
    %v3570 = vadd.f32 %v2771, %v3460
    %v3571 = vadd.f32 %v2774, %v3463
    %v3572 = vadd.f32 %v2776, %v3465
    %v3573 = vadd.f32 %v2779, %v3468
    %v3574 = vadd.f32 %v2781, %v3470
    %v3575 = vadd.f32 %v2784, %v3473
    %v3576 = vadd.f32 %v2786, %v3475
    %v3577 = vadd.f32 %v2789, %v3478
    %v3578 = vadd.f32 %v2791, %v3480
    %v3579 = vadd.f32 %v2794, %v3483
    %v3580 = vadd.f32 %v2796, %v3485
    %v3581 = vadd.f32 %v2799, %v3488
    %v3582 = vadd.f32 %v2801, %v3490
    %v3583 = vadd.f32 %v2804, %v3493
    %v3584 = vadd.f32 %v2806, %v3495
    %v3585 = vadd.f32 %v2809, %v3498
    %v3586 = vadd.f32 %v2811, %v3500
    %v3587 = vadd.f32 %v2814, %v3503
    %v3588 = vadd.f32 %v2816, %v3505
    %v3589 = vadd.f32 %v2819, %v3508
    %v3590 = vadd.f32 %v2821, %v3510
    %v3591 = vadd.f32 %v2824, %v3513
    %v3592 = vadd.f32 %v2826, %v3515
    %v3593 = vadd.f32 %v2829, %v3518
    %v3594 = vadd.f32 %v2831, %v3520
    %v3595 = vadd.f32 %v2834, %v3523
    %v3596 = vadd.f32 %v2836, %v3525
    %v3597 = vadd.f32 %v2839, %v3528
    %v3598 = vadd.f32 %v2841, %v3530
    %v3599 = vadd.f32 %v2844, %v3533
    %v3600 = vadd.f32 %v2846, %v3535
    %v3601 = vld [vmem:[%s957] sm:$0xf]
    %v3602 = vld [vmem:[%s957 + $0x4] sm:$0xf]
    %v3603 = vld [vmem:[%s957 + $0xc] sm:$0xf]
    %v3604 = vld [vmem:[%s957 + $0x10] sm:$0xf]
    %v3605 = vld [vmem:[%s957 + $0x18] sm:$0xf]
    %v3606 = vld [vmem:[%s957 + $0x1c] sm:$0xf]
    %v3607 = vld [vmem:[%s957 + $0x24] sm:$0xf]
    %v3608 = vld [vmem:[%s957 + $0x28] sm:$0xf]
    %v3609 = vld [vmem:[%s957 + $0x30] sm:$0xf]
    %v3610 = vld [vmem:[%s957 + $0x34] sm:$0xf]
    %v3611 = vld [vmem:[%s957 + $0x3c] sm:$0xf]
    %v3612 = vld [vmem:[%s957 + $0x40] sm:$0xf]
    %v3613 = vld [vmem:[%s957 + $0x48] sm:$0xf]
    %v3614 = vld [vmem:[%s957 + $0x4c] sm:$0xf]
    %v3615 = vld [vmem:[%s957 + $0x54] sm:$0xf]
    %v3616 = vld [vmem:[%s957 + $0x58] sm:$0xf]
    %v3617 = vld [vmem:[%s957 + $0x60] sm:$0xf]
    %v3618 = vld [vmem:[%s957 + $0x64] sm:$0xf]
    %v3619 = vld [vmem:[%s957 + $0x6c] sm:$0xf]
    %v3620 = vld [vmem:[%s957 + $0x70] sm:$0xf]
    %v3621 = vld [vmem:[%s957 + $0x78] sm:$0xf]
    %v3622 = vld [vmem:[%s957 + $0x7c] sm:$0xf]
    %v3623 = vld [vmem:[%s957 + $0x84] sm:$0xf]
    %v3624 = vld [vmem:[%s957 + $0x88] sm:$0xf]
    %v3625 = vld [vmem:[%s957 + $0x90] sm:$0xf]
    %v3626 = vld [vmem:[%s957 + $0x94] sm:$0xf]
    %v3627 = vld [vmem:[%s957 + $0x9c] sm:$0xf]
    %v3628 = vld [vmem:[%s957 + $0xa0] sm:$0xf]
    %v3629 = vld [vmem:[%s957 + $0xa8] sm:$0xf]
    %v3630 = vld [vmem:[%s957 + $0xac] sm:$0xf]
    %v3631 = vld [vmem:[%s957 + $0xb4] sm:$0xf]
    %v3632 = vld [vmem:[%s957 + $0xb8] sm:$0xf]
    %v3633 = vld [vmem:[%s957 + $0xd8] sm:$0xf]
    %v3634 = vld [vmem:[%s957 + $0xdc] sm:$0xf]
    %v3635 = vld [vmem:[%s957 + $0xe4] sm:$0xf]
    %v3636 = vld [vmem:[%s957 + $0xe8] sm:$0xf]
    %v3637 = vld [vmem:[%s957 + $0xf0] sm:$0xf]
    %v3638 = vld [vmem:[%s957 + $0xf4] sm:$0xf]
    %v3639 = vld [vmem:[%s957 + $0xfc] sm:$0xf]
    %v3640 = vld [vmem:[%s957 + $0x100] sm:$0xf]
    %v3641 = vld [vmem:[%s957 + $0x108] sm:$0xf]
    %v3642 = vld [vmem:[%s957 + $0x10c] sm:$0xf]
    %v3643 = vld [vmem:[%s957 + $0x114] sm:$0xf]
    %v3644 = vld [vmem:[%s957 + $0x118] sm:$0xf]
    %v3645 = vld [vmem:[%s957 + $0x120] sm:$0xf]
    %v3646 = vld [vmem:[%s957 + $0x124] sm:$0xf]
    %v3647 = vld [vmem:[%s957 + $0x12c] sm:$0xf]
    %v3648 = vld [vmem:[%s957 + $0x130] sm:$0xf]
    %v3649 = vld [vmem:[%s957 + $0x138] sm:$0xf]
    %v3650 = vld [vmem:[%s957 + $0x13c] sm:$0xf]
    %v3651 = vld [vmem:[%s957 + $0x144] sm:$0xf]
    %v3652 = vld [vmem:[%s957 + $0x148] sm:$0xf]
    %v3653 = vld [vmem:[%s957 + $0x150] sm:$0xf]
    %v3654 = vld [vmem:[%s957 + $0x154] sm:$0xf]
    %v3655 = vld [vmem:[%s957 + $0x15c] sm:$0xf]
    %v3656 = vld [vmem:[%s957 + $0x160] sm:$0xf]
    %v3657 = vld [vmem:[%s957 + $0x168] sm:$0xf]
    %v3658 = vld [vmem:[%s957 + $0x16c] sm:$0xf]
    %v3659 = vld [vmem:[%s957 + $0x174] sm:$0xf]
    %v3660 = vld [vmem:[%s957 + $0x178] sm:$0xf]
    %v3661 = vld [vmem:[%s957 + $0x180] sm:$0xf]
    %v3662 = vld [vmem:[%s957 + $0x184] sm:$0xf]
    %v3663 = vld [vmem:[%s957 + $0x18c] sm:$0xf]
    %v3664 = vld [vmem:[%s957 + $0x190] sm:$0xf]
    %s3665 = scalar_lea.vmem %s1, 6
    %v3666 = vld [vmem:[%s3665] sm:$0x3]
    %v3731 = vunpack.c.l.b16 %v3601
    %v3732 = vunpack.c.l.b16 %v3602
    %v3733 = vunpack.c.l.b16 %v3603
    %v3734 = vunpack.c.l.b16 %v3604
    %v3735 = vunpack.c.l.b16 %v3605
    %v3736 = vunpack.c.l.b16 %v3606
    %v3737 = vunpack.c.l.b16 %v3607
    %v3738 = vunpack.c.l.b16 %v3608
    %v3739 = vunpack.c.l.b16 %v3609
    %v3740 = vunpack.c.l.b16 %v3610
    %v3741 = vunpack.c.l.b16 %v3611
    %v3742 = vunpack.c.l.b16 %v3612
    %v3743 = vunpack.c.l.b16 %v3613
    %v3744 = vunpack.c.l.b16 %v3614
    %v3745 = vunpack.c.l.b16 %v3615
    %v3746 = vunpack.c.l.b16 %v3616
    %v3747 = vunpack.c.l.b16 %v3617
    %v3748 = vunpack.c.l.b16 %v3618
    %v3749 = vunpack.c.l.b16 %v3619
    %v3750 = vunpack.c.l.b16 %v3620
    %v3751 = vunpack.c.l.b16 %v3621
    %v3752 = vunpack.c.l.b16 %v3622
    %v3753 = vunpack.c.l.b16 %v3623
    %v3754 = vunpack.c.l.b16 %v3624
    %v3755 = vunpack.c.l.b16 %v3625
    %v3756 = vunpack.c.l.b16 %v3626
    %v3757 = vunpack.c.l.b16 %v3627
    %v3758 = vunpack.c.l.b16 %v3628
    %v3759 = vunpack.c.l.b16 %v3629
    %v3760 = vunpack.c.l.b16 %v3630
    %v3761 = vunpack.c.l.b16 %v3631
    %v3762 = vunpack.c.l.b16 %v3632
    %v3763 = vunpack.c.l.b16 %v3633
    %v3764 = vunpack.c.l.b16 %v3634
    %v3765 = vunpack.c.l.b16 %v3635
    %v3766 = vunpack.c.l.b16 %v3636
    %v3767 = vunpack.c.l.b16 %v3637
    %v3768 = vunpack.c.l.b16 %v3638
    %v3769 = vunpack.c.l.b16 %v3639
    %v3770 = vunpack.c.l.b16 %v3640
    %v3771 = vunpack.c.l.b16 %v3641
    %v3772 = vunpack.c.l.b16 %v3642
    %v3773 = vunpack.c.l.b16 %v3643
    %v3774 = vunpack.c.l.b16 %v3644
    %v3775 = vunpack.c.l.b16 %v3645
    %v3776 = vunpack.c.l.b16 %v3646
    %v3777 = vunpack.c.l.b16 %v3647
    %v3778 = vunpack.c.l.b16 %v3648
    %v3779 = vunpack.c.l.b16 %v3649
    %v3780 = vunpack.c.l.b16 %v3650
    %v3781 = vunpack.c.l.b16 %v3651
    %v3782 = vunpack.c.l.b16 %v3652
    %v3783 = vunpack.c.l.b16 %v3653
    %v3784 = vunpack.c.l.b16 %v3654
    %v3785 = vunpack.c.l.b16 %v3655
    %v3786 = vunpack.c.l.b16 %v3656
    %v3787 = vunpack.c.l.b16 %v3657
    %v3788 = vunpack.c.l.b16 %v3658
    %v3789 = vunpack.c.l.b16 %v3659
    %v3790 = vunpack.c.l.b16 %v3660
    %v3791 = vunpack.c.l.b16 %v3661
    %v3792 = vunpack.c.l.b16 %v3662
    %v3793 = vunpack.c.l.b16 %v3663
    %v3794 = vunpack.c.l.b16 %v3664
    %v3795 = vpack.c.b16 %v3732, %v3731
    %v3796 = vpack.c.b16 %v3734, %v3733
    %v3797 = vpack.c.b16 %v3736, %v3735
    %v3798 = vpack.c.b16 %v3738, %v3737
    %v3799 = vpack.c.b16 %v3740, %v3739
    %v3800 = vpack.c.b16 %v3742, %v3741
    %v3801 = vpack.c.b16 %v3744, %v3743
    %v3802 = vpack.c.b16 %v3746, %v3745
    %v3803 = vpack.c.b16 %v3748, %v3747
    %v3804 = vpack.c.b16 %v3750, %v3749
    %v3805 = vpack.c.b16 %v3752, %v3751
    %v3806 = vpack.c.b16 %v3754, %v3753
    %v3807 = vpack.c.b16 %v3756, %v3755
    %v3808 = vpack.c.b16 %v3758, %v3757
    %v3809 = vpack.c.b16 %v3760, %v3759
    %v3810 = vpack.c.b16 %v3762, %v3761
    %v3811 = vpack.c.b16 %v3764, %v3763
    %v3812 = vpack.c.b16 %v3766, %v3765
    %v3813 = vpack.c.b16 %v3768, %v3767
    %v3814 = vpack.c.b16 %v3770, %v3769
    %v3815 = vpack.c.b16 %v3772, %v3771
    %v3816 = vpack.c.b16 %v3774, %v3773
    %v3817 = vpack.c.b16 %v3776, %v3775
    %v3818 = vpack.c.b16 %v3778, %v3777
    %v3819 = vpack.c.b16 %v3780, %v3779
    %v3820 = vpack.c.b16 %v3782, %v3781
    %v3821 = vpack.c.b16 %v3784, %v3783
    %v3822 = vpack.c.b16 %v3786, %v3785
    %v3823 = vpack.c.b16 %v3788, %v3787
    %v3824 = vpack.c.b16 %v3790, %v3789
    %v3825 = vpack.c.b16 %v3792, %v3791
    %v3826 = vpack.c.b16 %v3794, %v3793
    %v3828 = vsel %vm2150, %v3795, 0
    %v3831 = vsel %vm2150, %v3796, 0
    %v3834 = vsel %vm2150, %v3797, 0
    %v3837 = vsel %vm2150, %v3798, 0
    %v3840 = vsel %vm2150, %v3799, 0
    %v3843 = vsel %vm2150, %v3800, 0
    %v3846 = vsel %vm2150, %v3801, 0
    %v3849 = vsel %vm2150, %v3802, 0
    %v3852 = vsel %vm2150, %v3803, 0
    %v3855 = vsel %vm2150, %v3804, 0
    %v3858 = vsel %vm2150, %v3805, 0
    %v3861 = vsel %vm2150, %v3806, 0
    %v3864 = vsel %vm2150, %v3807, 0
    %v3867 = vsel %vm2150, %v3808, 0
    %v3870 = vsel %vm2150, %v3809, 0
    %v3873 = vsel %vm2150, %v3810, 0
    %v3876 = vsel %vm2150, %v3811, 0
    %v3879 = vsel %vm2150, %v3812, 0
    %v3882 = vsel %vm2150, %v3813, 0
    %v3885 = vsel %vm2150, %v3814, 0
    %v3888 = vsel %vm2150, %v3815, 0
    %v3891 = vsel %vm2150, %v3816, 0
    %v3894 = vsel %vm2150, %v3817, 0
    %v3897 = vsel %vm2150, %v3818, 0
    %v3900 = vsel %vm2150, %v3819, 0
    %v3903 = vsel %vm2150, %v3820, 0
    %v3906 = vsel %vm2150, %v3821, 0
    %v3909 = vsel %vm2150, %v3822, 0
    %v3912 = vsel %vm2150, %v3823, 0
    %v3915 = vsel %vm2150, %v3824, 0
    %v3918 = vsel %vm2150, %v3825, 0
    %v3921 = vsel %vm2150, %v3826, 0
    %v3924 = vsel %vm2247, %v3666, 0
    %3926 = vmatpush.bf16.msra.mxu0 0
    %3927 = vmatpush.bf16.msra.mxu0 0
    %3928 = vmatpush.bf16.msra.mxu0 0
    %3929 = vmatpush.bf16.msra.mxu0 0
    %3930 = vmatpush.bf16.msra.mxu0 0
    %3931 = vmatpush.bf16.msra.mxu0 0
    %3932 = vmatpush.bf16.msra.mxu0 0
    %3933 = vmatpush.bf16.msra.mxu0 %v3924
    %3934 = vmatmul.bf16.gmra.mxu0 %v3828
    %v3935 = vpop.f32.mrf.mxu0
    %v3936 = vadd.f32 0.0, %v3935
    %v3937 = vpop.f32.mrf.mxu0
    %v3938 = vadd.f32 0.0, %v3937
    %3939 = vmatmul.bf16.gmra.mxu0 %v3831
    %v3940 = vpop.f32.mrf.mxu0
    %v3941 = vadd.f32 0.0, %v3940
    %v3942 = vpop.f32.mrf.mxu0
    %v3943 = vadd.f32 0.0, %v3942
    %3944 = vmatmul.bf16.gmra.mxu0 %v3834
    %v3945 = vpop.f32.mrf.mxu0
    %v3946 = vadd.f32 0.0, %v3945
    %v3947 = vpop.f32.mrf.mxu0
    %v3948 = vadd.f32 0.0, %v3947
    %3949 = vmatmul.bf16.gmra.mxu0 %v3837
    %v3950 = vpop.f32.mrf.mxu0
    %v3951 = vadd.f32 0.0, %v3950
    %v3952 = vpop.f32.mrf.mxu0
    %v3953 = vadd.f32 0.0, %v3952
    %3954 = vmatmul.bf16.gmra.mxu0 %v3840
    %v3955 = vpop.f32.mrf.mxu0
    %v3956 = vadd.f32 0.0, %v3955
    %v3957 = vpop.f32.mrf.mxu0
    %v3958 = vadd.f32 0.0, %v3957
    %3959 = vmatmul.bf16.gmra.mxu0 %v3843
    %v3960 = vpop.f32.mrf.mxu0
    %v3961 = vadd.f32 0.0, %v3960
    %v3962 = vpop.f32.mrf.mxu0
    %v3963 = vadd.f32 0.0, %v3962
    %3964 = vmatmul.bf16.gmra.mxu0 %v3846
    %v3965 = vpop.f32.mrf.mxu0
    %v3966 = vadd.f32 0.0, %v3965
    %v3967 = vpop.f32.mrf.mxu0
    %v3968 = vadd.f32 0.0, %v3967
    %3969 = vmatmul.bf16.gmra.mxu0 %v3849
    %v3970 = vpop.f32.mrf.mxu0
    %v3971 = vadd.f32 0.0, %v3970
    %v3972 = vpop.f32.mrf.mxu0
    %v3973 = vadd.f32 0.0, %v3972
    %3974 = vmatmul.bf16.gmra.mxu0 %v3852
    %v3975 = vpop.f32.mrf.mxu0
    %v3976 = vadd.f32 0.0, %v3975
    %v3977 = vpop.f32.mrf.mxu0
    %v3978 = vadd.f32 0.0, %v3977
    %3979 = vmatmul.bf16.gmra.mxu0 %v3855
    %v3980 = vpop.f32.mrf.mxu0
    %v3981 = vadd.f32 0.0, %v3980
    %v3982 = vpop.f32.mrf.mxu0
    %v3983 = vadd.f32 0.0, %v3982
    %3984 = vmatmul.bf16.gmra.mxu0 %v3858
    %v3985 = vpop.f32.mrf.mxu0
    %v3986 = vadd.f32 0.0, %v3985
    %v3987 = vpop.f32.mrf.mxu0
    %v3988 = vadd.f32 0.0, %v3987
    %3989 = vmatmul.bf16.gmra.mxu0 %v3861
    %v3990 = vpop.f32.mrf.mxu0
    %v3991 = vadd.f32 0.0, %v3990
    %v3992 = vpop.f32.mrf.mxu0
    %v3993 = vadd.f32 0.0, %v3992
    %3994 = vmatmul.bf16.gmra.mxu0 %v3864
    %v3995 = vpop.f32.mrf.mxu0
    %v3996 = vadd.f32 0.0, %v3995
    %v3997 = vpop.f32.mrf.mxu0
    %v3998 = vadd.f32 0.0, %v3997
    %3999 = vmatmul.bf16.gmra.mxu0 %v3867
    %v4000 = vpop.f32.mrf.mxu0
    %v4001 = vadd.f32 0.0, %v4000
    %v4002 = vpop.f32.mrf.mxu0
    %v4003 = vadd.f32 0.0, %v4002
    %4004 = vmatmul.bf16.gmra.mxu0 %v3870
    %v4005 = vpop.f32.mrf.mxu0
    %v4006 = vadd.f32 0.0, %v4005
    %v4007 = vpop.f32.mrf.mxu0
    %v4008 = vadd.f32 0.0, %v4007
    %4009 = vmatmul.bf16.gmra.mxu0 %v3873
    %v4010 = vpop.f32.mrf.mxu0
    %v4011 = vadd.f32 0.0, %v4010
    %v4012 = vpop.f32.mrf.mxu0
    %v4013 = vadd.f32 0.0, %v4012
    %4014 = vmatmul.bf16.gmra.mxu0 %v3876
    %v4015 = vpop.f32.mrf.mxu0
    %v4016 = vadd.f32 0.0, %v4015
    %v4017 = vpop.f32.mrf.mxu0
    %v4018 = vadd.f32 0.0, %v4017
    %4019 = vmatmul.bf16.gmra.mxu0 %v3879
    %v4020 = vpop.f32.mrf.mxu0
    %v4021 = vadd.f32 0.0, %v4020
    %v4022 = vpop.f32.mrf.mxu0
    %v4023 = vadd.f32 0.0, %v4022
    %4024 = vmatmul.bf16.gmra.mxu0 %v3882
    %v4025 = vpop.f32.mrf.mxu0
    %v4026 = vadd.f32 0.0, %v4025
    %v4027 = vpop.f32.mrf.mxu0
    %v4028 = vadd.f32 0.0, %v4027
    %4029 = vmatmul.bf16.gmra.mxu0 %v3885
    %v4030 = vpop.f32.mrf.mxu0
    %v4031 = vadd.f32 0.0, %v4030
    %v4032 = vpop.f32.mrf.mxu0
    %v4033 = vadd.f32 0.0, %v4032
    %4034 = vmatmul.bf16.gmra.mxu0 %v3888
    %v4035 = vpop.f32.mrf.mxu0
    %v4036 = vadd.f32 0.0, %v4035
    %v4037 = vpop.f32.mrf.mxu0
    %v4038 = vadd.f32 0.0, %v4037
    %4039 = vmatmul.bf16.gmra.mxu0 %v3891
    %v4040 = vpop.f32.mrf.mxu0
    %v4041 = vadd.f32 0.0, %v4040
    %v4042 = vpop.f32.mrf.mxu0
    %v4043 = vadd.f32 0.0, %v4042
    %4044 = vmatmul.bf16.gmra.mxu0 %v3894
    %v4045 = vpop.f32.mrf.mxu0
    %v4046 = vadd.f32 0.0, %v4045
    %v4047 = vpop.f32.mrf.mxu0
    %v4048 = vadd.f32 0.0, %v4047
    %4049 = vmatmul.bf16.gmra.mxu0 %v3897
    %v4050 = vpop.f32.mrf.mxu0
    %v4051 = vadd.f32 0.0, %v4050
    %v4052 = vpop.f32.mrf.mxu0
    %v4053 = vadd.f32 0.0, %v4052
    %4054 = vmatmul.bf16.gmra.mxu0 %v3900
    %v4055 = vpop.f32.mrf.mxu0
    %v4056 = vadd.f32 0.0, %v4055
    %v4057 = vpop.f32.mrf.mxu0
    %v4058 = vadd.f32 0.0, %v4057
    %4059 = vmatmul.bf16.gmra.mxu0 %v3903
    %v4060 = vpop.f32.mrf.mxu0
    %v4061 = vadd.f32 0.0, %v4060
    %v4062 = vpop.f32.mrf.mxu0
    %v4063 = vadd.f32 0.0, %v4062
    %4064 = vmatmul.bf16.gmra.mxu0 %v3906
    %v4065 = vpop.f32.mrf.mxu0
    %v4066 = vadd.f32 0.0, %v4065
    %v4067 = vpop.f32.mrf.mxu0
    %v4068 = vadd.f32 0.0, %v4067
    %4069 = vmatmul.bf16.gmra.mxu0 %v3909
    %v4070 = vpop.f32.mrf.mxu0
    %v4071 = vadd.f32 0.0, %v4070
    %v4072 = vpop.f32.mrf.mxu0
    %v4073 = vadd.f32 0.0, %v4072
    %4074 = vmatmul.bf16.gmra.mxu0 %v3912
    %v4075 = vpop.f32.mrf.mxu0
    %v4076 = vadd.f32 0.0, %v4075
    %v4077 = vpop.f32.mrf.mxu0
    %v4078 = vadd.f32 0.0, %v4077
    %4079 = vmatmul.bf16.gmra.mxu0 %v3915
    %v4080 = vpop.f32.mrf.mxu0
    %v4081 = vadd.f32 0.0, %v4080
    %v4082 = vpop.f32.mrf.mxu0
    %v4083 = vadd.f32 0.0, %v4082
    %4084 = vmatmul.bf16.gmra.mxu0 %v3918
    %v4085 = vpop.f32.mrf.mxu0
    %v4086 = vadd.f32 0.0, %v4085
    %v4087 = vpop.f32.mrf.mxu0
    %v4088 = vadd.f32 0.0, %v4087
    %4089 = vmatmul.bf16.gmra.mxu0 %v3921
    %v4090 = vpop.f32.mrf.mxu0
    %v4091 = vadd.f32 0.0, %v4090
    %v4092 = vpop.f32.mrf.mxu0
    %v4093 = vadd.f32 0.0, %v4092
    %4094 = vdwg.mxu0
    %v4095 = vadd.f32 %v3537, %v3936
    %v4096 = vadd.f32 %v3538, %v3938
    %v4097 = vadd.f32 %v3539, %v3941
    %v4098 = vadd.f32 %v3540, %v3943
    %v4099 = vadd.f32 %v3541, %v3946
    %v4100 = vadd.f32 %v3542, %v3948
    %v4101 = vadd.f32 %v3543, %v3951
    %v4102 = vadd.f32 %v3544, %v3953
    %v4103 = vadd.f32 %v3545, %v3956
    %v4104 = vadd.f32 %v3546, %v3958
    %v4105 = vadd.f32 %v3547, %v3961
    %v4106 = vadd.f32 %v3548, %v3963
    %v4107 = vadd.f32 %v3549, %v3966
    %v4108 = vadd.f32 %v3550, %v3968
    %v4109 = vadd.f32 %v3551, %v3971
    %v4110 = vadd.f32 %v3552, %v3973
    %v4111 = vadd.f32 %v3553, %v3976
    %v4112 = vadd.f32 %v3554, %v3978
    %v4113 = vadd.f32 %v3555, %v3981
    %v4114 = vadd.f32 %v3556, %v3983
    %v4115 = vadd.f32 %v3557, %v3986
    %v4116 = vadd.f32 %v3558, %v3988
    %v4117 = vadd.f32 %v3559, %v3991
    %v4118 = vadd.f32 %v3560, %v3993
    %v4119 = vadd.f32 %v3561, %v3996
    %v4120 = vadd.f32 %v3562, %v3998
    %v4121 = vadd.f32 %v3563, %v4001
    %v4122 = vadd.f32 %v3564, %v4003
    %v4123 = vadd.f32 %v3565, %v4006
    %v4124 = vadd.f32 %v3566, %v4008
    %v4125 = vadd.f32 %v3567, %v4011
    %v4126 = vadd.f32 %v3568, %v4013
    %v4127 = vadd.f32 %v3569, %v4016
    %v4128 = vadd.f32 %v3570, %v4018
    %v4129 = vadd.f32 %v3571, %v4021
    %v4130 = vadd.f32 %v3572, %v4023
    %v4131 = vadd.f32 %v3573, %v4026
    %v4132 = vadd.f32 %v3574, %v4028
    %v4133 = vadd.f32 %v3575, %v4031
    %v4134 = vadd.f32 %v3576, %v4033
    %v4135 = vadd.f32 %v3577, %v4036
    %v4136 = vadd.f32 %v3578, %v4038
    %v4137 = vadd.f32 %v3579, %v4041
    %v4138 = vadd.f32 %v3580, %v4043
    %v4139 = vadd.f32 %v3581, %v4046
    %v4140 = vadd.f32 %v3582, %v4048
    %v4141 = vadd.f32 %v3583, %v4051
    %v4142 = vadd.f32 %v3584, %v4053
    %v4143 = vadd.f32 %v3585, %v4056
    %v4144 = vadd.f32 %v3586, %v4058
    %v4145 = vadd.f32 %v3587, %v4061
    %v4146 = vadd.f32 %v3588, %v4063
    %v4147 = vadd.f32 %v3589, %v4066
    %v4148 = vadd.f32 %v3590, %v4068
    %v4149 = vadd.f32 %v3591, %v4071
    %v4150 = vadd.f32 %v3592, %v4073
    %v4151 = vadd.f32 %v3593, %v4076
    %v4152 = vadd.f32 %v3594, %v4078
    %v4153 = vadd.f32 %v3595, %v4081
    %v4154 = vadd.f32 %v3596, %v4083
    %v4155 = vadd.f32 %v3597, %v4086
    %v4156 = vadd.f32 %v3598, %v4088
    %v4157 = vadd.f32 %v3599, %v4091
    %v4158 = vadd.f32 %v3600, %v4093
    %v4159 = vld [vmem:[%s957] sm:$0xf]
    %v4160 = vld [vmem:[%s957 + $0x4] sm:$0xf]
    %v4161 = vld [vmem:[%s957 + $0x8] sm:$0x1]
    %v4162 = vld [vmem:[%s957 + $0xc] sm:$0xf]
    %v4163 = vld [vmem:[%s957 + $0x10] sm:$0xf]
    %v4164 = vld [vmem:[%s957 + $0x14] sm:$0x1]
    %v4165 = vld [vmem:[%s957 + $0x18] sm:$0xf]
    %v4166 = vld [vmem:[%s957 + $0x1c] sm:$0xf]
    %v4167 = vld [vmem:[%s957 + $0x20] sm:$0x1]
    %v4168 = vld [vmem:[%s957 + $0x24] sm:$0xf]
    %v4169 = vld [vmem:[%s957 + $0x28] sm:$0xf]
    %v4170 = vld [vmem:[%s957 + $0x2c] sm:$0x1]
    %v4171 = vld [vmem:[%s957 + $0x30] sm:$0xf]
    %v4172 = vld [vmem:[%s957 + $0x34] sm:$0xf]
    %v4173 = vld [vmem:[%s957 + $0x38] sm:$0x1]
    %v4174 = vld [vmem:[%s957 + $0x3c] sm:$0xf]
    %v4175 = vld [vmem:[%s957 + $0x40] sm:$0xf]
    %v4176 = vld [vmem:[%s957 + $0x44] sm:$0x1]
    %v4177 = vld [vmem:[%s957 + $0x48] sm:$0xf]
    %v4178 = vld [vmem:[%s957 + $0x4c] sm:$0xf]
    %v4179 = vld [vmem:[%s957 + $0x50] sm:$0x1]
    %v4180 = vld [vmem:[%s957 + $0x54] sm:$0xf]
    %v4181 = vld [vmem:[%s957 + $0x58] sm:$0xf]
    %v4182 = vld [vmem:[%s957 + $0x5c] sm:$0x1]
    %v4183 = vld [vmem:[%s957 + $0x60] sm:$0xf]
    %v4184 = vld [vmem:[%s957 + $0x64] sm:$0xf]
    %v4185 = vld [vmem:[%s957 + $0x68] sm:$0x1]
    %v4186 = vld [vmem:[%s957 + $0x6c] sm:$0xf]
    %v4187 = vld [vmem:[%s957 + $0x70] sm:$0xf]
    %v4188 = vld [vmem:[%s957 + $0x74] sm:$0x1]
    %v4189 = vld [vmem:[%s957 + $0x78] sm:$0xf]
    %v4190 = vld [vmem:[%s957 + $0x7c] sm:$0xf]
    %v4191 = vld [vmem:[%s957 + $0x80] sm:$0x1]
    %v4192 = vld [vmem:[%s957 + $0x84] sm:$0xf]
    %v4193 = vld [vmem:[%s957 + $0x88] sm:$0xf]
    %v4194 = vld [vmem:[%s957 + $0x8c] sm:$0x1]
    %v4195 = vld [vmem:[%s957 + $0x90] sm:$0xf]
    %v4196 = vld [vmem:[%s957 + $0x94] sm:$0xf]
    %v4197 = vld [vmem:[%s957 + $0x98] sm:$0x1]
    %v4198 = vld [vmem:[%s957 + $0x9c] sm:$0xf]
    %v4199 = vld [vmem:[%s957 + $0xa0] sm:$0xf]
    %v4200 = vld [vmem:[%s957 + $0xa4] sm:$0x1]
    %v4201 = vld [vmem:[%s957 + $0xa8] sm:$0xf]
    %v4202 = vld [vmem:[%s957 + $0xac] sm:$0xf]
    %v4203 = vld [vmem:[%s957 + $0xb0] sm:$0x1]
    %v4204 = vld [vmem:[%s957 + $0xb4] sm:$0xf]
    %v4205 = vld [vmem:[%s957 + $0xb8] sm:$0xf]
    %v4206 = vld [vmem:[%s957 + $0xbc] sm:$0x1]
    %v4207 = vld [vmem:[%s957 + $0xd8] sm:$0xf]
    %v4208 = vld [vmem:[%s957 + $0xdc] sm:$0xf]
    %v4209 = vld [vmem:[%s957 + $0xe0] sm:$0x1]
    %v4210 = vld [vmem:[%s957 + $0xe4] sm:$0xf]
    %v4211 = vld [vmem:[%s957 + $0xe8] sm:$0xf]
    %v4212 = vld [vmem:[%s957 + $0xec] sm:$0x1]
    %v4213 = vld [vmem:[%s957 + $0xf0] sm:$0xf]
    %v4214 = vld [vmem:[%s957 + $0xf4] sm:$0xf]
    %v4215 = vld [vmem:[%s957 + $0xf8] sm:$0x1]
    %v4216 = vld [vmem:[%s957 + $0xfc] sm:$0xf]
    %v4217 = vld [vmem:[%s957 + $0x100] sm:$0xf]
    %v4218 = vld [vmem:[%s957 + $0x104] sm:$0x1]
    %v4219 = vld [vmem:[%s957 + $0x108] sm:$0xf]
    %v4220 = vld [vmem:[%s957 + $0x10c] sm:$0xf]
    %v4221 = vld [vmem:[%s957 + $0x110] sm:$0x1]
    %v4222 = vld [vmem:[%s957 + $0x114] sm:$0xf]
    %v4223 = vld [vmem:[%s957 + $0x118] sm:$0xf]
    %v4224 = vld [vmem:[%s957 + $0x11c] sm:$0x1]
    %v4225 = vld [vmem:[%s957 + $0x120] sm:$0xf]
    %v4226 = vld [vmem:[%s957 + $0x124] sm:$0xf]
    %v4227 = vld [vmem:[%s957 + $0x128] sm:$0x1]
    %v4228 = vld [vmem:[%s957 + $0x12c] sm:$0xf]
    %v4229 = vld [vmem:[%s957 + $0x130] sm:$0xf]
    %v4230 = vld [vmem:[%s957 + $0x134] sm:$0x1]
    %v4231 = vld [vmem:[%s957 + $0x138] sm:$0xf]
    %v4232 = vld [vmem:[%s957 + $0x13c] sm:$0xf]
    %v4233 = vld [vmem:[%s957 + $0x140] sm:$0x1]
    %v4234 = vld [vmem:[%s957 + $0x144] sm:$0xf]
    %v4235 = vld [vmem:[%s957 + $0x148] sm:$0xf]
    %v4236 = vld [vmem:[%s957 + $0x14c] sm:$0x1]
    %v4237 = vld [vmem:[%s957 + $0x150] sm:$0xf]
    %v4238 = vld [vmem:[%s957 + $0x154] sm:$0xf]
    %v4239 = vld [vmem:[%s957 + $0x158] sm:$0x1]
    %v4240 = vld [vmem:[%s957 + $0x15c] sm:$0xf]
    %v4241 = vld [vmem:[%s957 + $0x160] sm:$0xf]
    %v4242 = vld [vmem:[%s957 + $0x164] sm:$0x1]
    %v4243 = vld [vmem:[%s957 + $0x168] sm:$0xf]
    %v4244 = vld [vmem:[%s957 + $0x16c] sm:$0xf]
    %v4245 = vld [vmem:[%s957 + $0x170] sm:$0x1]
    %v4246 = vld [vmem:[%s957 + $0x174] sm:$0xf]
    %v4247 = vld [vmem:[%s957 + $0x178] sm:$0xf]
    %v4248 = vld [vmem:[%s957 + $0x17c] sm:$0x1]
    %v4249 = vld [vmem:[%s957 + $0x180] sm:$0xf]
    %v4250 = vld [vmem:[%s957 + $0x184] sm:$0xf]
    %v4251 = vld [vmem:[%s957 + $0x188] sm:$0x1]
    %v4252 = vld [vmem:[%s957 + $0x18c] sm:$0xf]
    %v4253 = vld [vmem:[%s957 + $0x190] sm:$0xf]
    %v4254 = vld [vmem:[%s957 + $0x194] sm:$0x1]
    %v4256 = vshrl.u32 %v4159, 16
    %v4258 = vrot.slane %v4256, 4
    %v4259 = vshll.u32 %v4159, 16
    %v4261 = vrot.slane %v4259, 5
    %v4262 = vor.u32 %v4258, %v4261
    %v4263 = vrot.slane %v4262, 4
    %v4265 = vshll.u32 %v4160, 16
    %v4267 = vrot.slane %v4265, 5
    %v4268 = vsel %vm1283, %v4263, %v4267
    %v4269 = vshrl.u32 %v4160, 16
    %v4271 = vrot.slane %v4269, 4
    %v4272 = vor.u32 %v4271, %v4267
    %v4273 = vrot.slane %v4272, 4
    %v4275 = vshll.u32 %v4161, 16
    %v4277 = vrot.slane %v4275, 5
    %v4278 = vsel %vm1283, %v4273, %v4277
    %v4280 = vshrl.u32 %v4162, 16
    %v4282 = vrot.slane %v4280, 4
    %v4283 = vshll.u32 %v4162, 16
    %v4285 = vrot.slane %v4283, 5
    %v4286 = vor.u32 %v4282, %v4285
    %v4287 = vrot.slane %v4286, 4
    %v4289 = vshll.u32 %v4163, 16
    %v4291 = vrot.slane %v4289, 5
    %v4292 = vsel %vm1283, %v4287, %v4291
    %v4293 = vshrl.u32 %v4163, 16
    %v4295 = vrot.slane %v4293, 4
    %v4296 = vor.u32 %v4295, %v4291
    %v4297 = vrot.slane %v4296, 4
    %v4299 = vshll.u32 %v4164, 16
    %v4301 = vrot.slane %v4299, 5
    %v4302 = vsel %vm1283, %v4297, %v4301
    %v4304 = vshrl.u32 %v4165, 16
    %v4306 = vrot.slane %v4304, 4
    %v4307 = vshll.u32 %v4165, 16
    %v4309 = vrot.slane %v4307, 5
    %v4310 = vor.u32 %v4306, %v4309
    %v4311 = vrot.slane %v4310, 4
    %v4313 = vshll.u32 %v4166, 16
    %v4315 = vrot.slane %v4313, 5
    %v4316 = vsel %vm1283, %v4311, %v4315
    %v4317 = vshrl.u32 %v4166, 16
    %v4319 = vrot.slane %v4317, 4
    %v4320 = vor.u32 %v4319, %v4315
    %v4321 = vrot.slane %v4320, 4
    %v4323 = vshll.u32 %v4167, 16
    %v4325 = vrot.slane %v4323, 5
    %v4326 = vsel %vm1283, %v4321, %v4325
    %v4328 = vshrl.u32 %v4168, 16
    %v4330 = vrot.slane %v4328, 4
    %v4331 = vshll.u32 %v4168, 16
    %v4333 = vrot.slane %v4331, 5
    %v4334 = vor.u32 %v4330, %v4333
    %v4335 = vrot.slane %v4334, 4
    %v4337 = vshll.u32 %v4169, 16
    %v4339 = vrot.slane %v4337, 5
    %v4340 = vsel %vm1283, %v4335, %v4339
    %v4341 = vshrl.u32 %v4169, 16
    %v4343 = vrot.slane %v4341, 4
    %v4344 = vor.u32 %v4343, %v4339
    %v4345 = vrot.slane %v4344, 4
    %v4347 = vshll.u32 %v4170, 16
    %v4349 = vrot.slane %v4347, 5
    %v4350 = vsel %vm1283, %v4345, %v4349
    %v4352 = vshrl.u32 %v4171, 16
    %v4354 = vrot.slane %v4352, 4
    %v4355 = vshll.u32 %v4171, 16
    %v4357 = vrot.slane %v4355, 5
    %v4358 = vor.u32 %v4354, %v4357
    %v4359 = vrot.slane %v4358, 4
    %v4361 = vshll.u32 %v4172, 16
    %v4363 = vrot.slane %v4361, 5
    %v4364 = vsel %vm1283, %v4359, %v4363
    %v4365 = vshrl.u32 %v4172, 16
    %v4367 = vrot.slane %v4365, 4
    %v4368 = vor.u32 %v4367, %v4363
    %v4369 = vrot.slane %v4368, 4
    %v4371 = vshll.u32 %v4173, 16
    %v4373 = vrot.slane %v4371, 5
    %v4374 = vsel %vm1283, %v4369, %v4373
    %v4376 = vshrl.u32 %v4174, 16
    %v4378 = vrot.slane %v4376, 4
    %v4379 = vshll.u32 %v4174, 16
    %v4381 = vrot.slane %v4379, 5
    %v4382 = vor.u32 %v4378, %v4381
    %v4383 = vrot.slane %v4382, 4
    %v4385 = vshll.u32 %v4175, 16
    %v4387 = vrot.slane %v4385, 5
    %v4388 = vsel %vm1283, %v4383, %v4387
    %v4389 = vshrl.u32 %v4175, 16
    %v4391 = vrot.slane %v4389, 4
    %v4392 = vor.u32 %v4391, %v4387
    %v4393 = vrot.slane %v4392, 4
    %v4395 = vshll.u32 %v4176, 16
    %v4397 = vrot.slane %v4395, 5
    %v4398 = vsel %vm1283, %v4393, %v4397
    %v4400 = vshrl.u32 %v4177, 16
    %v4402 = vrot.slane %v4400, 4
    %v4403 = vshll.u32 %v4177, 16
    %v4405 = vrot.slane %v4403, 5
    %v4406 = vor.u32 %v4402, %v4405
    %v4407 = vrot.slane %v4406, 4
    %v4409 = vshll.u32 %v4178, 16
    %v4411 = vrot.slane %v4409, 5
    %v4412 = vsel %vm1283, %v4407, %v4411
    %v4413 = vshrl.u32 %v4178, 16
    %v4415 = vrot.slane %v4413, 4
    %v4416 = vor.u32 %v4415, %v4411
    %v4417 = vrot.slane %v4416, 4
    %v4419 = vshll.u32 %v4179, 16
    %v4421 = vrot.slane %v4419, 5
    %v4422 = vsel %vm1283, %v4417, %v4421
    %v4424 = vshrl.u32 %v4180, 16
    %v4426 = vrot.slane %v4424, 4
    %v4427 = vshll.u32 %v4180, 16
    %v4429 = vrot.slane %v4427, 5
    %v4430 = vor.u32 %v4426, %v4429
    %v4431 = vrot.slane %v4430, 4
    %v4433 = vshll.u32 %v4181, 16
    %v4435 = vrot.slane %v4433, 5
    %v4436 = vsel %vm1283, %v4431, %v4435
    %v4437 = vshrl.u32 %v4181, 16
    %v4439 = vrot.slane %v4437, 4
    %v4440 = vor.u32 %v4439, %v4435
    %v4441 = vrot.slane %v4440, 4
    %v4443 = vshll.u32 %v4182, 16
    %v4445 = vrot.slane %v4443, 5
    %v4446 = vsel %vm1283, %v4441, %v4445
    %v4448 = vshrl.u32 %v4183, 16
    %v4450 = vrot.slane %v4448, 4
    %v4451 = vshll.u32 %v4183, 16
    %v4453 = vrot.slane %v4451, 5
    %v4454 = vor.u32 %v4450, %v4453
    %v4455 = vrot.slane %v4454, 4
    %v4457 = vshll.u32 %v4184, 16
    %v4459 = vrot.slane %v4457, 5
    %v4460 = vsel %vm1283, %v4455, %v4459
    %v4461 = vshrl.u32 %v4184, 16
    %v4463 = vrot.slane %v4461, 4
    %v4464 = vor.u32 %v4463, %v4459
    %v4465 = vrot.slane %v4464, 4
    %v4467 = vshll.u32 %v4185, 16
    %v4469 = vrot.slane %v4467, 5
    %v4470 = vsel %vm1283, %v4465, %v4469
    %v4472 = vshrl.u32 %v4186, 16
    %v4474 = vrot.slane %v4472, 4
    %v4475 = vshll.u32 %v4186, 16
    %v4477 = vrot.slane %v4475, 5
    %v4478 = vor.u32 %v4474, %v4477
    %v4479 = vrot.slane %v4478, 4
    %v4481 = vshll.u32 %v4187, 16
    %v4483 = vrot.slane %v4481, 5
    %v4484 = vsel %vm1283, %v4479, %v4483
    %v4485 = vshrl.u32 %v4187, 16
    %v4487 = vrot.slane %v4485, 4
    %v4488 = vor.u32 %v4487, %v4483
    %v4489 = vrot.slane %v4488, 4
    %v4491 = vshll.u32 %v4188, 16
    %v4493 = vrot.slane %v4491, 5
    %v4494 = vsel %vm1283, %v4489, %v4493
    %v4496 = vshrl.u32 %v4189, 16
    %v4498 = vrot.slane %v4496, 4
    %v4499 = vshll.u32 %v4189, 16
    %v4501 = vrot.slane %v4499, 5
    %v4502 = vor.u32 %v4498, %v4501
    %v4503 = vrot.slane %v4502, 4
    %v4505 = vshll.u32 %v4190, 16
    %v4507 = vrot.slane %v4505, 5
    %v4508 = vsel %vm1283, %v4503, %v4507
    %v4509 = vshrl.u32 %v4190, 16
    %v4511 = vrot.slane %v4509, 4
    %v4512 = vor.u32 %v4511, %v4507
    %v4513 = vrot.slane %v4512, 4
    %v4515 = vshll.u32 %v4191, 16
    %v4517 = vrot.slane %v4515, 5
    %v4518 = vsel %vm1283, %v4513, %v4517
    %v4520 = vshrl.u32 %v4192, 16
    %v4522 = vrot.slane %v4520, 4
    %v4523 = vshll.u32 %v4192, 16
    %v4525 = vrot.slane %v4523, 5
    %v4526 = vor.u32 %v4522, %v4525
    %v4527 = vrot.slane %v4526, 4
    %v4529 = vshll.u32 %v4193, 16
    %v4531 = vrot.slane %v4529, 5
    %v4532 = vsel %vm1283, %v4527, %v4531
    %v4533 = vshrl.u32 %v4193, 16
    %v4535 = vrot.slane %v4533, 4
    %v4536 = vor.u32 %v4535, %v4531
    %v4537 = vrot.slane %v4536, 4
    %v4539 = vshll.u32 %v4194, 16
    %v4541 = vrot.slane %v4539, 5
    %v4542 = vsel %vm1283, %v4537, %v4541
    %v4544 = vshrl.u32 %v4195, 16
    %v4546 = vrot.slane %v4544, 4
    %v4547 = vshll.u32 %v4195, 16
    %v4549 = vrot.slane %v4547, 5
    %v4550 = vor.u32 %v4546, %v4549
    %v4551 = vrot.slane %v4550, 4
    %v4553 = vshll.u32 %v4196, 16
    %v4555 = vrot.slane %v4553, 5
    %v4556 = vsel %vm1283, %v4551, %v4555
    %v4557 = vshrl.u32 %v4196, 16
    %v4559 = vrot.slane %v4557, 4
    %v4560 = vor.u32 %v4559, %v4555
    %v4561 = vrot.slane %v4560, 4
    %v4563 = vshll.u32 %v4197, 16
    %v4565 = vrot.slane %v4563, 5
    %v4566 = vsel %vm1283, %v4561, %v4565
    %v4568 = vshrl.u32 %v4198, 16
    %v4570 = vrot.slane %v4568, 4
    %v4571 = vshll.u32 %v4198, 16
    %v4573 = vrot.slane %v4571, 5
    %v4574 = vor.u32 %v4570, %v4573
    %v4575 = vrot.slane %v4574, 4
    %v4577 = vshll.u32 %v4199, 16
    %v4579 = vrot.slane %v4577, 5
    %v4580 = vsel %vm1283, %v4575, %v4579
    %v4581 = vshrl.u32 %v4199, 16
    %v4583 = vrot.slane %v4581, 4
    %v4584 = vor.u32 %v4583, %v4579
    %v4585 = vrot.slane %v4584, 4
    %v4587 = vshll.u32 %v4200, 16
    %v4589 = vrot.slane %v4587, 5
    %v4590 = vsel %vm1283, %v4585, %v4589
    %v4592 = vshrl.u32 %v4201, 16
    %v4594 = vrot.slane %v4592, 4
    %v4595 = vshll.u32 %v4201, 16
    %v4597 = vrot.slane %v4595, 5
    %v4598 = vor.u32 %v4594, %v4597
    %v4599 = vrot.slane %v4598, 4
    %v4601 = vshll.u32 %v4202, 16
    %v4603 = vrot.slane %v4601, 5
    %v4604 = vsel %vm1283, %v4599, %v4603
    %v4605 = vshrl.u32 %v4202, 16
    %v4607 = vrot.slane %v4605, 4
    %v4608 = vor.u32 %v4607, %v4603
    %v4609 = vrot.slane %v4608, 4
    %v4611 = vshll.u32 %v4203, 16
    %v4613 = vrot.slane %v4611, 5
    %v4614 = vsel %vm1283, %v4609, %v4613
    %v4616 = vshrl.u32 %v4204, 16
    %v4618 = vrot.slane %v4616, 4
    %v4619 = vshll.u32 %v4204, 16
    %v4621 = vrot.slane %v4619, 5
    %v4622 = vor.u32 %v4618, %v4621
    %v4623 = vrot.slane %v4622, 4
    %v4625 = vshll.u32 %v4205, 16
    %v4627 = vrot.slane %v4625, 5
    %v4628 = vsel %vm1283, %v4623, %v4627
    %v4629 = vshrl.u32 %v4205, 16
    %v4631 = vrot.slane %v4629, 4
    %v4632 = vor.u32 %v4631, %v4627
    %v4633 = vrot.slane %v4632, 4
    %v4635 = vshll.u32 %v4206, 16
    %v4637 = vrot.slane %v4635, 5
    %v4638 = vsel %vm1283, %v4633, %v4637
    %v4640 = vshrl.u32 %v4207, 16
    %v4642 = vrot.slane %v4640, 4
    %v4643 = vshll.u32 %v4207, 16
    %v4645 = vrot.slane %v4643, 5
    %v4646 = vor.u32 %v4642, %v4645
    %v4647 = vrot.slane %v4646, 4
    %v4649 = vshll.u32 %v4208, 16
    %v4651 = vrot.slane %v4649, 5
    %v4652 = vsel %vm1283, %v4647, %v4651
    %v4653 = vshrl.u32 %v4208, 16
    %v4655 = vrot.slane %v4653, 4
    %v4656 = vor.u32 %v4655, %v4651
    %v4657 = vrot.slane %v4656, 4
    %v4659 = vshll.u32 %v4209, 16
    %v4661 = vrot.slane %v4659, 5
    %v4662 = vsel %vm1283, %v4657, %v4661
    %v4664 = vshrl.u32 %v4210, 16
    %v4666 = vrot.slane %v4664, 4
    %v4667 = vshll.u32 %v4210, 16
    %v4669 = vrot.slane %v4667, 5
    %v4670 = vor.u32 %v4666, %v4669
    %v4671 = vrot.slane %v4670, 4
    %v4673 = vshll.u32 %v4211, 16
    %v4675 = vrot.slane %v4673, 5
    %v4676 = vsel %vm1283, %v4671, %v4675
    %v4677 = vshrl.u32 %v4211, 16
    %v4679 = vrot.slane %v4677, 4
    %v4680 = vor.u32 %v4679, %v4675
    %v4681 = vrot.slane %v4680, 4
    %v4683 = vshll.u32 %v4212, 16
    %v4685 = vrot.slane %v4683, 5
    %v4686 = vsel %vm1283, %v4681, %v4685
    %v4688 = vshrl.u32 %v4213, 16
    %v4690 = vrot.slane %v4688, 4
    %v4691 = vshll.u32 %v4213, 16
    %v4693 = vrot.slane %v4691, 5
    %v4694 = vor.u32 %v4690, %v4693
    %v4695 = vrot.slane %v4694, 4
    %v4697 = vshll.u32 %v4214, 16
    %v4699 = vrot.slane %v4697, 5
    %v4700 = vsel %vm1283, %v4695, %v4699
    %v4701 = vshrl.u32 %v4214, 16
    %v4703 = vrot.slane %v4701, 4
    %v4704 = vor.u32 %v4703, %v4699
    %v4705 = vrot.slane %v4704, 4
    %v4707 = vshll.u32 %v4215, 16
    %v4709 = vrot.slane %v4707, 5
    %v4710 = vsel %vm1283, %v4705, %v4709
    %v4712 = vshrl.u32 %v4216, 16
    %v4714 = vrot.slane %v4712, 4
    %v4715 = vshll.u32 %v4216, 16
    %v4717 = vrot.slane %v4715, 5
    %v4718 = vor.u32 %v4714, %v4717
    %v4719 = vrot.slane %v4718, 4
    %v4721 = vshll.u32 %v4217, 16
    %v4723 = vrot.slane %v4721, 5
    %v4724 = vsel %vm1283, %v4719, %v4723
    %v4725 = vshrl.u32 %v4217, 16
    %v4727 = vrot.slane %v4725, 4
    %v4728 = vor.u32 %v4727, %v4723
    %v4729 = vrot.slane %v4728, 4
    %v4731 = vshll.u32 %v4218, 16
    %v4733 = vrot.slane %v4731, 5
    %v4734 = vsel %vm1283, %v4729, %v4733
    %v4736 = vshrl.u32 %v4219, 16
    %v4738 = vrot.slane %v4736, 4
    %v4739 = vshll.u32 %v4219, 16
    %v4741 = vrot.slane %v4739, 5
    %v4742 = vor.u32 %v4738, %v4741
    %v4743 = vrot.slane %v4742, 4
    %v4745 = vshll.u32 %v4220, 16
    %v4747 = vrot.slane %v4745, 5
    %v4748 = vsel %vm1283, %v4743, %v4747
    %v4749 = vshrl.u32 %v4220, 16
    %v4751 = vrot.slane %v4749, 4
    %v4752 = vor.u32 %v4751, %v4747
    %v4753 = vrot.slane %v4752, 4
    %v4755 = vshll.u32 %v4221, 16
    %v4757 = vrot.slane %v4755, 5
    %v4758 = vsel %vm1283, %v4753, %v4757
    %v4760 = vshrl.u32 %v4222, 16
    %v4762 = vrot.slane %v4760, 4
    %v4763 = vshll.u32 %v4222, 16
    %v4765 = vrot.slane %v4763, 5
    %v4766 = vor.u32 %v4762, %v4765
    %v4767 = vrot.slane %v4766, 4
    %v4769 = vshll.u32 %v4223, 16
    %v4771 = vrot.slane %v4769, 5
    %v4772 = vsel %vm1283, %v4767, %v4771
    %v4773 = vshrl.u32 %v4223, 16
    %v4775 = vrot.slane %v4773, 4
    %v4776 = vor.u32 %v4775, %v4771
    %v4777 = vrot.slane %v4776, 4
    %v4779 = vshll.u32 %v4224, 16
    %v4781 = vrot.slane %v4779, 5
    %v4782 = vsel %vm1283, %v4777, %v4781
    %v4784 = vshrl.u32 %v4225, 16
    %v4786 = vrot.slane %v4784, 4
    %v4787 = vshll.u32 %v4225, 16
    %v4789 = vrot.slane %v4787, 5
    %v4790 = vor.u32 %v4786, %v4789
    %v4791 = vrot.slane %v4790, 4
    %v4793 = vshll.u32 %v4226, 16
    %v4795 = vrot.slane %v4793, 5
    %v4796 = vsel %vm1283, %v4791, %v4795
    %v4797 = vshrl.u32 %v4226, 16
    %v4799 = vrot.slane %v4797, 4
    %v4800 = vor.u32 %v4799, %v4795
    %v4801 = vrot.slane %v4800, 4
    %v4803 = vshll.u32 %v4227, 16
    %v4805 = vrot.slane %v4803, 5
    %v4806 = vsel %vm1283, %v4801, %v4805
    %v4808 = vshrl.u32 %v4228, 16
    %v4810 = vrot.slane %v4808, 4
    %v4811 = vshll.u32 %v4228, 16
    %v4813 = vrot.slane %v4811, 5
    %v4814 = vor.u32 %v4810, %v4813
    %v4815 = vrot.slane %v4814, 4
    %v4817 = vshll.u32 %v4229, 16
    %v4819 = vrot.slane %v4817, 5
    %v4820 = vsel %vm1283, %v4815, %v4819
    %v4821 = vshrl.u32 %v4229, 16
    %v4823 = vrot.slane %v4821, 4
    %v4824 = vor.u32 %v4823, %v4819
    %v4825 = vrot.slane %v4824, 4
    %v4827 = vshll.u32 %v4230, 16
    %v4829 = vrot.slane %v4827, 5
    %v4830 = vsel %vm1283, %v4825, %v4829
    %v4832 = vshrl.u32 %v4231, 16
    %v4834 = vrot.slane %v4832, 4
    %v4835 = vshll.u32 %v4231, 16
    %v4837 = vrot.slane %v4835, 5
    %v4838 = vor.u32 %v4834, %v4837
    %v4839 = vrot.slane %v4838, 4
    %v4841 = vshll.u32 %v4232, 16
    %v4843 = vrot.slane %v4841, 5
    %v4844 = vsel %vm1283, %v4839, %v4843
    %v4845 = vshrl.u32 %v4232, 16
    %v4847 = vrot.slane %v4845, 4
    %v4848 = vor.u32 %v4847, %v4843
    %v4849 = vrot.slane %v4848, 4
    %v4851 = vshll.u32 %v4233, 16
    %v4853 = vrot.slane %v4851, 5
    %v4854 = vsel %vm1283, %v4849, %v4853
    %v4856 = vshrl.u32 %v4234, 16
    %v4858 = vrot.slane %v4856, 4
    %v4859 = vshll.u32 %v4234, 16
    %v4861 = vrot.slane %v4859, 5
    %v4862 = vor.u32 %v4858, %v4861
    %v4863 = vrot.slane %v4862, 4
    %v4865 = vshll.u32 %v4235, 16
    %v4867 = vrot.slane %v4865, 5
    %v4868 = vsel %vm1283, %v4863, %v4867
    %v4869 = vshrl.u32 %v4235, 16
    %v4871 = vrot.slane %v4869, 4
    %v4872 = vor.u32 %v4871, %v4867
    %v4873 = vrot.slane %v4872, 4
    %v4875 = vshll.u32 %v4236, 16
    %v4877 = vrot.slane %v4875, 5
    %v4878 = vsel %vm1283, %v4873, %v4877
    %v4880 = vshrl.u32 %v4237, 16
    %v4882 = vrot.slane %v4880, 4
    %v4883 = vshll.u32 %v4237, 16
    %v4885 = vrot.slane %v4883, 5
    %v4886 = vor.u32 %v4882, %v4885
    %v4887 = vrot.slane %v4886, 4
    %v4889 = vshll.u32 %v4238, 16
    %v4891 = vrot.slane %v4889, 5
    %v4892 = vsel %vm1283, %v4887, %v4891
    %v4893 = vshrl.u32 %v4238, 16
    %v4895 = vrot.slane %v4893, 4
    %v4896 = vor.u32 %v4895, %v4891
    %v4897 = vrot.slane %v4896, 4
    %v4899 = vshll.u32 %v4239, 16
    %v4901 = vrot.slane %v4899, 5
    %v4902 = vsel %vm1283, %v4897, %v4901
    %v4904 = vshrl.u32 %v4240, 16
    %v4906 = vrot.slane %v4904, 4
    %v4907 = vshll.u32 %v4240, 16
    %v4909 = vrot.slane %v4907, 5
    %v4910 = vor.u32 %v4906, %v4909
    %v4911 = vrot.slane %v4910, 4
    %v4913 = vshll.u32 %v4241, 16
    %v4915 = vrot.slane %v4913, 5
    %v4916 = vsel %vm1283, %v4911, %v4915
    %v4917 = vshrl.u32 %v4241, 16
    %v4919 = vrot.slane %v4917, 4
    %v4920 = vor.u32 %v4919, %v4915
    %v4921 = vrot.slane %v4920, 4
    %v4923 = vshll.u32 %v4242, 16
    %v4925 = vrot.slane %v4923, 5
    %v4926 = vsel %vm1283, %v4921, %v4925
    %v4928 = vshrl.u32 %v4243, 16
    %v4930 = vrot.slane %v4928, 4
    %v4931 = vshll.u32 %v4243, 16
    %v4933 = vrot.slane %v4931, 5
    %v4934 = vor.u32 %v4930, %v4933
    %v4935 = vrot.slane %v4934, 4
    %v4937 = vshll.u32 %v4244, 16
    %v4939 = vrot.slane %v4937, 5
    %v4940 = vsel %vm1283, %v4935, %v4939
    %v4941 = vshrl.u32 %v4244, 16
    %v4943 = vrot.slane %v4941, 4
    %v4944 = vor.u32 %v4943, %v4939
    %v4945 = vrot.slane %v4944, 4
    %v4947 = vshll.u32 %v4245, 16
    %v4949 = vrot.slane %v4947, 5
    %v4950 = vsel %vm1283, %v4945, %v4949
    %v4952 = vshrl.u32 %v4246, 16
    %v4954 = vrot.slane %v4952, 4
    %v4955 = vshll.u32 %v4246, 16
    %v4957 = vrot.slane %v4955, 5
    %v4958 = vor.u32 %v4954, %v4957
    %v4959 = vrot.slane %v4958, 4
    %v4961 = vshll.u32 %v4247, 16
    %v4963 = vrot.slane %v4961, 5
    %v4964 = vsel %vm1283, %v4959, %v4963
    %v4965 = vshrl.u32 %v4247, 16
    %v4967 = vrot.slane %v4965, 4
    %v4968 = vor.u32 %v4967, %v4963
    %v4969 = vrot.slane %v4968, 4
    %v4971 = vshll.u32 %v4248, 16
    %v4973 = vrot.slane %v4971, 5
    %v4974 = vsel %vm1283, %v4969, %v4973
    %v4976 = vshrl.u32 %v4249, 16
    %v4978 = vrot.slane %v4976, 4
    %v4979 = vshll.u32 %v4249, 16
    %v4981 = vrot.slane %v4979, 5
    %v4982 = vor.u32 %v4978, %v4981
    %v4983 = vrot.slane %v4982, 4
    %v4985 = vshll.u32 %v4250, 16
    %v4987 = vrot.slane %v4985, 5
    %v4988 = vsel %vm1283, %v4983, %v4987
    %v4989 = vshrl.u32 %v4250, 16
    %v4991 = vrot.slane %v4989, 4
    %v4992 = vor.u32 %v4991, %v4987
    %v4993 = vrot.slane %v4992, 4
    %v4995 = vshll.u32 %v4251, 16
    %v4997 = vrot.slane %v4995, 5
    %v4998 = vsel %vm1283, %v4993, %v4997
    %v5000 = vshrl.u32 %v4252, 16
    %v5002 = vrot.slane %v5000, 4
    %v5003 = vshll.u32 %v4252, 16
    %v5005 = vrot.slane %v5003, 5
    %v5006 = vor.u32 %v5002, %v5005
    %v5007 = vrot.slane %v5006, 4
    %v5009 = vshll.u32 %v4253, 16
    %v5011 = vrot.slane %v5009, 5
    %v5012 = vsel %vm1283, %v5007, %v5011
    %v5013 = vshrl.u32 %v4253, 16
    %v5015 = vrot.slane %v5013, 4
    %v5016 = vor.u32 %v5015, %v5011
    %v5017 = vrot.slane %v5016, 4
    %v5019 = vshll.u32 %v4254, 16
    %v5021 = vrot.slane %v5019, 5
    %v5022 = vsel %vm1283, %v5017, %v5021
    %s5023 = scalar_lea.vmem %s1, 8
    %v5024 = vld [vmem:[%s5023] sm:$0x3]
    %v5025 = vunpack.c.l.b16 %v4268
    %v5026 = vunpack.c.l.b16 %v4278
    %v5027 = vunpack.c.l.b16 %v4292
    %v5028 = vunpack.c.l.b16 %v4302
    %v5029 = vunpack.c.l.b16 %v4316
    %v5030 = vunpack.c.l.b16 %v4326
    %v5031 = vunpack.c.l.b16 %v4340
    %v5032 = vunpack.c.l.b16 %v4350
    %v5033 = vunpack.c.l.b16 %v4364
    %v5034 = vunpack.c.l.b16 %v4374
    %v5035 = vunpack.c.l.b16 %v4388
    %v5036 = vunpack.c.l.b16 %v4398
    %v5037 = vunpack.c.l.b16 %v4412
    %v5038 = vunpack.c.l.b16 %v4422
    %v5039 = vunpack.c.l.b16 %v4436
    %v5040 = vunpack.c.l.b16 %v4446
    %v5041 = vunpack.c.l.b16 %v4460
    %v5042 = vunpack.c.l.b16 %v4470
    %v5043 = vunpack.c.l.b16 %v4484
    %v5044 = vunpack.c.l.b16 %v4494
    %v5045 = vunpack.c.l.b16 %v4508
    %v5046 = vunpack.c.l.b16 %v4518
    %v5047 = vunpack.c.l.b16 %v4532
    %v5048 = vunpack.c.l.b16 %v4542
    %v5049 = vunpack.c.l.b16 %v4556
    %v5050 = vunpack.c.l.b16 %v4566
    %v5051 = vunpack.c.l.b16 %v4580
    %v5052 = vunpack.c.l.b16 %v4590
    %v5053 = vunpack.c.l.b16 %v4604
    %v5054 = vunpack.c.l.b16 %v4614
    %v5055 = vunpack.c.l.b16 %v4628
    %v5056 = vunpack.c.l.b16 %v4638
    %v5057 = vunpack.c.l.b16 %v4652
    %v5058 = vunpack.c.l.b16 %v4662
    %v5059 = vunpack.c.l.b16 %v4676
    %v5060 = vunpack.c.l.b16 %v4686
    %v5061 = vunpack.c.l.b16 %v4700
    %v5062 = vunpack.c.l.b16 %v4710
    %v5063 = vunpack.c.l.b16 %v4724
    %v5064 = vunpack.c.l.b16 %v4734
    %v5065 = vunpack.c.l.b16 %v4748
    %v5066 = vunpack.c.l.b16 %v4758
    %v5067 = vunpack.c.l.b16 %v4772
    %v5068 = vunpack.c.l.b16 %v4782
    %v5069 = vunpack.c.l.b16 %v4796
    %v5070 = vunpack.c.l.b16 %v4806
    %v5071 = vunpack.c.l.b16 %v4820
    %v5072 = vunpack.c.l.b16 %v4830
    %v5073 = vunpack.c.l.b16 %v4844
    %v5074 = vunpack.c.l.b16 %v4854
    %v5075 = vunpack.c.l.b16 %v4868
    %v5076 = vunpack.c.l.b16 %v4878
    %v5077 = vunpack.c.l.b16 %v4892
    %v5078 = vunpack.c.l.b16 %v4902
    %v5079 = vunpack.c.l.b16 %v4916
    %v5080 = vunpack.c.l.b16 %v4926
    %v5081 = vunpack.c.l.b16 %v4940
    %v5082 = vunpack.c.l.b16 %v4950
    %v5083 = vunpack.c.l.b16 %v4964
    %v5084 = vunpack.c.l.b16 %v4974
    %v5085 = vunpack.c.l.b16 %v4988
    %v5086 = vunpack.c.l.b16 %v4998
    %v5087 = vunpack.c.l.b16 %v5012
    %v5088 = vunpack.c.l.b16 %v5022
    %v5089 = vpack.c.b16 %v5026, %v5025
    %v5090 = vpack.c.b16 %v5028, %v5027
    %v5091 = vpack.c.b16 %v5030, %v5029
    %v5092 = vpack.c.b16 %v5032, %v5031
    %v5093 = vpack.c.b16 %v5034, %v5033
    %v5094 = vpack.c.b16 %v5036, %v5035
    %v5095 = vpack.c.b16 %v5038, %v5037
    %v5096 = vpack.c.b16 %v5040, %v5039
    %v5097 = vpack.c.b16 %v5042, %v5041
    %v5098 = vpack.c.b16 %v5044, %v5043
    %v5099 = vpack.c.b16 %v5046, %v5045
    %v5100 = vpack.c.b16 %v5048, %v5047
    %v5101 = vpack.c.b16 %v5050, %v5049
    %v5102 = vpack.c.b16 %v5052, %v5051
    %v5103 = vpack.c.b16 %v5054, %v5053
    %v5104 = vpack.c.b16 %v5056, %v5055
    %v5105 = vpack.c.b16 %v5058, %v5057
    %v5106 = vpack.c.b16 %v5060, %v5059
    %v5107 = vpack.c.b16 %v5062, %v5061
    %v5108 = vpack.c.b16 %v5064, %v5063
    %v5109 = vpack.c.b16 %v5066, %v5065
    %v5110 = vpack.c.b16 %v5068, %v5067
    %v5111 = vpack.c.b16 %v5070, %v5069
    %v5112 = vpack.c.b16 %v5072, %v5071
    %v5113 = vpack.c.b16 %v5074, %v5073
    %v5114 = vpack.c.b16 %v5076, %v5075
    %v5115 = vpack.c.b16 %v5078, %v5077
    %v5116 = vpack.c.b16 %v5080, %v5079
    %v5117 = vpack.c.b16 %v5082, %v5081
    %v5118 = vpack.c.b16 %v5084, %v5083
    %v5119 = vpack.c.b16 %v5086, %v5085
    %v5120 = vpack.c.b16 %v5088, %v5087
    %v5122 = vsel %vm2150, %v5089, 0
    %v5125 = vsel %vm2150, %v5090, 0
    %v5128 = vsel %vm2150, %v5091, 0
    %v5131 = vsel %vm2150, %v5092, 0
    %v5134 = vsel %vm2150, %v5093, 0
    %v5137 = vsel %vm2150, %v5094, 0
    %v5140 = vsel %vm2150, %v5095, 0
    %v5143 = vsel %vm2150, %v5096, 0
    %v5146 = vsel %vm2150, %v5097, 0
    %v5149 = vsel %vm2150, %v5098, 0
    %v5152 = vsel %vm2150, %v5099, 0
    %v5155 = vsel %vm2150, %v5100, 0
    %v5158 = vsel %vm2150, %v5101, 0
    %v5161 = vsel %vm2150, %v5102, 0
    %v5164 = vsel %vm2150, %v5103, 0
    %v5167 = vsel %vm2150, %v5104, 0
    %v5170 = vsel %vm2150, %v5105, 0
    %v5173 = vsel %vm2150, %v5106, 0
    %v5176 = vsel %vm2150, %v5107, 0
    %v5179 = vsel %vm2150, %v5108, 0
    %v5182 = vsel %vm2150, %v5109, 0
    %v5185 = vsel %vm2150, %v5110, 0
    %v5188 = vsel %vm2150, %v5111, 0
    %v5191 = vsel %vm2150, %v5112, 0
    %v5194 = vsel %vm2150, %v5113, 0
    %v5197 = vsel %vm2150, %v5114, 0
    %v5200 = vsel %vm2150, %v5115, 0
    %v5203 = vsel %vm2150, %v5116, 0
    %v5206 = vsel %vm2150, %v5117, 0
    %v5209 = vsel %vm2150, %v5118, 0
    %v5212 = vsel %vm2150, %v5119, 0
    %v5215 = vsel %vm2150, %v5120, 0
    %v5218 = vsel %vm2247, %v5024, 0
    %5220 = vmatpush.bf16.msra.mxu0 0
    %5221 = vmatpush.bf16.msra.mxu0 0
    %5222 = vmatpush.bf16.msra.mxu0 0
    %5223 = vmatpush.bf16.msra.mxu0 0
    %5224 = vmatpush.bf16.msra.mxu0 0
    %5225 = vmatpush.bf16.msra.mxu0 0
    %5226 = vmatpush.bf16.msra.mxu0 0
    %5227 = vmatpush.bf16.msra.mxu0 %v5218
    %5228 = vmatmul.bf16.gmra.mxu0 %v5122
    %v5229 = vpop.f32.mrf.mxu0
    %v5230 = vadd.f32 0.0, %v5229
    %v5231 = vpop.f32.mrf.mxu0
    %v5232 = vadd.f32 0.0, %v5231
    %5233 = vmatmul.bf16.gmra.mxu0 %v5125
    %v5234 = vpop.f32.mrf.mxu0
    %v5235 = vadd.f32 0.0, %v5234
    %v5236 = vpop.f32.mrf.mxu0
    %v5237 = vadd.f32 0.0, %v5236
    %5238 = vmatmul.bf16.gmra.mxu0 %v5128
    %v5239 = vpop.f32.mrf.mxu0
    %v5240 = vadd.f32 0.0, %v5239
    %v5241 = vpop.f32.mrf.mxu0
    %v5242 = vadd.f32 0.0, %v5241
    %5243 = vmatmul.bf16.gmra.mxu0 %v5131
    %v5244 = vpop.f32.mrf.mxu0
    %v5245 = vadd.f32 0.0, %v5244
    %v5246 = vpop.f32.mrf.mxu0
    %v5247 = vadd.f32 0.0, %v5246
    %5248 = vmatmul.bf16.gmra.mxu0 %v5134
    %v5249 = vpop.f32.mrf.mxu0
    %v5250 = vadd.f32 0.0, %v5249
    %v5251 = vpop.f32.mrf.mxu0
    %v5252 = vadd.f32 0.0, %v5251
    %5253 = vmatmul.bf16.gmra.mxu0 %v5137
    %v5254 = vpop.f32.mrf.mxu0
    %v5255 = vadd.f32 0.0, %v5254
    %v5256 = vpop.f32.mrf.mxu0
    %v5257 = vadd.f32 0.0, %v5256
    %5258 = vmatmul.bf16.gmra.mxu0 %v5140
    %v5259 = vpop.f32.mrf.mxu0
    %v5260 = vadd.f32 0.0, %v5259
    %v5261 = vpop.f32.mrf.mxu0
    %v5262 = vadd.f32 0.0, %v5261
    %5263 = vmatmul.bf16.gmra.mxu0 %v5143
    %v5264 = vpop.f32.mrf.mxu0
    %v5265 = vadd.f32 0.0, %v5264
    %v5266 = vpop.f32.mrf.mxu0
    %v5267 = vadd.f32 0.0, %v5266
    %5268 = vmatmul.bf16.gmra.mxu0 %v5146
    %v5269 = vpop.f32.mrf.mxu0
    %v5270 = vadd.f32 0.0, %v5269
    %v5271 = vpop.f32.mrf.mxu0
    %v5272 = vadd.f32 0.0, %v5271
    %5273 = vmatmul.bf16.gmra.mxu0 %v5149
    %v5274 = vpop.f32.mrf.mxu0
    %v5275 = vadd.f32 0.0, %v5274
    %v5276 = vpop.f32.mrf.mxu0
    %v5277 = vadd.f32 0.0, %v5276
    %5278 = vmatmul.bf16.gmra.mxu0 %v5152
    %v5279 = vpop.f32.mrf.mxu0
    %v5280 = vadd.f32 0.0, %v5279
    %v5281 = vpop.f32.mrf.mxu0
    %v5282 = vadd.f32 0.0, %v5281
    %5283 = vmatmul.bf16.gmra.mxu0 %v5155
    %v5284 = vpop.f32.mrf.mxu0
    %v5285 = vadd.f32 0.0, %v5284
    %v5286 = vpop.f32.mrf.mxu0
    %v5287 = vadd.f32 0.0, %v5286
    %5288 = vmatmul.bf16.gmra.mxu0 %v5158
    %v5289 = vpop.f32.mrf.mxu0
    %v5290 = vadd.f32 0.0, %v5289
    %v5291 = vpop.f32.mrf.mxu0
    %v5292 = vadd.f32 0.0, %v5291
    %5293 = vmatmul.bf16.gmra.mxu0 %v5161
    %v5294 = vpop.f32.mrf.mxu0
    %v5295 = vadd.f32 0.0, %v5294
    %v5296 = vpop.f32.mrf.mxu0
    %v5297 = vadd.f32 0.0, %v5296
    %5298 = vmatmul.bf16.gmra.mxu0 %v5164
    %v5299 = vpop.f32.mrf.mxu0
    %v5300 = vadd.f32 0.0, %v5299
    %v5301 = vpop.f32.mrf.mxu0
    %v5302 = vadd.f32 0.0, %v5301
    %5303 = vmatmul.bf16.gmra.mxu0 %v5167
    %v5304 = vpop.f32.mrf.mxu0
    %v5305 = vadd.f32 0.0, %v5304
    %v5306 = vpop.f32.mrf.mxu0
    %v5307 = vadd.f32 0.0, %v5306
    %5308 = vmatmul.bf16.gmra.mxu0 %v5170
    %v5309 = vpop.f32.mrf.mxu0
    %v5310 = vadd.f32 0.0, %v5309
    %v5311 = vpop.f32.mrf.mxu0
    %v5312 = vadd.f32 0.0, %v5311
    %5313 = vmatmul.bf16.gmra.mxu0 %v5173
    %v5314 = vpop.f32.mrf.mxu0
    %v5315 = vadd.f32 0.0, %v5314
    %v5316 = vpop.f32.mrf.mxu0
    %v5317 = vadd.f32 0.0, %v5316
    %5318 = vmatmul.bf16.gmra.mxu0 %v5176
    %v5319 = vpop.f32.mrf.mxu0
    %v5320 = vadd.f32 0.0, %v5319
    %v5321 = vpop.f32.mrf.mxu0
    %v5322 = vadd.f32 0.0, %v5321
    %5323 = vmatmul.bf16.gmra.mxu0 %v5179
    %v5324 = vpop.f32.mrf.mxu0
    %v5325 = vadd.f32 0.0, %v5324
    %v5326 = vpop.f32.mrf.mxu0
    %v5327 = vadd.f32 0.0, %v5326
    %5328 = vmatmul.bf16.gmra.mxu0 %v5182
    %v5329 = vpop.f32.mrf.mxu0
    %v5330 = vadd.f32 0.0, %v5329
    %v5331 = vpop.f32.mrf.mxu0
    %v5332 = vadd.f32 0.0, %v5331
    %5333 = vmatmul.bf16.gmra.mxu0 %v5185
    %v5334 = vpop.f32.mrf.mxu0
    %v5335 = vadd.f32 0.0, %v5334
    %v5336 = vpop.f32.mrf.mxu0
    %v5337 = vadd.f32 0.0, %v5336
    %5338 = vmatmul.bf16.gmra.mxu0 %v5188
    %v5339 = vpop.f32.mrf.mxu0
    %v5340 = vadd.f32 0.0, %v5339
    %v5341 = vpop.f32.mrf.mxu0
    %v5342 = vadd.f32 0.0, %v5341
    %5343 = vmatmul.bf16.gmra.mxu0 %v5191
    %v5344 = vpop.f32.mrf.mxu0
    %v5345 = vadd.f32 0.0, %v5344
    %v5346 = vpop.f32.mrf.mxu0
    %v5347 = vadd.f32 0.0, %v5346
    %5348 = vmatmul.bf16.gmra.mxu0 %v5194
    %v5349 = vpop.f32.mrf.mxu0
    %v5350 = vadd.f32 0.0, %v5349
    %v5351 = vpop.f32.mrf.mxu0
    %v5352 = vadd.f32 0.0, %v5351
    %5353 = vmatmul.bf16.gmra.mxu0 %v5197
    %v5354 = vpop.f32.mrf.mxu0
    %v5355 = vadd.f32 0.0, %v5354
    %v5356 = vpop.f32.mrf.mxu0
    %v5357 = vadd.f32 0.0, %v5356
    %5358 = vmatmul.bf16.gmra.mxu0 %v5200
    %v5359 = vpop.f32.mrf.mxu0
    %v5360 = vadd.f32 0.0, %v5359
    %v5361 = vpop.f32.mrf.mxu0
    %v5362 = vadd.f32 0.0, %v5361
    %5363 = vmatmul.bf16.gmra.mxu0 %v5203
    %v5364 = vpop.f32.mrf.mxu0
    %v5365 = vadd.f32 0.0, %v5364
    %v5366 = vpop.f32.mrf.mxu0
    %v5367 = vadd.f32 0.0, %v5366
    %5368 = vmatmul.bf16.gmra.mxu0 %v5206
    %v5369 = vpop.f32.mrf.mxu0
    %v5370 = vadd.f32 0.0, %v5369
    %v5371 = vpop.f32.mrf.mxu0
    %v5372 = vadd.f32 0.0, %v5371
    %5373 = vmatmul.bf16.gmra.mxu0 %v5209
    %v5374 = vpop.f32.mrf.mxu0
    %v5375 = vadd.f32 0.0, %v5374
    %v5376 = vpop.f32.mrf.mxu0
    %v5377 = vadd.f32 0.0, %v5376
    %5378 = vmatmul.bf16.gmra.mxu0 %v5212
    %v5379 = vpop.f32.mrf.mxu0
    %v5380 = vadd.f32 0.0, %v5379
    %v5381 = vpop.f32.mrf.mxu0
    %v5382 = vadd.f32 0.0, %v5381
    %5383 = vmatmul.bf16.gmra.mxu0 %v5215
    %v5384 = vpop.f32.mrf.mxu0
    %v5385 = vadd.f32 0.0, %v5384
    %v5386 = vpop.f32.mrf.mxu0
    %v5387 = vadd.f32 0.0, %v5386
    %5388 = vdwg.mxu0
    %v5389 = vadd.f32 %v4095, %v5230
    %v5390 = vadd.f32 %v4096, %v5232
    %v5391 = vadd.f32 %v4097, %v5235
    %v5392 = vadd.f32 %v4098, %v5237
    %v5393 = vadd.f32 %v4099, %v5240
    %v5394 = vadd.f32 %v4100, %v5242
    %v5395 = vadd.f32 %v4101, %v5245
    %v5396 = vadd.f32 %v4102, %v5247
    %v5397 = vadd.f32 %v4103, %v5250
    %v5398 = vadd.f32 %v4104, %v5252
    %v5399 = vadd.f32 %v4105, %v5255
    %v5400 = vadd.f32 %v4106, %v5257
    %v5401 = vadd.f32 %v4107, %v5260
    %v5402 = vadd.f32 %v4108, %v5262
    %v5403 = vadd.f32 %v4109, %v5265
    %v5404 = vadd.f32 %v4110, %v5267
    %v5405 = vadd.f32 %v4111, %v5270
    %v5406 = vadd.f32 %v4112, %v5272
    %v5407 = vadd.f32 %v4113, %v5275
    %v5408 = vadd.f32 %v4114, %v5277
    %v5409 = vadd.f32 %v4115, %v5280
    %v5410 = vadd.f32 %v4116, %v5282
    %v5411 = vadd.f32 %v4117, %v5285
    %v5412 = vadd.f32 %v4118, %v5287
    %v5413 = vadd.f32 %v4119, %v5290
    %v5414 = vadd.f32 %v4120, %v5292
    %v5415 = vadd.f32 %v4121, %v5295
    %v5416 = vadd.f32 %v4122, %v5297
    %v5417 = vadd.f32 %v4123, %v5300
    %v5418 = vadd.f32 %v4124, %v5302
    %v5419 = vadd.f32 %v4125, %v5305
    %v5420 = vadd.f32 %v4126, %v5307
    %v5421 = vadd.f32 %v4127, %v5310
    %v5422 = vadd.f32 %v4128, %v5312
    %v5423 = vadd.f32 %v4129, %v5315
    %v5424 = vadd.f32 %v4130, %v5317
    %v5425 = vadd.f32 %v4131, %v5320
    %v5426 = vadd.f32 %v4132, %v5322
    %v5427 = vadd.f32 %v4133, %v5325
    %v5428 = vadd.f32 %v4134, %v5327
    %v5429 = vadd.f32 %v4135, %v5330
    %v5430 = vadd.f32 %v4136, %v5332
    %v5431 = vadd.f32 %v4137, %v5335
    %v5432 = vadd.f32 %v4138, %v5337
    %v5433 = vadd.f32 %v4139, %v5340
    %v5434 = vadd.f32 %v4140, %v5342
    %v5435 = vadd.f32 %v4141, %v5345
    %v5436 = vadd.f32 %v4142, %v5347
    %v5437 = vadd.f32 %v4143, %v5350
    %v5438 = vadd.f32 %v4144, %v5352
    %v5439 = vadd.f32 %v4145, %v5355
    %v5440 = vadd.f32 %v4146, %v5357
    %v5441 = vadd.f32 %v4147, %v5360
    %v5442 = vadd.f32 %v4148, %v5362
    %v5443 = vadd.f32 %v4149, %v5365
    %v5444 = vadd.f32 %v4150, %v5367
    %v5445 = vadd.f32 %v4151, %v5370
    %v5446 = vadd.f32 %v4152, %v5372
    %v5447 = vadd.f32 %v4153, %v5375
    %v5448 = vadd.f32 %v4154, %v5377
    %v5449 = vadd.f32 %v4155, %v5380
    %v5450 = vadd.f32 %v4156, %v5382
    %v5451 = vadd.f32 %v4157, %v5385
    %v5452 = vadd.f32 %v4158, %v5387
    %v5453 = vld [vmem:[%s957] sm:$0xe]
    %v5454 = vld [vmem:[%s957 + $0xc] sm:$0xe]
    %v5455 = vld [vmem:[%s957 + $0x18] sm:$0xe]
    %v5456 = vld [vmem:[%s957 + $0x24] sm:$0xe]
    %v5457 = vld [vmem:[%s957 + $0x30] sm:$0xe]
    %v5458 = vld [vmem:[%s957 + $0x3c] sm:$0xe]
    %v5459 = vld [vmem:[%s957 + $0x48] sm:$0xe]
    %v5460 = vld [vmem:[%s957 + $0x54] sm:$0xe]
    %v5461 = vld [vmem:[%s957 + $0x60] sm:$0xe]
    %v5462 = vld [vmem:[%s957 + $0x6c] sm:$0xe]
    %v5463 = vld [vmem:[%s957 + $0x78] sm:$0xe]
    %v5464 = vld [vmem:[%s957 + $0x84] sm:$0xe]
    %v5465 = vld [vmem:[%s957 + $0x90] sm:$0xe]
    %v5466 = vld [vmem:[%s957 + $0x9c] sm:$0xe]
    %v5467 = vld [vmem:[%s957 + $0xa8] sm:$0xe]
    %v5468 = vld [vmem:[%s957 + $0xb4] sm:$0xe]
    %v5469 = vld [vmem:[%s957 + $0xd8] sm:$0xe]
    %v5470 = vld [vmem:[%s957 + $0xe4] sm:$0xe]
    %v5471 = vld [vmem:[%s957 + $0xf0] sm:$0xe]
    %v5472 = vld [vmem:[%s957 + $0xfc] sm:$0xe]
    %v5473 = vld [vmem:[%s957 + $0x108] sm:$0xe]
    %v5474 = vld [vmem:[%s957 + $0x114] sm:$0xe]
    %v5475 = vld [vmem:[%s957 + $0x120] sm:$0xe]
    %v5476 = vld [vmem:[%s957 + $0x12c] sm:$0xe]
    %v5477 = vld [vmem:[%s957 + $0x138] sm:$0xe]
    %v5478 = vld [vmem:[%s957 + $0x144] sm:$0xe]
    %v5479 = vld [vmem:[%s957 + $0x150] sm:$0xe]
    %v5480 = vld [vmem:[%s957 + $0x15c] sm:$0xe]
    %v5481 = vld [vmem:[%s957 + $0x168] sm:$0xe]
    %v5482 = vld [vmem:[%s957 + $0x174] sm:$0xe]
    %v5483 = vld [vmem:[%s957 + $0x180] sm:$0xe]
    %v5484 = vld [vmem:[%s957 + $0x18c] sm:$0xe]
    %v5581 = vrot.slane %v5453, 5
    %v5582 = vrot.slane %v5581, 4
    %v5583 = vrot.slane %v4160, 5
    %v5584 = vsel %vm2946, %v5582, %v5583
    %v5585 = vrot.slane %v5583, 4
    %v5586 = vrot.slane %v4161, 5
    %v5587 = vsel %vm2946, %v5585, %v5586
    %v5588 = vrot.slane %v5454, 5
    %v5589 = vrot.slane %v5588, 4
    %v5590 = vrot.slane %v4163, 5
    %v5591 = vsel %vm2946, %v5589, %v5590
    %v5592 = vrot.slane %v5590, 4
    %v5593 = vrot.slane %v4164, 5
    %v5594 = vsel %vm2946, %v5592, %v5593
    %v5595 = vrot.slane %v5455, 5
    %v5596 = vrot.slane %v5595, 4
    %v5597 = vrot.slane %v4166, 5
    %v5598 = vsel %vm2946, %v5596, %v5597
    %v5599 = vrot.slane %v5597, 4
    %v5600 = vrot.slane %v4167, 5
    %v5601 = vsel %vm2946, %v5599, %v5600
    %v5602 = vrot.slane %v5456, 5
    %v5603 = vrot.slane %v5602, 4
    %v5604 = vrot.slane %v4169, 5
    %v5605 = vsel %vm2946, %v5603, %v5604
    %v5606 = vrot.slane %v5604, 4
    %v5607 = vrot.slane %v4170, 5
    %v5608 = vsel %vm2946, %v5606, %v5607
    %v5609 = vrot.slane %v5457, 5
    %v5610 = vrot.slane %v5609, 4
    %v5611 = vrot.slane %v4172, 5
    %v5612 = vsel %vm2946, %v5610, %v5611
    %v5613 = vrot.slane %v5611, 4
    %v5614 = vrot.slane %v4173, 5
    %v5615 = vsel %vm2946, %v5613, %v5614
    %v5616 = vrot.slane %v5458, 5
    %v5617 = vrot.slane %v5616, 4
    %v5618 = vrot.slane %v4175, 5
    %v5619 = vsel %vm2946, %v5617, %v5618
    %v5620 = vrot.slane %v5618, 4
    %v5621 = vrot.slane %v4176, 5
    %v5622 = vsel %vm2946, %v5620, %v5621
    %v5623 = vrot.slane %v5459, 5
    %v5624 = vrot.slane %v5623, 4
    %v5625 = vrot.slane %v4178, 5
    %v5626 = vsel %vm2946, %v5624, %v5625
    %v5627 = vrot.slane %v5625, 4
    %v5628 = vrot.slane %v4179, 5
    %v5629 = vsel %vm2946, %v5627, %v5628
    %v5630 = vrot.slane %v5460, 5
    %v5631 = vrot.slane %v5630, 4
    %v5632 = vrot.slane %v4181, 5
    %v5633 = vsel %vm2946, %v5631, %v5632
    %v5634 = vrot.slane %v5632, 4
    %v5635 = vrot.slane %v4182, 5
    %v5636 = vsel %vm2946, %v5634, %v5635
    %v5637 = vrot.slane %v5461, 5
    %v5638 = vrot.slane %v5637, 4
    %v5639 = vrot.slane %v4184, 5
    %v5640 = vsel %vm2946, %v5638, %v5639
    %v5641 = vrot.slane %v5639, 4
    %v5642 = vrot.slane %v4185, 5
    %v5643 = vsel %vm2946, %v5641, %v5642
    %v5644 = vrot.slane %v5462, 5
    %v5645 = vrot.slane %v5644, 4
    %v5646 = vrot.slane %v4187, 5
    %v5647 = vsel %vm2946, %v5645, %v5646
    %v5648 = vrot.slane %v5646, 4
    %v5649 = vrot.slane %v4188, 5
    %v5650 = vsel %vm2946, %v5648, %v5649
    %v5651 = vrot.slane %v5463, 5
    %v5652 = vrot.slane %v5651, 4
    %v5653 = vrot.slane %v4190, 5
    %v5654 = vsel %vm2946, %v5652, %v5653
    %v5655 = vrot.slane %v5653, 4
    %v5656 = vrot.slane %v4191, 5
    %v5657 = vsel %vm2946, %v5655, %v5656
    %v5658 = vrot.slane %v5464, 5
    %v5659 = vrot.slane %v5658, 4
    %v5660 = vrot.slane %v4193, 5
    %v5661 = vsel %vm2946, %v5659, %v5660
    %v5662 = vrot.slane %v5660, 4
    %v5663 = vrot.slane %v4194, 5
    %v5664 = vsel %vm2946, %v5662, %v5663
    %v5665 = vrot.slane %v5465, 5
    %v5666 = vrot.slane %v5665, 4
    %v5667 = vrot.slane %v4196, 5
    %v5668 = vsel %vm2946, %v5666, %v5667
    %v5669 = vrot.slane %v5667, 4
    %v5670 = vrot.slane %v4197, 5
    %v5671 = vsel %vm2946, %v5669, %v5670
    %v5672 = vrot.slane %v5466, 5
    %v5673 = vrot.slane %v5672, 4
    %v5674 = vrot.slane %v4199, 5
    %v5675 = vsel %vm2946, %v5673, %v5674
    %v5676 = vrot.slane %v5674, 4
    %v5677 = vrot.slane %v4200, 5
    %v5678 = vsel %vm2946, %v5676, %v5677
    %v5679 = vrot.slane %v5467, 5
    %v5680 = vrot.slane %v5679, 4
    %v5681 = vrot.slane %v4202, 5
    %v5682 = vsel %vm2946, %v5680, %v5681
    %v5683 = vrot.slane %v5681, 4
    %v5684 = vrot.slane %v4203, 5
    %v5685 = vsel %vm2946, %v5683, %v5684
    %v5686 = vrot.slane %v5468, 5
    %v5687 = vrot.slane %v5686, 4
    %v5688 = vrot.slane %v4205, 5
    %v5689 = vsel %vm2946, %v5687, %v5688
    %v5690 = vrot.slane %v5688, 4
    %v5691 = vrot.slane %v4206, 5
    %v5692 = vsel %vm2946, %v5690, %v5691
    %v5693 = vrot.slane %v5469, 5
    %v5694 = vrot.slane %v5693, 4
    %v5695 = vrot.slane %v4208, 5
    %v5696 = vsel %vm2946, %v5694, %v5695
    %v5697 = vrot.slane %v5695, 4
    %v5698 = vrot.slane %v4209, 5
    %v5699 = vsel %vm2946, %v5697, %v5698
    %v5700 = vrot.slane %v5470, 5
    %v5701 = vrot.slane %v5700, 4
    %v5702 = vrot.slane %v4211, 5
    %v5703 = vsel %vm2946, %v5701, %v5702
    %v5704 = vrot.slane %v5702, 4
    %v5705 = vrot.slane %v4212, 5
    %v5706 = vsel %vm2946, %v5704, %v5705
    %v5707 = vrot.slane %v5471, 5
    %v5708 = vrot.slane %v5707, 4
    %v5709 = vrot.slane %v4214, 5
    %v5710 = vsel %vm2946, %v5708, %v5709
    %v5711 = vrot.slane %v5709, 4
    %v5712 = vrot.slane %v4215, 5
    %v5713 = vsel %vm2946, %v5711, %v5712
    %v5714 = vrot.slane %v5472, 5
    %v5715 = vrot.slane %v5714, 4
    %v5716 = vrot.slane %v4217, 5
    %v5717 = vsel %vm2946, %v5715, %v5716
    %v5718 = vrot.slane %v5716, 4
    %v5719 = vrot.slane %v4218, 5
    %v5720 = vsel %vm2946, %v5718, %v5719
    %v5721 = vrot.slane %v5473, 5
    %v5722 = vrot.slane %v5721, 4
    %v5723 = vrot.slane %v4220, 5
    %v5724 = vsel %vm2946, %v5722, %v5723
    %v5725 = vrot.slane %v5723, 4
    %v5726 = vrot.slane %v4221, 5
    %v5727 = vsel %vm2946, %v5725, %v5726
    %v5728 = vrot.slane %v5474, 5
    %v5729 = vrot.slane %v5728, 4
    %v5730 = vrot.slane %v4223, 5
    %v5731 = vsel %vm2946, %v5729, %v5730
    %v5732 = vrot.slane %v5730, 4
    %v5733 = vrot.slane %v4224, 5
    %v5734 = vsel %vm2946, %v5732, %v5733
    %v5735 = vrot.slane %v5475, 5
    %v5736 = vrot.slane %v5735, 4
    %v5737 = vrot.slane %v4226, 5
    %v5738 = vsel %vm2946, %v5736, %v5737
    %v5739 = vrot.slane %v5737, 4
    %v5740 = vrot.slane %v4227, 5
    %v5741 = vsel %vm2946, %v5739, %v5740
    %v5742 = vrot.slane %v5476, 5
    %v5743 = vrot.slane %v5742, 4
    %v5744 = vrot.slane %v4229, 5
    %v5745 = vsel %vm2946, %v5743, %v5744
    %v5746 = vrot.slane %v5744, 4
    %v5747 = vrot.slane %v4230, 5
    %v5748 = vsel %vm2946, %v5746, %v5747
    %v5749 = vrot.slane %v5477, 5
    %v5750 = vrot.slane %v5749, 4
    %v5751 = vrot.slane %v4232, 5
    %v5752 = vsel %vm2946, %v5750, %v5751
    %v5753 = vrot.slane %v5751, 4
    %v5754 = vrot.slane %v4233, 5
    %v5755 = vsel %vm2946, %v5753, %v5754
    %v5756 = vrot.slane %v5478, 5
    %v5757 = vrot.slane %v5756, 4
    %v5758 = vrot.slane %v4235, 5
    %v5759 = vsel %vm2946, %v5757, %v5758
    %v5760 = vrot.slane %v5758, 4
    %v5761 = vrot.slane %v4236, 5
    %v5762 = vsel %vm2946, %v5760, %v5761
    %v5763 = vrot.slane %v5479, 5
    %v5764 = vrot.slane %v5763, 4
    %v5765 = vrot.slane %v4238, 5
    %v5766 = vsel %vm2946, %v5764, %v5765
    %v5767 = vrot.slane %v5765, 4
    %v5768 = vrot.slane %v4239, 5
    %v5769 = vsel %vm2946, %v5767, %v5768
    %v5770 = vrot.slane %v5480, 5
    %v5771 = vrot.slane %v5770, 4
    %v5772 = vrot.slane %v4241, 5
    %v5773 = vsel %vm2946, %v5771, %v5772
    %v5774 = vrot.slane %v5772, 4
    %v5775 = vrot.slane %v4242, 5
    %v5776 = vsel %vm2946, %v5774, %v5775
    %v5777 = vrot.slane %v5481, 5
    %v5778 = vrot.slane %v5777, 4
    %v5779 = vrot.slane %v4244, 5
    %v5780 = vsel %vm2946, %v5778, %v5779
    %v5781 = vrot.slane %v5779, 4
    %v5782 = vrot.slane %v4245, 5
    %v5783 = vsel %vm2946, %v5781, %v5782
    %v5784 = vrot.slane %v5482, 5
    %v5785 = vrot.slane %v5784, 4
    %v5786 = vrot.slane %v4247, 5
    %v5787 = vsel %vm2946, %v5785, %v5786
    %v5788 = vrot.slane %v5786, 4
    %v5789 = vrot.slane %v4248, 5
    %v5790 = vsel %vm2946, %v5788, %v5789
    %v5791 = vrot.slane %v5483, 5
    %v5792 = vrot.slane %v5791, 4
    %v5793 = vrot.slane %v4250, 5
    %v5794 = vsel %vm2946, %v5792, %v5793
    %v5795 = vrot.slane %v5793, 4
    %v5796 = vrot.slane %v4251, 5
    %v5797 = vsel %vm2946, %v5795, %v5796
    %v5798 = vrot.slane %v5484, 5
    %v5799 = vrot.slane %v5798, 4
    %v5800 = vrot.slane %v4253, 5
    %v5801 = vsel %vm2946, %v5799, %v5800
    %v5802 = vrot.slane %v5800, 4
    %v5803 = vrot.slane %v4254, 5
    %v5804 = vsel %vm2946, %v5802, %v5803
    %s5805 = scalar_lea.vmem %s1, 10
    %v5806 = vld [vmem:[%s5805] sm:$0x3]
    %v5807 = vunpack.c.l.b16 %v5584
    %v5808 = vunpack.c.l.b16 %v5587
    %v5809 = vunpack.c.l.b16 %v5591
    %v5810 = vunpack.c.l.b16 %v5594
    %v5811 = vunpack.c.l.b16 %v5598
    %v5812 = vunpack.c.l.b16 %v5601
    %v5813 = vunpack.c.l.b16 %v5605
    %v5814 = vunpack.c.l.b16 %v5608
    %v5815 = vunpack.c.l.b16 %v5612
    %v5816 = vunpack.c.l.b16 %v5615
    %v5817 = vunpack.c.l.b16 %v5619
    %v5818 = vunpack.c.l.b16 %v5622
    %v5819 = vunpack.c.l.b16 %v5626
    %v5820 = vunpack.c.l.b16 %v5629
    %v5821 = vunpack.c.l.b16 %v5633
    %v5822 = vunpack.c.l.b16 %v5636
    %v5823 = vunpack.c.l.b16 %v5640
    %v5824 = vunpack.c.l.b16 %v5643
    %v5825 = vunpack.c.l.b16 %v5647
    %v5826 = vunpack.c.l.b16 %v5650
    %v5827 = vunpack.c.l.b16 %v5654
    %v5828 = vunpack.c.l.b16 %v5657
    %v5829 = vunpack.c.l.b16 %v5661
    %v5830 = vunpack.c.l.b16 %v5664
    %v5831 = vunpack.c.l.b16 %v5668
    %v5832 = vunpack.c.l.b16 %v5671
    %v5833 = vunpack.c.l.b16 %v5675
    %v5834 = vunpack.c.l.b16 %v5678
    %v5835 = vunpack.c.l.b16 %v5682
    %v5836 = vunpack.c.l.b16 %v5685
    %v5837 = vunpack.c.l.b16 %v5689
    %v5838 = vunpack.c.l.b16 %v5692
    %v5839 = vunpack.c.l.b16 %v5696
    %v5840 = vunpack.c.l.b16 %v5699
    %v5841 = vunpack.c.l.b16 %v5703
    %v5842 = vunpack.c.l.b16 %v5706
    %v5843 = vunpack.c.l.b16 %v5710
    %v5844 = vunpack.c.l.b16 %v5713
    %v5845 = vunpack.c.l.b16 %v5717
    %v5846 = vunpack.c.l.b16 %v5720
    %v5847 = vunpack.c.l.b16 %v5724
    %v5848 = vunpack.c.l.b16 %v5727
    %v5849 = vunpack.c.l.b16 %v5731
    %v5850 = vunpack.c.l.b16 %v5734
    %v5851 = vunpack.c.l.b16 %v5738
    %v5852 = vunpack.c.l.b16 %v5741
    %v5853 = vunpack.c.l.b16 %v5745
    %v5854 = vunpack.c.l.b16 %v5748
    %v5855 = vunpack.c.l.b16 %v5752
    %v5856 = vunpack.c.l.b16 %v5755
    %v5857 = vunpack.c.l.b16 %v5759
    %v5858 = vunpack.c.l.b16 %v5762
    %v5859 = vunpack.c.l.b16 %v5766
    %v5860 = vunpack.c.l.b16 %v5769
    %v5861 = vunpack.c.l.b16 %v5773
    %v5862 = vunpack.c.l.b16 %v5776
    %v5863 = vunpack.c.l.b16 %v5780
    %v5864 = vunpack.c.l.b16 %v5783
    %v5865 = vunpack.c.l.b16 %v5787
    %v5866 = vunpack.c.l.b16 %v5790
    %v5867 = vunpack.c.l.b16 %v5794
    %v5868 = vunpack.c.l.b16 %v5797
    %v5869 = vunpack.c.l.b16 %v5801
    %v5870 = vunpack.c.l.b16 %v5804
    %v5871 = vpack.c.b16 %v5808, %v5807
    %v5872 = vpack.c.b16 %v5810, %v5809
    %v5873 = vpack.c.b16 %v5812, %v5811
    %v5874 = vpack.c.b16 %v5814, %v5813
    %v5875 = vpack.c.b16 %v5816, %v5815
    %v5876 = vpack.c.b16 %v5818, %v5817
    %v5877 = vpack.c.b16 %v5820, %v5819
    %v5878 = vpack.c.b16 %v5822, %v5821
    %v5879 = vpack.c.b16 %v5824, %v5823
    %v5880 = vpack.c.b16 %v5826, %v5825
    %v5881 = vpack.c.b16 %v5828, %v5827
    %v5882 = vpack.c.b16 %v5830, %v5829
    %v5883 = vpack.c.b16 %v5832, %v5831
    %v5884 = vpack.c.b16 %v5834, %v5833
    %v5885 = vpack.c.b16 %v5836, %v5835
    %v5886 = vpack.c.b16 %v5838, %v5837
    %v5887 = vpack.c.b16 %v5840, %v5839
    %v5888 = vpack.c.b16 %v5842, %v5841
    %v5889 = vpack.c.b16 %v5844, %v5843
    %v5890 = vpack.c.b16 %v5846, %v5845
    %v5891 = vpack.c.b16 %v5848, %v5847
    %v5892 = vpack.c.b16 %v5850, %v5849
    %v5893 = vpack.c.b16 %v5852, %v5851
    %v5894 = vpack.c.b16 %v5854, %v5853
    %v5895 = vpack.c.b16 %v5856, %v5855
    %v5896 = vpack.c.b16 %v5858, %v5857
    %v5897 = vpack.c.b16 %v5860, %v5859
    %v5898 = vpack.c.b16 %v5862, %v5861
    %v5899 = vpack.c.b16 %v5864, %v5863
    %v5900 = vpack.c.b16 %v5866, %v5865
    %v5901 = vpack.c.b16 %v5868, %v5867
    %v5902 = vpack.c.b16 %v5870, %v5869
    %v5904 = vsel %vm2150, %v5871, 0
    %v5907 = vsel %vm2150, %v5872, 0
    %v5910 = vsel %vm2150, %v5873, 0
    %v5913 = vsel %vm2150, %v5874, 0
    %v5916 = vsel %vm2150, %v5875, 0
    %v5919 = vsel %vm2150, %v5876, 0
    %v5922 = vsel %vm2150, %v5877, 0
    %v5925 = vsel %vm2150, %v5878, 0
    %v5928 = vsel %vm2150, %v5879, 0
    %v5931 = vsel %vm2150, %v5880, 0
    %v5934 = vsel %vm2150, %v5881, 0
    %v5937 = vsel %vm2150, %v5882, 0
    %v5940 = vsel %vm2150, %v5883, 0
    %v5943 = vsel %vm2150, %v5884, 0
    %v5946 = vsel %vm2150, %v5885, 0
    %v5949 = vsel %vm2150, %v5886, 0
    %v5952 = vsel %vm2150, %v5887, 0
    %v5955 = vsel %vm2150, %v5888, 0
    %v5958 = vsel %vm2150, %v5889, 0
    %v5961 = vsel %vm2150, %v5890, 0
    %v5964 = vsel %vm2150, %v5891, 0
    %v5967 = vsel %vm2150, %v5892, 0
    %v5970 = vsel %vm2150, %v5893, 0
    %v5973 = vsel %vm2150, %v5894, 0
    %v5976 = vsel %vm2150, %v5895, 0
    %v5979 = vsel %vm2150, %v5896, 0
    %v5982 = vsel %vm2150, %v5897, 0
    %v5985 = vsel %vm2150, %v5898, 0
    %v5988 = vsel %vm2150, %v5899, 0
    %v5991 = vsel %vm2150, %v5900, 0
    %v5994 = vsel %vm2150, %v5901, 0
    %v5997 = vsel %vm2150, %v5902, 0
    %v6000 = vsel %vm2247, %v5806, 0
    %6002 = vmatpush.bf16.msra.mxu0 0
    %6003 = vmatpush.bf16.msra.mxu0 0
    %6004 = vmatpush.bf16.msra.mxu0 0
    %6005 = vmatpush.bf16.msra.mxu0 0
    %6006 = vmatpush.bf16.msra.mxu0 0
    %6007 = vmatpush.bf16.msra.mxu0 0
    %6008 = vmatpush.bf16.msra.mxu0 0
    %6009 = vmatpush.bf16.msra.mxu0 %v6000
    %6010 = vmatmul.bf16.gmra.mxu0 %v5904
    %v6011 = vpop.f32.mrf.mxu0
    %v6012 = vadd.f32 0.0, %v6011
    %v6013 = vpop.f32.mrf.mxu0
    %v6014 = vadd.f32 0.0, %v6013
    %6015 = vmatmul.bf16.gmra.mxu0 %v5907
    %v6016 = vpop.f32.mrf.mxu0
    %v6017 = vadd.f32 0.0, %v6016
    %v6018 = vpop.f32.mrf.mxu0
    %v6019 = vadd.f32 0.0, %v6018
    %6020 = vmatmul.bf16.gmra.mxu0 %v5910
    %v6021 = vpop.f32.mrf.mxu0
    %v6022 = vadd.f32 0.0, %v6021
    %v6023 = vpop.f32.mrf.mxu0
    %v6024 = vadd.f32 0.0, %v6023
    %6025 = vmatmul.bf16.gmra.mxu0 %v5913
    %v6026 = vpop.f32.mrf.mxu0
    %v6027 = vadd.f32 0.0, %v6026
    %v6028 = vpop.f32.mrf.mxu0
    %v6029 = vadd.f32 0.0, %v6028
    %6030 = vmatmul.bf16.gmra.mxu0 %v5916
    %v6031 = vpop.f32.mrf.mxu0
    %v6032 = vadd.f32 0.0, %v6031
    %v6033 = vpop.f32.mrf.mxu0
    %v6034 = vadd.f32 0.0, %v6033
    %6035 = vmatmul.bf16.gmra.mxu0 %v5919
    %v6036 = vpop.f32.mrf.mxu0
    %v6037 = vadd.f32 0.0, %v6036
    %v6038 = vpop.f32.mrf.mxu0
    %v6039 = vadd.f32 0.0, %v6038
    %6040 = vmatmul.bf16.gmra.mxu0 %v5922
    %v6041 = vpop.f32.mrf.mxu0
    %v6042 = vadd.f32 0.0, %v6041
    %v6043 = vpop.f32.mrf.mxu0
    %v6044 = vadd.f32 0.0, %v6043
    %6045 = vmatmul.bf16.gmra.mxu0 %v5925
    %v6046 = vpop.f32.mrf.mxu0
    %v6047 = vadd.f32 0.0, %v6046
    %v6048 = vpop.f32.mrf.mxu0
    %v6049 = vadd.f32 0.0, %v6048
    %6050 = vmatmul.bf16.gmra.mxu0 %v5928
    %v6051 = vpop.f32.mrf.mxu0
    %v6052 = vadd.f32 0.0, %v6051
    %v6053 = vpop.f32.mrf.mxu0
    %v6054 = vadd.f32 0.0, %v6053
    %6055 = vmatmul.bf16.gmra.mxu0 %v5931
    %v6056 = vpop.f32.mrf.mxu0
    %v6057 = vadd.f32 0.0, %v6056
    %v6058 = vpop.f32.mrf.mxu0
    %v6059 = vadd.f32 0.0, %v6058
    %6060 = vmatmul.bf16.gmra.mxu0 %v5934
    %v6061 = vpop.f32.mrf.mxu0
    %v6062 = vadd.f32 0.0, %v6061
    %v6063 = vpop.f32.mrf.mxu0
    %v6064 = vadd.f32 0.0, %v6063
    %6065 = vmatmul.bf16.gmra.mxu0 %v5937
    %v6066 = vpop.f32.mrf.mxu0
    %v6067 = vadd.f32 0.0, %v6066
    %v6068 = vpop.f32.mrf.mxu0
    %v6069 = vadd.f32 0.0, %v6068
    %6070 = vmatmul.bf16.gmra.mxu0 %v5940
    %v6071 = vpop.f32.mrf.mxu0
    %v6072 = vadd.f32 0.0, %v6071
    %v6073 = vpop.f32.mrf.mxu0
    %v6074 = vadd.f32 0.0, %v6073
    %6075 = vmatmul.bf16.gmra.mxu0 %v5943
    %v6076 = vpop.f32.mrf.mxu0
    %v6077 = vadd.f32 0.0, %v6076
    %v6078 = vpop.f32.mrf.mxu0
    %v6079 = vadd.f32 0.0, %v6078
    %6080 = vmatmul.bf16.gmra.mxu0 %v5946
    %v6081 = vpop.f32.mrf.mxu0
    %v6082 = vadd.f32 0.0, %v6081
    %v6083 = vpop.f32.mrf.mxu0
    %v6084 = vadd.f32 0.0, %v6083
    %6085 = vmatmul.bf16.gmra.mxu0 %v5949
    %v6086 = vpop.f32.mrf.mxu0
    %v6087 = vadd.f32 0.0, %v6086
    %v6088 = vpop.f32.mrf.mxu0
    %v6089 = vadd.f32 0.0, %v6088
    %6090 = vmatmul.bf16.gmra.mxu0 %v5952
    %v6091 = vpop.f32.mrf.mxu0
    %v6092 = vadd.f32 0.0, %v6091
    %v6093 = vpop.f32.mrf.mxu0
    %v6094 = vadd.f32 0.0, %v6093
    %6095 = vmatmul.bf16.gmra.mxu0 %v5955
    %v6096 = vpop.f32.mrf.mxu0
    %v6097 = vadd.f32 0.0, %v6096
    %v6098 = vpop.f32.mrf.mxu0
    %v6099 = vadd.f32 0.0, %v6098
    %6100 = vmatmul.bf16.gmra.mxu0 %v5958
    %v6101 = vpop.f32.mrf.mxu0
    %v6102 = vadd.f32 0.0, %v6101
    %v6103 = vpop.f32.mrf.mxu0
    %v6104 = vadd.f32 0.0, %v6103
    %6105 = vmatmul.bf16.gmra.mxu0 %v5961
    %v6106 = vpop.f32.mrf.mxu0
    %v6107 = vadd.f32 0.0, %v6106
    %v6108 = vpop.f32.mrf.mxu0
    %v6109 = vadd.f32 0.0, %v6108
    %6110 = vmatmul.bf16.gmra.mxu0 %v5964
    %v6111 = vpop.f32.mrf.mxu0
    %v6112 = vadd.f32 0.0, %v6111
    %v6113 = vpop.f32.mrf.mxu0
    %v6114 = vadd.f32 0.0, %v6113
    %6115 = vmatmul.bf16.gmra.mxu0 %v5967
    %v6116 = vpop.f32.mrf.mxu0
    %v6117 = vadd.f32 0.0, %v6116
    %v6118 = vpop.f32.mrf.mxu0
    %v6119 = vadd.f32 0.0, %v6118
    %6120 = vmatmul.bf16.gmra.mxu0 %v5970
    %v6121 = vpop.f32.mrf.mxu0
    %v6122 = vadd.f32 0.0, %v6121
    %v6123 = vpop.f32.mrf.mxu0
    %v6124 = vadd.f32 0.0, %v6123
    %6125 = vmatmul.bf16.gmra.mxu0 %v5973
    %v6126 = vpop.f32.mrf.mxu0
    %v6127 = vadd.f32 0.0, %v6126
    %v6128 = vpop.f32.mrf.mxu0
    %v6129 = vadd.f32 0.0, %v6128
    %6130 = vmatmul.bf16.gmra.mxu0 %v5976
    %v6131 = vpop.f32.mrf.mxu0
    %v6132 = vadd.f32 0.0, %v6131
    %v6133 = vpop.f32.mrf.mxu0
    %v6134 = vadd.f32 0.0, %v6133
    %6135 = vmatmul.bf16.gmra.mxu0 %v5979
    %v6136 = vpop.f32.mrf.mxu0
    %v6137 = vadd.f32 0.0, %v6136
    %v6138 = vpop.f32.mrf.mxu0
    %v6139 = vadd.f32 0.0, %v6138
    %6140 = vmatmul.bf16.gmra.mxu0 %v5982
    %v6141 = vpop.f32.mrf.mxu0
    %v6142 = vadd.f32 0.0, %v6141
    %v6143 = vpop.f32.mrf.mxu0
    %v6144 = vadd.f32 0.0, %v6143
    %6145 = vmatmul.bf16.gmra.mxu0 %v5985
    %v6146 = vpop.f32.mrf.mxu0
    %v6147 = vadd.f32 0.0, %v6146
    %v6148 = vpop.f32.mrf.mxu0
    %v6149 = vadd.f32 0.0, %v6148
    %6150 = vmatmul.bf16.gmra.mxu0 %v5988
    %v6151 = vpop.f32.mrf.mxu0
    %v6152 = vadd.f32 0.0, %v6151
    %v6153 = vpop.f32.mrf.mxu0
    %v6154 = vadd.f32 0.0, %v6153
    %6155 = vmatmul.bf16.gmra.mxu0 %v5991
    %v6156 = vpop.f32.mrf.mxu0
    %v6157 = vadd.f32 0.0, %v6156
    %v6158 = vpop.f32.mrf.mxu0
    %v6159 = vadd.f32 0.0, %v6158
    %6160 = vmatmul.bf16.gmra.mxu0 %v5994
    %v6161 = vpop.f32.mrf.mxu0
    %v6162 = vadd.f32 0.0, %v6161
    %v6163 = vpop.f32.mrf.mxu0
    %v6164 = vadd.f32 0.0, %v6163
    %6165 = vmatmul.bf16.gmra.mxu0 %v5997
    %v6166 = vpop.f32.mrf.mxu0
    %v6167 = vadd.f32 0.0, %v6166
    %v6168 = vpop.f32.mrf.mxu0
    %v6169 = vadd.f32 0.0, %v6168
    %6170 = vdwg.mxu0
    %v6171 = vadd.f32 %v5389, %v6012
    %v6172 = vadd.f32 %v5390, %v6014
    %v6173 = vadd.f32 %v5391, %v6017
    %v6174 = vadd.f32 %v5392, %v6019
    %v6175 = vadd.f32 %v5393, %v6022
    %v6176 = vadd.f32 %v5394, %v6024
    %v6177 = vadd.f32 %v5395, %v6027
    %v6178 = vadd.f32 %v5396, %v6029
    %v6179 = vadd.f32 %v5397, %v6032
    %v6180 = vadd.f32 %v5398, %v6034
    %v6181 = vadd.f32 %v5399, %v6037
    %v6182 = vadd.f32 %v5400, %v6039
    %v6183 = vadd.f32 %v5401, %v6042
    %v6184 = vadd.f32 %v5402, %v6044
    %v6185 = vadd.f32 %v5403, %v6047
    %v6186 = vadd.f32 %v5404, %v6049
    %v6187 = vadd.f32 %v5405, %v6052
    %v6188 = vadd.f32 %v5406, %v6054
    %v6189 = vadd.f32 %v5407, %v6057
    %v6190 = vadd.f32 %v5408, %v6059
    %v6191 = vadd.f32 %v5409, %v6062
    %v6192 = vadd.f32 %v5410, %v6064
    %v6193 = vadd.f32 %v5411, %v6067
    %v6194 = vadd.f32 %v5412, %v6069
    %v6195 = vadd.f32 %v5413, %v6072
    %v6196 = vadd.f32 %v5414, %v6074
    %v6197 = vadd.f32 %v5415, %v6077
    %v6198 = vadd.f32 %v5416, %v6079
    %v6199 = vadd.f32 %v5417, %v6082
    %v6200 = vadd.f32 %v5418, %v6084
    %v6201 = vadd.f32 %v5419, %v6087
    %v6202 = vadd.f32 %v5420, %v6089
    %v6203 = vadd.f32 %v5421, %v6092
    %v6204 = vadd.f32 %v5422, %v6094
    %v6205 = vadd.f32 %v5423, %v6097
    %v6206 = vadd.f32 %v5424, %v6099
    %v6207 = vadd.f32 %v5425, %v6102
    %v6208 = vadd.f32 %v5426, %v6104
    %v6209 = vadd.f32 %v5427, %v6107
    %v6210 = vadd.f32 %v5428, %v6109
    %v6211 = vadd.f32 %v5429, %v6112
    %v6212 = vadd.f32 %v5430, %v6114
    %v6213 = vadd.f32 %v5431, %v6117
    %v6214 = vadd.f32 %v5432, %v6119
    %v6215 = vadd.f32 %v5433, %v6122
    %v6216 = vadd.f32 %v5434, %v6124
    %v6217 = vadd.f32 %v5435, %v6127
    %v6218 = vadd.f32 %v5436, %v6129
    %v6219 = vadd.f32 %v5437, %v6132
    %v6220 = vadd.f32 %v5438, %v6134
    %v6221 = vadd.f32 %v5439, %v6137
    %v6222 = vadd.f32 %v5440, %v6139
    %v6223 = vadd.f32 %v5441, %v6142
    %v6224 = vadd.f32 %v5442, %v6144
    %v6225 = vadd.f32 %v5443, %v6147
    %v6226 = vadd.f32 %v5444, %v6149
    %v6227 = vadd.f32 %v5445, %v6152
    %v6228 = vadd.f32 %v5446, %v6154
    %v6229 = vadd.f32 %v5447, %v6157
    %v6230 = vadd.f32 %v5448, %v6159
    %v6231 = vadd.f32 %v5449, %v6162
    %v6232 = vadd.f32 %v5450, %v6164
    %v6233 = vadd.f32 %v5451, %v6167
    %v6234 = vadd.f32 %v5452, %v6169
    %s6235 = scalar_lea.vmem [#allocation2], 24
    %v6236 = vld [vmem:[%s6235] sm:$0xf]
    %v6237 = vld [vmem:[%s6235 + $0x4] sm:$0xf]
    %v6238 = vld [vmem:[%s6235 + $0xc] sm:$0xf]
    %v6239 = vld [vmem:[%s6235 + $0x10] sm:$0xf]
    %v6240 = vld [vmem:[%s6235 + $0x18] sm:$0xf]
    %v6241 = vld [vmem:[%s6235 + $0x1c] sm:$0xf]
    %v6242 = vld [vmem:[%s6235 + $0x24] sm:$0xf]
    %v6243 = vld [vmem:[%s6235 + $0x28] sm:$0xf]
    %v6244 = vld [vmem:[%s6235 + $0x30] sm:$0xf]
    %v6245 = vld [vmem:[%s6235 + $0x34] sm:$0xf]
    %v6246 = vld [vmem:[%s6235 + $0x3c] sm:$0xf]
    %v6247 = vld [vmem:[%s6235 + $0x40] sm:$0xf]
    %v6248 = vld [vmem:[%s6235 + $0x48] sm:$0xf]
    %v6249 = vld [vmem:[%s6235 + $0x4c] sm:$0xf]
    %v6250 = vld [vmem:[%s6235 + $0x54] sm:$0xf]
    %v6251 = vld [vmem:[%s6235 + $0x58] sm:$0xf]
    %v6252 = vld [vmem:[%s6235 + $0x60] sm:$0xf]
    %v6253 = vld [vmem:[%s6235 + $0x64] sm:$0xf]
    %v6254 = vld [vmem:[%s6235 + $0x6c] sm:$0xf]
    %v6255 = vld [vmem:[%s6235 + $0x70] sm:$0xf]
    %v6256 = vld [vmem:[%s6235 + $0x78] sm:$0xf]
    %v6257 = vld [vmem:[%s6235 + $0x7c] sm:$0xf]
    %v6258 = vld [vmem:[%s6235 + $0x84] sm:$0xf]
    %v6259 = vld [vmem:[%s6235 + $0x88] sm:$0xf]
    %v6260 = vld [vmem:[%s6235 + $0x90] sm:$0xf]
    %v6261 = vld [vmem:[%s6235 + $0x94] sm:$0xf]
    %v6262 = vld [vmem:[%s6235 + $0x9c] sm:$0xf]
    %v6263 = vld [vmem:[%s6235 + $0xa0] sm:$0xf]
    %v6264 = vld [vmem:[%s6235 + $0xa8] sm:$0xf]
    %v6265 = vld [vmem:[%s6235 + $0xac] sm:$0xf]
    %v6266 = vld [vmem:[%s6235 + $0xb4] sm:$0xf]
    %v6267 = vld [vmem:[%s6235 + $0xb8] sm:$0xf]
    %v6268 = vld [vmem:[%s6235 + $0xd8] sm:$0xf]
    %v6269 = vld [vmem:[%s6235 + $0xdc] sm:$0xf]
    %v6270 = vld [vmem:[%s6235 + $0xe4] sm:$0xf]
    %v6271 = vld [vmem:[%s6235 + $0xe8] sm:$0xf]
    %v6272 = vld [vmem:[%s6235 + $0xf0] sm:$0xf]
    %v6273 = vld [vmem:[%s6235 + $0xf4] sm:$0xf]
    %v6274 = vld [vmem:[%s6235 + $0xfc] sm:$0xf]
    %v6275 = vld [vmem:[%s6235 + $0x100] sm:$0xf]
    %v6276 = vld [vmem:[%s6235 + $0x108] sm:$0xf]
    %v6277 = vld [vmem:[%s6235 + $0x10c] sm:$0xf]
    %v6278 = vld [vmem:[%s6235 + $0x114] sm:$0xf]
    %v6279 = vld [vmem:[%s6235 + $0x118] sm:$0xf]
    %v6280 = vld [vmem:[%s6235 + $0x120] sm:$0xf]
    %v6281 = vld [vmem:[%s6235 + $0x124] sm:$0xf]
    %v6282 = vld [vmem:[%s6235 + $0x12c] sm:$0xf]
    %v6283 = vld [vmem:[%s6235 + $0x130] sm:$0xf]
    %v6284 = vld [vmem:[%s6235 + $0x138] sm:$0xf]
    %v6285 = vld [vmem:[%s6235 + $0x13c] sm:$0xf]
    %v6286 = vld [vmem:[%s6235 + $0x144] sm:$0xf]
    %v6287 = vld [vmem:[%s6235 + $0x148] sm:$0xf]
    %v6288 = vld [vmem:[%s6235 + $0x150] sm:$0xf]
    %v6289 = vld [vmem:[%s6235 + $0x154] sm:$0xf]
    %v6290 = vld [vmem:[%s6235 + $0x15c] sm:$0xf]
    %v6291 = vld [vmem:[%s6235 + $0x160] sm:$0xf]
    %v6292 = vld [vmem:[%s6235 + $0x168] sm:$0xf]
    %v6293 = vld [vmem:[%s6235 + $0x16c] sm:$0xf]
    %v6294 = vld [vmem:[%s6235 + $0x174] sm:$0xf]
    %v6295 = vld [vmem:[%s6235 + $0x178] sm:$0xf]
    %v6296 = vld [vmem:[%s6235 + $0x180] sm:$0xf]
    %v6297 = vld [vmem:[%s6235 + $0x184] sm:$0xf]
    %v6298 = vld [vmem:[%s6235 + $0x18c] sm:$0xf]
    %v6299 = vld [vmem:[%s6235 + $0x190] sm:$0xf]
    %s6300 = scalar_lea.vmem %s1, 12
    %v6301 = vld [vmem:[%s6300] sm:$0x3]
    %v6366 = vunpack.c.l.b16 %v6236
    %v6367 = vunpack.c.l.b16 %v6237
    %v6368 = vunpack.c.l.b16 %v6238
    %v6369 = vunpack.c.l.b16 %v6239
    %v6370 = vunpack.c.l.b16 %v6240
    %v6371 = vunpack.c.l.b16 %v6241
    %v6372 = vunpack.c.l.b16 %v6242
    %v6373 = vunpack.c.l.b16 %v6243
    %v6374 = vunpack.c.l.b16 %v6244
    %v6375 = vunpack.c.l.b16 %v6245
    %v6376 = vunpack.c.l.b16 %v6246
    %v6377 = vunpack.c.l.b16 %v6247
    %v6378 = vunpack.c.l.b16 %v6248
    %v6379 = vunpack.c.l.b16 %v6249
    %v6380 = vunpack.c.l.b16 %v6250
    %v6381 = vunpack.c.l.b16 %v6251
    %v6382 = vunpack.c.l.b16 %v6252
    %v6383 = vunpack.c.l.b16 %v6253
    %v6384 = vunpack.c.l.b16 %v6254
    %v6385 = vunpack.c.l.b16 %v6255
    %v6386 = vunpack.c.l.b16 %v6256
    %v6387 = vunpack.c.l.b16 %v6257
    %v6388 = vunpack.c.l.b16 %v6258
    %v6389 = vunpack.c.l.b16 %v6259
    %v6390 = vunpack.c.l.b16 %v6260
    %v6391 = vunpack.c.l.b16 %v6261
    %v6392 = vunpack.c.l.b16 %v6262
    %v6393 = vunpack.c.l.b16 %v6263
    %v6394 = vunpack.c.l.b16 %v6264
    %v6395 = vunpack.c.l.b16 %v6265
    %v6396 = vunpack.c.l.b16 %v6266
    %v6397 = vunpack.c.l.b16 %v6267
    %v6398 = vunpack.c.l.b16 %v6268
    %v6399 = vunpack.c.l.b16 %v6269
    %v6400 = vunpack.c.l.b16 %v6270
    %v6401 = vunpack.c.l.b16 %v6271
    %v6402 = vunpack.c.l.b16 %v6272
    %v6403 = vunpack.c.l.b16 %v6273
    %v6404 = vunpack.c.l.b16 %v6274
    %v6405 = vunpack.c.l.b16 %v6275
    %v6406 = vunpack.c.l.b16 %v6276
    %v6407 = vunpack.c.l.b16 %v6277
    %v6408 = vunpack.c.l.b16 %v6278
    %v6409 = vunpack.c.l.b16 %v6279
    %v6410 = vunpack.c.l.b16 %v6280
    %v6411 = vunpack.c.l.b16 %v6281
    %v6412 = vunpack.c.l.b16 %v6282
    %v6413 = vunpack.c.l.b16 %v6283
    %v6414 = vunpack.c.l.b16 %v6284
    %v6415 = vunpack.c.l.b16 %v6285
    %v6416 = vunpack.c.l.b16 %v6286
    %v6417 = vunpack.c.l.b16 %v6287
    %v6418 = vunpack.c.l.b16 %v6288
    %v6419 = vunpack.c.l.b16 %v6289
    %v6420 = vunpack.c.l.b16 %v6290
    %v6421 = vunpack.c.l.b16 %v6291
    %v6422 = vunpack.c.l.b16 %v6292
    %v6423 = vunpack.c.l.b16 %v6293
    %v6424 = vunpack.c.l.b16 %v6294
    %v6425 = vunpack.c.l.b16 %v6295
    %v6426 = vunpack.c.l.b16 %v6296
    %v6427 = vunpack.c.l.b16 %v6297
    %v6428 = vunpack.c.l.b16 %v6298
    %v6429 = vunpack.c.l.b16 %v6299
    %v6430 = vpack.c.b16 %v6367, %v6366
    %v6431 = vpack.c.b16 %v6369, %v6368
    %v6432 = vpack.c.b16 %v6371, %v6370
    %v6433 = vpack.c.b16 %v6373, %v6372
    %v6434 = vpack.c.b16 %v6375, %v6374
    %v6435 = vpack.c.b16 %v6377, %v6376
    %v6436 = vpack.c.b16 %v6379, %v6378
    %v6437 = vpack.c.b16 %v6381, %v6380
    %v6438 = vpack.c.b16 %v6383, %v6382
    %v6439 = vpack.c.b16 %v6385, %v6384
    %v6440 = vpack.c.b16 %v6387, %v6386
    %v6441 = vpack.c.b16 %v6389, %v6388
    %v6442 = vpack.c.b16 %v6391, %v6390
    %v6443 = vpack.c.b16 %v6393, %v6392
    %v6444 = vpack.c.b16 %v6395, %v6394
    %v6445 = vpack.c.b16 %v6397, %v6396
    %v6446 = vpack.c.b16 %v6399, %v6398
    %v6447 = vpack.c.b16 %v6401, %v6400
    %v6448 = vpack.c.b16 %v6403, %v6402
    %v6449 = vpack.c.b16 %v6405, %v6404
    %v6450 = vpack.c.b16 %v6407, %v6406
    %v6451 = vpack.c.b16 %v6409, %v6408
    %v6452 = vpack.c.b16 %v6411, %v6410
    %v6453 = vpack.c.b16 %v6413, %v6412
    %v6454 = vpack.c.b16 %v6415, %v6414
    %v6455 = vpack.c.b16 %v6417, %v6416
    %v6456 = vpack.c.b16 %v6419, %v6418
    %v6457 = vpack.c.b16 %v6421, %v6420
    %v6458 = vpack.c.b16 %v6423, %v6422
    %v6459 = vpack.c.b16 %v6425, %v6424
    %v6460 = vpack.c.b16 %v6427, %v6426
    %v6461 = vpack.c.b16 %v6429, %v6428
    %v6463 = vsel %vm2150, %v6430, 0
    %v6466 = vsel %vm2150, %v6431, 0
    %v6469 = vsel %vm2150, %v6432, 0
    %v6472 = vsel %vm2150, %v6433, 0
    %v6475 = vsel %vm2150, %v6434, 0
    %v6478 = vsel %vm2150, %v6435, 0
    %v6481 = vsel %vm2150, %v6436, 0
    %v6484 = vsel %vm2150, %v6437, 0
    %v6487 = vsel %vm2150, %v6438, 0
    %v6490 = vsel %vm2150, %v6439, 0
    %v6493 = vsel %vm2150, %v6440, 0
    %v6496 = vsel %vm2150, %v6441, 0
    %v6499 = vsel %vm2150, %v6442, 0
    %v6502 = vsel %vm2150, %v6443, 0
    %v6505 = vsel %vm2150, %v6444, 0
    %v6508 = vsel %vm2150, %v6445, 0
    %v6511 = vsel %vm2150, %v6446, 0
    %v6514 = vsel %vm2150, %v6447, 0
    %v6517 = vsel %vm2150, %v6448, 0
    %v6520 = vsel %vm2150, %v6449, 0
    %v6523 = vsel %vm2150, %v6450, 0
    %v6526 = vsel %vm2150, %v6451, 0
    %v6529 = vsel %vm2150, %v6452, 0
    %v6532 = vsel %vm2150, %v6453, 0
    %v6535 = vsel %vm2150, %v6454, 0
    %v6538 = vsel %vm2150, %v6455, 0
    %v6541 = vsel %vm2150, %v6456, 0
    %v6544 = vsel %vm2150, %v6457, 0
    %v6547 = vsel %vm2150, %v6458, 0
    %v6550 = vsel %vm2150, %v6459, 0
    %v6553 = vsel %vm2150, %v6460, 0
    %v6556 = vsel %vm2150, %v6461, 0
    %v6559 = vsel %vm2247, %v6301, 0
    %6561 = vmatpush.bf16.msra.mxu0 0
    %6562 = vmatpush.bf16.msra.mxu0 0
    %6563 = vmatpush.bf16.msra.mxu0 0
    %6564 = vmatpush.bf16.msra.mxu0 0
    %6565 = vmatpush.bf16.msra.mxu0 0
    %6566 = vmatpush.bf16.msra.mxu0 0
    %6567 = vmatpush.bf16.msra.mxu0 0
    %6568 = vmatpush.bf16.msra.mxu0 %v6559
    %6569 = vmatmul.bf16.gmra.mxu0 %v6463
    %v6570 = vpop.f32.mrf.mxu0
    %v6571 = vadd.f32 0.0, %v6570
    %v6572 = vpop.f32.mrf.mxu0
    %v6573 = vadd.f32 0.0, %v6572
    %6574 = vmatmul.bf16.gmra.mxu0 %v6466
    %v6575 = vpop.f32.mrf.mxu0
    %v6576 = vadd.f32 0.0, %v6575
    %v6577 = vpop.f32.mrf.mxu0
    %v6578 = vadd.f32 0.0, %v6577
    %6579 = vmatmul.bf16.gmra.mxu0 %v6469
    %v6580 = vpop.f32.mrf.mxu0
    %v6581 = vadd.f32 0.0, %v6580
    %v6582 = vpop.f32.mrf.mxu0
    %v6583 = vadd.f32 0.0, %v6582
    %6584 = vmatmul.bf16.gmra.mxu0 %v6472
    %v6585 = vpop.f32.mrf.mxu0
    %v6586 = vadd.f32 0.0, %v6585
    %v6587 = vpop.f32.mrf.mxu0
    %v6588 = vadd.f32 0.0, %v6587
    %6589 = vmatmul.bf16.gmra.mxu0 %v6475
    %v6590 = vpop.f32.mrf.mxu0
    %v6591 = vadd.f32 0.0, %v6590
    %v6592 = vpop.f32.mrf.mxu0
    %v6593 = vadd.f32 0.0, %v6592
    %6594 = vmatmul.bf16.gmra.mxu0 %v6478
    %v6595 = vpop.f32.mrf.mxu0
    %v6596 = vadd.f32 0.0, %v6595
    %v6597 = vpop.f32.mrf.mxu0
    %v6598 = vadd.f32 0.0, %v6597
    %6599 = vmatmul.bf16.gmra.mxu0 %v6481
    %v6600 = vpop.f32.mrf.mxu0
    %v6601 = vadd.f32 0.0, %v6600
    %v6602 = vpop.f32.mrf.mxu0
    %v6603 = vadd.f32 0.0, %v6602
    %6604 = vmatmul.bf16.gmra.mxu0 %v6484
    %v6605 = vpop.f32.mrf.mxu0
    %v6606 = vadd.f32 0.0, %v6605
    %v6607 = vpop.f32.mrf.mxu0
    %v6608 = vadd.f32 0.0, %v6607
    %6609 = vmatmul.bf16.gmra.mxu0 %v6487
    %v6610 = vpop.f32.mrf.mxu0
    %v6611 = vadd.f32 0.0, %v6610
    %v6612 = vpop.f32.mrf.mxu0
    %v6613 = vadd.f32 0.0, %v6612
    %6614 = vmatmul.bf16.gmra.mxu0 %v6490
    %v6615 = vpop.f32.mrf.mxu0
    %v6616 = vadd.f32 0.0, %v6615
    %v6617 = vpop.f32.mrf.mxu0
    %v6618 = vadd.f32 0.0, %v6617
    %6619 = vmatmul.bf16.gmra.mxu0 %v6493
    %v6620 = vpop.f32.mrf.mxu0
    %v6621 = vadd.f32 0.0, %v6620
    %v6622 = vpop.f32.mrf.mxu0
    %v6623 = vadd.f32 0.0, %v6622
    %6624 = vmatmul.bf16.gmra.mxu0 %v6496
    %v6625 = vpop.f32.mrf.mxu0
    %v6626 = vadd.f32 0.0, %v6625
    %v6627 = vpop.f32.mrf.mxu0
    %v6628 = vadd.f32 0.0, %v6627
    %6629 = vmatmul.bf16.gmra.mxu0 %v6499
    %v6630 = vpop.f32.mrf.mxu0
    %v6631 = vadd.f32 0.0, %v6630
    %v6632 = vpop.f32.mrf.mxu0
    %v6633 = vadd.f32 0.0, %v6632
    %6634 = vmatmul.bf16.gmra.mxu0 %v6502
    %v6635 = vpop.f32.mrf.mxu0
    %v6636 = vadd.f32 0.0, %v6635
    %v6637 = vpop.f32.mrf.mxu0
    %v6638 = vadd.f32 0.0, %v6637
    %6639 = vmatmul.bf16.gmra.mxu0 %v6505
    %v6640 = vpop.f32.mrf.mxu0
    %v6641 = vadd.f32 0.0, %v6640
    %v6642 = vpop.f32.mrf.mxu0
    %v6643 = vadd.f32 0.0, %v6642
    %6644 = vmatmul.bf16.gmra.mxu0 %v6508
    %v6645 = vpop.f32.mrf.mxu0
    %v6646 = vadd.f32 0.0, %v6645
    %v6647 = vpop.f32.mrf.mxu0
    %v6648 = vadd.f32 0.0, %v6647
    %6649 = vmatmul.bf16.gmra.mxu0 %v6511
    %v6650 = vpop.f32.mrf.mxu0
    %v6651 = vadd.f32 0.0, %v6650
    %v6652 = vpop.f32.mrf.mxu0
    %v6653 = vadd.f32 0.0, %v6652
    %6654 = vmatmul.bf16.gmra.mxu0 %v6514
    %v6655 = vpop.f32.mrf.mxu0
    %v6656 = vadd.f32 0.0, %v6655
    %v6657 = vpop.f32.mrf.mxu0
    %v6658 = vadd.f32 0.0, %v6657
    %6659 = vmatmul.bf16.gmra.mxu0 %v6517
    %v6660 = vpop.f32.mrf.mxu0
    %v6661 = vadd.f32 0.0, %v6660
    %v6662 = vpop.f32.mrf.mxu0
    %v6663 = vadd.f32 0.0, %v6662
    %6664 = vmatmul.bf16.gmra.mxu0 %v6520
    %v6665 = vpop.f32.mrf.mxu0
    %v6666 = vadd.f32 0.0, %v6665
    %v6667 = vpop.f32.mrf.mxu0
    %v6668 = vadd.f32 0.0, %v6667
    %6669 = vmatmul.bf16.gmra.mxu0 %v6523
    %v6670 = vpop.f32.mrf.mxu0
    %v6671 = vadd.f32 0.0, %v6670
    %v6672 = vpop.f32.mrf.mxu0
    %v6673 = vadd.f32 0.0, %v6672
    %6674 = vmatmul.bf16.gmra.mxu0 %v6526
    %v6675 = vpop.f32.mrf.mxu0
    %v6676 = vadd.f32 0.0, %v6675
    %v6677 = vpop.f32.mrf.mxu0
    %v6678 = vadd.f32 0.0, %v6677
    %6679 = vmatmul.bf16.gmra.mxu0 %v6529
    %v6680 = vpop.f32.mrf.mxu0
    %v6681 = vadd.f32 0.0, %v6680
    %v6682 = vpop.f32.mrf.mxu0
    %v6683 = vadd.f32 0.0, %v6682
    %6684 = vmatmul.bf16.gmra.mxu0 %v6532
    %v6685 = vpop.f32.mrf.mxu0
    %v6686 = vadd.f32 0.0, %v6685
    %v6687 = vpop.f32.mrf.mxu0
    %v6688 = vadd.f32 0.0, %v6687
    %6689 = vmatmul.bf16.gmra.mxu0 %v6535
    %v6690 = vpop.f32.mrf.mxu0
    %v6691 = vadd.f32 0.0, %v6690
    %v6692 = vpop.f32.mrf.mxu0
    %v6693 = vadd.f32 0.0, %v6692
    %6694 = vmatmul.bf16.gmra.mxu0 %v6538
    %v6695 = vpop.f32.mrf.mxu0
    %v6696 = vadd.f32 0.0, %v6695
    %v6697 = vpop.f32.mrf.mxu0
    %v6698 = vadd.f32 0.0, %v6697
    %6699 = vmatmul.bf16.gmra.mxu0 %v6541
    %v6700 = vpop.f32.mrf.mxu0
    %v6701 = vadd.f32 0.0, %v6700
    %v6702 = vpop.f32.mrf.mxu0
    %v6703 = vadd.f32 0.0, %v6702
    %6704 = vmatmul.bf16.gmra.mxu0 %v6544
    %v6705 = vpop.f32.mrf.mxu0
    %v6706 = vadd.f32 0.0, %v6705
    %v6707 = vpop.f32.mrf.mxu0
    %v6708 = vadd.f32 0.0, %v6707
    %6709 = vmatmul.bf16.gmra.mxu0 %v6547
    %v6710 = vpop.f32.mrf.mxu0
    %v6711 = vadd.f32 0.0, %v6710
    %v6712 = vpop.f32.mrf.mxu0
    %v6713 = vadd.f32 0.0, %v6712
    %6714 = vmatmul.bf16.gmra.mxu0 %v6550
    %v6715 = vpop.f32.mrf.mxu0
    %v6716 = vadd.f32 0.0, %v6715
    %v6717 = vpop.f32.mrf.mxu0
    %v6718 = vadd.f32 0.0, %v6717
    %6719 = vmatmul.bf16.gmra.mxu0 %v6553
    %v6720 = vpop.f32.mrf.mxu0
    %v6721 = vadd.f32 0.0, %v6720
    %v6722 = vpop.f32.mrf.mxu0
    %v6723 = vadd.f32 0.0, %v6722
    %6724 = vmatmul.bf16.gmra.mxu0 %v6556
    %v6725 = vpop.f32.mrf.mxu0
    %v6726 = vadd.f32 0.0, %v6725
    %v6727 = vpop.f32.mrf.mxu0
    %v6728 = vadd.f32 0.0, %v6727
    %6729 = vdwg.mxu0
    %v6730 = vadd.f32 %v6171, %v6571
    %v6731 = vadd.f32 %v6172, %v6573
    %v6732 = vadd.f32 %v6173, %v6576
    %v6733 = vadd.f32 %v6174, %v6578
    %v6734 = vadd.f32 %v6175, %v6581
    %v6735 = vadd.f32 %v6176, %v6583
    %v6736 = vadd.f32 %v6177, %v6586
    %v6737 = vadd.f32 %v6178, %v6588
    %v6738 = vadd.f32 %v6179, %v6591
    %v6739 = vadd.f32 %v6180, %v6593
    %v6740 = vadd.f32 %v6181, %v6596
    %v6741 = vadd.f32 %v6182, %v6598
    %v6742 = vadd.f32 %v6183, %v6601
    %v6743 = vadd.f32 %v6184, %v6603
    %v6744 = vadd.f32 %v6185, %v6606
    %v6745 = vadd.f32 %v6186, %v6608
    %v6746 = vadd.f32 %v6187, %v6611
    %v6747 = vadd.f32 %v6188, %v6613
    %v6748 = vadd.f32 %v6189, %v6616
    %v6749 = vadd.f32 %v6190, %v6618
    %v6750 = vadd.f32 %v6191, %v6621
    %v6751 = vadd.f32 %v6192, %v6623
    %v6752 = vadd.f32 %v6193, %v6626
    %v6753 = vadd.f32 %v6194, %v6628
    %v6754 = vadd.f32 %v6195, %v6631
    %v6755 = vadd.f32 %v6196, %v6633
    %v6756 = vadd.f32 %v6197, %v6636
    %v6757 = vadd.f32 %v6198, %v6638
    %v6758 = vadd.f32 %v6199, %v6641
    %v6759 = vadd.f32 %v6200, %v6643
    %v6760 = vadd.f32 %v6201, %v6646
    %v6761 = vadd.f32 %v6202, %v6648
    %v6762 = vadd.f32 %v6203, %v6651
    %v6763 = vadd.f32 %v6204, %v6653
    %v6764 = vadd.f32 %v6205, %v6656
    %v6765 = vadd.f32 %v6206, %v6658
    %v6766 = vadd.f32 %v6207, %v6661
    %v6767 = vadd.f32 %v6208, %v6663
    %v6768 = vadd.f32 %v6209, %v6666
    %v6769 = vadd.f32 %v6210, %v6668
    %v6770 = vadd.f32 %v6211, %v6671
    %v6771 = vadd.f32 %v6212, %v6673
    %v6772 = vadd.f32 %v6213, %v6676
    %v6773 = vadd.f32 %v6214, %v6678
    %v6774 = vadd.f32 %v6215, %v6681
    %v6775 = vadd.f32 %v6216, %v6683
    %v6776 = vadd.f32 %v6217, %v6686
    %v6777 = vadd.f32 %v6218, %v6688
    %v6778 = vadd.f32 %v6219, %v6691
    %v6779 = vadd.f32 %v6220, %v6693
    %v6780 = vadd.f32 %v6221, %v6696
    %v6781 = vadd.f32 %v6222, %v6698
    %v6782 = vadd.f32 %v6223, %v6701
    %v6783 = vadd.f32 %v6224, %v6703
    %v6784 = vadd.f32 %v6225, %v6706
    %v6785 = vadd.f32 %v6226, %v6708
    %v6786 = vadd.f32 %v6227, %v6711
    %v6787 = vadd.f32 %v6228, %v6713
    %v6788 = vadd.f32 %v6229, %v6716
    %v6789 = vadd.f32 %v6230, %v6718
    %v6790 = vadd.f32 %v6231, %v6721
    %v6791 = vadd.f32 %v6232, %v6723
    %v6792 = vadd.f32 %v6233, %v6726
    %v6793 = vadd.f32 %v6234, %v6728
    %v6794 = vld [vmem:[%s6235] sm:$0xf]
    %v6795 = vld [vmem:[%s6235 + $0x4] sm:$0xf]
    %v6796 = vld [vmem:[%s6235 + $0x8] sm:$0x1]
    %v6797 = vld [vmem:[%s6235 + $0xc] sm:$0xf]
    %v6798 = vld [vmem:[%s6235 + $0x10] sm:$0xf]
    %v6799 = vld [vmem:[%s6235 + $0x14] sm:$0x1]
    %v6800 = vld [vmem:[%s6235 + $0x18] sm:$0xf]
    %v6801 = vld [vmem:[%s6235 + $0x1c] sm:$0xf]
    %v6802 = vld [vmem:[%s6235 + $0x20] sm:$0x1]
    %v6803 = vld [vmem:[%s6235 + $0x24] sm:$0xf]
    %v6804 = vld [vmem:[%s6235 + $0x28] sm:$0xf]
    %v6805 = vld [vmem:[%s6235 + $0x2c] sm:$0x1]
    %v6806 = vld [vmem:[%s6235 + $0x30] sm:$0xf]
    %v6807 = vld [vmem:[%s6235 + $0x34] sm:$0xf]
    %v6808 = vld [vmem:[%s6235 + $0x38] sm:$0x1]
    %v6809 = vld [vmem:[%s6235 + $0x3c] sm:$0xf]
    %v6810 = vld [vmem:[%s6235 + $0x40] sm:$0xf]
    %v6811 = vld [vmem:[%s6235 + $0x44] sm:$0x1]
    %v6812 = vld [vmem:[%s6235 + $0x48] sm:$0xf]
    %v6813 = vld [vmem:[%s6235 + $0x4c] sm:$0xf]
    %v6814 = vld [vmem:[%s6235 + $0x50] sm:$0x1]
    %v6815 = vld [vmem:[%s6235 + $0x54] sm:$0xf]
    %v6816 = vld [vmem:[%s6235 + $0x58] sm:$0xf]
    %v6817 = vld [vmem:[%s6235 + $0x5c] sm:$0x1]
    %v6818 = vld [vmem:[%s6235 + $0x60] sm:$0xf]
    %v6819 = vld [vmem:[%s6235 + $0x64] sm:$0xf]
    %v6820 = vld [vmem:[%s6235 + $0x68] sm:$0x1]
    %v6821 = vld [vmem:[%s6235 + $0x6c] sm:$0xf]
    %v6822 = vld [vmem:[%s6235 + $0x70] sm:$0xf]
    %v6823 = vld [vmem:[%s6235 + $0x74] sm:$0x1]
    %v6824 = vld [vmem:[%s6235 + $0x78] sm:$0xf]
    %v6825 = vld [vmem:[%s6235 + $0x7c] sm:$0xf]
    %v6826 = vld [vmem:[%s6235 + $0x80] sm:$0x1]
    %v6827 = vld [vmem:[%s6235 + $0x84] sm:$0xf]
    %v6828 = vld [vmem:[%s6235 + $0x88] sm:$0xf]
    %v6829 = vld [vmem:[%s6235 + $0x8c] sm:$0x1]
    %v6830 = vld [vmem:[%s6235 + $0x90] sm:$0xf]
    %v6831 = vld [vmem:[%s6235 + $0x94] sm:$0xf]
    %v6832 = vld [vmem:[%s6235 + $0x98] sm:$0x1]
    %v6833 = vld [vmem:[%s6235 + $0x9c] sm:$0xf]
    %v6834 = vld [vmem:[%s6235 + $0xa0] sm:$0xf]
    %v6835 = vld [vmem:[%s6235 + $0xa4] sm:$0x1]
    %v6836 = vld [vmem:[%s6235 + $0xa8] sm:$0xf]
    %v6837 = vld [vmem:[%s6235 + $0xac] sm:$0xf]
    %v6838 = vld [vmem:[%s6235 + $0xb0] sm:$0x1]
    %v6839 = vld [vmem:[%s6235 + $0xb4] sm:$0xf]
    %v6840 = vld [vmem:[%s6235 + $0xb8] sm:$0xf]
    %v6841 = vld [vmem:[%s6235 + $0xbc] sm:$0x1]
    %v6842 = vld [vmem:[%s6235 + $0xd8] sm:$0xf]
    %v6843 = vld [vmem:[%s6235 + $0xdc] sm:$0xf]
    %v6844 = vld [vmem:[%s6235 + $0xe0] sm:$0x1]
    %v6845 = vld [vmem:[%s6235 + $0xe4] sm:$0xf]
    %v6846 = vld [vmem:[%s6235 + $0xe8] sm:$0xf]
    %v6847 = vld [vmem:[%s6235 + $0xec] sm:$0x1]
    %v6848 = vld [vmem:[%s6235 + $0xf0] sm:$0xf]
    %v6849 = vld [vmem:[%s6235 + $0xf4] sm:$0xf]
    %v6850 = vld [vmem:[%s6235 + $0xf8] sm:$0x1]
    %v6851 = vld [vmem:[%s6235 + $0xfc] sm:$0xf]
    %v6852 = vld [vmem:[%s6235 + $0x100] sm:$0xf]
    %v6853 = vld [vmem:[%s6235 + $0x104] sm:$0x1]
    %v6854 = vld [vmem:[%s6235 + $0x108] sm:$0xf]
    %v6855 = vld [vmem:[%s6235 + $0x10c] sm:$0xf]
    %v6856 = vld [vmem:[%s6235 + $0x110] sm:$0x1]
    %v6857 = vld [vmem:[%s6235 + $0x114] sm:$0xf]
    %v6858 = vld [vmem:[%s6235 + $0x118] sm:$0xf]
    %v6859 = vld [vmem:[%s6235 + $0x11c] sm:$0x1]
    %v6860 = vld [vmem:[%s6235 + $0x120] sm:$0xf]
    %v6861 = vld [vmem:[%s6235 + $0x124] sm:$0xf]
    %v6862 = vld [vmem:[%s6235 + $0x128] sm:$0x1]
    %v6863 = vld [vmem:[%s6235 + $0x12c] sm:$0xf]
    %v6864 = vld [vmem:[%s6235 + $0x130] sm:$0xf]
    %v6865 = vld [vmem:[%s6235 + $0x134] sm:$0x1]
    %v6866 = vld [vmem:[%s6235 + $0x138] sm:$0xf]
    %v6867 = vld [vmem:[%s6235 + $0x13c] sm:$0xf]
    %v6868 = vld [vmem:[%s6235 + $0x140] sm:$0x1]
    %v6869 = vld [vmem:[%s6235 + $0x144] sm:$0xf]
    %v6870 = vld [vmem:[%s6235 + $0x148] sm:$0xf]
    %v6871 = vld [vmem:[%s6235 + $0x14c] sm:$0x1]
    %v6872 = vld [vmem:[%s6235 + $0x150] sm:$0xf]
    %v6873 = vld [vmem:[%s6235 + $0x154] sm:$0xf]
    %v6874 = vld [vmem:[%s6235 + $0x158] sm:$0x1]
    %v6875 = vld [vmem:[%s6235 + $0x15c] sm:$0xf]
    %v6876 = vld [vmem:[%s6235 + $0x160] sm:$0xf]
    %v6877 = vld [vmem:[%s6235 + $0x164] sm:$0x1]
    %v6878 = vld [vmem:[%s6235 + $0x168] sm:$0xf]
    %v6879 = vld [vmem:[%s6235 + $0x16c] sm:$0xf]
    %v6880 = vld [vmem:[%s6235 + $0x170] sm:$0x1]
    %v6881 = vld [vmem:[%s6235 + $0x174] sm:$0xf]
    %v6882 = vld [vmem:[%s6235 + $0x178] sm:$0xf]
    %v6883 = vld [vmem:[%s6235 + $0x17c] sm:$0x1]
    %v6884 = vld [vmem:[%s6235 + $0x180] sm:$0xf]
    %v6885 = vld [vmem:[%s6235 + $0x184] sm:$0xf]
    %v6886 = vld [vmem:[%s6235 + $0x188] sm:$0x1]
    %v6887 = vld [vmem:[%s6235 + $0x18c] sm:$0xf]
    %v6888 = vld [vmem:[%s6235 + $0x190] sm:$0xf]
    %v6889 = vld [vmem:[%s6235 + $0x194] sm:$0x1]
    %v6891 = vshrl.u32 %v6794, 16
    %v6893 = vrot.slane %v6891, 4
    %v6894 = vshll.u32 %v6794, 16
    %v6896 = vrot.slane %v6894, 5
    %v6897 = vor.u32 %v6893, %v6896
    %v6898 = vrot.slane %v6897, 4
    %v6900 = vshll.u32 %v6795, 16
    %v6902 = vrot.slane %v6900, 5
    %v6903 = vsel %vm1283, %v6898, %v6902
    %v6904 = vshrl.u32 %v6795, 16
    %v6906 = vrot.slane %v6904, 4
    %v6907 = vor.u32 %v6906, %v6902
    %v6908 = vrot.slane %v6907, 4
    %v6910 = vshll.u32 %v6796, 16
    %v6912 = vrot.slane %v6910, 5
    %v6913 = vsel %vm1283, %v6908, %v6912
    %v6915 = vshrl.u32 %v6797, 16
    %v6917 = vrot.slane %v6915, 4
    %v6918 = vshll.u32 %v6797, 16
    %v6920 = vrot.slane %v6918, 5
    %v6921 = vor.u32 %v6917, %v6920
    %v6922 = vrot.slane %v6921, 4
    %v6924 = vshll.u32 %v6798, 16
    %v6926 = vrot.slane %v6924, 5
    %v6927 = vsel %vm1283, %v6922, %v6926
    %v6928 = vshrl.u32 %v6798, 16
    %v6930 = vrot.slane %v6928, 4
    %v6931 = vor.u32 %v6930, %v6926
    %v6932 = vrot.slane %v6931, 4
    %v6934 = vshll.u32 %v6799, 16
    %v6936 = vrot.slane %v6934, 5
    %v6937 = vsel %vm1283, %v6932, %v6936
    %v6939 = vshrl.u32 %v6800, 16
    %v6941 = vrot.slane %v6939, 4
    %v6942 = vshll.u32 %v6800, 16
    %v6944 = vrot.slane %v6942, 5
    %v6945 = vor.u32 %v6941, %v6944
    %v6946 = vrot.slane %v6945, 4
    %v6948 = vshll.u32 %v6801, 16
    %v6950 = vrot.slane %v6948, 5
    %v6951 = vsel %vm1283, %v6946, %v6950
    %v6952 = vshrl.u32 %v6801, 16
    %v6954 = vrot.slane %v6952, 4
    %v6955 = vor.u32 %v6954, %v6950
    %v6956 = vrot.slane %v6955, 4
    %v6958 = vshll.u32 %v6802, 16
    %v6960 = vrot.slane %v6958, 5
    %v6961 = vsel %vm1283, %v6956, %v6960
    %v6963 = vshrl.u32 %v6803, 16
    %v6965 = vrot.slane %v6963, 4
    %v6966 = vshll.u32 %v6803, 16
    %v6968 = vrot.slane %v6966, 5
    %v6969 = vor.u32 %v6965, %v6968
    %v6970 = vrot.slane %v6969, 4
    %v6972 = vshll.u32 %v6804, 16
    %v6974 = vrot.slane %v6972, 5
    %v6975 = vsel %vm1283, %v6970, %v6974
    %v6976 = vshrl.u32 %v6804, 16
    %v6978 = vrot.slane %v6976, 4
    %v6979 = vor.u32 %v6978, %v6974
    %v6980 = vrot.slane %v6979, 4
    %v6982 = vshll.u32 %v6805, 16
    %v6984 = vrot.slane %v6982, 5
    %v6985 = vsel %vm1283, %v6980, %v6984
    %v6987 = vshrl.u32 %v6806, 16
    %v6989 = vrot.slane %v6987, 4
    %v6990 = vshll.u32 %v6806, 16
    %v6992 = vrot.slane %v6990, 5
    %v6993 = vor.u32 %v6989, %v6992
    %v6994 = vrot.slane %v6993, 4
    %v6996 = vshll.u32 %v6807, 16
    %v6998 = vrot.slane %v6996, 5
    %v6999 = vsel %vm1283, %v6994, %v6998
    %v7000 = vshrl.u32 %v6807, 16
    %v7002 = vrot.slane %v7000, 4
    %v7003 = vor.u32 %v7002, %v6998
    %v7004 = vrot.slane %v7003, 4
    %v7006 = vshll.u32 %v6808, 16
    %v7008 = vrot.slane %v7006, 5
    %v7009 = vsel %vm1283, %v7004, %v7008
    %v7011 = vshrl.u32 %v6809, 16
    %v7013 = vrot.slane %v7011, 4
    %v7014 = vshll.u32 %v6809, 16
    %v7016 = vrot.slane %v7014, 5
    %v7017 = vor.u32 %v7013, %v7016
    %v7018 = vrot.slane %v7017, 4
    %v7020 = vshll.u32 %v6810, 16
    %v7022 = vrot.slane %v7020, 5
    %v7023 = vsel %vm1283, %v7018, %v7022
    %v7024 = vshrl.u32 %v6810, 16
    %v7026 = vrot.slane %v7024, 4
    %v7027 = vor.u32 %v7026, %v7022
    %v7028 = vrot.slane %v7027, 4
    %v7030 = vshll.u32 %v6811, 16
    %v7032 = vrot.slane %v7030, 5
    %v7033 = vsel %vm1283, %v7028, %v7032
    %v7035 = vshrl.u32 %v6812, 16
    %v7037 = vrot.slane %v7035, 4
    %v7038 = vshll.u32 %v6812, 16
    %v7040 = vrot.slane %v7038, 5
    %v7041 = vor.u32 %v7037, %v7040
    %v7042 = vrot.slane %v7041, 4
    %v7044 = vshll.u32 %v6813, 16
    %v7046 = vrot.slane %v7044, 5
    %v7047 = vsel %vm1283, %v7042, %v7046
    %v7048 = vshrl.u32 %v6813, 16
    %v7050 = vrot.slane %v7048, 4
    %v7051 = vor.u32 %v7050, %v7046
    %v7052 = vrot.slane %v7051, 4
    %v7054 = vshll.u32 %v6814, 16
    %v7056 = vrot.slane %v7054, 5
    %v7057 = vsel %vm1283, %v7052, %v7056
    %v7059 = vshrl.u32 %v6815, 16
    %v7061 = vrot.slane %v7059, 4
    %v7062 = vshll.u32 %v6815, 16
    %v7064 = vrot.slane %v7062, 5
    %v7065 = vor.u32 %v7061, %v7064
    %v7066 = vrot.slane %v7065, 4
    %v7068 = vshll.u32 %v6816, 16
    %v7070 = vrot.slane %v7068, 5
    %v7071 = vsel %vm1283, %v7066, %v7070
    %v7072 = vshrl.u32 %v6816, 16
    %v7074 = vrot.slane %v7072, 4
    %v7075 = vor.u32 %v7074, %v7070
    %v7076 = vrot.slane %v7075, 4
    %v7078 = vshll.u32 %v6817, 16
    %v7080 = vrot.slane %v7078, 5
    %v7081 = vsel %vm1283, %v7076, %v7080
    %v7083 = vshrl.u32 %v6818, 16
    %v7085 = vrot.slane %v7083, 4
    %v7086 = vshll.u32 %v6818, 16
    %v7088 = vrot.slane %v7086, 5
    %v7089 = vor.u32 %v7085, %v7088
    %v7090 = vrot.slane %v7089, 4
    %v7092 = vshll.u32 %v6819, 16
    %v7094 = vrot.slane %v7092, 5
    %v7095 = vsel %vm1283, %v7090, %v7094
    %v7096 = vshrl.u32 %v6819, 16
    %v7098 = vrot.slane %v7096, 4
    %v7099 = vor.u32 %v7098, %v7094
    %v7100 = vrot.slane %v7099, 4
    %v7102 = vshll.u32 %v6820, 16
    %v7104 = vrot.slane %v7102, 5
    %v7105 = vsel %vm1283, %v7100, %v7104
    %v7107 = vshrl.u32 %v6821, 16
    %v7109 = vrot.slane %v7107, 4
    %v7110 = vshll.u32 %v6821, 16
    %v7112 = vrot.slane %v7110, 5
    %v7113 = vor.u32 %v7109, %v7112
    %v7114 = vrot.slane %v7113, 4
    %v7116 = vshll.u32 %v6822, 16
    %v7118 = vrot.slane %v7116, 5
    %v7119 = vsel %vm1283, %v7114, %v7118
    %v7120 = vshrl.u32 %v6822, 16
    %v7122 = vrot.slane %v7120, 4
    %v7123 = vor.u32 %v7122, %v7118
    %v7124 = vrot.slane %v7123, 4
    %v7126 = vshll.u32 %v6823, 16
    %v7128 = vrot.slane %v7126, 5
    %v7129 = vsel %vm1283, %v7124, %v7128
    %v7131 = vshrl.u32 %v6824, 16
    %v7133 = vrot.slane %v7131, 4
    %v7134 = vshll.u32 %v6824, 16
    %v7136 = vrot.slane %v7134, 5
    %v7137 = vor.u32 %v7133, %v7136
    %v7138 = vrot.slane %v7137, 4
    %v7140 = vshll.u32 %v6825, 16
    %v7142 = vrot.slane %v7140, 5
    %v7143 = vsel %vm1283, %v7138, %v7142
    %v7144 = vshrl.u32 %v6825, 16
    %v7146 = vrot.slane %v7144, 4
    %v7147 = vor.u32 %v7146, %v7142
    %v7148 = vrot.slane %v7147, 4
    %v7150 = vshll.u32 %v6826, 16
    %v7152 = vrot.slane %v7150, 5
    %v7153 = vsel %vm1283, %v7148, %v7152
    %v7155 = vshrl.u32 %v6827, 16
    %v7157 = vrot.slane %v7155, 4
    %v7158 = vshll.u32 %v6827, 16
    %v7160 = vrot.slane %v7158, 5
    %v7161 = vor.u32 %v7157, %v7160
    %v7162 = vrot.slane %v7161, 4
    %v7164 = vshll.u32 %v6828, 16
    %v7166 = vrot.slane %v7164, 5
    %v7167 = vsel %vm1283, %v7162, %v7166
    %v7168 = vshrl.u32 %v6828, 16
    %v7170 = vrot.slane %v7168, 4
    %v7171 = vor.u32 %v7170, %v7166
    %v7172 = vrot.slane %v7171, 4
    %v7174 = vshll.u32 %v6829, 16
    %v7176 = vrot.slane %v7174, 5
    %v7177 = vsel %vm1283, %v7172, %v7176
    %v7179 = vshrl.u32 %v6830, 16
    %v7181 = vrot.slane %v7179, 4
    %v7182 = vshll.u32 %v6830, 16
    %v7184 = vrot.slane %v7182, 5
    %v7185 = vor.u32 %v7181, %v7184
    %v7186 = vrot.slane %v7185, 4
    %v7188 = vshll.u32 %v6831, 16
    %v7190 = vrot.slane %v7188, 5
    %v7191 = vsel %vm1283, %v7186, %v7190
    %v7192 = vshrl.u32 %v6831, 16
    %v7194 = vrot.slane %v7192, 4
    %v7195 = vor.u32 %v7194, %v7190
    %v7196 = vrot.slane %v7195, 4
    %v7198 = vshll.u32 %v6832, 16
    %v7200 = vrot.slane %v7198, 5
    %v7201 = vsel %vm1283, %v7196, %v7200
    %v7203 = vshrl.u32 %v6833, 16
    %v7205 = vrot.slane %v7203, 4
    %v7206 = vshll.u32 %v6833, 16
    %v7208 = vrot.slane %v7206, 5
    %v7209 = vor.u32 %v7205, %v7208
    %v7210 = vrot.slane %v7209, 4
    %v7212 = vshll.u32 %v6834, 16
    %v7214 = vrot.slane %v7212, 5
    %v7215 = vsel %vm1283, %v7210, %v7214
    %v7216 = vshrl.u32 %v6834, 16
    %v7218 = vrot.slane %v7216, 4
    %v7219 = vor.u32 %v7218, %v7214
    %v7220 = vrot.slane %v7219, 4
    %v7222 = vshll.u32 %v6835, 16
    %v7224 = vrot.slane %v7222, 5
    %v7225 = vsel %vm1283, %v7220, %v7224
    %v7227 = vshrl.u32 %v6836, 16
    %v7229 = vrot.slane %v7227, 4
    %v7230 = vshll.u32 %v6836, 16
    %v7232 = vrot.slane %v7230, 5
    %v7233 = vor.u32 %v7229, %v7232
    %v7234 = vrot.slane %v7233, 4
    %v7236 = vshll.u32 %v6837, 16
    %v7238 = vrot.slane %v7236, 5
    %v7239 = vsel %vm1283, %v7234, %v7238
    %v7240 = vshrl.u32 %v6837, 16
    %v7242 = vrot.slane %v7240, 4
    %v7243 = vor.u32 %v7242, %v7238
    %v7244 = vrot.slane %v7243, 4
    %v7246 = vshll.u32 %v6838, 16
    %v7248 = vrot.slane %v7246, 5
    %v7249 = vsel %vm1283, %v7244, %v7248
    %v7251 = vshrl.u32 %v6839, 16
    %v7253 = vrot.slane %v7251, 4
    %v7254 = vshll.u32 %v6839, 16
    %v7256 = vrot.slane %v7254, 5
    %v7257 = vor.u32 %v7253, %v7256
    %v7258 = vrot.slane %v7257, 4
    %v7260 = vshll.u32 %v6840, 16
    %v7262 = vrot.slane %v7260, 5
    %v7263 = vsel %vm1283, %v7258, %v7262
    %v7264 = vshrl.u32 %v6840, 16
    %v7266 = vrot.slane %v7264, 4
    %v7267 = vor.u32 %v7266, %v7262
    %v7268 = vrot.slane %v7267, 4
    %v7270 = vshll.u32 %v6841, 16
    %v7272 = vrot.slane %v7270, 5
    %v7273 = vsel %vm1283, %v7268, %v7272
    %v7275 = vshrl.u32 %v6842, 16
    %v7277 = vrot.slane %v7275, 4
    %v7278 = vshll.u32 %v6842, 16
    %v7280 = vrot.slane %v7278, 5
    %v7281 = vor.u32 %v7277, %v7280
    %v7282 = vrot.slane %v7281, 4
    %v7284 = vshll.u32 %v6843, 16
    %v7286 = vrot.slane %v7284, 5
    %v7287 = vsel %vm1283, %v7282, %v7286
    %v7288 = vshrl.u32 %v6843, 16
    %v7290 = vrot.slane %v7288, 4
    %v7291 = vor.u32 %v7290, %v7286
    %v7292 = vrot.slane %v7291, 4
    %v7294 = vshll.u32 %v6844, 16
    %v7296 = vrot.slane %v7294, 5
    %v7297 = vsel %vm1283, %v7292, %v7296
    %v7299 = vshrl.u32 %v6845, 16
    %v7301 = vrot.slane %v7299, 4
    %v7302 = vshll.u32 %v6845, 16
    %v7304 = vrot.slane %v7302, 5
    %v7305 = vor.u32 %v7301, %v7304
    %v7306 = vrot.slane %v7305, 4
    %v7308 = vshll.u32 %v6846, 16
    %v7310 = vrot.slane %v7308, 5
    %v7311 = vsel %vm1283, %v7306, %v7310
    %v7312 = vshrl.u32 %v6846, 16
    %v7314 = vrot.slane %v7312, 4
    %v7315 = vor.u32 %v7314, %v7310
    %v7316 = vrot.slane %v7315, 4
    %v7318 = vshll.u32 %v6847, 16
    %v7320 = vrot.slane %v7318, 5
    %v7321 = vsel %vm1283, %v7316, %v7320
    %v7323 = vshrl.u32 %v6848, 16
    %v7325 = vrot.slane %v7323, 4
    %v7326 = vshll.u32 %v6848, 16
    %v7328 = vrot.slane %v7326, 5
    %v7329 = vor.u32 %v7325, %v7328
    %v7330 = vrot.slane %v7329, 4
    %v7332 = vshll.u32 %v6849, 16
    %v7334 = vrot.slane %v7332, 5
    %v7335 = vsel %vm1283, %v7330, %v7334
    %v7336 = vshrl.u32 %v6849, 16
    %v7338 = vrot.slane %v7336, 4
    %v7339 = vor.u32 %v7338, %v7334
    %v7340 = vrot.slane %v7339, 4
    %v7342 = vshll.u32 %v6850, 16
    %v7344 = vrot.slane %v7342, 5
    %v7345 = vsel %vm1283, %v7340, %v7344
    %v7347 = vshrl.u32 %v6851, 16
    %v7349 = vrot.slane %v7347, 4
    %v7350 = vshll.u32 %v6851, 16
    %v7352 = vrot.slane %v7350, 5
    %v7353 = vor.u32 %v7349, %v7352
    %v7354 = vrot.slane %v7353, 4
    %v7356 = vshll.u32 %v6852, 16
    %v7358 = vrot.slane %v7356, 5
    %v7359 = vsel %vm1283, %v7354, %v7358
    %v7360 = vshrl.u32 %v6852, 16
    %v7362 = vrot.slane %v7360, 4
    %v7363 = vor.u32 %v7362, %v7358
    %v7364 = vrot.slane %v7363, 4
    %v7366 = vshll.u32 %v6853, 16
    %v7368 = vrot.slane %v7366, 5
    %v7369 = vsel %vm1283, %v7364, %v7368
    %v7371 = vshrl.u32 %v6854, 16
    %v7373 = vrot.slane %v7371, 4
    %v7374 = vshll.u32 %v6854, 16
    %v7376 = vrot.slane %v7374, 5
    %v7377 = vor.u32 %v7373, %v7376
    %v7378 = vrot.slane %v7377, 4
    %v7380 = vshll.u32 %v6855, 16
    %v7382 = vrot.slane %v7380, 5
    %v7383 = vsel %vm1283, %v7378, %v7382
    %v7384 = vshrl.u32 %v6855, 16
    %v7386 = vrot.slane %v7384, 4
    %v7387 = vor.u32 %v7386, %v7382
    %v7388 = vrot.slane %v7387, 4
    %v7390 = vshll.u32 %v6856, 16
    %v7392 = vrot.slane %v7390, 5
    %v7393 = vsel %vm1283, %v7388, %v7392
    %v7395 = vshrl.u32 %v6857, 16
    %v7397 = vrot.slane %v7395, 4
    %v7398 = vshll.u32 %v6857, 16
    %v7400 = vrot.slane %v7398, 5
    %v7401 = vor.u32 %v7397, %v7400
    %v7402 = vrot.slane %v7401, 4
    %v7404 = vshll.u32 %v6858, 16
    %v7406 = vrot.slane %v7404, 5
    %v7407 = vsel %vm1283, %v7402, %v7406
    %v7408 = vshrl.u32 %v6858, 16
    %v7410 = vrot.slane %v7408, 4
    %v7411 = vor.u32 %v7410, %v7406
    %v7412 = vrot.slane %v7411, 4
    %v7414 = vshll.u32 %v6859, 16
    %v7416 = vrot.slane %v7414, 5
    %v7417 = vsel %vm1283, %v7412, %v7416
    %v7419 = vshrl.u32 %v6860, 16
    %v7421 = vrot.slane %v7419, 4
    %v7422 = vshll.u32 %v6860, 16
    %v7424 = vrot.slane %v7422, 5
    %v7425 = vor.u32 %v7421, %v7424
    %v7426 = vrot.slane %v7425, 4
    %v7428 = vshll.u32 %v6861, 16
    %v7430 = vrot.slane %v7428, 5
    %v7431 = vsel %vm1283, %v7426, %v7430
    %v7432 = vshrl.u32 %v6861, 16
    %v7434 = vrot.slane %v7432, 4
    %v7435 = vor.u32 %v7434, %v7430
    %v7436 = vrot.slane %v7435, 4
    %v7438 = vshll.u32 %v6862, 16
    %v7440 = vrot.slane %v7438, 5
    %v7441 = vsel %vm1283, %v7436, %v7440
    %v7443 = vshrl.u32 %v6863, 16
    %v7445 = vrot.slane %v7443, 4
    %v7446 = vshll.u32 %v6863, 16
    %v7448 = vrot.slane %v7446, 5
    %v7449 = vor.u32 %v7445, %v7448
    %v7450 = vrot.slane %v7449, 4
    %v7452 = vshll.u32 %v6864, 16
    %v7454 = vrot.slane %v7452, 5
    %v7455 = vsel %vm1283, %v7450, %v7454
    %v7456 = vshrl.u32 %v6864, 16
    %v7458 = vrot.slane %v7456, 4
    %v7459 = vor.u32 %v7458, %v7454
    %v7460 = vrot.slane %v7459, 4
    %v7462 = vshll.u32 %v6865, 16
    %v7464 = vrot.slane %v7462, 5
    %v7465 = vsel %vm1283, %v7460, %v7464
    %v7467 = vshrl.u32 %v6866, 16
    %v7469 = vrot.slane %v7467, 4
    %v7470 = vshll.u32 %v6866, 16
    %v7472 = vrot.slane %v7470, 5
    %v7473 = vor.u32 %v7469, %v7472
    %v7474 = vrot.slane %v7473, 4
    %v7476 = vshll.u32 %v6867, 16
    %v7478 = vrot.slane %v7476, 5
    %v7479 = vsel %vm1283, %v7474, %v7478
    %v7480 = vshrl.u32 %v6867, 16
    %v7482 = vrot.slane %v7480, 4
    %v7483 = vor.u32 %v7482, %v7478
    %v7484 = vrot.slane %v7483, 4
    %v7486 = vshll.u32 %v6868, 16
    %v7488 = vrot.slane %v7486, 5
    %v7489 = vsel %vm1283, %v7484, %v7488
    %v7491 = vshrl.u32 %v6869, 16
    %v7493 = vrot.slane %v7491, 4
    %v7494 = vshll.u32 %v6869, 16
    %v7496 = vrot.slane %v7494, 5
    %v7497 = vor.u32 %v7493, %v7496
    %v7498 = vrot.slane %v7497, 4
    %v7500 = vshll.u32 %v6870, 16
    %v7502 = vrot.slane %v7500, 5
    %v7503 = vsel %vm1283, %v7498, %v7502
    %v7504 = vshrl.u32 %v6870, 16
    %v7506 = vrot.slane %v7504, 4
    %v7507 = vor.u32 %v7506, %v7502
    %v7508 = vrot.slane %v7507, 4
    %v7510 = vshll.u32 %v6871, 16
    %v7512 = vrot.slane %v7510, 5
    %v7513 = vsel %vm1283, %v7508, %v7512
    %v7515 = vshrl.u32 %v6872, 16
    %v7517 = vrot.slane %v7515, 4
    %v7518 = vshll.u32 %v6872, 16
    %v7520 = vrot.slane %v7518, 5
    %v7521 = vor.u32 %v7517, %v7520
    %v7522 = vrot.slane %v7521, 4
    %v7524 = vshll.u32 %v6873, 16
    %v7526 = vrot.slane %v7524, 5
    %v7527 = vsel %vm1283, %v7522, %v7526
    %v7528 = vshrl.u32 %v6873, 16
    %v7530 = vrot.slane %v7528, 4
    %v7531 = vor.u32 %v7530, %v7526
    %v7532 = vrot.slane %v7531, 4
    %v7534 = vshll.u32 %v6874, 16
    %v7536 = vrot.slane %v7534, 5
    %v7537 = vsel %vm1283, %v7532, %v7536
    %v7539 = vshrl.u32 %v6875, 16
    %v7541 = vrot.slane %v7539, 4
    %v7542 = vshll.u32 %v6875, 16
    %v7544 = vrot.slane %v7542, 5
    %v7545 = vor.u32 %v7541, %v7544
    %v7546 = vrot.slane %v7545, 4
    %v7548 = vshll.u32 %v6876, 16
    %v7550 = vrot.slane %v7548, 5
    %v7551 = vsel %vm1283, %v7546, %v7550
    %v7552 = vshrl.u32 %v6876, 16
    %v7554 = vrot.slane %v7552, 4
    %v7555 = vor.u32 %v7554, %v7550
    %v7556 = vrot.slane %v7555, 4
    %v7558 = vshll.u32 %v6877, 16
    %v7560 = vrot.slane %v7558, 5
    %v7561 = vsel %vm1283, %v7556, %v7560
    %v7563 = vshrl.u32 %v6878, 16
    %v7565 = vrot.slane %v7563, 4
    %v7566 = vshll.u32 %v6878, 16
    %v7568 = vrot.slane %v7566, 5
    %v7569 = vor.u32 %v7565, %v7568
    %v7570 = vrot.slane %v7569, 4
    %v7572 = vshll.u32 %v6879, 16
    %v7574 = vrot.slane %v7572, 5
    %v7575 = vsel %vm1283, %v7570, %v7574
    %v7576 = vshrl.u32 %v6879, 16
    %v7578 = vrot.slane %v7576, 4
    %v7579 = vor.u32 %v7578, %v7574
    %v7580 = vrot.slane %v7579, 4
    %v7582 = vshll.u32 %v6880, 16
    %v7584 = vrot.slane %v7582, 5
    %v7585 = vsel %vm1283, %v7580, %v7584
    %v7587 = vshrl.u32 %v6881, 16
    %v7589 = vrot.slane %v7587, 4
    %v7590 = vshll.u32 %v6881, 16
    %v7592 = vrot.slane %v7590, 5
    %v7593 = vor.u32 %v7589, %v7592
    %v7594 = vrot.slane %v7593, 4
    %v7596 = vshll.u32 %v6882, 16
    %v7598 = vrot.slane %v7596, 5
    %v7599 = vsel %vm1283, %v7594, %v7598
    %v7600 = vshrl.u32 %v6882, 16
    %v7602 = vrot.slane %v7600, 4
    %v7603 = vor.u32 %v7602, %v7598
    %v7604 = vrot.slane %v7603, 4
    %v7606 = vshll.u32 %v6883, 16
    %v7608 = vrot.slane %v7606, 5
    %v7609 = vsel %vm1283, %v7604, %v7608
    %v7611 = vshrl.u32 %v6884, 16
    %v7613 = vrot.slane %v7611, 4
    %v7614 = vshll.u32 %v6884, 16
    %v7616 = vrot.slane %v7614, 5
    %v7617 = vor.u32 %v7613, %v7616
    %v7618 = vrot.slane %v7617, 4
    %v7620 = vshll.u32 %v6885, 16
    %v7622 = vrot.slane %v7620, 5
    %v7623 = vsel %vm1283, %v7618, %v7622
    %v7624 = vshrl.u32 %v6885, 16
    %v7626 = vrot.slane %v7624, 4
    %v7627 = vor.u32 %v7626, %v7622
    %v7628 = vrot.slane %v7627, 4
    %v7630 = vshll.u32 %v6886, 16
    %v7632 = vrot.slane %v7630, 5
    %v7633 = vsel %vm1283, %v7628, %v7632
    %v7635 = vshrl.u32 %v6887, 16
    %v7637 = vrot.slane %v7635, 4
    %v7638 = vshll.u32 %v6887, 16
    %v7640 = vrot.slane %v7638, 5
    %v7641 = vor.u32 %v7637, %v7640
    %v7642 = vrot.slane %v7641, 4
    %v7644 = vshll.u32 %v6888, 16
    %v7646 = vrot.slane %v7644, 5
    %v7647 = vsel %vm1283, %v7642, %v7646
    %v7648 = vshrl.u32 %v6888, 16
    %v7650 = vrot.slane %v7648, 4
    %v7651 = vor.u32 %v7650, %v7646
    %v7652 = vrot.slane %v7651, 4
    %v7654 = vshll.u32 %v6889, 16
    %v7656 = vrot.slane %v7654, 5
    %v7657 = vsel %vm1283, %v7652, %v7656
    %s7658 = scalar_lea.vmem %s1, 14
    %v7659 = vld [vmem:[%s7658] sm:$0x3]
    %v7660 = vunpack.c.l.b16 %v6903
    %v7661 = vunpack.c.l.b16 %v6913
    %v7662 = vunpack.c.l.b16 %v6927
    %v7663 = vunpack.c.l.b16 %v6937
    %v7664 = vunpack.c.l.b16 %v6951
    %v7665 = vunpack.c.l.b16 %v6961
    %v7666 = vunpack.c.l.b16 %v6975
    %v7667 = vunpack.c.l.b16 %v6985
    %v7668 = vunpack.c.l.b16 %v6999
    %v7669 = vunpack.c.l.b16 %v7009
    %v7670 = vunpack.c.l.b16 %v7023
    %v7671 = vunpack.c.l.b16 %v7033
    %v7672 = vunpack.c.l.b16 %v7047
    %v7673 = vunpack.c.l.b16 %v7057
    %v7674 = vunpack.c.l.b16 %v7071
    %v7675 = vunpack.c.l.b16 %v7081
    %v7676 = vunpack.c.l.b16 %v7095
    %v7677 = vunpack.c.l.b16 %v7105
    %v7678 = vunpack.c.l.b16 %v7119
    %v7679 = vunpack.c.l.b16 %v7129
    %v7680 = vunpack.c.l.b16 %v7143
    %v7681 = vunpack.c.l.b16 %v7153
    %v7682 = vunpack.c.l.b16 %v7167
    %v7683 = vunpack.c.l.b16 %v7177
    %v7684 = vunpack.c.l.b16 %v7191
    %v7685 = vunpack.c.l.b16 %v7201
    %v7686 = vunpack.c.l.b16 %v7215
    %v7687 = vunpack.c.l.b16 %v7225
    %v7688 = vunpack.c.l.b16 %v7239
    %v7689 = vunpack.c.l.b16 %v7249
    %v7690 = vunpack.c.l.b16 %v7263
    %v7691 = vunpack.c.l.b16 %v7273
    %v7692 = vunpack.c.l.b16 %v7287
    %v7693 = vunpack.c.l.b16 %v7297
    %v7694 = vunpack.c.l.b16 %v7311
    %v7695 = vunpack.c.l.b16 %v7321
    %v7696 = vunpack.c.l.b16 %v7335
    %v7697 = vunpack.c.l.b16 %v7345
    %v7698 = vunpack.c.l.b16 %v7359
    %v7699 = vunpack.c.l.b16 %v7369
    %v7700 = vunpack.c.l.b16 %v7383
    %v7701 = vunpack.c.l.b16 %v7393
    %v7702 = vunpack.c.l.b16 %v7407
    %v7703 = vunpack.c.l.b16 %v7417
    %v7704 = vunpack.c.l.b16 %v7431
    %v7705 = vunpack.c.l.b16 %v7441
    %v7706 = vunpack.c.l.b16 %v7455
    %v7707 = vunpack.c.l.b16 %v7465
    %v7708 = vunpack.c.l.b16 %v7479
    %v7709 = vunpack.c.l.b16 %v7489
    %v7710 = vunpack.c.l.b16 %v7503
    %v7711 = vunpack.c.l.b16 %v7513
    %v7712 = vunpack.c.l.b16 %v7527
    %v7713 = vunpack.c.l.b16 %v7537
    %v7714 = vunpack.c.l.b16 %v7551
    %v7715 = vunpack.c.l.b16 %v7561
    %v7716 = vunpack.c.l.b16 %v7575
    %v7717 = vunpack.c.l.b16 %v7585
    %v7718 = vunpack.c.l.b16 %v7599
    %v7719 = vunpack.c.l.b16 %v7609
    %v7720 = vunpack.c.l.b16 %v7623
    %v7721 = vunpack.c.l.b16 %v7633
    %v7722 = vunpack.c.l.b16 %v7647
    %v7723 = vunpack.c.l.b16 %v7657
    %v7724 = vpack.c.b16 %v7661, %v7660
    %v7725 = vpack.c.b16 %v7663, %v7662
    %v7726 = vpack.c.b16 %v7665, %v7664
    %v7727 = vpack.c.b16 %v7667, %v7666
    %v7728 = vpack.c.b16 %v7669, %v7668
    %v7729 = vpack.c.b16 %v7671, %v7670
    %v7730 = vpack.c.b16 %v7673, %v7672
    %v7731 = vpack.c.b16 %v7675, %v7674
    %v7732 = vpack.c.b16 %v7677, %v7676
    %v7733 = vpack.c.b16 %v7679, %v7678
    %v7734 = vpack.c.b16 %v7681, %v7680
    %v7735 = vpack.c.b16 %v7683, %v7682
    %v7736 = vpack.c.b16 %v7685, %v7684
    %v7737 = vpack.c.b16 %v7687, %v7686
    %v7738 = vpack.c.b16 %v7689, %v7688
    %v7739 = vpack.c.b16 %v7691, %v7690
    %v7740 = vpack.c.b16 %v7693, %v7692
    %v7741 = vpack.c.b16 %v7695, %v7694
    %v7742 = vpack.c.b16 %v7697, %v7696
    %v7743 = vpack.c.b16 %v7699, %v7698
    %v7744 = vpack.c.b16 %v7701, %v7700
    %v7745 = vpack.c.b16 %v7703, %v7702
    %v7746 = vpack.c.b16 %v7705, %v7704
    %v7747 = vpack.c.b16 %v7707, %v7706
    %v7748 = vpack.c.b16 %v7709, %v7708
    %v7749 = vpack.c.b16 %v7711, %v7710
    %v7750 = vpack.c.b16 %v7713, %v7712
    %v7751 = vpack.c.b16 %v7715, %v7714
    %v7752 = vpack.c.b16 %v7717, %v7716
    %v7753 = vpack.c.b16 %v7719, %v7718
    %v7754 = vpack.c.b16 %v7721, %v7720
    %v7755 = vpack.c.b16 %v7723, %v7722
    %v7757 = vsel %vm2150, %v7724, 0
    %v7760 = vsel %vm2150, %v7725, 0
    %v7763 = vsel %vm2150, %v7726, 0
    %v7766 = vsel %vm2150, %v7727, 0
    %v7769 = vsel %vm2150, %v7728, 0
    %v7772 = vsel %vm2150, %v7729, 0
    %v7775 = vsel %vm2150, %v7730, 0
    %v7778 = vsel %vm2150, %v7731, 0
    %v7781 = vsel %vm2150, %v7732, 0
    %v7784 = vsel %vm2150, %v7733, 0
    %v7787 = vsel %vm2150, %v7734, 0
    %v7790 = vsel %vm2150, %v7735, 0
    %v7793 = vsel %vm2150, %v7736, 0
    %v7796 = vsel %vm2150, %v7737, 0
    %v7799 = vsel %vm2150, %v7738, 0
    %v7802 = vsel %vm2150, %v7739, 0
    %v7805 = vsel %vm2150, %v7740, 0
    %v7808 = vsel %vm2150, %v7741, 0
    %v7811 = vsel %vm2150, %v7742, 0
    %v7814 = vsel %vm2150, %v7743, 0
    %v7817 = vsel %vm2150, %v7744, 0
    %v7820 = vsel %vm2150, %v7745, 0
    %v7823 = vsel %vm2150, %v7746, 0
    %v7826 = vsel %vm2150, %v7747, 0
    %v7829 = vsel %vm2150, %v7748, 0
    %v7832 = vsel %vm2150, %v7749, 0
    %v7835 = vsel %vm2150, %v7750, 0
    %v7838 = vsel %vm2150, %v7751, 0
    %v7841 = vsel %vm2150, %v7752, 0
    %v7844 = vsel %vm2150, %v7753, 0
    %v7847 = vsel %vm2150, %v7754, 0
    %v7850 = vsel %vm2150, %v7755, 0
    %v7853 = vsel %vm2247, %v7659, 0
    %7855 = vmatpush.bf16.msra.mxu0 0
    %7856 = vmatpush.bf16.msra.mxu0 0
    %7857 = vmatpush.bf16.msra.mxu0 0
    %7858 = vmatpush.bf16.msra.mxu0 0
    %7859 = vmatpush.bf16.msra.mxu0 0
    %7860 = vmatpush.bf16.msra.mxu0 0
    %7861 = vmatpush.bf16.msra.mxu0 0
    %7862 = vmatpush.bf16.msra.mxu0 %v7853
    %7863 = vmatmul.bf16.gmra.mxu0 %v7757
    %v7864 = vpop.f32.mrf.mxu0
    %v7865 = vadd.f32 0.0, %v7864
    %v7866 = vpop.f32.mrf.mxu0
    %v7867 = vadd.f32 0.0, %v7866
    %7868 = vmatmul.bf16.gmra.mxu0 %v7760
    %v7869 = vpop.f32.mrf.mxu0
    %v7870 = vadd.f32 0.0, %v7869
    %v7871 = vpop.f32.mrf.mxu0
    %v7872 = vadd.f32 0.0, %v7871
    %7873 = vmatmul.bf16.gmra.mxu0 %v7763
    %v7874 = vpop.f32.mrf.mxu0
    %v7875 = vadd.f32 0.0, %v7874
    %v7876 = vpop.f32.mrf.mxu0
    %v7877 = vadd.f32 0.0, %v7876
    %7878 = vmatmul.bf16.gmra.mxu0 %v7766
    %v7879 = vpop.f32.mrf.mxu0
    %v7880 = vadd.f32 0.0, %v7879
    %v7881 = vpop.f32.mrf.mxu0
    %v7882 = vadd.f32 0.0, %v7881
    %7883 = vmatmul.bf16.gmra.mxu0 %v7769
    %v7884 = vpop.f32.mrf.mxu0
    %v7885 = vadd.f32 0.0, %v7884
    %v7886 = vpop.f32.mrf.mxu0
    %v7887 = vadd.f32 0.0, %v7886
    %7888 = vmatmul.bf16.gmra.mxu0 %v7772
    %v7889 = vpop.f32.mrf.mxu0
    %v7890 = vadd.f32 0.0, %v7889
    %v7891 = vpop.f32.mrf.mxu0
    %v7892 = vadd.f32 0.0, %v7891
    %7893 = vmatmul.bf16.gmra.mxu0 %v7775
    %v7894 = vpop.f32.mrf.mxu0
    %v7895 = vadd.f32 0.0, %v7894
    %v7896 = vpop.f32.mrf.mxu0
    %v7897 = vadd.f32 0.0, %v7896
    %7898 = vmatmul.bf16.gmra.mxu0 %v7778
    %v7899 = vpop.f32.mrf.mxu0
    %v7900 = vadd.f32 0.0, %v7899
    %v7901 = vpop.f32.mrf.mxu0
    %v7902 = vadd.f32 0.0, %v7901
    %7903 = vmatmul.bf16.gmra.mxu0 %v7781
    %v7904 = vpop.f32.mrf.mxu0
    %v7905 = vadd.f32 0.0, %v7904
    %v7906 = vpop.f32.mrf.mxu0
    %v7907 = vadd.f32 0.0, %v7906
    %7908 = vmatmul.bf16.gmra.mxu0 %v7784
    %v7909 = vpop.f32.mrf.mxu0
    %v7910 = vadd.f32 0.0, %v7909
    %v7911 = vpop.f32.mrf.mxu0
    %v7912 = vadd.f32 0.0, %v7911
    %7913 = vmatmul.bf16.gmra.mxu0 %v7787
    %v7914 = vpop.f32.mrf.mxu0
    %v7915 = vadd.f32 0.0, %v7914
    %v7916 = vpop.f32.mrf.mxu0
    %v7917 = vadd.f32 0.0, %v7916
    %7918 = vmatmul.bf16.gmra.mxu0 %v7790
    %v7919 = vpop.f32.mrf.mxu0
    %v7920 = vadd.f32 0.0, %v7919
    %v7921 = vpop.f32.mrf.mxu0
    %v7922 = vadd.f32 0.0, %v7921
    %7923 = vmatmul.bf16.gmra.mxu0 %v7793
    %v7924 = vpop.f32.mrf.mxu0
    %v7925 = vadd.f32 0.0, %v7924
    %v7926 = vpop.f32.mrf.mxu0
    %v7927 = vadd.f32 0.0, %v7926
    %7928 = vmatmul.bf16.gmra.mxu0 %v7796
    %v7929 = vpop.f32.mrf.mxu0
    %v7930 = vadd.f32 0.0, %v7929
    %v7931 = vpop.f32.mrf.mxu0
    %v7932 = vadd.f32 0.0, %v7931
    %7933 = vmatmul.bf16.gmra.mxu0 %v7799
    %v7934 = vpop.f32.mrf.mxu0
    %v7935 = vadd.f32 0.0, %v7934
    %v7936 = vpop.f32.mrf.mxu0
    %v7937 = vadd.f32 0.0, %v7936
    %7938 = vmatmul.bf16.gmra.mxu0 %v7802
    %v7939 = vpop.f32.mrf.mxu0
    %v7940 = vadd.f32 0.0, %v7939
    %v7941 = vpop.f32.mrf.mxu0
    %v7942 = vadd.f32 0.0, %v7941
    %7943 = vmatmul.bf16.gmra.mxu0 %v7805
    %v7944 = vpop.f32.mrf.mxu0
    %v7945 = vadd.f32 0.0, %v7944
    %v7946 = vpop.f32.mrf.mxu0
    %v7947 = vadd.f32 0.0, %v7946
    %7948 = vmatmul.bf16.gmra.mxu0 %v7808
    %v7949 = vpop.f32.mrf.mxu0
    %v7950 = vadd.f32 0.0, %v7949
    %v7951 = vpop.f32.mrf.mxu0
    %v7952 = vadd.f32 0.0, %v7951
    %7953 = vmatmul.bf16.gmra.mxu0 %v7811
    %v7954 = vpop.f32.mrf.mxu0
    %v7955 = vadd.f32 0.0, %v7954
    %v7956 = vpop.f32.mrf.mxu0
    %v7957 = vadd.f32 0.0, %v7956
    %7958 = vmatmul.bf16.gmra.mxu0 %v7814
    %v7959 = vpop.f32.mrf.mxu0
    %v7960 = vadd.f32 0.0, %v7959
    %v7961 = vpop.f32.mrf.mxu0
    %v7962 = vadd.f32 0.0, %v7961
    %7963 = vmatmul.bf16.gmra.mxu0 %v7817
    %v7964 = vpop.f32.mrf.mxu0
    %v7965 = vadd.f32 0.0, %v7964
    %v7966 = vpop.f32.mrf.mxu0
    %v7967 = vadd.f32 0.0, %v7966
    %7968 = vmatmul.bf16.gmra.mxu0 %v7820
    %v7969 = vpop.f32.mrf.mxu0
    %v7970 = vadd.f32 0.0, %v7969
    %v7971 = vpop.f32.mrf.mxu0
    %v7972 = vadd.f32 0.0, %v7971
    %7973 = vmatmul.bf16.gmra.mxu0 %v7823
    %v7974 = vpop.f32.mrf.mxu0
    %v7975 = vadd.f32 0.0, %v7974
    %v7976 = vpop.f32.mrf.mxu0
    %v7977 = vadd.f32 0.0, %v7976
    %7978 = vmatmul.bf16.gmra.mxu0 %v7826
    %v7979 = vpop.f32.mrf.mxu0
    %v7980 = vadd.f32 0.0, %v7979
    %v7981 = vpop.f32.mrf.mxu0
    %v7982 = vadd.f32 0.0, %v7981
    %7983 = vmatmul.bf16.gmra.mxu0 %v7829
    %v7984 = vpop.f32.mrf.mxu0
    %v7985 = vadd.f32 0.0, %v7984
    %v7986 = vpop.f32.mrf.mxu0
    %v7987 = vadd.f32 0.0, %v7986
    %7988 = vmatmul.bf16.gmra.mxu0 %v7832
    %v7989 = vpop.f32.mrf.mxu0
    %v7990 = vadd.f32 0.0, %v7989
    %v7991 = vpop.f32.mrf.mxu0
    %v7992 = vadd.f32 0.0, %v7991
    %7993 = vmatmul.bf16.gmra.mxu0 %v7835
    %v7994 = vpop.f32.mrf.mxu0
    %v7995 = vadd.f32 0.0, %v7994
    %v7996 = vpop.f32.mrf.mxu0
    %v7997 = vadd.f32 0.0, %v7996
    %7998 = vmatmul.bf16.gmra.mxu0 %v7838
    %v7999 = vpop.f32.mrf.mxu0
    %v8000 = vadd.f32 0.0, %v7999
    %v8001 = vpop.f32.mrf.mxu0
    %v8002 = vadd.f32 0.0, %v8001
    %8003 = vmatmul.bf16.gmra.mxu0 %v7841
    %v8004 = vpop.f32.mrf.mxu0
    %v8005 = vadd.f32 0.0, %v8004
    %v8006 = vpop.f32.mrf.mxu0
    %v8007 = vadd.f32 0.0, %v8006
    %8008 = vmatmul.bf16.gmra.mxu0 %v7844
    %v8009 = vpop.f32.mrf.mxu0
    %v8010 = vadd.f32 0.0, %v8009
    %v8011 = vpop.f32.mrf.mxu0
    %v8012 = vadd.f32 0.0, %v8011
    %8013 = vmatmul.bf16.gmra.mxu0 %v7847
    %v8014 = vpop.f32.mrf.mxu0
    %v8015 = vadd.f32 0.0, %v8014
    %v8016 = vpop.f32.mrf.mxu0
    %v8017 = vadd.f32 0.0, %v8016
    %8018 = vmatmul.bf16.gmra.mxu0 %v7850
    %v8019 = vpop.f32.mrf.mxu0
    %v8020 = vadd.f32 0.0, %v8019
    %v8021 = vpop.f32.mrf.mxu0
    %v8022 = vadd.f32 0.0, %v8021
    %8023 = vdwg.mxu0
    %v8024 = vadd.f32 %v6730, %v7865
    %v8025 = vadd.f32 %v6731, %v7867
    %v8026 = vadd.f32 %v6732, %v7870
    %v8027 = vadd.f32 %v6733, %v7872
    %v8028 = vadd.f32 %v6734, %v7875
    %v8029 = vadd.f32 %v6735, %v7877
    %v8030 = vadd.f32 %v6736, %v7880
    %v8031 = vadd.f32 %v6737, %v7882
    %v8032 = vadd.f32 %v6738, %v7885
    %v8033 = vadd.f32 %v6739, %v7887
    %v8034 = vadd.f32 %v6740, %v7890
    %v8035 = vadd.f32 %v6741, %v7892
    %v8036 = vadd.f32 %v6742, %v7895
    %v8037 = vadd.f32 %v6743, %v7897
    %v8038 = vadd.f32 %v6744, %v7900
    %v8039 = vadd.f32 %v6745, %v7902
    %v8040 = vadd.f32 %v6746, %v7905
    %v8041 = vadd.f32 %v6747, %v7907
    %v8042 = vadd.f32 %v6748, %v7910
    %v8043 = vadd.f32 %v6749, %v7912
    %v8044 = vadd.f32 %v6750, %v7915
    %v8045 = vadd.f32 %v6751, %v7917
    %v8046 = vadd.f32 %v6752, %v7920
    %v8047 = vadd.f32 %v6753, %v7922
    %v8048 = vadd.f32 %v6754, %v7925
    %v8049 = vadd.f32 %v6755, %v7927
    %v8050 = vadd.f32 %v6756, %v7930
    %v8051 = vadd.f32 %v6757, %v7932
    %v8052 = vadd.f32 %v6758, %v7935
    %v8053 = vadd.f32 %v6759, %v7937
    %v8054 = vadd.f32 %v6760, %v7940
    %v8055 = vadd.f32 %v6761, %v7942
    %v8056 = vadd.f32 %v6762, %v7945
    %v8057 = vadd.f32 %v6763, %v7947
    %v8058 = vadd.f32 %v6764, %v7950
    %v8059 = vadd.f32 %v6765, %v7952
    %v8060 = vadd.f32 %v6766, %v7955
    %v8061 = vadd.f32 %v6767, %v7957
    %v8062 = vadd.f32 %v6768, %v7960
    %v8063 = vadd.f32 %v6769, %v7962
    %v8064 = vadd.f32 %v6770, %v7965
    %v8065 = vadd.f32 %v6771, %v7967
    %v8066 = vadd.f32 %v6772, %v7970
    %v8067 = vadd.f32 %v6773, %v7972
    %v8068 = vadd.f32 %v6774, %v7975
    %v8069 = vadd.f32 %v6775, %v7977
    %v8070 = vadd.f32 %v6776, %v7980
    %v8071 = vadd.f32 %v6777, %v7982
    %v8072 = vadd.f32 %v6778, %v7985
    %v8073 = vadd.f32 %v6779, %v7987
    %v8074 = vadd.f32 %v6780, %v7990
    %v8075 = vadd.f32 %v6781, %v7992
    %v8076 = vadd.f32 %v6782, %v7995
    %v8077 = vadd.f32 %v6783, %v7997
    %v8078 = vadd.f32 %v6784, %v8000
    %v8079 = vadd.f32 %v6785, %v8002
    %v8080 = vadd.f32 %v6786, %v8005
    %v8081 = vadd.f32 %v6787, %v8007
    %v8082 = vadd.f32 %v6788, %v8010
    %v8083 = vadd.f32 %v6789, %v8012
    %v8084 = vadd.f32 %v6790, %v8015
    %v8085 = vadd.f32 %v6791, %v8017
    %v8086 = vadd.f32 %v6792, %v8020
    %v8087 = vadd.f32 %v6793, %v8022
    %v8088 = vld [vmem:[%s6235] sm:$0xe]
    %v8089 = vld [vmem:[%s6235 + $0xc] sm:$0xe]
    %v8090 = vld [vmem:[%s6235 + $0x18] sm:$0xe]
    %v8091 = vld [vmem:[%s6235 + $0x24] sm:$0xe]
    %v8092 = vld [vmem:[%s6235 + $0x30] sm:$0xe]
    %v8093 = vld [vmem:[%s6235 + $0x3c] sm:$0xe]
    %v8094 = vld [vmem:[%s6235 + $0x48] sm:$0xe]
    %v8095 = vld [vmem:[%s6235 + $0x54] sm:$0xe]
    %v8096 = vld [vmem:[%s6235 + $0x60] sm:$0xe]
    %v8097 = vld [vmem:[%s6235 + $0x6c] sm:$0xe]
    %v8098 = vld [vmem:[%s6235 + $0x78] sm:$0xe]
    %v8099 = vld [vmem:[%s6235 + $0x84] sm:$0xe]
    %v8100 = vld [vmem:[%s6235 + $0x90] sm:$0xe]
    %v8101 = vld [vmem:[%s6235 + $0x9c] sm:$0xe]
    %v8102 = vld [vmem:[%s6235 + $0xa8] sm:$0xe]
    %v8103 = vld [vmem:[%s6235 + $0xb4] sm:$0xe]
    %v8104 = vld [vmem:[%s6235 + $0xd8] sm:$0xe]
    %v8105 = vld [vmem:[%s6235 + $0xe4] sm:$0xe]
    %v8106 = vld [vmem:[%s6235 + $0xf0] sm:$0xe]
    %v8107 = vld [vmem:[%s6235 + $0xfc] sm:$0xe]
    %v8108 = vld [vmem:[%s6235 + $0x108] sm:$0xe]
    %v8109 = vld [vmem:[%s6235 + $0x114] sm:$0xe]
    %v8110 = vld [vmem:[%s6235 + $0x120] sm:$0xe]
    %v8111 = vld [vmem:[%s6235 + $0x12c] sm:$0xe]
    %v8112 = vld [vmem:[%s6235 + $0x138] sm:$0xe]
    %v8113 = vld [vmem:[%s6235 + $0x144] sm:$0xe]
    %v8114 = vld [vmem:[%s6235 + $0x150] sm:$0xe]
    %v8115 = vld [vmem:[%s6235 + $0x15c] sm:$0xe]
    %v8116 = vld [vmem:[%s6235 + $0x168] sm:$0xe]
    %v8117 = vld [vmem:[%s6235 + $0x174] sm:$0xe]
    %v8118 = vld [vmem:[%s6235 + $0x180] sm:$0xe]
    %v8119 = vld [vmem:[%s6235 + $0x18c] sm:$0xe]
    %v8216 = vrot.slane %v8088, 5
    %v8217 = vrot.slane %v8216, 4
    %v8218 = vrot.slane %v6795, 5
    %v8219 = vsel %vm2946, %v8217, %v8218
    %v8220 = vrot.slane %v8218, 4
    %v8221 = vrot.slane %v6796, 5
    %v8222 = vsel %vm2946, %v8220, %v8221
    %v8223 = vrot.slane %v8089, 5
    %v8224 = vrot.slane %v8223, 4
    %v8225 = vrot.slane %v6798, 5
    %v8226 = vsel %vm2946, %v8224, %v8225
    %v8227 = vrot.slane %v8225, 4
    %v8228 = vrot.slane %v6799, 5
    %v8229 = vsel %vm2946, %v8227, %v8228
    %v8230 = vrot.slane %v8090, 5
    %v8231 = vrot.slane %v8230, 4
    %v8232 = vrot.slane %v6801, 5
    %v8233 = vsel %vm2946, %v8231, %v8232
    %v8234 = vrot.slane %v8232, 4
    %v8235 = vrot.slane %v6802, 5
    %v8236 = vsel %vm2946, %v8234, %v8235
    %v8237 = vrot.slane %v8091, 5
    %v8238 = vrot.slane %v8237, 4
    %v8239 = vrot.slane %v6804, 5
    %v8240 = vsel %vm2946, %v8238, %v8239
    %v8241 = vrot.slane %v8239, 4
    %v8242 = vrot.slane %v6805, 5
    %v8243 = vsel %vm2946, %v8241, %v8242
    %v8244 = vrot.slane %v8092, 5
    %v8245 = vrot.slane %v8244, 4
    %v8246 = vrot.slane %v6807, 5
    %v8247 = vsel %vm2946, %v8245, %v8246
    %v8248 = vrot.slane %v8246, 4
    %v8249 = vrot.slane %v6808, 5
    %v8250 = vsel %vm2946, %v8248, %v8249
    %v8251 = vrot.slane %v8093, 5
    %v8252 = vrot.slane %v8251, 4
    %v8253 = vrot.slane %v6810, 5
    %v8254 = vsel %vm2946, %v8252, %v8253
    %v8255 = vrot.slane %v8253, 4
    %v8256 = vrot.slane %v6811, 5
    %v8257 = vsel %vm2946, %v8255, %v8256
    %v8258 = vrot.slane %v8094, 5
    %v8259 = vrot.slane %v8258, 4
    %v8260 = vrot.slane %v6813, 5
    %v8261 = vsel %vm2946, %v8259, %v8260
    %v8262 = vrot.slane %v8260, 4
    %v8263 = vrot.slane %v6814, 5
    %v8264 = vsel %vm2946, %v8262, %v8263
    %v8265 = vrot.slane %v8095, 5
    %v8266 = vrot.slane %v8265, 4
    %v8267 = vrot.slane %v6816, 5
    %v8268 = vsel %vm2946, %v8266, %v8267
    %v8269 = vrot.slane %v8267, 4
    %v8270 = vrot.slane %v6817, 5
    %v8271 = vsel %vm2946, %v8269, %v8270
    %v8272 = vrot.slane %v8096, 5
    %v8273 = vrot.slane %v8272, 4
    %v8274 = vrot.slane %v6819, 5
    %v8275 = vsel %vm2946, %v8273, %v8274
    %v8276 = vrot.slane %v8274, 4
    %v8277 = vrot.slane %v6820, 5
    %v8278 = vsel %vm2946, %v8276, %v8277
    %v8279 = vrot.slane %v8097, 5
    %v8280 = vrot.slane %v8279, 4
    %v8281 = vrot.slane %v6822, 5
    %v8282 = vsel %vm2946, %v8280, %v8281
    %v8283 = vrot.slane %v8281, 4
    %v8284 = vrot.slane %v6823, 5
    %v8285 = vsel %vm2946, %v8283, %v8284
    %v8286 = vrot.slane %v8098, 5
    %v8287 = vrot.slane %v8286, 4
    %v8288 = vrot.slane %v6825, 5
    %v8289 = vsel %vm2946, %v8287, %v8288
    %v8290 = vrot.slane %v8288, 4
    %v8291 = vrot.slane %v6826, 5
    %v8292 = vsel %vm2946, %v8290, %v8291
    %v8293 = vrot.slane %v8099, 5
    %v8294 = vrot.slane %v8293, 4
    %v8295 = vrot.slane %v6828, 5
    %v8296 = vsel %vm2946, %v8294, %v8295
    %v8297 = vrot.slane %v8295, 4
    %v8298 = vrot.slane %v6829, 5
    %v8299 = vsel %vm2946, %v8297, %v8298
    %v8300 = vrot.slane %v8100, 5
    %v8301 = vrot.slane %v8300, 4
    %v8302 = vrot.slane %v6831, 5
    %v8303 = vsel %vm2946, %v8301, %v8302
    %v8304 = vrot.slane %v8302, 4
    %v8305 = vrot.slane %v6832, 5
    %v8306 = vsel %vm2946, %v8304, %v8305
    %v8307 = vrot.slane %v8101, 5
    %v8308 = vrot.slane %v8307, 4
    %v8309 = vrot.slane %v6834, 5
    %v8310 = vsel %vm2946, %v8308, %v8309
    %v8311 = vrot.slane %v8309, 4
    %v8312 = vrot.slane %v6835, 5
    %v8313 = vsel %vm2946, %v8311, %v8312
    %v8314 = vrot.slane %v8102, 5
    %v8315 = vrot.slane %v8314, 4
    %v8316 = vrot.slane %v6837, 5
    %v8317 = vsel %vm2946, %v8315, %v8316
    %v8318 = vrot.slane %v8316, 4
    %v8319 = vrot.slane %v6838, 5
    %v8320 = vsel %vm2946, %v8318, %v8319
    %v8321 = vrot.slane %v8103, 5
    %v8322 = vrot.slane %v8321, 4
    %v8323 = vrot.slane %v6840, 5
    %v8324 = vsel %vm2946, %v8322, %v8323
    %v8325 = vrot.slane %v8323, 4
    %v8326 = vrot.slane %v6841, 5
    %v8327 = vsel %vm2946, %v8325, %v8326
    %v8328 = vrot.slane %v8104, 5
    %v8329 = vrot.slane %v8328, 4
    %v8330 = vrot.slane %v6843, 5
    %v8331 = vsel %vm2946, %v8329, %v8330
    %v8332 = vrot.slane %v8330, 4
    %v8333 = vrot.slane %v6844, 5
    %v8334 = vsel %vm2946, %v8332, %v8333
    %v8335 = vrot.slane %v8105, 5
    %v8336 = vrot.slane %v8335, 4
    %v8337 = vrot.slane %v6846, 5
    %v8338 = vsel %vm2946, %v8336, %v8337
    %v8339 = vrot.slane %v8337, 4
    %v8340 = vrot.slane %v6847, 5
    %v8341 = vsel %vm2946, %v8339, %v8340
    %v8342 = vrot.slane %v8106, 5
    %v8343 = vrot.slane %v8342, 4
    %v8344 = vrot.slane %v6849, 5
    %v8345 = vsel %vm2946, %v8343, %v8344
    %v8346 = vrot.slane %v8344, 4
    %v8347 = vrot.slane %v6850, 5
    %v8348 = vsel %vm2946, %v8346, %v8347
    %v8349 = vrot.slane %v8107, 5
    %v8350 = vrot.slane %v8349, 4
    %v8351 = vrot.slane %v6852, 5
    %v8352 = vsel %vm2946, %v8350, %v8351
    %v8353 = vrot.slane %v8351, 4
    %v8354 = vrot.slane %v6853, 5
    %v8355 = vsel %vm2946, %v8353, %v8354
    %v8356 = vrot.slane %v8108, 5
    %v8357 = vrot.slane %v8356, 4
    %v8358 = vrot.slane %v6855, 5
    %v8359 = vsel %vm2946, %v8357, %v8358
    %v8360 = vrot.slane %v8358, 4
    %v8361 = vrot.slane %v6856, 5
    %v8362 = vsel %vm2946, %v8360, %v8361
    %v8363 = vrot.slane %v8109, 5
    %v8364 = vrot.slane %v8363, 4
    %v8365 = vrot.slane %v6858, 5
    %v8366 = vsel %vm2946, %v8364, %v8365
    %v8367 = vrot.slane %v8365, 4
    %v8368 = vrot.slane %v6859, 5
    %v8369 = vsel %vm2946, %v8367, %v8368
    %v8370 = vrot.slane %v8110, 5
    %v8371 = vrot.slane %v8370, 4
    %v8372 = vrot.slane %v6861, 5
    %v8373 = vsel %vm2946, %v8371, %v8372
    %v8374 = vrot.slane %v8372, 4
    %v8375 = vrot.slane %v6862, 5
    %v8376 = vsel %vm2946, %v8374, %v8375
    %v8377 = vrot.slane %v8111, 5
    %v8378 = vrot.slane %v8377, 4
    %v8379 = vrot.slane %v6864, 5
    %v8380 = vsel %vm2946, %v8378, %v8379
    %v8381 = vrot.slane %v8379, 4
    %v8382 = vrot.slane %v6865, 5
    %v8383 = vsel %vm2946, %v8381, %v8382
    %v8384 = vrot.slane %v8112, 5
    %v8385 = vrot.slane %v8384, 4
    %v8386 = vrot.slane %v6867, 5
    %v8387 = vsel %vm2946, %v8385, %v8386
    %v8388 = vrot.slane %v8386, 4
    %v8389 = vrot.slane %v6868, 5
    %v8390 = vsel %vm2946, %v8388, %v8389
    %v8391 = vrot.slane %v8113, 5
    %v8392 = vrot.slane %v8391, 4
    %v8393 = vrot.slane %v6870, 5
    %v8394 = vsel %vm2946, %v8392, %v8393
    %v8395 = vrot.slane %v8393, 4
    %v8396 = vrot.slane %v6871, 5
    %v8397 = vsel %vm2946, %v8395, %v8396
    %v8398 = vrot.slane %v8114, 5
    %v8399 = vrot.slane %v8398, 4
    %v8400 = vrot.slane %v6873, 5
    %v8401 = vsel %vm2946, %v8399, %v8400
    %v8402 = vrot.slane %v8400, 4
    %v8403 = vrot.slane %v6874, 5
    %v8404 = vsel %vm2946, %v8402, %v8403
    %v8405 = vrot.slane %v8115, 5
    %v8406 = vrot.slane %v8405, 4
    %v8407 = vrot.slane %v6876, 5
    %v8408 = vsel %vm2946, %v8406, %v8407
    %v8409 = vrot.slane %v8407, 4
    %v8410 = vrot.slane %v6877, 5
    %v8411 = vsel %vm2946, %v8409, %v8410
    %v8412 = vrot.slane %v8116, 5
    %v8413 = vrot.slane %v8412, 4
    %v8414 = vrot.slane %v6879, 5
    %v8415 = vsel %vm2946, %v8413, %v8414
    %v8416 = vrot.slane %v8414, 4
    %v8417 = vrot.slane %v6880, 5
    %v8418 = vsel %vm2946, %v8416, %v8417
    %v8419 = vrot.slane %v8117, 5
    %v8420 = vrot.slane %v8419, 4
    %v8421 = vrot.slane %v6882, 5
    %v8422 = vsel %vm2946, %v8420, %v8421
    %v8423 = vrot.slane %v8421, 4
    %v8424 = vrot.slane %v6883, 5
    %v8425 = vsel %vm2946, %v8423, %v8424
    %v8426 = vrot.slane %v8118, 5
    %v8427 = vrot.slane %v8426, 4
    %v8428 = vrot.slane %v6885, 5
    %v8429 = vsel %vm2946, %v8427, %v8428
    %v8430 = vrot.slane %v8428, 4
    %v8431 = vrot.slane %v6886, 5
    %v8432 = vsel %vm2946, %v8430, %v8431
    %v8433 = vrot.slane %v8119, 5
    %v8434 = vrot.slane %v8433, 4
    %v8435 = vrot.slane %v6888, 5
    %v8436 = vsel %vm2946, %v8434, %v8435
    %v8437 = vrot.slane %v8435, 4
    %v8438 = vrot.slane %v6889, 5
    %v8439 = vsel %vm2946, %v8437, %v8438
    %s8440 = scalar_lea.vmem %s1, 16
    %v8441 = vld [vmem:[%s8440] sm:$0x3]
    %v8442 = vunpack.c.l.b16 %v8219
    %v8443 = vunpack.c.l.b16 %v8222
    %v8444 = vunpack.c.l.b16 %v8226
    %v8445 = vunpack.c.l.b16 %v8229
    %v8446 = vunpack.c.l.b16 %v8233
    %v8447 = vunpack.c.l.b16 %v8236
    %v8448 = vunpack.c.l.b16 %v8240
    %v8449 = vunpack.c.l.b16 %v8243
    %v8450 = vunpack.c.l.b16 %v8247
    %v8451 = vunpack.c.l.b16 %v8250
    %v8452 = vunpack.c.l.b16 %v8254
    %v8453 = vunpack.c.l.b16 %v8257
    %v8454 = vunpack.c.l.b16 %v8261
    %v8455 = vunpack.c.l.b16 %v8264
    %v8456 = vunpack.c.l.b16 %v8268
    %v8457 = vunpack.c.l.b16 %v8271
    %v8458 = vunpack.c.l.b16 %v8275
    %v8459 = vunpack.c.l.b16 %v8278
    %v8460 = vunpack.c.l.b16 %v8282
    %v8461 = vunpack.c.l.b16 %v8285
    %v8462 = vunpack.c.l.b16 %v8289
    %v8463 = vunpack.c.l.b16 %v8292
    %v8464 = vunpack.c.l.b16 %v8296
    %v8465 = vunpack.c.l.b16 %v8299
    %v8466 = vunpack.c.l.b16 %v8303
    %v8467 = vunpack.c.l.b16 %v8306
    %v8468 = vunpack.c.l.b16 %v8310
    %v8469 = vunpack.c.l.b16 %v8313
    %v8470 = vunpack.c.l.b16 %v8317
    %v8471 = vunpack.c.l.b16 %v8320
    %v8472 = vunpack.c.l.b16 %v8324
    %v8473 = vunpack.c.l.b16 %v8327
    %v8474 = vunpack.c.l.b16 %v8331
    %v8475 = vunpack.c.l.b16 %v8334
    %v8476 = vunpack.c.l.b16 %v8338
    %v8477 = vunpack.c.l.b16 %v8341
    %v8478 = vunpack.c.l.b16 %v8345
    %v8479 = vunpack.c.l.b16 %v8348
    %v8480 = vunpack.c.l.b16 %v8352
    %v8481 = vunpack.c.l.b16 %v8355
    %v8482 = vunpack.c.l.b16 %v8359
    %v8483 = vunpack.c.l.b16 %v8362
    %v8484 = vunpack.c.l.b16 %v8366
    %v8485 = vunpack.c.l.b16 %v8369
    %v8486 = vunpack.c.l.b16 %v8373
    %v8487 = vunpack.c.l.b16 %v8376
    %v8488 = vunpack.c.l.b16 %v8380
    %v8489 = vunpack.c.l.b16 %v8383
    %v8490 = vunpack.c.l.b16 %v8387
    %v8491 = vunpack.c.l.b16 %v8390
    %v8492 = vunpack.c.l.b16 %v8394
    %v8493 = vunpack.c.l.b16 %v8397
    %v8494 = vunpack.c.l.b16 %v8401
    %v8495 = vunpack.c.l.b16 %v8404
    %v8496 = vunpack.c.l.b16 %v8408
    %v8497 = vunpack.c.l.b16 %v8411
    %v8498 = vunpack.c.l.b16 %v8415
    %v8499 = vunpack.c.l.b16 %v8418
    %v8500 = vunpack.c.l.b16 %v8422
    %v8501 = vunpack.c.l.b16 %v8425
    %v8502 = vunpack.c.l.b16 %v8429
    %v8503 = vunpack.c.l.b16 %v8432
    %v8504 = vunpack.c.l.b16 %v8436
    %v8505 = vunpack.c.l.b16 %v8439
    %v8506 = vpack.c.b16 %v8443, %v8442
    %v8507 = vpack.c.b16 %v8445, %v8444
    %v8508 = vpack.c.b16 %v8447, %v8446
    %v8509 = vpack.c.b16 %v8449, %v8448
    %v8510 = vpack.c.b16 %v8451, %v8450
    %v8511 = vpack.c.b16 %v8453, %v8452
    %v8512 = vpack.c.b16 %v8455, %v8454
    %v8513 = vpack.c.b16 %v8457, %v8456
    %v8514 = vpack.c.b16 %v8459, %v8458
    %v8515 = vpack.c.b16 %v8461, %v8460
    %v8516 = vpack.c.b16 %v8463, %v8462
    %v8517 = vpack.c.b16 %v8465, %v8464
    %v8518 = vpack.c.b16 %v8467, %v8466
    %v8519 = vpack.c.b16 %v8469, %v8468
    %v8520 = vpack.c.b16 %v8471, %v8470
    %v8521 = vpack.c.b16 %v8473, %v8472
    %v8522 = vpack.c.b16 %v8475, %v8474
    %v8523 = vpack.c.b16 %v8477, %v8476
    %v8524 = vpack.c.b16 %v8479, %v8478
    %v8525 = vpack.c.b16 %v8481, %v8480
    %v8526 = vpack.c.b16 %v8483, %v8482
    %v8527 = vpack.c.b16 %v8485, %v8484
    %v8528 = vpack.c.b16 %v8487, %v8486
    %v8529 = vpack.c.b16 %v8489, %v8488
    %v8530 = vpack.c.b16 %v8491, %v8490
    %v8531 = vpack.c.b16 %v8493, %v8492
    %v8532 = vpack.c.b16 %v8495, %v8494
    %v8533 = vpack.c.b16 %v8497, %v8496
    %v8534 = vpack.c.b16 %v8499, %v8498
    %v8535 = vpack.c.b16 %v8501, %v8500
    %v8536 = vpack.c.b16 %v8503, %v8502
    %v8537 = vpack.c.b16 %v8505, %v8504
    %v8539 = vsel %vm2150, %v8506, 0
    %v8542 = vsel %vm2150, %v8507, 0
    %v8545 = vsel %vm2150, %v8508, 0
    %v8548 = vsel %vm2150, %v8509, 0
    %v8551 = vsel %vm2150, %v8510, 0
    %v8554 = vsel %vm2150, %v8511, 0
    %v8557 = vsel %vm2150, %v8512, 0
    %v8560 = vsel %vm2150, %v8513, 0
    %v8563 = vsel %vm2150, %v8514, 0
    %v8566 = vsel %vm2150, %v8515, 0
    %v8569 = vsel %vm2150, %v8516, 0
    %v8572 = vsel %vm2150, %v8517, 0
    %v8575 = vsel %vm2150, %v8518, 0
    %v8578 = vsel %vm2150, %v8519, 0
    %v8581 = vsel %vm2150, %v8520, 0
    %v8584 = vsel %vm2150, %v8521, 0
    %v8587 = vsel %vm2150, %v8522, 0
    %v8590 = vsel %vm2150, %v8523, 0
    %v8593 = vsel %vm2150, %v8524, 0
    %v8596 = vsel %vm2150, %v8525, 0
    %v8599 = vsel %vm2150, %v8526, 0
    %v8602 = vsel %vm2150, %v8527, 0
    %v8605 = vsel %vm2150, %v8528, 0
    %v8608 = vsel %vm2150, %v8529, 0
    %v8611 = vsel %vm2150, %v8530, 0
    %v8614 = vsel %vm2150, %v8531, 0
    %v8617 = vsel %vm2150, %v8532, 0
    %v8620 = vsel %vm2150, %v8533, 0
    %v8623 = vsel %vm2150, %v8534, 0
    %v8626 = vsel %vm2150, %v8535, 0
    %v8629 = vsel %vm2150, %v8536, 0
    %v8632 = vsel %vm2150, %v8537, 0
    %v8635 = vsel %vm2247, %v8441, 0
    %8637 = vmatpush.bf16.msra.mxu0 0
    %8638 = vmatpush.bf16.msra.mxu0 0
    %8639 = vmatpush.bf16.msra.mxu0 0
    %8640 = vmatpush.bf16.msra.mxu0 0
    %8641 = vmatpush.bf16.msra.mxu0 0
    %8642 = vmatpush.bf16.msra.mxu0 0
    %8643 = vmatpush.bf16.msra.mxu0 0
    %8644 = vmatpush.bf16.msra.mxu0 %v8635
    %8645 = vmatmul.bf16.gmra.mxu0 %v8539
    %v8646 = vpop.f32.mrf.mxu0
    %v8647 = vadd.f32 0.0, %v8646
    %v8648 = vpop.f32.mrf.mxu0
    %v8649 = vadd.f32 0.0, %v8648
    %8650 = vmatmul.bf16.gmra.mxu0 %v8542
    %v8651 = vpop.f32.mrf.mxu0
    %v8652 = vadd.f32 0.0, %v8651
    %v8653 = vpop.f32.mrf.mxu0
    %v8654 = vadd.f32 0.0, %v8653
    %8655 = vmatmul.bf16.gmra.mxu0 %v8545
    %v8656 = vpop.f32.mrf.mxu0
    %v8657 = vadd.f32 0.0, %v8656
    %v8658 = vpop.f32.mrf.mxu0
    %v8659 = vadd.f32 0.0, %v8658
    %8660 = vmatmul.bf16.gmra.mxu0 %v8548
    %v8661 = vpop.f32.mrf.mxu0
    %v8662 = vadd.f32 0.0, %v8661
    %v8663 = vpop.f32.mrf.mxu0
    %v8664 = vadd.f32 0.0, %v8663
    %8665 = vmatmul.bf16.gmra.mxu0 %v8551
    %v8666 = vpop.f32.mrf.mxu0
    %v8667 = vadd.f32 0.0, %v8666
    %v8668 = vpop.f32.mrf.mxu0
    %v8669 = vadd.f32 0.0, %v8668
    %8670 = vmatmul.bf16.gmra.mxu0 %v8554
    %v8671 = vpop.f32.mrf.mxu0
    %v8672 = vadd.f32 0.0, %v8671
    %v8673 = vpop.f32.mrf.mxu0
    %v8674 = vadd.f32 0.0, %v8673
    %8675 = vmatmul.bf16.gmra.mxu0 %v8557
    %v8676 = vpop.f32.mrf.mxu0
    %v8677 = vadd.f32 0.0, %v8676
    %v8678 = vpop.f32.mrf.mxu0
    %v8679 = vadd.f32 0.0, %v8678
    %8680 = vmatmul.bf16.gmra.mxu0 %v8560
    %v8681 = vpop.f32.mrf.mxu0
    %v8682 = vadd.f32 0.0, %v8681
    %v8683 = vpop.f32.mrf.mxu0
    %v8684 = vadd.f32 0.0, %v8683
    %8685 = vmatmul.bf16.gmra.mxu0 %v8563
    %v8686 = vpop.f32.mrf.mxu0
    %v8687 = vadd.f32 0.0, %v8686
    %v8688 = vpop.f32.mrf.mxu0
    %v8689 = vadd.f32 0.0, %v8688
    %8690 = vmatmul.bf16.gmra.mxu0 %v8566
    %v8691 = vpop.f32.mrf.mxu0
    %v8692 = vadd.f32 0.0, %v8691
    %v8693 = vpop.f32.mrf.mxu0
    %v8694 = vadd.f32 0.0, %v8693
    %8695 = vmatmul.bf16.gmra.mxu0 %v8569
    %v8696 = vpop.f32.mrf.mxu0
    %v8697 = vadd.f32 0.0, %v8696
    %v8698 = vpop.f32.mrf.mxu0
    %v8699 = vadd.f32 0.0, %v8698
    %8700 = vmatmul.bf16.gmra.mxu0 %v8572
    %v8701 = vpop.f32.mrf.mxu0
    %v8702 = vadd.f32 0.0, %v8701
    %v8703 = vpop.f32.mrf.mxu0
    %v8704 = vadd.f32 0.0, %v8703
    %8705 = vmatmul.bf16.gmra.mxu0 %v8575
    %v8706 = vpop.f32.mrf.mxu0
    %v8707 = vadd.f32 0.0, %v8706
    %v8708 = vpop.f32.mrf.mxu0
    %v8709 = vadd.f32 0.0, %v8708
    %8710 = vmatmul.bf16.gmra.mxu0 %v8578
    %v8711 = vpop.f32.mrf.mxu0
    %v8712 = vadd.f32 0.0, %v8711
    %v8713 = vpop.f32.mrf.mxu0
    %v8714 = vadd.f32 0.0, %v8713
    %8715 = vmatmul.bf16.gmra.mxu0 %v8581
    %v8716 = vpop.f32.mrf.mxu0
    %v8717 = vadd.f32 0.0, %v8716
    %v8718 = vpop.f32.mrf.mxu0
    %v8719 = vadd.f32 0.0, %v8718
    %8720 = vmatmul.bf16.gmra.mxu0 %v8584
    %v8721 = vpop.f32.mrf.mxu0
    %v8722 = vadd.f32 0.0, %v8721
    %v8723 = vpop.f32.mrf.mxu0
    %v8724 = vadd.f32 0.0, %v8723
    %8725 = vmatmul.bf16.gmra.mxu0 %v8587
    %v8726 = vpop.f32.mrf.mxu0
    %v8727 = vadd.f32 0.0, %v8726
    %v8728 = vpop.f32.mrf.mxu0
    %v8729 = vadd.f32 0.0, %v8728
    %8730 = vmatmul.bf16.gmra.mxu0 %v8590
    %v8731 = vpop.f32.mrf.mxu0
    %v8732 = vadd.f32 0.0, %v8731
    %v8733 = vpop.f32.mrf.mxu0
    %v8734 = vadd.f32 0.0, %v8733
    %8735 = vmatmul.bf16.gmra.mxu0 %v8593
    %v8736 = vpop.f32.mrf.mxu0
    %v8737 = vadd.f32 0.0, %v8736
    %v8738 = vpop.f32.mrf.mxu0
    %v8739 = vadd.f32 0.0, %v8738
    %8740 = vmatmul.bf16.gmra.mxu0 %v8596
    %v8741 = vpop.f32.mrf.mxu0
    %v8742 = vadd.f32 0.0, %v8741
    %v8743 = vpop.f32.mrf.mxu0
    %v8744 = vadd.f32 0.0, %v8743
    %8745 = vmatmul.bf16.gmra.mxu0 %v8599
    %v8746 = vpop.f32.mrf.mxu0
    %v8747 = vadd.f32 0.0, %v8746
    %v8748 = vpop.f32.mrf.mxu0
    %v8749 = vadd.f32 0.0, %v8748
    %8750 = vmatmul.bf16.gmra.mxu0 %v8602
    %v8751 = vpop.f32.mrf.mxu0
    %v8752 = vadd.f32 0.0, %v8751
    %v8753 = vpop.f32.mrf.mxu0
    %v8754 = vadd.f32 0.0, %v8753
    %8755 = vmatmul.bf16.gmra.mxu0 %v8605
    %v8756 = vpop.f32.mrf.mxu0
    %v8757 = vadd.f32 0.0, %v8756
    %v8758 = vpop.f32.mrf.mxu0
    %v8759 = vadd.f32 0.0, %v8758
    %8760 = vmatmul.bf16.gmra.mxu0 %v8608
    %v8761 = vpop.f32.mrf.mxu0
    %v8762 = vadd.f32 0.0, %v8761
    %v8763 = vpop.f32.mrf.mxu0
    %v8764 = vadd.f32 0.0, %v8763
    %8765 = vmatmul.bf16.gmra.mxu0 %v8611
    %v8766 = vpop.f32.mrf.mxu0
    %v8767 = vadd.f32 0.0, %v8766
    %v8768 = vpop.f32.mrf.mxu0
    %v8769 = vadd.f32 0.0, %v8768
    %8770 = vmatmul.bf16.gmra.mxu0 %v8614
    %v8771 = vpop.f32.mrf.mxu0
    %v8772 = vadd.f32 0.0, %v8771
    %v8773 = vpop.f32.mrf.mxu0
    %v8774 = vadd.f32 0.0, %v8773
    %8775 = vmatmul.bf16.gmra.mxu0 %v8617
    %v8776 = vpop.f32.mrf.mxu0
    %v8777 = vadd.f32 0.0, %v8776
    %v8778 = vpop.f32.mrf.mxu0
    %v8779 = vadd.f32 0.0, %v8778
    %8780 = vmatmul.bf16.gmra.mxu0 %v8620
    %v8781 = vpop.f32.mrf.mxu0
    %v8782 = vadd.f32 0.0, %v8781
    %v8783 = vpop.f32.mrf.mxu0
    %v8784 = vadd.f32 0.0, %v8783
    %8785 = vmatmul.bf16.gmra.mxu0 %v8623
    %v8786 = vpop.f32.mrf.mxu0
    %v8787 = vadd.f32 0.0, %v8786
    %v8788 = vpop.f32.mrf.mxu0
    %v8789 = vadd.f32 0.0, %v8788
    %8790 = vmatmul.bf16.gmra.mxu0 %v8626
    %v8791 = vpop.f32.mrf.mxu0
    %v8792 = vadd.f32 0.0, %v8791
    %v8793 = vpop.f32.mrf.mxu0
    %v8794 = vadd.f32 0.0, %v8793
    %8795 = vmatmul.bf16.gmra.mxu0 %v8629
    %v8796 = vpop.f32.mrf.mxu0
    %v8797 = vadd.f32 0.0, %v8796
    %v8798 = vpop.f32.mrf.mxu0
    %v8799 = vadd.f32 0.0, %v8798
    %8800 = vmatmul.bf16.gmra.mxu0 %v8632
    %v8801 = vpop.f32.mrf.mxu0
    %v8802 = vadd.f32 0.0, %v8801
    %v8803 = vpop.f32.mrf.mxu0
    %v8804 = vadd.f32 0.0, %v8803
    %8805 = vdwg.mxu0
    %v8806 = vadd.f32 %v8024, %v8647
    %v8807 = vadd.f32 %v8025, %v8649
    %v8808 = vadd.f32 %v8026, %v8652
    %v8809 = vadd.f32 %v8027, %v8654
    %v8810 = vadd.f32 %v8028, %v8657
    %v8811 = vadd.f32 %v8029, %v8659
    %v8812 = vadd.f32 %v8030, %v8662
    %v8813 = vadd.f32 %v8031, %v8664
    %v8814 = vadd.f32 %v8032, %v8667
    %v8815 = vadd.f32 %v8033, %v8669
    %v8816 = vadd.f32 %v8034, %v8672
    %v8817 = vadd.f32 %v8035, %v8674
    %v8818 = vadd.f32 %v8036, %v8677
    %v8819 = vadd.f32 %v8037, %v8679
    %v8820 = vadd.f32 %v8038, %v8682
    %v8821 = vadd.f32 %v8039, %v8684
    %v8822 = vadd.f32 %v8040, %v8687
    %v8823 = vadd.f32 %v8041, %v8689
    %v8824 = vadd.f32 %v8042, %v8692
    %v8825 = vadd.f32 %v8043, %v8694
    %v8826 = vadd.f32 %v8044, %v8697
    %v8827 = vadd.f32 %v8045, %v8699
    %v8828 = vadd.f32 %v8046, %v8702
    %v8829 = vadd.f32 %v8047, %v8704
    %v8830 = vadd.f32 %v8048, %v8707
    %v8831 = vadd.f32 %v8049, %v8709
    %v8832 = vadd.f32 %v8050, %v8712
    %v8833 = vadd.f32 %v8051, %v8714
    %v8834 = vadd.f32 %v8052, %v8717
    %v8835 = vadd.f32 %v8053, %v8719
    %v8836 = vadd.f32 %v8054, %v8722
    %v8837 = vadd.f32 %v8055, %v8724
    %v8838 = vadd.f32 %v8056, %v8727
    %v8839 = vadd.f32 %v8057, %v8729
    %v8840 = vadd.f32 %v8058, %v8732
    %v8841 = vadd.f32 %v8059, %v8734
    %v8842 = vadd.f32 %v8060, %v8737
    %v8843 = vadd.f32 %v8061, %v8739
    %v8844 = vadd.f32 %v8062, %v8742
    %v8845 = vadd.f32 %v8063, %v8744
    %v8846 = vadd.f32 %v8064, %v8747
    %v8847 = vadd.f32 %v8065, %v8749
    %v8848 = vadd.f32 %v8066, %v8752
    %v8849 = vadd.f32 %v8067, %v8754
    %v8850 = vadd.f32 %v8068, %v8757
    %v8851 = vadd.f32 %v8069, %v8759
    %v8852 = vadd.f32 %v8070, %v8762
    %v8853 = vadd.f32 %v8071, %v8764
    %v8854 = vadd.f32 %v8072, %v8767
    %v8855 = vadd.f32 %v8073, %v8769
    %v8856 = vadd.f32 %v8074, %v8772
    %v8857 = vadd.f32 %v8075, %v8774
    %v8858 = vadd.f32 %v8076, %v8777
    %v8859 = vadd.f32 %v8077, %v8779
    %v8860 = vadd.f32 %v8078, %v8782
    %v8861 = vadd.f32 %v8079, %v8784
    %v8862 = vadd.f32 %v8080, %v8787
    %v8863 = vadd.f32 %v8081, %v8789
    %v8864 = vadd.f32 %v8082, %v8792
    %v8865 = vadd.f32 %v8083, %v8794
    %v8866 = vadd.f32 %v8084, %v8797
    %v8867 = vadd.f32 %v8085, %v8799
    %v8868 = vadd.f32 %v8086, %v8802
    %v8869 = vadd.f32 %v8087, %v8804
    %v8870 = vpack.c.bf16 %v8806, %v8806
    %v8871 = vpack.c.bf16 %v8807, %v8807
    %v8872 = vpack.c.bf16 %v8808, %v8808
    %v8873 = vpack.c.bf16 %v8809, %v8809
    %v8874 = vpack.c.bf16 %v8810, %v8810
    %v8875 = vpack.c.bf16 %v8811, %v8811
    %v8876 = vpack.c.bf16 %v8812, %v8812
    %v8877 = vpack.c.bf16 %v8813, %v8813
    %v8878 = vpack.c.bf16 %v8814, %v8814
    %v8879 = vpack.c.bf16 %v8815, %v8815
    %v8880 = vpack.c.bf16 %v8816, %v8816
    %v8881 = vpack.c.bf16 %v8817, %v8817
    %v8882 = vpack.c.bf16 %v8818, %v8818
    %v8883 = vpack.c.bf16 %v8819, %v8819
    %v8884 = vpack.c.bf16 %v8820, %v8820
    %v8885 = vpack.c.bf16 %v8821, %v8821
    %v8886 = vpack.c.bf16 %v8822, %v8822
    %v8887 = vpack.c.bf16 %v8823, %v8823
    %v8888 = vpack.c.bf16 %v8824, %v8824
    %v8889 = vpack.c.bf16 %v8825, %v8825
    %v8890 = vpack.c.bf16 %v8826, %v8826
    %v8891 = vpack.c.bf16 %v8827, %v8827
    %v8892 = vpack.c.bf16 %v8828, %v8828
    %v8893 = vpack.c.bf16 %v8829, %v8829
    %v8894 = vpack.c.bf16 %v8830, %v8830
    %v8895 = vpack.c.bf16 %v8831, %v8831
    %v8896 = vpack.c.bf16 %v8832, %v8832
    %v8897 = vpack.c.bf16 %v8833, %v8833
    %v8898 = vpack.c.bf16 %v8834, %v8834
    %v8899 = vpack.c.bf16 %v8835, %v8835
    %v8900 = vpack.c.bf16 %v8836, %v8836
    %v8901 = vpack.c.bf16 %v8837, %v8837
    %v8902 = vpack.c.bf16 %v8838, %v8838
    %v8903 = vpack.c.bf16 %v8839, %v8839
    %v8904 = vpack.c.bf16 %v8840, %v8840
    %v8905 = vpack.c.bf16 %v8841, %v8841
    %v8906 = vpack.c.bf16 %v8842, %v8842
    %v8907 = vpack.c.bf16 %v8843, %v8843
    %v8908 = vpack.c.bf16 %v8844, %v8844
    %v8909 = vpack.c.bf16 %v8845, %v8845
    %v8910 = vpack.c.bf16 %v8846, %v8846
    %v8911 = vpack.c.bf16 %v8847, %v8847
    %v8912 = vpack.c.bf16 %v8848, %v8848
    %v8913 = vpack.c.bf16 %v8849, %v8849
    %v8914 = vpack.c.bf16 %v8850, %v8850
    %v8915 = vpack.c.bf16 %v8851, %v8851
    %v8916 = vpack.c.bf16 %v8852, %v8852
    %v8917 = vpack.c.bf16 %v8853, %v8853
    %v8918 = vpack.c.bf16 %v8854, %v8854
    %v8919 = vpack.c.bf16 %v8855, %v8855
    %v8920 = vpack.c.bf16 %v8856, %v8856
    %v8921 = vpack.c.bf16 %v8857, %v8857
    %v8922 = vpack.c.bf16 %v8858, %v8858
    %v8923 = vpack.c.bf16 %v8859, %v8859
    %v8924 = vpack.c.bf16 %v8860, %v8860
    %v8925 = vpack.c.bf16 %v8861, %v8861
    %v8926 = vpack.c.bf16 %v8862, %v8862
    %v8927 = vpack.c.bf16 %v8863, %v8863
    %v8928 = vpack.c.bf16 %v8864, %v8864
    %v8929 = vpack.c.bf16 %v8865, %v8865
    %v8930 = vpack.c.bf16 %v8866, %v8866
    %v8931 = vpack.c.bf16 %v8867, %v8867
    %v8932 = vpack.c.bf16 %v8868, %v8868
    %v8933 = vpack.c.bf16 %v8869, %v8869
    %8934 = vst.msk [vmem:[%s2] sm:$0xf] %vm15, %v8870
    %8935 = vst.msk [vmem:[%s2 + $0x4] sm:$0xf] %vm15, %v8871
    %8936 = vst.msk [vmem:[%s2 + $0x8] sm:$0xf] %vm15, %v8872
    %8937 = vst.msk [vmem:[%s2 + $0xc] sm:$0xf] %vm15, %v8873
    %8938 = vst.msk [vmem:[%s2 + $0x10] sm:$0xf] %vm15, %v8874
    %8939 = vst.msk [vmem:[%s2 + $0x14] sm:$0xf] %vm15, %v8875
    %8940 = vst.msk [vmem:[%s2 + $0x18] sm:$0xf] %vm15, %v8876
    %8941 = vst.msk [vmem:[%s2 + $0x1c] sm:$0xf] %vm15, %v8877
    %8942 = vst.msk [vmem:[%s2 + $0x20] sm:$0xf] %vm15, %v8878
    %8943 = vst.msk [vmem:[%s2 + $0x24] sm:$0xf] %vm15, %v8879
    %8944 = vst.msk [vmem:[%s2 + $0x28] sm:$0xf] %vm15, %v8880
    %8945 = vst.msk [vmem:[%s2 + $0x2c] sm:$0xf] %vm15, %v8881
    %8946 = vst.msk [vmem:[%s2 + $0x30] sm:$0xf] %vm15, %v8882
    %8947 = vst.msk [vmem:[%s2 + $0x34] sm:$0xf] %vm15, %v8883
    %8948 = vst.msk [vmem:[%s2 + $0x38] sm:$0xf] %vm15, %v8884
    %8949 = vst.msk [vmem:[%s2 + $0x3c] sm:$0xf] %vm15, %v8885
    %8950 = vst.msk [vmem:[%s2 + $0x40] sm:$0xf] %vm15, %v8886
    %8951 = vst.msk [vmem:[%s2 + $0x44] sm:$0xf] %vm15, %v8887
    %8952 = vst.msk [vmem:[%s2 + $0x48] sm:$0xf] %vm15, %v8888
    %8953 = vst.msk [vmem:[%s2 + $0x4c] sm:$0xf] %vm15, %v8889
    %8954 = vst.msk [vmem:[%s2 + $0x50] sm:$0xf] %vm15, %v8890
    %8955 = vst.msk [vmem:[%s2 + $0x54] sm:$0xf] %vm15, %v8891
    %8956 = vst.msk [vmem:[%s2 + $0x58] sm:$0xf] %vm15, %v8892
    %8957 = vst.msk [vmem:[%s2 + $0x5c] sm:$0xf] %vm15, %v8893
    %8958 = vst.msk [vmem:[%s2 + $0x60] sm:$0xf] %vm15, %v8894
    %8959 = vst.msk [vmem:[%s2 + $0x64] sm:$0xf] %vm15, %v8895
    %8960 = vst.msk [vmem:[%s2 + $0x68] sm:$0xf] %vm15, %v8896
    %8961 = vst.msk [vmem:[%s2 + $0x6c] sm:$0xf] %vm15, %v8897
    %8962 = vst.msk [vmem:[%s2 + $0x70] sm:$0xf] %vm15, %v8898
    %8963 = vst.msk [vmem:[%s2 + $0x74] sm:$0xf] %vm15, %v8899
    %8964 = vst.msk [vmem:[%s2 + $0x78] sm:$0xf] %vm15, %v8900
    %8965 = vst.msk [vmem:[%s2 + $0x7c] sm:$0xf] %vm15, %v8901
    %8966 = vst.msk [vmem:[%s2 + $0x80] sm:$0xf] %vm15, %v8902
    %8967 = vst.msk [vmem:[%s2 + $0x84] sm:$0xf] %vm15, %v8903
    %8968 = vst.msk [vmem:[%s2 + $0x88] sm:$0xf] %vm15, %v8904
    %8969 = vst.msk [vmem:[%s2 + $0x8c] sm:$0xf] %vm15, %v8905
    %8970 = vst.msk [vmem:[%s2 + $0x90] sm:$0xf] %vm15, %v8906
    %8971 = vst.msk [vmem:[%s2 + $0x94] sm:$0xf] %vm15, %v8907
    %8972 = vst.msk [vmem:[%s2 + $0x98] sm:$0xf] %vm15, %v8908
    %8973 = vst.msk [vmem:[%s2 + $0x9c] sm:$0xf] %vm15, %v8909
    %8974 = vst.msk [vmem:[%s2 + $0xa0] sm:$0xf] %vm15, %v8910
    %8975 = vst.msk [vmem:[%s2 + $0xa4] sm:$0xf] %vm15, %v8911
    %8976 = vst.msk [vmem:[%s2 + $0xa8] sm:$0xf] %vm15, %v8912
    %8977 = vst.msk [vmem:[%s2 + $0xac] sm:$0xf] %vm15, %v8913
    %8978 = vst.msk [vmem:[%s2 + $0xb0] sm:$0xf] %vm15, %v8914
    %8979 = vst.msk [vmem:[%s2 + $0xb4] sm:$0xf] %vm15, %v8915
    %8980 = vst.msk [vmem:[%s2 + $0xb8] sm:$0xf] %vm15, %v8916
    %8981 = vst.msk [vmem:[%s2 + $0xbc] sm:$0xf] %vm15, %v8917
    %8982 = vst.msk [vmem:[%s2 + $0xc0] sm:$0xf] %vm15, %v8918
    %8983 = vst.msk [vmem:[%s2 + $0xc4] sm:$0xf] %vm15, %v8919
    %8984 = vst.msk [vmem:[%s2 + $0xc8] sm:$0xf] %vm15, %v8920
    %8985 = vst.msk [vmem:[%s2 + $0xcc] sm:$0xf] %vm15, %v8921
    %8986 = vst.msk [vmem:[%s2 + $0xd0] sm:$0xf] %vm15, %v8922
    %8987 = vst.msk [vmem:[%s2 + $0xd4] sm:$0xf] %vm15, %v8923
    %8988 = vst.msk [vmem:[%s2 + $0xd8] sm:$0xf] %vm15, %v8924
    %8989 = vst.msk [vmem:[%s2 + $0xdc] sm:$0xf] %vm15, %v8925
    %8990 = vst.msk [vmem:[%s2 + $0xe0] sm:$0xf] %vm15, %v8926
    %8991 = vst.msk [vmem:[%s2 + $0xe4] sm:$0xf] %vm15, %v8927
    %8992 = vst.msk [vmem:[%s2 + $0xe8] sm:$0xf] %vm15, %v8928
    %8993 = vst.msk [vmem:[%s2 + $0xec] sm:$0xf] %vm15, %v8929
    %8994 = vst.msk [vmem:[%s2 + $0xf0] sm:$0xf] %vm15, %v8930
    %8995 = vst.msk [vmem:[%s2 + $0xf4] sm:$0xf] %vm15, %v8931
    %8996 = vst.msk [vmem:[%s2 + $0xf8] sm:$0xf] %vm15, %v8932
    %8997 = vst.msk [vmem:[%s2 + $0xfc] sm:$0xf] %vm15, %v8933
    %v8998 = vunpack.c.l.bf16 %v8870
    %v8999 = vunpack.c.l.bf16 %v8871
    %v9000 = vunpack.c.l.bf16 %v8872
    %v9001 = vunpack.c.l.bf16 %v8873
    %v9002 = vunpack.c.l.bf16 %v8874
    %v9003 = vunpack.c.l.bf16 %v8875
    %v9004 = vunpack.c.l.bf16 %v8876
    %v9005 = vunpack.c.l.bf16 %v8877
    %v9006 = vunpack.c.l.bf16 %v8878
    %v9007 = vunpack.c.l.bf16 %v8879
    %v9008 = vunpack.c.l.bf16 %v8880
    %v9009 = vunpack.c.l.bf16 %v8881
    %v9010 = vunpack.c.l.bf16 %v8882
    %v9011 = vunpack.c.l.bf16 %v8883
    %v9012 = vunpack.c.l.bf16 %v8884
    %v9013 = vunpack.c.l.bf16 %v8885
    %v9014 = vunpack.c.l.bf16 %v8886
    %v9015 = vunpack.c.l.bf16 %v8887
    %v9016 = vunpack.c.l.bf16 %v8888
    %v9017 = vunpack.c.l.bf16 %v8889
    %v9018 = vunpack.c.l.bf16 %v8890
    %v9019 = vunpack.c.l.bf16 %v8891
    %v9020 = vunpack.c.l.bf16 %v8892
    %v9021 = vunpack.c.l.bf16 %v8893
    %v9022 = vunpack.c.l.bf16 %v8894
    %v9023 = vunpack.c.l.bf16 %v8895
    %v9024 = vunpack.c.l.bf16 %v8896
    %v9025 = vunpack.c.l.bf16 %v8897
    %v9026 = vunpack.c.l.bf16 %v8898
    %v9027 = vunpack.c.l.bf16 %v8899
    %v9028 = vunpack.c.l.bf16 %v8900
    %v9029 = vunpack.c.l.bf16 %v8901
    %v9030 = vunpack.c.l.bf16 %v8902
    %v9031 = vunpack.c.l.bf16 %v8903
    %v9032 = vunpack.c.l.bf16 %v8904
    %v9033 = vunpack.c.l.bf16 %v8905
    %v9034 = vunpack.c.l.bf16 %v8906
    %v9035 = vunpack.c.l.bf16 %v8907
    %v9036 = vunpack.c.l.bf16 %v8908
    %v9037 = vunpack.c.l.bf16 %v8909
    %v9038 = vunpack.c.l.bf16 %v8910
    %v9039 = vunpack.c.l.bf16 %v8911
    %v9040 = vunpack.c.l.bf16 %v8912
    %v9041 = vunpack.c.l.bf16 %v8913
    %v9042 = vunpack.c.l.bf16 %v8914
    %v9043 = vunpack.c.l.bf16 %v8915
    %v9044 = vunpack.c.l.bf16 %v8916
    %v9045 = vunpack.c.l.bf16 %v8917
    %v9046 = vunpack.c.l.bf16 %v8918
    %v9047 = vunpack.c.l.bf16 %v8919
    %v9048 = vunpack.c.l.bf16 %v8920
    %v9049 = vunpack.c.l.bf16 %v8921
    %v9050 = vunpack.c.l.bf16 %v8922
    %v9051 = vunpack.c.l.bf16 %v8923
    %v9052 = vunpack.c.l.bf16 %v8924
    %v9053 = vunpack.c.l.bf16 %v8925
    %v9054 = vunpack.c.l.bf16 %v8926
    %v9055 = vunpack.c.l.bf16 %v8927
    %v9056 = vunpack.c.l.bf16 %v8928
    %v9057 = vunpack.c.l.bf16 %v8929
    %v9058 = vunpack.c.l.bf16 %v8930
    %v9059 = vunpack.c.l.bf16 %v8931
    %v9060 = vunpack.c.l.bf16 %v8932
    %v9061 = vunpack.c.l.bf16 %v8933
    %v9062 = vsel %vm2150, %v8998, 0.0
    %v9063 = vsel %vm2150, %v8999, 0.0
    %v9064 = vadd.f32 %v9062, %v9063
    %v9065 = vsel %vm2150, %v9000, 0.0
    %v9066 = vadd.f32 %v9064, %v9065
    %v9067 = vsel %vm2150, %v9001, 0.0
    %v9068 = vadd.f32 %v9066, %v9067
    %v9069 = vsel %vm2150, %v9002, 0.0
    %v9070 = vadd.f32 %v9068, %v9069
    %v9071 = vsel %vm2150, %v9003, 0.0
    %v9072 = vadd.f32 %v9070, %v9071
    %v9073 = vsel %vm2150, %v9004, 0.0
    %v9074 = vadd.f32 %v9072, %v9073
    %v9075 = vsel %vm2150, %v9005, 0.0
    %v9076 = vadd.f32 %v9074, %v9075
    %v9077 = vsel %vm2150, %v9006, 0.0
    %v9078 = vadd.f32 %v9076, %v9077
    %v9079 = vsel %vm2150, %v9007, 0.0
    %v9080 = vadd.f32 %v9078, %v9079
    %v9081 = vsel %vm2150, %v9008, 0.0
    %v9082 = vadd.f32 %v9080, %v9081
    %v9083 = vsel %vm2150, %v9009, 0.0
    %v9084 = vadd.f32 %v9082, %v9083
    %v9085 = vsel %vm2150, %v9010, 0.0
    %v9086 = vadd.f32 %v9084, %v9085
    %v9087 = vsel %vm2150, %v9011, 0.0
    %v9088 = vadd.f32 %v9086, %v9087
    %v9089 = vsel %vm2150, %v9012, 0.0
    %v9090 = vadd.f32 %v9088, %v9089
    %v9091 = vsel %vm2150, %v9013, 0.0
    %v9092 = vadd.f32 %v9090, %v9091
    %v9093 = vsel %vm2150, %v9014, 0.0
    %v9094 = vadd.f32 %v9092, %v9093
    %v9095 = vsel %vm2150, %v9015, 0.0
    %v9096 = vadd.f32 %v9094, %v9095
    %v9097 = vsel %vm2150, %v9016, 0.0
    %v9098 = vadd.f32 %v9096, %v9097
    %v9099 = vsel %vm2150, %v9017, 0.0
    %v9100 = vadd.f32 %v9098, %v9099
    %v9101 = vsel %vm2150, %v9018, 0.0
    %v9102 = vadd.f32 %v9100, %v9101
    %v9103 = vsel %vm2150, %v9019, 0.0
    %v9104 = vadd.f32 %v9102, %v9103
    %v9105 = vsel %vm2150, %v9020, 0.0
    %v9106 = vadd.f32 %v9104, %v9105
    %v9107 = vsel %vm2150, %v9021, 0.0
    %v9108 = vadd.f32 %v9106, %v9107
    %v9109 = vsel %vm2150, %v9022, 0.0
    %v9110 = vadd.f32 %v9108, %v9109
    %v9111 = vsel %vm2150, %v9023, 0.0
    %v9112 = vadd.f32 %v9110, %v9111
    %v9113 = vsel %vm2150, %v9024, 0.0
    %v9114 = vadd.f32 %v9112, %v9113
    %v9115 = vsel %vm2150, %v9025, 0.0
    %v9116 = vadd.f32 %v9114, %v9115
    %v9117 = vsel %vm2150, %v9026, 0.0
    %v9118 = vadd.f32 %v9116, %v9117
    %v9119 = vsel %vm2150, %v9027, 0.0
    %v9120 = vadd.f32 %v9118, %v9119
    %v9121 = vsel %vm2150, %v9028, 0.0
    %v9122 = vadd.f32 %v9120, %v9121
    %v9123 = vsel %vm2150, %v9029, 0.0
    %v9124 = vadd.f32 %v9122, %v9123
    %v9125 = vsel %vm2150, %v9030, 0.0
    %v9126 = vadd.f32 %v9124, %v9125
    %v9127 = vsel %vm2150, %v9031, 0.0
    %v9128 = vadd.f32 %v9126, %v9127
    %v9129 = vsel %vm2150, %v9032, 0.0
    %v9130 = vadd.f32 %v9128, %v9129
    %v9131 = vsel %vm2150, %v9033, 0.0
    %v9132 = vadd.f32 %v9130, %v9131
    %v9133 = vsel %vm2150, %v9034, 0.0
    %v9134 = vadd.f32 %v9132, %v9133
    %v9135 = vsel %vm2150, %v9035, 0.0
    %v9136 = vadd.f32 %v9134, %v9135
    %v9137 = vsel %vm2150, %v9036, 0.0
    %v9138 = vadd.f32 %v9136, %v9137
    %v9139 = vsel %vm2150, %v9037, 0.0
    %v9140 = vadd.f32 %v9138, %v9139
    %v9141 = vsel %vm2150, %v9038, 0.0
    %v9142 = vadd.f32 %v9140, %v9141
    %v9143 = vsel %vm2150, %v9039, 0.0
    %v9144 = vadd.f32 %v9142, %v9143
    %v9145 = vsel %vm2150, %v9040, 0.0
    %v9146 = vadd.f32 %v9144, %v9145
    %v9147 = vsel %vm2150, %v9041, 0.0
    %v9148 = vadd.f32 %v9146, %v9147
    %v9149 = vsel %vm2150, %v9042, 0.0
    %v9150 = vadd.f32 %v9148, %v9149
    %v9151 = vsel %vm2150, %v9043, 0.0
    %v9152 = vadd.f32 %v9150, %v9151
    %v9153 = vsel %vm2150, %v9044, 0.0
    %v9154 = vadd.f32 %v9152, %v9153
    %v9155 = vsel %vm2150, %v9045, 0.0
    %v9156 = vadd.f32 %v9154, %v9155
    %v9157 = vsel %vm2150, %v9046, 0.0
    %v9158 = vadd.f32 %v9156, %v9157
    %v9159 = vsel %vm2150, %v9047, 0.0
    %v9160 = vadd.f32 %v9158, %v9159
    %v9161 = vsel %vm2150, %v9048, 0.0
    %v9162 = vadd.f32 %v9160, %v9161
    %v9163 = vsel %vm2150, %v9049, 0.0
    %v9164 = vadd.f32 %v9162, %v9163
    %v9165 = vsel %vm2150, %v9050, 0.0
    %v9166 = vadd.f32 %v9164, %v9165
    %v9167 = vsel %vm2150, %v9051, 0.0
    %v9168 = vadd.f32 %v9166, %v9167
    %v9169 = vsel %vm2150, %v9052, 0.0
    %v9170 = vadd.f32 %v9168, %v9169
    %v9171 = vsel %vm2150, %v9053, 0.0
    %v9172 = vadd.f32 %v9170, %v9171
    %v9173 = vsel %vm2150, %v9054, 0.0
    %v9174 = vadd.f32 %v9172, %v9173
    %v9175 = vsel %vm2150, %v9055, 0.0
    %v9176 = vadd.f32 %v9174, %v9175
    %v9177 = vsel %vm2150, %v9056, 0.0
    %v9178 = vadd.f32 %v9176, %v9177
    %v9179 = vsel %vm2150, %v9057, 0.0
    %v9180 = vadd.f32 %v9178, %v9179
    %v9181 = vsel %vm2150, %v9058, 0.0
    %v9182 = vadd.f32 %v9180, %v9181
    %v9183 = vsel %vm2150, %v9059, 0.0
    %v9184 = vadd.f32 %v9182, %v9183
    %v9185 = vsel %vm2150, %v9060, 0.0
    %v9186 = vadd.f32 %v9184, %v9185
    %v9187 = vsel %vm2150, %v9061, 0.0
    %v9188 = vadd.f32 %v9186, %v9187
    %v9189 = vrot.slane %v9188, 4
    %v9190 = vadd.f32 %v9188, %v9189
    %v9191 = vrot.slane %v9190, 2
    %v9192 = vadd.f32 %v9190, %v9191
    %v9193 = vrot.slane %v9192, 1
    %v9194 = vadd.f32 %v9192, %v9193
    %v9195 = vrcp.pop 512.0
    %v9196 = vmul.f32 512.0, %v9195
    %v9197 = vsub.f32 1.0, %v9196
    %v9198 = vmul.f32 %v9195, %v9197
    %v9199 = vadd.f32 %v9195, %v9198
    %vm9200 = vweird.f32 %v9195
    %v9201 = vsel %vm9200, %v9195, %v9199
    %v9202 = vmul.f32 %v9194, %v9201
    %v9203 = vsub.f32 %v8998, %v9202
    %v9204 = vsub.f32 %v8999, %v9202
    %v9205 = vsub.f32 %v9000, %v9202
    %v9206 = vsub.f32 %v9001, %v9202
    %v9207 = vsub.f32 %v9002, %v9202
    %v9208 = vsub.f32 %v9003, %v9202
    %v9209 = vsub.f32 %v9004, %v9202
    %v9210 = vsub.f32 %v9005, %v9202
    %v9211 = vsub.f32 %v9006, %v9202
    %v9212 = vsub.f32 %v9007, %v9202
    %v9213 = vsub.f32 %v9008, %v9202
    %v9214 = vsub.f32 %v9009, %v9202
    %v9215 = vsub.f32 %v9010, %v9202
    %v9216 = vsub.f32 %v9011, %v9202
    %v9217 = vsub.f32 %v9012, %v9202
    %v9218 = vsub.f32 %v9013, %v9202
    %v9219 = vsub.f32 %v9014, %v9202
    %v9220 = vsub.f32 %v9015, %v9202
    %v9221 = vsub.f32 %v9016, %v9202
    %v9222 = vsub.f32 %v9017, %v9202
    %v9223 = vsub.f32 %v9018, %v9202
    %v9224 = vsub.f32 %v9019, %v9202
    %v9225 = vsub.f32 %v9020, %v9202
    %v9226 = vsub.f32 %v9021, %v9202
    %v9227 = vsub.f32 %v9022, %v9202
    %v9228 = vsub.f32 %v9023, %v9202
    %v9229 = vsub.f32 %v9024, %v9202
    %v9230 = vsub.f32 %v9025, %v9202
    %v9231 = vsub.f32 %v9026, %v9202
    %v9232 = vsub.f32 %v9027, %v9202
    %v9233 = vsub.f32 %v9028, %v9202
    %v9234 = vsub.f32 %v9029, %v9202
    %v9235 = vsub.f32 %v9030, %v9202
    %v9236 = vsub.f32 %v9031, %v9202
    %v9237 = vsub.f32 %v9032, %v9202
    %v9238 = vsub.f32 %v9033, %v9202
    %v9239 = vsub.f32 %v9034, %v9202
    %v9240 = vsub.f32 %v9035, %v9202
    %v9241 = vsub.f32 %v9036, %v9202
    %v9242 = vsub.f32 %v9037, %v9202
    %v9243 = vsub.f32 %v9038, %v9202
    %v9244 = vsub.f32 %v9039, %v9202
    %v9245 = vsub.f32 %v9040, %v9202
    %v9246 = vsub.f32 %v9041, %v9202
    %v9247 = vsub.f32 %v9042, %v9202
    %v9248 = vsub.f32 %v9043, %v9202
    %v9249 = vsub.f32 %v9044, %v9202
    %v9250 = vsub.f32 %v9045, %v9202
    %v9251 = vsub.f32 %v9046, %v9202
    %v9252 = vsub.f32 %v9047, %v9202
    %v9253 = vsub.f32 %v9048, %v9202
    %v9254 = vsub.f32 %v9049, %v9202
    %v9255 = vsub.f32 %v9050, %v9202
    %v9256 = vsub.f32 %v9051, %v9202
    %v9257 = vsub.f32 %v9052, %v9202
    %v9258 = vsub.f32 %v9053, %v9202
    %v9259 = vsub.f32 %v9054, %v9202
    %v9260 = vsub.f32 %v9055, %v9202
    %v9261 = vsub.f32 %v9056, %v9202
    %v9262 = vsub.f32 %v9057, %v9202
    %v9263 = vsub.f32 %v9058, %v9202
    %v9264 = vsub.f32 %v9059, %v9202
    %v9265 = vsub.f32 %v9060, %v9202
    %v9266 = vsub.f32 %v9061, %v9202
    %v9267 = vmul.f32 %v9203, %v9203
    %v9268 = vmul.f32 %v9204, %v9204
    %v9269 = vmul.f32 %v9205, %v9205
    %v9270 = vmul.f32 %v9206, %v9206
    %v9271 = vmul.f32 %v9207, %v9207
    %v9272 = vmul.f32 %v9208, %v9208
    %v9273 = vmul.f32 %v9209, %v9209
    %v9274 = vmul.f32 %v9210, %v9210
    %v9275 = vmul.f32 %v9211, %v9211
    %v9276 = vmul.f32 %v9212, %v9212
    %v9277 = vmul.f32 %v9213, %v9213
    %v9278 = vmul.f32 %v9214, %v9214
    %v9279 = vmul.f32 %v9215, %v9215
    %v9280 = vmul.f32 %v9216, %v9216
    %v9281 = vmul.f32 %v9217, %v9217
    %v9282 = vmul.f32 %v9218, %v9218
    %v9283 = vmul.f32 %v9219, %v9219
    %v9284 = vmul.f32 %v9220, %v9220
    %v9285 = vmul.f32 %v9221, %v9221
    %v9286 = vmul.f32 %v9222, %v9222
    %v9287 = vmul.f32 %v9223, %v9223
    %v9288 = vmul.f32 %v9224, %v9224
    %v9289 = vmul.f32 %v9225, %v9225
    %v9290 = vmul.f32 %v9226, %v9226
    %v9291 = vmul.f32 %v9227, %v9227
    %v9292 = vmul.f32 %v9228, %v9228
    %v9293 = vmul.f32 %v9229, %v9229
    %v9294 = vmul.f32 %v9230, %v9230
    %v9295 = vmul.f32 %v9231, %v9231
    %v9296 = vmul.f32 %v9232, %v9232
    %v9297 = vmul.f32 %v9233, %v9233
    %v9298 = vmul.f32 %v9234, %v9234
    %v9299 = vmul.f32 %v9235, %v9235
    %v9300 = vmul.f32 %v9236, %v9236
    %v9301 = vmul.f32 %v9237, %v9237
    %v9302 = vmul.f32 %v9238, %v9238
    %v9303 = vmul.f32 %v9239, %v9239
    %v9304 = vmul.f32 %v9240, %v9240
    %v9305 = vmul.f32 %v9241, %v9241
    %v9306 = vmul.f32 %v9242, %v9242
    %v9307 = vmul.f32 %v9243, %v9243
    %v9308 = vmul.f32 %v9244, %v9244
    %v9309 = vmul.f32 %v9245, %v9245
    %v9310 = vmul.f32 %v9246, %v9246
    %v9311 = vmul.f32 %v9247, %v9247
    %v9312 = vmul.f32 %v9248, %v9248
    %v9313 = vmul.f32 %v9249, %v9249
    %v9314 = vmul.f32 %v9250, %v9250
    %v9315 = vmul.f32 %v9251, %v9251
    %v9316 = vmul.f32 %v9252, %v9252
    %v9317 = vmul.f32 %v9253, %v9253
    %v9318 = vmul.f32 %v9254, %v9254
    %v9319 = vmul.f32 %v9255, %v9255
    %v9320 = vmul.f32 %v9256, %v9256
    %v9321 = vmul.f32 %v9257, %v9257
    %v9322 = vmul.f32 %v9258, %v9258
    %v9323 = vmul.f32 %v9259, %v9259
    %v9324 = vmul.f32 %v9260, %v9260
    %v9325 = vmul.f32 %v9261, %v9261
    %v9326 = vmul.f32 %v9262, %v9262
    %v9327 = vmul.f32 %v9263, %v9263
    %v9328 = vmul.f32 %v9264, %v9264
    %v9329 = vmul.f32 %v9265, %v9265
    %v9330 = vmul.f32 %v9266, %v9266
    %v9331 = vsel %vm2150, %v9267, 0.0
    %v9332 = vsel %vm2150, %v9268, 0.0
    %v9333 = vadd.f32 %v9331, %v9332
    %v9334 = vsel %vm2150, %v9269, 0.0
    %v9335 = vadd.f32 %v9333, %v9334
    %v9336 = vsel %vm2150, %v9270, 0.0
    %v9337 = vadd.f32 %v9335, %v9336
    %v9338 = vsel %vm2150, %v9271, 0.0
    %v9339 = vadd.f32 %v9337, %v9338
    %v9340 = vsel %vm2150, %v9272, 0.0
    %v9341 = vadd.f32 %v9339, %v9340
    %v9342 = vsel %vm2150, %v9273, 0.0
    %v9343 = vadd.f32 %v9341, %v9342
    %v9344 = vsel %vm2150, %v9274, 0.0
    %v9345 = vadd.f32 %v9343, %v9344
    %v9346 = vsel %vm2150, %v9275, 0.0
    %v9347 = vadd.f32 %v9345, %v9346
    %v9348 = vsel %vm2150, %v9276, 0.0
    %v9349 = vadd.f32 %v9347, %v9348
    %v9350 = vsel %vm2150, %v9277, 0.0
    %v9351 = vadd.f32 %v9349, %v9350
    %v9352 = vsel %vm2150, %v9278, 0.0
    %v9353 = vadd.f32 %v9351, %v9352
    %v9354 = vsel %vm2150, %v9279, 0.0
    %v9355 = vadd.f32 %v9353, %v9354
    %v9356 = vsel %vm2150, %v9280, 0.0
    %v9357 = vadd.f32 %v9355, %v9356
    %v9358 = vsel %vm2150, %v9281, 0.0
    %v9359 = vadd.f32 %v9357, %v9358
    %v9360 = vsel %vm2150, %v9282, 0.0
    %v9361 = vadd.f32 %v9359, %v9360
    %v9362 = vsel %vm2150, %v9283, 0.0
    %v9363 = vadd.f32 %v9361, %v9362
    %v9364 = vsel %vm2150, %v9284, 0.0
    %v9365 = vadd.f32 %v9363, %v9364
    %v9366 = vsel %vm2150, %v9285, 0.0
    %v9367 = vadd.f32 %v9365, %v9366
    %v9368 = vsel %vm2150, %v9286, 0.0
    %v9369 = vadd.f32 %v9367, %v9368
    %v9370 = vsel %vm2150, %v9287, 0.0
    %v9371 = vadd.f32 %v9369, %v9370
    %v9372 = vsel %vm2150, %v9288, 0.0
    %v9373 = vadd.f32 %v9371, %v9372
    %v9374 = vsel %vm2150, %v9289, 0.0
    %v9375 = vadd.f32 %v9373, %v9374
    %v9376 = vsel %vm2150, %v9290, 0.0
    %v9377 = vadd.f32 %v9375, %v9376
    %v9378 = vsel %vm2150, %v9291, 0.0
    %v9379 = vadd.f32 %v9377, %v9378
    %v9380 = vsel %vm2150, %v9292, 0.0
    %v9381 = vadd.f32 %v9379, %v9380
    %v9382 = vsel %vm2150, %v9293, 0.0
    %v9383 = vadd.f32 %v9381, %v9382
    %v9384 = vsel %vm2150, %v9294, 0.0
    %v9385 = vadd.f32 %v9383, %v9384
    %v9386 = vsel %vm2150, %v9295, 0.0
    %v9387 = vadd.f32 %v9385, %v9386
    %v9388 = vsel %vm2150, %v9296, 0.0
    %v9389 = vadd.f32 %v9387, %v9388
    %v9390 = vsel %vm2150, %v9297, 0.0
    %v9391 = vadd.f32 %v9389, %v9390
    %v9392 = vsel %vm2150, %v9298, 0.0
    %v9393 = vadd.f32 %v9391, %v9392
    %v9394 = vsel %vm2150, %v9299, 0.0
    %v9395 = vadd.f32 %v9393, %v9394
    %v9396 = vsel %vm2150, %v9300, 0.0
    %v9397 = vadd.f32 %v9395, %v9396
    %v9398 = vsel %vm2150, %v9301, 0.0
    %v9399 = vadd.f32 %v9397, %v9398
    %v9400 = vsel %vm2150, %v9302, 0.0
    %v9401 = vadd.f32 %v9399, %v9400
    %v9402 = vsel %vm2150, %v9303, 0.0
    %v9403 = vadd.f32 %v9401, %v9402
    %v9404 = vsel %vm2150, %v9304, 0.0
    %v9405 = vadd.f32 %v9403, %v9404
    %v9406 = vsel %vm2150, %v9305, 0.0
    %v9407 = vadd.f32 %v9405, %v9406
    %v9408 = vsel %vm2150, %v9306, 0.0
    %v9409 = vadd.f32 %v9407, %v9408
    %v9410 = vsel %vm2150, %v9307, 0.0
    %v9411 = vadd.f32 %v9409, %v9410
    %v9412 = vsel %vm2150, %v9308, 0.0
    %v9413 = vadd.f32 %v9411, %v9412
    %v9414 = vsel %vm2150, %v9309, 0.0
    %v9415 = vadd.f32 %v9413, %v9414
    %v9416 = vsel %vm2150, %v9310, 0.0
    %v9417 = vadd.f32 %v9415, %v9416
    %v9418 = vsel %vm2150, %v9311, 0.0
    %v9419 = vadd.f32 %v9417, %v9418
    %v9420 = vsel %vm2150, %v9312, 0.0
    %v9421 = vadd.f32 %v9419, %v9420
    %v9422 = vsel %vm2150, %v9313, 0.0
    %v9423 = vadd.f32 %v9421, %v9422
    %v9424 = vsel %vm2150, %v9314, 0.0
    %v9425 = vadd.f32 %v9423, %v9424
    %v9426 = vsel %vm2150, %v9315, 0.0
    %v9427 = vadd.f32 %v9425, %v9426
    %v9428 = vsel %vm2150, %v9316, 0.0
    %v9429 = vadd.f32 %v9427, %v9428
    %v9430 = vsel %vm2150, %v9317, 0.0
    %v9431 = vadd.f32 %v9429, %v9430
    %v9432 = vsel %vm2150, %v9318, 0.0
    %v9433 = vadd.f32 %v9431, %v9432
    %v9434 = vsel %vm2150, %v9319, 0.0
    %v9435 = vadd.f32 %v9433, %v9434
    %v9436 = vsel %vm2150, %v9320, 0.0
    %v9437 = vadd.f32 %v9435, %v9436
    %v9438 = vsel %vm2150, %v9321, 0.0
    %v9439 = vadd.f32 %v9437, %v9438
    %v9440 = vsel %vm2150, %v9322, 0.0
    %v9441 = vadd.f32 %v9439, %v9440
    %v9442 = vsel %vm2150, %v9323, 0.0
    %v9443 = vadd.f32 %v9441, %v9442
    %v9444 = vsel %vm2150, %v9324, 0.0
    %v9445 = vadd.f32 %v9443, %v9444
    %v9446 = vsel %vm2150, %v9325, 0.0
    %v9447 = vadd.f32 %v9445, %v9446
    %v9448 = vsel %vm2150, %v9326, 0.0
    %v9449 = vadd.f32 %v9447, %v9448
    %v9450 = vsel %vm2150, %v9327, 0.0
    %v9451 = vadd.f32 %v9449, %v9450
    %v9452 = vsel %vm2150, %v9328, 0.0
    %v9453 = vadd.f32 %v9451, %v9452
    %v9454 = vsel %vm2150, %v9329, 0.0
    %v9455 = vadd.f32 %v9453, %v9454
    %v9456 = vsel %vm2150, %v9330, 0.0
    %v9457 = vadd.f32 %v9455, %v9456
    %v9458 = vrot.slane %v9457, 4
    %v9459 = vadd.f32 %v9457, %v9458
    %v9460 = vrot.slane %v9459, 2
    %v9461 = vadd.f32 %v9459, %v9460
    %v9462 = vrot.slane %v9461, 1
    %v9463 = vadd.f32 %v9461, %v9462
    %vm9464 = vcmask 1040384
    %v9465 = vsel %vm9464, %v9194, %v9463
    %vm9466 = vcmask 25600
    %9467 = vst.msk [vmem:[#allocation3] sm:$0x3] %vm9466, %v9465
    // Predicated region
    $region10: #{tpu_custom_call.1} parent=1 // pred_check
      _
    $region11: #{tpu_custom_call.1} parent=1 // pred_check_branch
      %9469 = sbr.rel (0) target = $region13
    $region12: #{tpu_custom_call.1} parent=1 // pred_region
      _
    $region13: #{tpu_custom_call.1} parent=1 // pred_fallthru
      _
    // Predicated region
    $region14: #{tpu_custom_call.1} parent=1 // pred_check
      _
    $region15: #{tpu_custom_call.1} parent=1 // pred_check_branch
      %9471 = sbr.rel (0) target = $region17
    $region16: #{tpu_custom_call.1} parent=1 // pred_region
      %9473 = vsyncadd [#allocation4], 0
      %s9475 = sshll.u32 [#allocation3], 4
      %s9476 = int_to_ptr.vmem [resolvable:$true] %s9475
      %s9477 = sshll.u32 %s3, 4
      %s9478 = int_to_ptr.hbm [resolvable:$true] %s9477
      %9480 = dma.vmem_to_hbm [thread:$0]  %s9476, 32, %s9478, [#allocation4]
    $region17: #{tpu_custom_call.1} parent=1 // pred_fallthru
      _
    // Predicated region
    $region18: #{tpu_custom_call.1} parent=1 // pred_check
      _
    $region19: #{tpu_custom_call.1} parent=1 // pred_check_branch
      %9482 = sbr.rel (0) target = $region21
    $region20: #{tpu_custom_call.1} parent=1 // pred_region
      _
    $region21: #{tpu_custom_call.1} parent=1 // pred_fallthru
      _
    // Predicated region
    $region22: #{tpu_custom_call.1} parent=1 // pred_check
      _
    $region23: #{tpu_custom_call.1} parent=1 // pred_check_branch
      %9484 = sbr.rel (0) target = $region25
    $region24: #{tpu_custom_call.1} parent=1 // pred_region
      %9486 = dma.done [#allocation4], 32
    $region25: #{tpu_custom_call.1} parent=1 // pred_fallthru
      _
    %9487 = vsyncpa [#allocation4], 1

</llo_original>
